<compile_context>
chip_gen: v5e
topology: v5e:2x2
jax: 0.10.0
libtpu: 0.0.40
codegen_flags: <defaults>
</compile_context>

<pallas_src>
import functools
import math

import jax
import jax.numpy as jnp
from jax import lax
from jax.experimental import pallas as pl
from jax.experimental.pallas import tpu as pltpu

NEG_SLOPE = 0.01        # F.leaky_relu default
LN_EPS = 1e-5           # nn.TransformerEncoderLayer default layer_norm_eps
NHEAD = 2
FF_DIM = 2048           # nn.TransformerEncoderLayer default dim_feedforward
NUM_BLOCKS = 3          # lstm1/transformer1 ... lstm3/transformer3
MASK_NEG = -1e30
HS = 64                 # width of hidden_{mu,sigma_m,sigma_v}1
H_MU2 = 32
H_MU3 = 16
H_SV2 = 8


def _leaky_relu(x):
    return jnp.where(x >= 0, x, NEG_SLOPE * x)


def _layernorm(x, g, b):
    mu = jnp.mean(x, axis=-1, keepdims=True)
    var = jnp.mean((x - mu) ** 2, axis=-1, keepdims=True)
    return (x - mu) * lax.rsqrt(var + LN_EPS) * g + b


def _softmax_approx(x):
    # attention softmax: denominator reciprocal on the EUP (approx) path
    x = x - jnp.max(x, axis=-1, keepdims=True)
    e = jnp.exp(x)
    return e * pl.reciprocal(jnp.sum(e, axis=-1, keepdims=True), approx=True)


def _slab_layout(D, ff):
    """Column offsets of the packed per-layer weight / bias slabs."""
    o = {}
    # weight slab (D rows): [w_ih(4D) | w_hh(4D) | wq(D) | wk(D) | wv(D) | pad(D) | wo(D)]
    o['WIH'] = 0
    o['WHH'] = 4 * D
    o['WQ'] = 8 * D
    o['WK'] = 9 * D
    o['WV'] = 10 * D
    o['WO'] = 12 * D              # pad keeps wo 128-lane aligned for D=32
    o['W_WIDTH'] = 13 * D
    # bias slab (1 row): [b1(ff) | b_lstm(4D) | bq | bk | bv | bo | b2 | ln1_g | ln1_b | ln2_g | ln2_b]
    o['B1'] = 0
    o['BL'] = ff
    o['BQ'] = ff + 4 * D
    o['BK'] = ff + 5 * D
    o['BV'] = ff + 6 * D
    o['BO'] = ff + 7 * D
    o['B2'] = ff + 8 * D
    o['LN1G'] = ff + 9 * D
    o['LN1B'] = ff + 10 * D
    o['LN2G'] = ff + 11 * D
    o['LN2B'] = ff + 12 * D
    o['B_WIDTH'] = ff + 13 * D
    return o


# --------------------------------------------------------------------------
# Fused forward kernel (one grid step per lstm+transformer block)
# --------------------------------------------------------------------------
def _fused_kernel(env_ref, act_ref, wrec_ref, bias_ref, ffw_ref, h1_ref, h2_ref,
                  out_ref, x_scr,
                  *, S, B_pad, B_sel, D, A, nhead, ff, ff_chunk, off):
    step = pl.program_id(0)
    last = pl.num_programs(0) - 1
    SB = S * B_pad
    hd = D // nhead
    scale = 1.0 / math.sqrt(hd)
    f32 = jnp.float32

    # layer 0 consumes the (padded, s-major flattened) env input; later layers use the
    # activation carried in VMEM scratch across grid steps.
    @pl.when(step == 0)
    def _():
        x_scr[...] = env_ref[...]

    x = x_scr[...]                                        # (SB, D) f32

    wrec = wrec_ref.at[0]                                 # (D, 13D) view, this layer
    brf = bias_ref.at[0]                                  # (1, BW) view, this layer

    def wcol(a, n):
        return wrec[:, a:a + n]

    def brow(a, n):
        return brf[:, a:a + n]

    # ---------------- LSTM (1 layer, h0 = c0 = 0, PyTorch gate order i,f,g,o) --------
    # Per-gate weights / input projections: no lane-misaligned activation slices inside
    # the serial recurrence (weight slicing happens once per layer, off the chain).
    gx, whh = [], []
    for k in range(4):
        gx.append(jnp.dot(x, wcol(off['WIH'] + k * D, D), preferred_element_type=f32)
                  + brow(off['BL'] + k * D, D))
        whh.append(wcol(off['WHH'] + k * D, D))
    h = jnp.zeros((B_pad, D), f32)
    c = jnp.zeros((B_pad, D), f32)
    outs = []
    for t in range(S):                                    # unrolled recurrence
        r = t * B_pad                                     # sublane-aligned (B_pad = 8)
        gi = gx[0][r:r + B_pad, :] + jnp.dot(h, whh[0], preferred_element_type=f32)
        gf = gx[1][r:r + B_pad, :] + jnp.dot(h, whh[1], preferred_element_type=f32)
        gg = gx[2][r:r + B_pad, :] + jnp.dot(h, whh[2], preferred_element_type=f32)
        go = gx[3][r:r + B_pad, :] + jnp.dot(h, whh[3], preferred_element_type=f32)
        c = jax.nn.sigmoid(gf) * c + jax.nn.sigmoid(gi) * jnp.tanh(gg)
        h = jax.nn.sigmoid(go) * jnp.tanh(c)
        outs.append(h)
    x = jnp.concatenate(outs, axis=0)                     # (SB, D), 8-row aligned pieces

    # ---------------- TransformerEncoderLayer (post-norm, relu FFN, eval dropout) ----
    # All-pairs attention over flat SB rows; cross-batch pairs masked (integer mask).
    ri = lax.broadcasted_iota(jnp.int32, (SB, SB), 0)
    ci = lax.broadcasted_iota(jnp.int32, (SB, SB), 1)
    bm = B_pad - 1                                        # B_pad is a power of two
    same_b = jnp.bitwise_and(ri, bm) == jnp.bitwise_and(ci, bm)

    attn = jnp.zeros((SB, D), f32)
    for n in range(nhead):
        qh = jnp.dot(x, wcol(off['WQ'] + n * hd, hd), preferred_element_type=f32) \
            + brow(off['BQ'] + n * hd, hd)
        kh = jnp.dot(x, wcol(off['WK'] + n * hd, hd), preferred_element_type=f32) \
            + brow(off['BK'] + n * hd, hd)
        vh = jnp.dot(x, wcol(off['WV'] + n * hd, hd), preferred_element_type=f32) \
            + brow(off['BV'] + n * hd, hd)
        s = lax.dot_general(qh, kh, (((1,), (1,)), ((), ())),
                            preferred_element_type=f32) * scale
        p = _softmax_approx(jnp.where(same_b, s, f32(MASK_NEG)))
        ctx = jnp.dot(p, vh, preferred_element_type=f32)                # (SB, hd)
        wo_n = wrec[n * hd:(n + 1) * hd, off['WO']:off['WO'] + D]       # (hd, D)
        attn = attn + jnp.dot(ctx, wo_n, preferred_element_type=f32)
    attn = attn + brow(off['BO'], D)
    x1 = _layernorm(x + attn, brow(off['LN1G'], D), brow(off['LN1B'], D))

    # ---------------- FFN: bf16 weights, chunked over ff, f32 accumulation -----------
    w1r = ffw_ref.at[0, 0]                                # (D, ff) bf16, in  -> hidden
    w2r = ffw_ref.at[0, 1]                                # (D, ff) bf16, pre-transposed w2
    x1_bf = x1.astype(jnp.bfloat16)
    ffa = jnp.zeros((SB, D), f32)
    for c0 in range(0, ff, ff_chunk):
        hch = jnp.maximum(
            jnp.dot(x1_bf, w1r[:, c0:c0 + ff_chunk], preferred_element_type=f32)
            + brow(off['B1'] + c0, ff_chunk), 0.0)
        ffa = ffa + lax.dot_general(hch.astype(jnp.bfloat16), w2r[:, c0:c0 + ff_chunk],
                                    (((1,), (1,)), ((), ())),
                                    preferred_element_type=f32)
    x = _layernorm(x1 + ffa + brow(off['B2'], D),
                   brow(off['LN2G'], D), brow(off['LN2B'], D))

    x_scr[...] = x                                        # carry to next layer / heads

    # ---------------- heads (only on the last grid step) -----------------------------
    @pl.when(step == last)
    def _():
        # attn_out[:, -1, :]  (last *real* batch row of every timestep) via 0/1 matmul
        rs = lax.broadcasted_iota(jnp.int32, (S, SB), 0)
        cs = lax.broadcasted_iota(jnp.int32, (S, SB), 1)
        sel = jnp.where(cs == rs * B_pad + B_sel, 1.0, 0.0).astype(f32)
        feat = jnp.dot(sel, x, preferred_element_type=f32)            # (S, D)

        ones = jnp.ones((S, 1), f32)
        # fused stems of the mu / sigma_m / sigma_v heads (bias folded via ones column)
        cat1 = jnp.concatenate([feat, act_ref[...], ones], axis=1)    # (S, D + A + 1)
        stem = _leaky_relu(jnp.dot(cat1, h1_ref[...],
                                   preferred_element_type=f32))       # (S, 3*HS)

        C2 = H_MU2 + H_SV2 + A * A
        C3 = H_MU3 + 1
        r0 = 0
        w2a = h2_ref[r0:r0 + 3 * HS + 1, :]                           # (3*HS+1, C2)
        r0 += 3 * HS + 1
        w3a = h2_ref[r0:r0 + H_MU2 + H_SV2 + 1, 0:C3]                 # (41, C3)
        r0 += H_MU2 + H_SV2 + 1
        w4a = h2_ref[r0:r0 + H_MU3 + 1, 0:A]                          # (17, A)

        out2 = jnp.dot(jnp.concatenate([stem, ones], axis=1), w2a,
                       preferred_element_type=f32)                    # (S, C2) = [mu2|sv2|sm]
        lr2 = _leaky_relu(out2[:, 0:H_MU2 + H_SV2])
        out3 = jnp.dot(jnp.concatenate([lr2, ones], axis=1), w3a,
                       preferred_element_type=f32)                    # (S, C3) = [mu3|sv]
        mu_h = _leaky_relu(out3[:, 0:H_MU3])
        logits = jnp.dot(jnp.concatenate([mu_h, ones], axis=1), w4a,
                         preferred_element_type=f32)                  # (S, A)
        logits = logits - jnp.max(logits, axis=-1, keepdims=True)
        e = jnp.exp(logits)
        mu = e / jnp.sum(e, axis=-1, keepdims=True)                   # exact softmax

        sm = out2[:, H_MU2 + H_SV2:H_MU2 + H_SV2 + A * A]
        sv = out3[:, H_MU3:H_MU3 + 1]

        used = A + A * A + 1
        pad = jnp.zeros((S, out_ref.shape[1] - used), f32)
        out_ref[...] = jnp.concatenate([mu, sm, sv, pad], axis=1)


# --------------------------------------------------------------------------
# Wrapper: one pallas_call, grid over the 3 lstm/transformer blocks
# --------------------------------------------------------------------------
@jax.jit
def attn_qlearning_forward(packed, env_state, action_state):
    S, B, D = env_state.shape
    A = action_state.shape[1]
    ff = packed['ffw'].shape[-1]
    off = _slab_layout(D, ff)
    B_pad = max(8, pl.next_power_of_2(B))                 # power of two >= 8
    SB = S * B_pad
    ff_chunk = 256 if ff % 256 == 0 else ff
    out_w = max(128, pl.cdiv(A + A * A + 1, 128) * 128)

    env = env_state.astype(jnp.float32)
    if B_pad != B:
        env = jnp.pad(env, ((0, 0), (0, B_pad - B), (0, 0)))
    x_flat = env.reshape(SB, D)                           # s-major flat rows (row = s*B_pad + b)

    kernel = functools.partial(
        _fused_kernel, S=S, B_pad=B_pad, B_sel=B - 1, D=D, A=A,
        nhead=NHEAD, ff=ff, ff_chunk=ff_chunk, off=off)

    grid_spec = pltpu.PrefetchScalarGridSpec(
        num_scalar_prefetch=0,
        grid=(NUM_BLOCKS,),
        in_specs=[
            pl.BlockSpec((SB, D), lambda i: (0, 0)),                      # env (fetched once)
            pl.BlockSpec((S, A), lambda i: (0, 0)),                       # action_state
            pl.BlockSpec((1, D, off['W_WIDTH']), lambda i: (i, 0, 0)),    # per-layer rec/attn weights
            pl.BlockSpec((1, 1, off['B_WIDTH']), lambda i: (i, 0, 0)),    # per-layer biases / LN
            pl.BlockSpec((1, 2, D, ff), lambda i: (i, 0, 0, 0)),          # per-layer FFN (bf16)
            pl.BlockSpec(packed['head1'].shape, lambda i: (0, 0)),        # head stem slab
            pl.BlockSpec(packed['head2'].shape, lambda i: (0, 0)),        # head tail slab
        ],
        out_specs=pl.BlockSpec((S, out_w), lambda i: (0, 0)),
        scratch_shapes=[pltpu.VMEM((SB, D), jnp.float32)],                # activation carry
    )
    packed_out = pl.pallas_call(
        kernel,
        out_shape=jax.ShapeDtypeStruct((S, out_w), jnp.float32),
        grid_spec=grid_spec,
        compiler_params=pltpu.CompilerParams(dimension_semantics=("arbitrary",)),
    )(x_flat, action_state.astype(jnp.float32),
      packed['w_rec'], packed['bias'], packed['ffw'],
      packed['head1'], packed['head2'])

    mu = packed_out[:, :A]
    sigma_matrix = packed_out[:, A:A + A * A].reshape(S, A, A)
    sigma_vector = packed_out[:, A + A * A:A + A * A + 1]
    return mu, sigma_matrix, sigma_vector


# --------------------------------------------------------------------------
# Deterministic synthetic parameters (raw) + packing into kernel slabs
# --------------------------------------------------------------------------
def init_raw_params(key, D, A, ff=FF_DIM):
    keys = iter(jax.random.split(key, 128))

    def uniform(shape, bound):
        return jax.random.uniform(next(keys), shape, jnp.float32, -bound, bound)

    def linear(i_d, o_d):
        b = 1.0 / math.sqrt(i_d)
        return uniform((i_d, o_d), b), uniform((1, o_d), b)

    layers = []
    for _ in range(NUM_BLOCKS):
        bd = 1.0 / math.sqrt(D)
        lyr = {
            'w_ih': uniform((D, 4 * D), bd),        # W_ih^T, gate order i,f,g,o
            'w_hh': uniform((D, 4 * D), bd),        # W_hh^T
            'b_lstm': uniform((1, 4 * D), bd) + uniform((1, 4 * D), bd),   # b_ih + b_hh
        }
        lyr['wq'], lyr['bq'] = linear(D, D)
        lyr['wk'], lyr['bk'] = linear(D, D)
        lyr['wv'], lyr['bv'] = linear(D, D)
        lyr['wo'], lyr['bo'] = linear(D, D)
        lyr['w1'], lyr['b1'] = linear(D, ff)
        lyr['w2'], lyr['b2'] = linear(ff, D)
        lyr['ln1_g'] = jnp.ones((1, D), jnp.float32)
        lyr['ln1_b'] = jnp.zeros((1, D), jnp.float32)
        lyr['ln2_g'] = jnp.ones((1, D), jnp.float32)
        lyr['ln2_b'] = jnp.zeros((1, D), jnp.float32)
        layers.append(lyr)

    heads = {}
    heads['wmu1'], heads['bmu1'] = linear(D + A, HS)
    heads['wsm1'], heads['bsm1'] = linear(D + A, HS)
    heads['wsv1'], heads['bsv1'] = linear(D + A, HS)
    heads['wmu2'], heads['bmu2'] = linear(HS, H_MU2)
    heads['wmu3'], heads['bmu3'] = linear(H_MU2, H_MU3)
    heads['wmu4'], heads['bmu4'] = linear(H_MU3, A)
    heads['wsm2'], heads['bsm2'] = linear(HS, A * A)
    heads['wsv2'], heads['bsv2'] = linear(HS, H_SV2)
    heads['wsv3'], heads['bsv3'] = linear(H_SV2, 1)
    return {'layers': layers, 'heads': heads}


def pack_params(raw, D, A, ff=FF_DIM):
    off = _slab_layout(D, ff)
    w_rec, biases, ffw = [], [], []
    for lyr in raw['layers']:
        w = jnp.zeros((D, off['W_WIDTH']), jnp.float32)
        w = w.at[:, off['WIH']:off['WIH'] + 4 * D].set(lyr['w_ih'])
        w = w.at[:, off['WHH']:off['WHH'] + 4 * D].set(lyr['w_hh'])
        w = w.at[:, off['WQ']:off['WQ'] + D].set(lyr['wq'])
        w = w.at[:, off['WK']:off['WK'] + D].set(lyr['wk'])
        w = w.at[:, off['WV']:off['WV'] + D].set(lyr['wv'])
        w = w.at[:, off['WO']:off['WO'] + D].set(lyr['wo'])
        w_rec.append(w)

        b = jnp.zeros((1, off['B_WIDTH']), jnp.float32)
        b = b.at[:, off['B1']:off['B1'] + ff].set(lyr['b1'])
        b = b.at[:, off['BL']:off['BL'] + 4 * D].set(lyr['b_lstm'])
        b = b.at[:, off['BQ']:off['BQ'] + D].set(lyr['bq'])
        b = b.at[:, off['BK']:off['BK'] + D].set(lyr['bk'])
        b = b.at[:, off['BV']:off['BV'] + D].set(lyr['bv'])
        b = b.at[:, off['BO']:off['BO'] + D].set(lyr['bo'])
        b = b.at[:, off['B2']:off['B2'] + D].set(lyr['b2'])
        b = b.at[:, off['LN1G']:off['LN1G'] + D].set(lyr['ln1_g'])
        b = b.at[:, off['LN1B']:off['LN1B'] + D].set(lyr['ln1_b'])
        b = b.at[:, off['LN2G']:off['LN2G'] + D].set(lyr['ln2_g'])
        b = b.at[:, off['LN2B']:off['LN2B'] + D].set(lyr['ln2_b'])
        biases.append(b)

        ffw.append(jnp.stack([lyr['w1'], lyr['w2'].T], axis=0).astype(jnp.bfloat16))

    h = raw['heads']
    w_stem = jnp.concatenate([h['wmu1'], h['wsm1'], h['wsv1']], axis=1)   # (D+A, 3*HS)
    b_stem = jnp.concatenate([h['bmu1'], h['bsm1'], h['bsv1']], axis=1)   # (1, 3*HS)
    head1 = jnp.concatenate([w_stem, b_stem], axis=0)                     # (D+A+1, 3*HS)

    C2 = H_MU2 + H_SV2 + A * A
    C3 = H_MU3 + 1
    W2 = jnp.zeros((3 * HS, C2), jnp.float32)
    W2 = W2.at[0:HS, 0:H_MU2].set(h['wmu2'])
    W2 = W2.at[2 * HS:3 * HS, H_MU2:H_MU2 + H_SV2].set(h['wsv2'])
    W2 = W2.at[HS:2 * HS, H_MU2 + H_SV2:C2].set(h['wsm2'])
    b2r = jnp.zeros((1, C2), jnp.float32)
    b2r = b2r.at[:, 0:H_MU2].set(h['bmu2'])
    b2r = b2r.at[:, H_MU2:H_MU2 + H_SV2].set(h['bsv2'])
    b2r = b2r.at[:, H_MU2 + H_SV2:C2].set(h['bsm2'])

    W3 = jnp.zeros((H_MU2 + H_SV2, C2), jnp.float32)
    W3 = W3.at[0:H_MU2, 0:H_MU3].set(h['wmu3'])
    W3 = W3.at[H_MU2:H_MU2 + H_SV2, H_MU3:C3].set(h['wsv3'])
    b3r = jnp.zeros((1, C2), jnp.float32)
    b3r = b3r.at[:, 0:H_MU3].set(h['bmu3'])
    b3r = b3r.at[:, H_MU3:C3].set(h['bsv3'])

    W4 = jnp.zeros((H_MU3, C2), jnp.float32)
    W4 = W4.at[:, 0:A].set(h['wmu4'])
    b4r = jnp.zeros((1, C2), jnp.float32)
    b4r = b4r.at[:, 0:A].set(h['bmu4'])

    head2 = jnp.concatenate([W2, b2r, W3, b3r, W4, b4r], axis=0)          # (3*HS+59, C2)

    return {
        'w_rec': jnp.stack(w_rec, axis=0),     # (3, D, 13D)   f32
        'bias': jnp.stack(biases, axis=0),     # (3, 1, ff+13D) f32
        'ffw': jnp.stack(ffw, axis=0),         # (3, 2, D, ff)  bf16
        'head1': head1,                        # (D+A+1, 3*HS)  f32
        'head2': head2,                        # (...,   C2)    f32
    }


# --------------------------------------------------------------------------
# Plain-JAX reference (mimics the kernel's bf16 FFN rounding; loose fp check)
# --------------------------------------------------------------------------
def reference_forward(raw, env_state, action_state, nhead=NHEAD):
    S, B, D = env_state.shape
    A = action_state.shape[1]
    hd = D // nhead
    x = env_state.astype(jnp.float32)
    for lyr in raw['layers']:
        h = jnp.zeros((B, D), jnp.float32)
        c = jnp.zeros((B, D), jnp.float32)
        outs = []
        for t in range(S):
            g = x[t] @ lyr['w_ih'] + h @ lyr['w_hh'] + lyr['b_lstm']
            i_g = jax.nn.sigmoid(g[:, :D])
            f_g = jax.nn.sigmoid(g[:, D:2 * D])
            g_g = jnp.tanh(g[:, 2 * D:3 * D])
            o_g = jax.nn.sigmoid(g[:, 3 * D:])
            c = f_g * c + i_g * g_g
            h = o_g * jnp.tanh(c)
            outs.append(h)
        x = jnp.stack(outs, axis=0)                                   # (S, B, D)

        q = x @ lyr['wq'] + lyr['bq']
        k = x @ lyr['wk'] + lyr['bk']
        v = x @ lyr['wv'] + lyr['bv']
        ctxs = []
        for n in range(nhead):
            qh = q[..., n * hd:(n + 1) * hd]
            kh = k[..., n * hd:(n + 1) * hd]
            vh = v[..., n * hd:(n + 1) * hd]
            sc = jnp.einsum('sbe,tbe->bst', qh, kh) / math.sqrt(hd)
            p = jax.nn.softmax(sc, axis=-1)
            ctxs.append(jnp.einsum('bst,tbe->sbe', p, vh))
        ctx = jnp.concatenate(ctxs, axis=-1)
        attn = ctx @ lyr['wo'] + lyr['bo']
        x1 = _layernorm(x + attn, lyr['ln1_g'], lyr['ln1_b'])

        w1 = lyr['w1'].astype(jnp.bfloat16).astype(jnp.float32)       # bf16-rounded weights
        w2 = lyr['w2'].astype(jnp.bfloat16).astype(jnp.float32)
        x1b = x1.astype(jnp.bfloat16).astype(jnp.float32)
        hdn = jnp.maximum(x1b @ w1 + lyr['b1'], 0.0)
        ffo = hdn.astype(jnp.bfloat16).astype(jnp.float32) @ w2 + lyr['b2']
        x = _layernorm(x1 + ffo, lyr['ln2_g'], lyr['ln2_b'])

    feat = x[:, -1, :]                                                # (S, D)
    h = raw['heads']
    cat = jnp.concatenate([feat, action_state.astype(jnp.float32)], axis=1)
    mu = _leaky_relu(cat @ h['wmu1'] + h['bmu1'])
    mu = _leaky_relu(mu @ h['wmu2'] + h['bmu2'])
    mu = _leaky_relu(mu @ h['wmu3'] + h['bmu3'])
    mu = jax.nn.softmax(mu @ h['wmu4'] + h['bmu4'], axis=1)
    sm = _leaky_relu(cat @ h['wsm1'] + h['bsm1']) @ h['wsm2'] + h['bsm2']
    sv = _leaky_relu(cat @ h['wsv1'] + h['bsv1'])
    sv = _leaky_relu(sv @ h['wsv2'] + h['bsv2'])
    sv = sv @ h['wsv3'] + h['bsv3']
    return mu, sm.reshape(S, A, A), sv


if __name__ == "__main__":
    S, B, D, A = 8, 4, 32, 4      # seq, inner batch, input_size, action_size
    key = jax.random.PRNGKey(0)
    kp, ke, ka = jax.random.split(key, 3)
    raw = init_raw_params(kp, D, A)
    packed = pack_params(raw, D, A)
    env_state = jax.random.normal(ke, (S, B, D), jnp.float32)
    action_state = jax.random.normal(ka, (S, A), jnp.float32)

    mu, sigma_matrix, sigma_vector = attn_qlearning_forward(packed, env_state, action_state)
    jax.block_until_ready((mu, sigma_matrix, sigma_vector))

    assert mu.shape == (S, A)
    assert sigma_matrix.shape == (S, A, A)
    assert sigma_vector.shape == (S, 1)
    assert bool(jnp.all(jnp.isfinite(mu)))
    assert bool(jnp.all(jnp.isfinite(sigma_matrix)))
    assert bool(jnp.all(jnp.isfinite(sigma_vector)))
    assert bool(jnp.allclose(jnp.sum(mu, axis=1), 1.0, atol=1e-4))

    # structural check against a plain-JAX reference (loose fp tolerance)
    mu_r, sm_r, sv_r = reference_forward(raw, env_state, action_state)
    assert bool(jnp.allclose(mu, mu_r, atol=5e-2, rtol=5e-2))
    assert bool(jnp.allclose(sigma_matrix, sm_r, atol=5e-2, rtol=5e-2))
    assert bool(jnp.allclose(sigma_vector, sv_r, atol=5e-2, rtol=5e-2))

    print("KERNEL_OK")
</pallas_src>

<mosaic_0001>
module attributes {stable_mosaic.version = 11 : i64} {
  func.func @_fused_kernel(%arg0: i32, %arg1: memref<64x32xf32, #tpu.memory_space<vmem>>, %arg2: memref<8x4xf32, #tpu.memory_space<vmem>>, %arg3: memref<1x32x416xf32, #tpu.memory_space<vmem>>, %arg4: memref<1x1x2464xf32, #tpu.memory_space<vmem>>, %arg5: memref<1x2x32x2048xbf16, #tpu.memory_space<vmem>>, %arg6: memref<37x192xf32, #tpu.memory_space<vmem>>, %arg7: memref<251x56xf32, #tpu.memory_space<vmem>>, %arg8: memref<8x128xf32, #tpu.memory_space<vmem>>, %arg9: memref<64x32xf32, #tpu.memory_space<vmem>>) attributes {dimension_semantics = [#tpu.dimension_semantics<arbitrary>], iteration_bounds = array<i64: 3>, scalar_prefetch = 0 : i64, scratch_operands = 1 : i64, tpu.core_type = #tpu.core_type<tc>, window_params = [{pipeline_mode = #tpu.pipeline_mode<synchronous>, transform_indices = @transform_0, window_bounds = array<i64: 64, 32>}, {pipeline_mode = #tpu.pipeline_mode<synchronous>, transform_indices = @transform_1, window_bounds = array<i64: 8, 4>}, {transform_indices = @transform_2, window_bounds = array<i64: 1, 32, 416>}, {transform_indices = @transform_3, window_bounds = array<i64: 1, 1, 2464>}, {transform_indices = @transform_4, window_bounds = array<i64: 1, 2, 32, 2048>}, {pipeline_mode = #tpu.pipeline_mode<synchronous>, transform_indices = @transform_5, window_bounds = array<i64: 37, 192>}, {pipeline_mode = #tpu.pipeline_mode<synchronous>, transform_indices = @transform_6, window_bounds = array<i64: 251, 56>}, {pipeline_mode = #tpu.pipeline_mode<synchronous>, transform_indices = @transform_7, window_bounds = array<i64: 8, 128>}]} {
    %c0_i32 = arith.constant 0 : i32
    %0 = arith.cmpi eq, %arg0, %c0_i32 : i32
    %1 = arith.extui %0 : i1 to i32
    %c0_i32_0 = arith.constant 0 : i32
    %2 = arith.cmpi ne, %1, %c0_i32_0 : i32
    scf.if %2 {
      %c0_381 = arith.constant 0 : index
      %c0_382 = arith.constant 0 : index
      %633 = vector.load %arg1[%c0_381, %c0_382] : memref<64x32xf32, #tpu.memory_space<vmem>>, vector<64x32xf32>
      %c0_383 = arith.constant 0 : index
      %c0_384 = arith.constant 0 : index
      %634 = vector.load %arg9[%c0_383, %c0_384] : memref<64x32xf32, #tpu.memory_space<vmem>>, vector<64x32xf32>
      tpu.vector_store %arg9[%c0_383, %c0_384], %633 {strides = array<i32>} : memref<64x32xf32, #tpu.memory_space<vmem>>, vector<64x32xf32>,
    } else {
    }
    %c0 = arith.constant 0 : index
    %c0_1 = arith.constant 0 : index
    %3 = vector.load %arg9[%c0, %c0_1] : memref<64x32xf32, #tpu.memory_space<vmem>>, vector<64x32xf32>
    %c0_i32_2 = arith.constant 0 : i32
    %c0_i32_3 = arith.constant 0 : i32
    %c0_i32_4 = arith.constant 0 : i32
    %4 = tpu.memref_slice %arg3[%c0_i32_2, %c0_i32_3, %c0_i32_4] : memref<1x32x416xf32, #tpu.memory_space<vmem>> -> memref<1x32x416xf32, #tpu.memory_space<vmem>>
    %5 = tpu.memref_squeeze %4 : memref<1x32x416xf32, #tpu.memory_space<vmem>> -> memref<32x416xf32, #tpu.memory_space<vmem>>
    %c0_5 = arith.constant 0 : index
    %c0_6 = arith.constant 0 : index
    %6 = vector.load %5[%c0_5, %c0_6] : memref<32x416xf32, #tpu.memory_space<vmem>>, vector<32x32xf32>
    %cst = arith.constant dense<0.000000e+00> : vector<64x32xf32>
    %7 = tpu.matmul %3, %6, %cst {dimension_numbers = #tpu.dot_dimension_numbers<[1], [0], [0], [1], [0, 0, 1, 1], [], []>} : vector<64x32xf32>, vector<32x32xf32>, vector<64x32xf32> -> vector<64x32xf32>
    %c0_i32_7 = arith.constant 0 : i32
    %c0_i32_8 = arith.constant 0 : i32
    %c0_i32_9 = arith.constant 0 : i32
    %8 = tpu.memref_slice %arg4[%c0_i32_7, %c0_i32_8, %c0_i32_9] : memref<1x1x2464xf32, #tpu.memory_space<vmem>> -> memref<1x1x2464xf32, #tpu.memory_space<vmem>>
    %9 = tpu.memref_squeeze %8 : memref<1x1x2464xf32, #tpu.memory_space<vmem>> -> memref<1x2464xf32, #tpu.memory_space<vmem>>
    %c0_10 = arith.constant 0 : index
    %c2048 = arith.constant 2048 : index
    %10 = vector.load %9[%c0_10, %c2048] : memref<1x2464xf32, #tpu.memory_space<vmem>>, vector<1x32xf32>
    %11 = vector.broadcast %10 : vector<1x32xf32> to vector<64x32xf32>
    %12 = arith.addf %7, %11 : vector<64x32xf32>
    %c0_i32_11 = arith.constant 0 : i32
    %c0_i32_12 = arith.constant 0 : i32
    %c0_i32_13 = arith.constant 0 : i32
    %13 = tpu.memref_slice %arg3[%c0_i32_11, %c0_i32_12, %c0_i32_13] : memref<1x32x416xf32, #tpu.memory_space<vmem>> -> memref<1x32x416xf32, #tpu.memory_space<vmem>>
    %14 = tpu.memref_squeeze %13 : memref<1x32x416xf32, #tpu.memory_space<vmem>> -> memref<32x416xf32, #tpu.memory_space<vmem>>
    %c0_14 = arith.constant 0 : index
    %c128 = arith.constant 128 : index
    %15 = vector.load %14[%c0_14, %c128] : memref<32x416xf32, #tpu.memory_space<vmem>>, vector<32x32xf32>
    %c0_i32_15 = arith.constant 0 : i32
    %c0_i32_16 = arith.constant 0 : i32
    %c0_i32_17 = arith.constant 0 : i32
    %16 = tpu.memref_slice %arg3[%c0_i32_15, %c0_i32_16, %c0_i32_17] : memref<1x32x416xf32, #tpu.memory_space<vmem>> -> memref<1x32x416xf32, #tpu.memory_space<vmem>>
    %17 = tpu.memref_squeeze %16 : memref<1x32x416xf32, #tpu.memory_space<vmem>> -> memref<32x416xf32, #tpu.memory_space<vmem>>
    %c0_18 = arith.constant 0 : index
    %c32 = arith.constant 32 : index
    %18 = vector.load %17[%c0_18, %c32] : memref<32x416xf32, #tpu.memory_space<vmem>>, vector<32x32xf32>
    %cst_19 = arith.constant dense<0.000000e+00> : vector<64x32xf32>
    %19 = tpu.matmul %3, %18, %cst_19 {dimension_numbers = #tpu.dot_dimension_numbers<[1], [0], [0], [1], [0, 0, 1, 1], [], []>} : vector<64x32xf32>, vector<32x32xf32>, vector<64x32xf32> -> vector<64x32xf32>
    %c0_i32_20 = arith.constant 0 : i32
    %c0_i32_21 = arith.constant 0 : i32
    %c0_i32_22 = arith.constant 0 : i32
    %20 = tpu.memref_slice %arg4[%c0_i32_20, %c0_i32_21, %c0_i32_22] : memref<1x1x2464xf32, #tpu.memory_space<vmem>> -> memref<1x1x2464xf32, #tpu.memory_space<vmem>>
    %21 = tpu.memref_squeeze %20 : memref<1x1x2464xf32, #tpu.memory_space<vmem>> -> memref<1x2464xf32, #tpu.memory_space<vmem>>
    %c0_23 = arith.constant 0 : index
    %c2080 = arith.constant 2080 : index
    %22 = vector.load %21[%c0_23, %c2080] : memref<1x2464xf32, #tpu.memory_space<vmem>>, vector<1x32xf32>
    %23 = vector.broadcast %22 : vector<1x32xf32> to vector<64x32xf32>
    %24 = arith.addf %19, %23 : vector<64x32xf32>
    %c0_i32_24 = arith.constant 0 : i32
    %c0_i32_25 = arith.constant 0 : i32
    %c0_i32_26 = arith.constant 0 : i32
    %25 = tpu.memref_slice %arg3[%c0_i32_24, %c0_i32_25, %c0_i32_26] : memref<1x32x416xf32, #tpu.memory_space<vmem>> -> memref<1x32x416xf32, #tpu.memory_space<vmem>>
    %26 = tpu.memref_squeeze %25 : memref<1x32x416xf32, #tpu.memory_space<vmem>> -> memref<32x416xf32, #tpu.memory_space<vmem>>
    %c0_27 = arith.constant 0 : index
    %c160 = arith.constant 160 : index
    %27 = vector.load %26[%c0_27, %c160] : memref<32x416xf32, #tpu.memory_space<vmem>>, vector<32x32xf32>
    %c0_i32_28 = arith.constant 0 : i32
    %c0_i32_29 = arith.constant 0 : i32
    %c0_i32_30 = arith.constant 0 : i32
    %28 = tpu.memref_slice %arg3[%c0_i32_28, %c0_i32_29, %c0_i32_30] : memref<1x32x416xf32, #tpu.memory_space<vmem>> -> memref<1x32x416xf32, #tpu.memory_space<vmem>>
    %29 = tpu.memref_squeeze %28 : memref<1x32x416xf32, #tpu.memory_space<vmem>> -> memref<32x416xf32, #tpu.memory_space<vmem>>
    %c0_31 = arith.constant 0 : index
    %c64 = arith.constant 64 : index
    %30 = vector.load %29[%c0_31, %c64] : memref<32x416xf32, #tpu.memory_space<vmem>>, vector<32x32xf32>
    %cst_32 = arith.constant dense<0.000000e+00> : vector<64x32xf32>
    %31 = tpu.matmul %3, %30, %cst_32 {dimension_numbers = #tpu.dot_dimension_numbers<[1], [0], [0], [1], [0, 0, 1, 1], [], []>} : vector<64x32xf32>, vector<32x32xf32>, vector<64x32xf32> -> vector<64x32xf32>
    %c0_i32_33 = arith.constant 0 : i32
    %c0_i32_34 = arith.constant 0 : i32
    %c0_i32_35 = arith.constant 0 : i32
    %32 = tpu.memref_slice %arg4[%c0_i32_33, %c0_i32_34, %c0_i32_35] : memref<1x1x2464xf32, #tpu.memory_space<vmem>> -> memref<1x1x2464xf32, #tpu.memory_space<vmem>>
    %33 = tpu.memref_squeeze %32 : memref<1x1x2464xf32, #tpu.memory_space<vmem>> -> memref<1x2464xf32, #tpu.memory_space<vmem>>
    %c0_36 = arith.constant 0 : index
    %c2112 = arith.constant 2112 : index
    %34 = vector.load %33[%c0_36, %c2112] : memref<1x2464xf32, #tpu.memory_space<vmem>>, vector<1x32xf32>
    %35 = vector.broadcast %34 : vector<1x32xf32> to vector<64x32xf32>
    %36 = arith.addf %31, %35 : vector<64x32xf32>
    %c0_i32_37 = arith.constant 0 : i32
    %c0_i32_38 = arith.constant 0 : i32
    %c0_i32_39 = arith.constant 0 : i32
    %37 = tpu.memref_slice %arg3[%c0_i32_37, %c0_i32_38, %c0_i32_39] : memref<1x32x416xf32, #tpu.memory_space<vmem>> -> memref<1x32x416xf32, #tpu.memory_space<vmem>>
    %38 = tpu.memref_squeeze %37 : memref<1x32x416xf32, #tpu.memory_space<vmem>> -> memref<32x416xf32, #tpu.memory_space<vmem>>
    %c0_40 = arith.constant 0 : index
    %c192 = arith.constant 192 : index
    %39 = vector.load %38[%c0_40, %c192] : memref<32x416xf32, #tpu.memory_space<vmem>>, vector<32x32xf32>
    %c0_i32_41 = arith.constant 0 : i32
    %c0_i32_42 = arith.constant 0 : i32
    %c0_i32_43 = arith.constant 0 : i32
    %40 = tpu.memref_slice %arg3[%c0_i32_41, %c0_i32_42, %c0_i32_43] : memref<1x32x416xf32, #tpu.memory_space<vmem>> -> memref<1x32x416xf32, #tpu.memory_space<vmem>>
    %41 = tpu.memref_squeeze %40 : memref<1x32x416xf32, #tpu.memory_space<vmem>> -> memref<32x416xf32, #tpu.memory_space<vmem>>
    %c0_44 = arith.constant 0 : index
    %c96 = arith.constant 96 : index
    %42 = vector.load %41[%c0_44, %c96] : memref<32x416xf32, #tpu.memory_space<vmem>>, vector<32x32xf32>
    %cst_45 = arith.constant dense<0.000000e+00> : vector<64x32xf32>
    %43 = tpu.matmul %3, %42, %cst_45 {dimension_numbers = #tpu.dot_dimension_numbers<[1], [0], [0], [1], [0, 0, 1, 1], [], []>} : vector<64x32xf32>, vector<32x32xf32>, vector<64x32xf32> -> vector<64x32xf32>
    %c0_i32_46 = arith.constant 0 : i32
    %c0_i32_47 = arith.constant 0 : i32
    %c0_i32_48 = arith.constant 0 : i32
    %44 = tpu.memref_slice %arg4[%c0_i32_46, %c0_i32_47, %c0_i32_48] : memref<1x1x2464xf32, #tpu.memory_space<vmem>> -> memref<1x1x2464xf32, #tpu.memory_space<vmem>>
    %45 = tpu.memref_squeeze %44 : memref<1x1x2464xf32, #tpu.memory_space<vmem>> -> memref<1x2464xf32, #tpu.memory_space<vmem>>
    %c0_49 = arith.constant 0 : index
    %c2144 = arith.constant 2144 : index
    %46 = vector.load %45[%c0_49, %c2144] : memref<1x2464xf32, #tpu.memory_space<vmem>>, vector<1x32xf32>
    %47 = vector.broadcast %46 : vector<1x32xf32> to vector<64x32xf32>
    %48 = arith.addf %43, %47 : vector<64x32xf32>
    %c0_i32_50 = arith.constant 0 : i32
    %c0_i32_51 = arith.constant 0 : i32
    %c0_i32_52 = arith.constant 0 : i32
    %49 = tpu.memref_slice %arg3[%c0_i32_50, %c0_i32_51, %c0_i32_52] : memref<1x32x416xf32, #tpu.memory_space<vmem>> -> memref<1x32x416xf32, #tpu.memory_space<vmem>>
    %50 = tpu.memref_squeeze %49 : memref<1x32x416xf32, #tpu.memory_space<vmem>> -> memref<32x416xf32, #tpu.memory_space<vmem>>
    %c0_53 = arith.constant 0 : index
    %c224 = arith.constant 224 : index
    %51 = vector.load %50[%c0_53, %c224] : memref<32x416xf32, #tpu.memory_space<vmem>>, vector<32x32xf32>
    %cst_54 = arith.constant 0.000000e+00 : f32
    %52 = vector.broadcast %cst_54 : f32 to vector<8x32xf32>
    %cst_55 = arith.constant 0.000000e+00 : f32
    %53 = vector.broadcast %cst_55 : f32 to vector<8x32xf32>
    %54 = vector.extract_strided_slice %12 {offsets = [0, 0], sizes = [8, 32], strides = [1, 1]} : vector<64x32xf32> to vector<8x32xf32>
    %cst_56 = arith.constant dense<0.000000e+00> : vector<8x32xf32>
    %55 = tpu.matmul %52, %15, %cst_56 {dimension_numbers = #tpu.dot_dimension_numbers<[1], [0], [0], [1], [0, 0, 1, 1], [], []>} : vector<8x32xf32>, vector<32x32xf32>, vector<8x32xf32> -> vector<8x32xf32>
    %56 = arith.addf %54, %55 : vector<8x32xf32>
    %57 = vector.extract_strided_slice %24 {offsets = [0, 0], sizes = [8, 32], strides = [1, 1]} : vector<64x32xf32> to vector<8x32xf32>
    %cst_57 = arith.constant dense<0.000000e+00> : vector<8x32xf32>
    %58 = tpu.matmul %52, %27, %cst_57 {dimension_numbers = #tpu.dot_dimension_numbers<[1], [0], [0], [1], [0, 0, 1, 1], [], []>} : vector<8x32xf32>, vector<32x32xf32>, vector<8x32xf32> -> vector<8x32xf32>
    %59 = arith.addf %57, %58 : vector<8x32xf32>
    %60 = vector.extract_strided_slice %36 {offsets = [0, 0], sizes = [8, 32], strides = [1, 1]} : vector<64x32xf32> to vector<8x32xf32>
    %cst_58 = arith.constant dense<0.000000e+00> : vector<8x32xf32>
    %61 = tpu.matmul %52, %39, %cst_58 {dimension_numbers = #tpu.dot_dimension_numbers<[1], [0], [0], [1], [0, 0, 1, 1], [], []>} : vector<8x32xf32>, vector<32x32xf32>, vector<8x32xf32> -> vector<8x32xf32>
    %62 = arith.addf %60, %61 : vector<8x32xf32>
    %63 = vector.extract_strided_slice %48 {offsets = [0, 0], sizes = [8, 32], strides = [1, 1]} : vector<64x32xf32> to vector<8x32xf32>
    %cst_59 = arith.constant dense<0.000000e+00> : vector<8x32xf32>
    %64 = tpu.matmul %52, %51, %cst_59 {dimension_numbers = #tpu.dot_dimension_numbers<[1], [0], [0], [1], [0, 0, 1, 1], [], []>} : vector<8x32xf32>, vector<32x32xf32>, vector<8x32xf32> -> vector<8x32xf32>
    %65 = arith.addf %63, %64 : vector<8x32xf32>
    %66 = arith.negf %59 : vector<8x32xf32>
    %67 = math.exp %66 : vector<8x32xf32>
    %cst_60 = arith.constant 1.000000e+00 : f32
    %68 = vector.broadcast %cst_60 : f32 to vector<8x32xf32>
    %69 = arith.addf %68, %67 : vector<8x32xf32>
    %70 = arith.divf %68, %69 : vector<8x32xf32>
    %71 = arith.mulf %70, %53 : vector<8x32xf32>
    %72 = arith.negf %56 : vector<8x32xf32>
    %73 = math.exp %72 : vector<8x32xf32>
    %cst_61 = arith.constant 1.000000e+00 : f32
    %74 = vector.broadcast %cst_61 : f32 to vector<8x32xf32>
    %75 = arith.addf %74, %73 : vector<8x32xf32>
    %76 = arith.divf %74, %75 : vector<8x32xf32>
    %77 = math.tanh %62 : vector<8x32xf32>
    %78 = arith.mulf %76, %77 : vector<8x32xf32>
    %79 = arith.addf %71, %78 : vector<8x32xf32>
    %80 = arith.negf %65 : vector<8x32xf32>
    %81 = math.exp %80 : vector<8x32xf32>
    %cst_62 = arith.constant 1.000000e+00 : f32
    %82 = vector.broadcast %cst_62 : f32 to vector<8x32xf32>
    %83 = arith.addf %82, %81 : vector<8x32xf32>
    %84 = arith.divf %82, %83 : vector<8x32xf32>
    %85 = math.tanh %79 : vector<8x32xf32>
    %86 = arith.mulf %84, %85 : vector<8x32xf32>
    %87 = vector.extract_strided_slice %12 {offsets = [8, 0], sizes = [8, 32], strides = [1, 1]} : vector<64x32xf32> to vector<8x32xf32>
    %cst_63 = arith.constant dense<0.000000e+00> : vector<8x32xf32>
    %88 = tpu.matmul %86, %15, %cst_63 {dimension_numbers = #tpu.dot_dimension_numbers<[1], [0], [0], [1], [0, 0, 1, 1], [], []>} : vector<8x32xf32>, vector<32x32xf32>, vector<8x32xf32> -> vector<8x32xf32>
    %89 = arith.addf %87, %88 : vector<8x32xf32>
    %90 = vector.extract_strided_slice %24 {offsets = [8, 0], sizes = [8, 32], strides = [1, 1]} : vector<64x32xf32> to vector<8x32xf32>
    %cst_64 = arith.constant dense<0.000000e+00> : vector<8x32xf32>
    %91 = tpu.matmul %86, %27, %cst_64 {dimension_numbers = #tpu.dot_dimension_numbers<[1], [0], [0], [1], [0, 0, 1, 1], [], []>} : vector<8x32xf32>, vector<32x32xf32>, vector<8x32xf32> -> vector<8x32xf32>
    %92 = arith.addf %90, %91 : vector<8x32xf32>
    %93 = vector.extract_strided_slice %36 {offsets = [8, 0], sizes = [8, 32], strides = [1, 1]} : vector<64x32xf32> to vector<8x32xf32>
    %cst_65 = arith.constant dense<0.000000e+00> : vector<8x32xf32>
    %94 = tpu.matmul %86, %39, %cst_65 {dimension_numbers = #tpu.dot_dimension_numbers<[1], [0], [0], [1], [0, 0, 1, 1], [], []>} : vector<8x32xf32>, vector<32x32xf32>, vector<8x32xf32> -> vector<8x32xf32>
    %95 = arith.addf %93, %94 : vector<8x32xf32>
    %96 = vector.extract_strided_slice %48 {offsets = [8, 0], sizes = [8, 32], strides = [1, 1]} : vector<64x32xf32> to vector<8x32xf32>
    %cst_66 = arith.constant dense<0.000000e+00> : vector<8x32xf32>
    %97 = tpu.matmul %86, %51, %cst_66 {dimension_numbers = #tpu.dot_dimension_numbers<[1], [0], [0], [1], [0, 0, 1, 1], [], []>} : vector<8x32xf32>, vector<32x32xf32>, vector<8x32xf32> -> vector<8x32xf32>
    %98 = arith.addf %96, %97 : vector<8x32xf32>
    %99 = arith.negf %92 : vector<8x32xf32>
    %100 = math.exp %99 : vector<8x32xf32>
    %cst_67 = arith.constant 1.000000e+00 : f32
    %101 = vector.broadcast %cst_67 : f32 to vector<8x32xf32>
    %102 = arith.addf %101, %100 : vector<8x32xf32>
    %103 = arith.divf %101, %102 : vector<8x32xf32>
    %104 = arith.mulf %103, %79 : vector<8x32xf32>
    %105 = arith.negf %89 : vector<8x32xf32>
    %106 = math.exp %105 : vector<8x32xf32>
    %cst_68 = arith.constant 1.000000e+00 : f32
    %107 = vector.broadcast %cst_68 : f32 to vector<8x32xf32>
    %108 = arith.addf %107, %106 : vector<8x32xf32>
    %109 = arith.divf %107, %108 : vector<8x32xf32>
    %110 = math.tanh %95 : vector<8x32xf32>
    %111 = arith.mulf %109, %110 : vector<8x32xf32>
    %112 = arith.addf %104, %111 : vector<8x32xf32>
    %113 = arith.negf %98 : vector<8x32xf32>
    %114 = math.exp %113 : vector<8x32xf32>
    %cst_69 = arith.constant 1.000000e+00 : f32
    %115 = vector.broadcast %cst_69 : f32 to vector<8x32xf32>
    %116 = arith.addf %115, %114 : vector<8x32xf32>
    %117 = arith.divf %115, %116 : vector<8x32xf32>
    %118 = math.tanh %112 : vector<8x32xf32>
    %119 = arith.mulf %117, %118 : vector<8x32xf32>
    %120 = vector.extract_strided_slice %12 {offsets = [16, 0], sizes = [8, 32], strides = [1, 1]} : vector<64x32xf32> to vector<8x32xf32>
    %cst_70 = arith.constant dense<0.000000e+00> : vector<8x32xf32>
    %121 = tpu.matmul %119, %15, %cst_70 {dimension_numbers = #tpu.dot_dimension_numbers<[1], [0], [0], [1], [0, 0, 1, 1], [], []>} : vector<8x32xf32>, vector<32x32xf32>, vector<8x32xf32> -> vector<8x32xf32>
    %122 = arith.addf %120, %121 : vector<8x32xf32>
    %123 = vector.extract_strided_slice %24 {offsets = [16, 0], sizes = [8, 32], strides = [1, 1]} : vector<64x32xf32> to vector<8x32xf32>
    %cst_71 = arith.constant dense<0.000000e+00> : vector<8x32xf32>
    %124 = tpu.matmul %119, %27, %cst_71 {dimension_numbers = #tpu.dot_dimension_numbers<[1], [0], [0], [1], [0, 0, 1, 1], [], []>} : vector<8x32xf32>, vector<32x32xf32>, vector<8x32xf32> -> vector<8x32xf32>
    %125 = arith.addf %123, %124 : vector<8x32xf32>
    %126 = vector.extract_strided_slice %36 {offsets = [16, 0], sizes = [8, 32], strides = [1, 1]} : vector<64x32xf32> to vector<8x32xf32>
    %cst_72 = arith.constant dense<0.000000e+00> : vector<8x32xf32>
    %127 = tpu.matmul %119, %39, %cst_72 {dimension_numbers = #tpu.dot_dimension_numbers<[1], [0], [0], [1], [0, 0, 1, 1], [], []>} : vector<8x32xf32>, vector<32x32xf32>, vector<8x32xf32> -> vector<8x32xf32>
    %128 = arith.addf %126, %127 : vector<8x32xf32>
    %129 = vector.extract_strided_slice %48 {offsets = [16, 0], sizes = [8, 32], strides = [1, 1]} : vector<64x32xf32> to vector<8x32xf32>
    %cst_73 = arith.constant dense<0.000000e+00> : vector<8x32xf32>
    %130 = tpu.matmul %119, %51, %cst_73 {dimension_numbers = #tpu.dot_dimension_numbers<[1], [0], [0], [1], [0, 0, 1, 1], [], []>} : vector<8x32xf32>, vector<32x32xf32>, vector<8x32xf32> -> vector<8x32xf32>
    %131 = arith.addf %129, %130 : vector<8x32xf32>
    %132 = arith.negf %125 : vector<8x32xf32>
    %133 = math.exp %132 : vector<8x32xf32>
    %cst_74 = arith.constant 1.000000e+00 : f32
    %134 = vector.broadcast %cst_74 : f32 to vector<8x32xf32>
    %135 = arith.addf %134, %133 : vector<8x32xf32>
    %136 = arith.divf %134, %135 : vector<8x32xf32>
    %137 = arith.mulf %136, %112 : vector<8x32xf32>
    %138 = arith.negf %122 : vector<8x32xf32>
    %139 = math.exp %138 : vector<8x32xf32>
    %cst_75 = arith.constant 1.000000e+00 : f32
    %140 = vector.broadcast %cst_75 : f32 to vector<8x32xf32>
    %141 = arith.addf %140, %139 : vector<8x32xf32>
    %142 = arith.divf %140, %141 : vector<8x32xf32>
    %143 = math.tanh %128 : vector<8x32xf32>
    %144 = arith.mulf %142, %143 : vector<8x32xf32>
    %145 = arith.addf %137, %144 : vector<8x32xf32>
    %146 = arith.negf %131 : vector<8x32xf32>
    %147 = math.exp %146 : vector<8x32xf32>
    %cst_76 = arith.constant 1.000000e+00 : f32
    %148 = vector.broadcast %cst_76 : f32 to vector<8x32xf32>
    %149 = arith.addf %148, %147 : vector<8x32xf32>
    %150 = arith.divf %148, %149 : vector<8x32xf32>
    %151 = math.tanh %145 : vector<8x32xf32>
    %152 = arith.mulf %150, %151 : vector<8x32xf32>
    %153 = vector.extract_strided_slice %12 {offsets = [24, 0], sizes = [8, 32], strides = [1, 1]} : vector<64x32xf32> to vector<8x32xf32>
    %cst_77 = arith.constant dense<0.000000e+00> : vector<8x32xf32>
    %154 = tpu.matmul %152, %15, %cst_77 {dimension_numbers = #tpu.dot_dimension_numbers<[1], [0], [0], [1], [0, 0, 1, 1], [], []>} : vector<8x32xf32>, vector<32x32xf32>, vector<8x32xf32> -> vector<8x32xf32>
    %155 = arith.addf %153, %154 : vector<8x32xf32>
    %156 = vector.extract_strided_slice %24 {offsets = [24, 0], sizes = [8, 32], strides = [1, 1]} : vector<64x32xf32> to vector<8x32xf32>
    %cst_78 = arith.constant dense<0.000000e+00> : vector<8x32xf32>
    %157 = tpu.matmul %152, %27, %cst_78 {dimension_numbers = #tpu.dot_dimension_numbers<[1], [0], [0], [1], [0, 0, 1, 1], [], []>} : vector<8x32xf32>, vector<32x32xf32>, vector<8x32xf32> -> vector<8x32xf32>
    %158 = arith.addf %156, %157 : vector<8x32xf32>
    %159 = vector.extract_strided_slice %36 {offsets = [24, 0], sizes = [8, 32], strides = [1, 1]} : vector<64x32xf32> to vector<8x32xf32>
    %cst_79 = arith.constant dense<0.000000e+00> : vector<8x32xf32>
    %160 = tpu.matmul %152, %39, %cst_79 {dimension_numbers = #tpu.dot_dimension_numbers<[1], [0], [0], [1], [0, 0, 1, 1], [], []>} : vector<8x32xf32>, vector<32x32xf32>, vector<8x32xf32> -> vector<8x32xf32>
    %161 = arith.addf %159, %160 : vector<8x32xf32>
    %162 = vector.extract_strided_slice %48 {offsets = [24, 0], sizes = [8, 32], strides = [1, 1]} : vector<64x32xf32> to vector<8x32xf32>
    %cst_80 = arith.constant dense<0.000000e+00> : vector<8x32xf32>
    %163 = tpu.matmul %152, %51, %cst_80 {dimension_numbers = #tpu.dot_dimension_numbers<[1], [0], [0], [1], [0, 0, 1, 1], [], []>} : vector<8x32xf32>, vector<32x32xf32>, vector<8x32xf32> -> vector<8x32xf32>
    %164 = arith.addf %162, %163 : vector<8x32xf32>
    %165 = arith.negf %158 : vector<8x32xf32>
    %166 = math.exp %165 : vector<8x32xf32>
    %cst_81 = arith.constant 1.000000e+00 : f32
    %167 = vector.broadcast %cst_81 : f32 to vector<8x32xf32>
    %168 = arith.addf %167, %166 : vector<8x32xf32>
    %169 = arith.divf %167, %168 : vector<8x32xf32>
    %170 = arith.mulf %169, %145 : vector<8x32xf32>
    %171 = arith.negf %155 : vector<8x32xf32>
    %172 = math.exp %171 : vector<8x32xf32>
    %cst_82 = arith.constant 1.000000e+00 : f32
    %173 = vector.broadcast %cst_82 : f32 to vector<8x32xf32>
    %174 = arith.addf %173, %172 : vector<8x32xf32>
    %175 = arith.divf %173, %174 : vector<8x32xf32>
    %176 = math.tanh %161 : vector<8x32xf32>
    %177 = arith.mulf %175, %176 : vector<8x32xf32>
    %178 = arith.addf %170, %177 : vector<8x32xf32>
    %179 = arith.negf %164 : vector<8x32xf32>
    %180 = math.exp %179 : vector<8x32xf32>
    %cst_83 = arith.constant 1.000000e+00 : f32
    %181 = vector.broadcast %cst_83 : f32 to vector<8x32xf32>
    %182 = arith.addf %181, %180 : vector<8x32xf32>
    %183 = arith.divf %181, %182 : vector<8x32xf32>
    %184 = math.tanh %178 : vector<8x32xf32>
    %185 = arith.mulf %183, %184 : vector<8x32xf32>
    %186 = vector.extract_strided_slice %12 {offsets = [32, 0], sizes = [8, 32], strides = [1, 1]} : vector<64x32xf32> to vector<8x32xf32>
    %cst_84 = arith.constant dense<0.000000e+00> : vector<8x32xf32>
    %187 = tpu.matmul %185, %15, %cst_84 {dimension_numbers = #tpu.dot_dimension_numbers<[1], [0], [0], [1], [0, 0, 1, 1], [], []>} : vector<8x32xf32>, vector<32x32xf32>, vector<8x32xf32> -> vector<8x32xf32>
    %188 = arith.addf %186, %187 : vector<8x32xf32>
    %189 = vector.extract_strided_slice %24 {offsets = [32, 0], sizes = [8, 32], strides = [1, 1]} : vector<64x32xf32> to vector<8x32xf32>
    %cst_85 = arith.constant dense<0.000000e+00> : vector<8x32xf32>
    %190 = tpu.matmul %185, %27, %cst_85 {dimension_numbers = #tpu.dot_dimension_numbers<[1], [0], [0], [1], [0, 0, 1, 1], [], []>} : vector<8x32xf32>, vector<32x32xf32>, vector<8x32xf32> -> vector<8x32xf32>
    %191 = arith.addf %189, %190 : vector<8x32xf32>
    %192 = vector.extract_strided_slice %36 {offsets = [32, 0], sizes = [8, 32], strides = [1, 1]} : vector<64x32xf32> to vector<8x32xf32>
    %cst_86 = arith.constant dense<0.000000e+00> : vector<8x32xf32>
    %193 = tpu.matmul %185, %39, %cst_86 {dimension_numbers = #tpu.dot_dimension_numbers<[1], [0], [0], [1], [0, 0, 1, 1], [], []>} : vector<8x32xf32>, vector<32x32xf32>, vector<8x32xf32> -> vector<8x32xf32>
    %194 = arith.addf %192, %193 : vector<8x32xf32>
    %195 = vector.extract_strided_slice %48 {offsets = [32, 0], sizes = [8, 32], strides = [1, 1]} : vector<64x32xf32> to vector<8x32xf32>
    %cst_87 = arith.constant dense<0.000000e+00> : vector<8x32xf32>
    %196 = tpu.matmul %185, %51, %cst_87 {dimension_numbers = #tpu.dot_dimension_numbers<[1], [0], [0], [1], [0, 0, 1, 1], [], []>} : vector<8x32xf32>, vector<32x32xf32>, vector<8x32xf32> -> vector<8x32xf32>
    %197 = arith.addf %195, %196 : vector<8x32xf32>
    %198 = arith.negf %191 : vector<8x32xf32>
    %199 = math.exp %198 : vector<8x32xf32>
    %cst_88 = arith.constant 1.000000e+00 : f32
    %200 = vector.broadcast %cst_88 : f32 to vector<8x32xf32>
    %201 = arith.addf %200, %199 : vector<8x32xf32>
    %202 = arith.divf %200, %201 : vector<8x32xf32>
    %203 = arith.mulf %202, %178 : vector<8x32xf32>
    %204 = arith.negf %188 : vector<8x32xf32>
    %205 = math.exp %204 : vector<8x32xf32>
    %cst_89 = arith.constant 1.000000e+00 : f32
    %206 = vector.broadcast %cst_89 : f32 to vector<8x32xf32>
    %207 = arith.addf %206, %205 : vector<8x32xf32>
    %208 = arith.divf %206, %207 : vector<8x32xf32>
    %209 = math.tanh %194 : vector<8x32xf32>
    %210 = arith.mulf %208, %209 : vector<8x32xf32>
    %211 = arith.addf %203, %210 : vector<8x32xf32>
    %212 = arith.negf %197 : vector<8x32xf32>
    %213 = math.exp %212 : vector<8x32xf32>
    %cst_90 = arith.constant 1.000000e+00 : f32
    %214 = vector.broadcast %cst_90 : f32 to vector<8x32xf32>
    %215 = arith.addf %214, %213 : vector<8x32xf32>
    %216 = arith.divf %214, %215 : vector<8x32xf32>
    %217 = math.tanh %211 : vector<8x32xf32>
    %218 = arith.mulf %216, %217 : vector<8x32xf32>
    %219 = vector.extract_strided_slice %12 {offsets = [40, 0], sizes = [8, 32], strides = [1, 1]} : vector<64x32xf32> to vector<8x32xf32>
    %cst_91 = arith.constant dense<0.000000e+00> : vector<8x32xf32>
    %220 = tpu.matmul %218, %15, %cst_91 {dimension_numbers = #tpu.dot_dimension_numbers<[1], [0], [0], [1], [0, 0, 1, 1], [], []>} : vector<8x32xf32>, vector<32x32xf32>, vector<8x32xf32> -> vector<8x32xf32>
    %221 = arith.addf %219, %220 : vector<8x32xf32>
    %222 = vector.extract_strided_slice %24 {offsets = [40, 0], sizes = [8, 32], strides = [1, 1]} : vector<64x32xf32> to vector<8x32xf32>
    %cst_92 = arith.constant dense<0.000000e+00> : vector<8x32xf32>
    %223 = tpu.matmul %218, %27, %cst_92 {dimension_numbers = #tpu.dot_dimension_numbers<[1], [0], [0], [1], [0, 0, 1, 1], [], []>} : vector<8x32xf32>, vector<32x32xf32>, vector<8x32xf32> -> vector<8x32xf32>
    %224 = arith.addf %222, %223 : vector<8x32xf32>
    %225 = vector.extract_strided_slice %36 {offsets = [40, 0], sizes = [8, 32], strides = [1, 1]} : vector<64x32xf32> to vector<8x32xf32>
    %cst_93 = arith.constant dense<0.000000e+00> : vector<8x32xf32>
    %226 = tpu.matmul %218, %39, %cst_93 {dimension_numbers = #tpu.dot_dimension_numbers<[1], [0], [0], [1], [0, 0, 1, 1], [], []>} : vector<8x32xf32>, vector<32x32xf32>, vector<8x32xf32> -> vector<8x32xf32>
    %227 = arith.addf %225, %226 : vector<8x32xf32>
    %228 = vector.extract_strided_slice %48 {offsets = [40, 0], sizes = [8, 32], strides = [1, 1]} : vector<64x32xf32> to vector<8x32xf32>
    %cst_94 = arith.constant dense<0.000000e+00> : vector<8x32xf32>
    %229 = tpu.matmul %218, %51, %cst_94 {dimension_numbers = #tpu.dot_dimension_numbers<[1], [0], [0], [1], [0, 0, 1, 1], [], []>} : vector<8x32xf32>, vector<32x32xf32>, vector<8x32xf32> -> vector<8x32xf32>
    %230 = arith.addf %228, %229 : vector<8x32xf32>
    %231 = arith.negf %224 : vector<8x32xf32>
    %232 = math.exp %231 : vector<8x32xf32>
    %cst_95 = arith.constant 1.000000e+00 : f32
    %233 = vector.broadcast %cst_95 : f32 to vector<8x32xf32>
    %234 = arith.addf %233, %232 : vector<8x32xf32>
    %235 = arith.divf %233, %234 : vector<8x32xf32>
    %236 = arith.mulf %235, %211 : vector<8x32xf32>
    %237 = arith.negf %221 : vector<8x32xf32>
    %238 = math.exp %237 : vector<8x32xf32>
    %cst_96 = arith.constant 1.000000e+00 : f32
    %239 = vector.broadcast %cst_96 : f32 to vector<8x32xf32>
    %240 = arith.addf %239, %238 : vector<8x32xf32>
    %241 = arith.divf %239, %240 : vector<8x32xf32>
    %242 = math.tanh %227 : vector<8x32xf32>
    %243 = arith.mulf %241, %242 : vector<8x32xf32>
    %244 = arith.addf %236, %243 : vector<8x32xf32>
    %245 = arith.negf %230 : vector<8x32xf32>
    %246 = math.exp %245 : vector<8x32xf32>
    %cst_97 = arith.constant 1.000000e+00 : f32
    %247 = vector.broadcast %cst_97 : f32 to vector<8x32xf32>
    %248 = arith.addf %247, %246 : vector<8x32xf32>
    %249 = arith.divf %247, %248 : vector<8x32xf32>
    %250 = math.tanh %244 : vector<8x32xf32>
    %251 = arith.mulf %249, %250 : vector<8x32xf32>
    %252 = vector.extract_strided_slice %12 {offsets = [48, 0], sizes = [8, 32], strides = [1, 1]} : vector<64x32xf32> to vector<8x32xf32>
    %cst_98 = arith.constant dense<0.000000e+00> : vector<8x32xf32>
    %253 = tpu.matmul %251, %15, %cst_98 {dimension_numbers = #tpu.dot_dimension_numbers<[1], [0], [0], [1], [0, 0, 1, 1], [], []>} : vector<8x32xf32>, vector<32x32xf32>, vector<8x32xf32> -> vector<8x32xf32>
    %254 = arith.addf %252, %253 : vector<8x32xf32>
    %255 = vector.extract_strided_slice %24 {offsets = [48, 0], sizes = [8, 32], strides = [1, 1]} : vector<64x32xf32> to vector<8x32xf32>
    %cst_99 = arith.constant dense<0.000000e+00> : vector<8x32xf32>
    %256 = tpu.matmul %251, %27, %cst_99 {dimension_numbers = #tpu.dot_dimension_numbers<[1], [0], [0], [1], [0, 0, 1, 1], [], []>} : vector<8x32xf32>, vector<32x32xf32>, vector<8x32xf32> -> vector<8x32xf32>
    %257 = arith.addf %255, %256 : vector<8x32xf32>
    %258 = vector.extract_strided_slice %36 {offsets = [48, 0], sizes = [8, 32], strides = [1, 1]} : vector<64x32xf32> to vector<8x32xf32>
    %cst_100 = arith.constant dense<0.000000e+00> : vector<8x32xf32>
    %259 = tpu.matmul %251, %39, %cst_100 {dimension_numbers = #tpu.dot_dimension_numbers<[1], [0], [0], [1], [0, 0, 1, 1], [], []>} : vector<8x32xf32>, vector<32x32xf32>, vector<8x32xf32> -> vector<8x32xf32>
    %260 = arith.addf %258, %259 : vector<8x32xf32>
    %261 = vector.extract_strided_slice %48 {offsets = [48, 0], sizes = [8, 32], strides = [1, 1]} : vector<64x32xf32> to vector<8x32xf32>
    %cst_101 = arith.constant dense<0.000000e+00> : vector<8x32xf32>
    %262 = tpu.matmul %251, %51, %cst_101 {dimension_numbers = #tpu.dot_dimension_numbers<[1], [0], [0], [1], [0, 0, 1, 1], [], []>} : vector<8x32xf32>, vector<32x32xf32>, vector<8x32xf32> -> vector<8x32xf32>
    %263 = arith.addf %261, %262 : vector<8x32xf32>
    %264 = arith.negf %257 : vector<8x32xf32>
    %265 = math.exp %264 : vector<8x32xf32>
    %cst_102 = arith.constant 1.000000e+00 : f32
    %266 = vector.broadcast %cst_102 : f32 to vector<8x32xf32>
    %267 = arith.addf %266, %265 : vector<8x32xf32>
    %268 = arith.divf %266, %267 : vector<8x32xf32>
    %269 = arith.mulf %268, %244 : vector<8x32xf32>
    %270 = arith.negf %254 : vector<8x32xf32>
    %271 = math.exp %270 : vector<8x32xf32>
    %cst_103 = arith.constant 1.000000e+00 : f32
    %272 = vector.broadcast %cst_103 : f32 to vector<8x32xf32>
    %273 = arith.addf %272, %271 : vector<8x32xf32>
    %274 = arith.divf %272, %273 : vector<8x32xf32>
    %275 = math.tanh %260 : vector<8x32xf32>
    %276 = arith.mulf %274, %275 : vector<8x32xf32>
    %277 = arith.addf %269, %276 : vector<8x32xf32>
    %278 = arith.negf %263 : vector<8x32xf32>
    %279 = math.exp %278 : vector<8x32xf32>
    %cst_104 = arith.constant 1.000000e+00 : f32
    %280 = vector.broadcast %cst_104 : f32 to vector<8x32xf32>
    %281 = arith.addf %280, %279 : vector<8x32xf32>
    %282 = arith.divf %280, %281 : vector<8x32xf32>
    %283 = math.tanh %277 : vector<8x32xf32>
    %284 = arith.mulf %282, %283 : vector<8x32xf32>
    %285 = vector.extract_strided_slice %12 {offsets = [56, 0], sizes = [8, 32], strides = [1, 1]} : vector<64x32xf32> to vector<8x32xf32>
    %cst_105 = arith.constant dense<0.000000e+00> : vector<8x32xf32>
    %286 = tpu.matmul %284, %15, %cst_105 {dimension_numbers = #tpu.dot_dimension_numbers<[1], [0], [0], [1], [0, 0, 1, 1], [], []>} : vector<8x32xf32>, vector<32x32xf32>, vector<8x32xf32> -> vector<8x32xf32>
    %287 = arith.addf %285, %286 : vector<8x32xf32>
    %288 = vector.extract_strided_slice %24 {offsets = [56, 0], sizes = [8, 32], strides = [1, 1]} : vector<64x32xf32> to vector<8x32xf32>
    %cst_106 = arith.constant dense<0.000000e+00> : vector<8x32xf32>
    %289 = tpu.matmul %284, %27, %cst_106 {dimension_numbers = #tpu.dot_dimension_numbers<[1], [0], [0], [1], [0, 0, 1, 1], [], []>} : vector<8x32xf32>, vector<32x32xf32>, vector<8x32xf32> -> vector<8x32xf32>
    %290 = arith.addf %288, %289 : vector<8x32xf32>
    %291 = vector.extract_strided_slice %36 {offsets = [56, 0], sizes = [8, 32], strides = [1, 1]} : vector<64x32xf32> to vector<8x32xf32>
    %cst_107 = arith.constant dense<0.000000e+00> : vector<8x32xf32>
    %292 = tpu.matmul %284, %39, %cst_107 {dimension_numbers = #tpu.dot_dimension_numbers<[1], [0], [0], [1], [0, 0, 1, 1], [], []>} : vector<8x32xf32>, vector<32x32xf32>, vector<8x32xf32> -> vector<8x32xf32>
    %293 = arith.addf %291, %292 : vector<8x32xf32>
    %294 = vector.extract_strided_slice %48 {offsets = [56, 0], sizes = [8, 32], strides = [1, 1]} : vector<64x32xf32> to vector<8x32xf32>
    %cst_108 = arith.constant dense<0.000000e+00> : vector<8x32xf32>
    %295 = tpu.matmul %284, %51, %cst_108 {dimension_numbers = #tpu.dot_dimension_numbers<[1], [0], [0], [1], [0, 0, 1, 1], [], []>} : vector<8x32xf32>, vector<32x32xf32>, vector<8x32xf32> -> vector<8x32xf32>
    %296 = arith.addf %294, %295 : vector<8x32xf32>
    %297 = arith.negf %290 : vector<8x32xf32>
    %298 = math.exp %297 : vector<8x32xf32>
    %cst_109 = arith.constant 1.000000e+00 : f32
    %299 = vector.broadcast %cst_109 : f32 to vector<8x32xf32>
    %300 = arith.addf %299, %298 : vector<8x32xf32>
    %301 = arith.divf %299, %300 : vector<8x32xf32>
    %302 = arith.mulf %301, %277 : vector<8x32xf32>
    %303 = arith.negf %287 : vector<8x32xf32>
    %304 = math.exp %303 : vector<8x32xf32>
    %cst_110 = arith.constant 1.000000e+00 : f32
    %305 = vector.broadcast %cst_110 : f32 to vector<8x32xf32>
    %306 = arith.addf %305, %304 : vector<8x32xf32>
    %307 = arith.divf %305, %306 : vector<8x32xf32>
    %308 = math.tanh %293 : vector<8x32xf32>
    %309 = arith.mulf %307, %308 : vector<8x32xf32>
    %310 = arith.addf %302, %309 : vector<8x32xf32>
    %311 = arith.negf %296 : vector<8x32xf32>
    %312 = math.exp %311 : vector<8x32xf32>
    %cst_111 = arith.constant 1.000000e+00 : f32
    %313 = vector.broadcast %cst_111 : f32 to vector<8x32xf32>
    %314 = arith.addf %313, %312 : vector<8x32xf32>
    %315 = arith.divf %313, %314 : vector<8x32xf32>
    %316 = math.tanh %310 : vector<8x32xf32>
    %317 = arith.mulf %315, %316 : vector<8x32xf32>
    %318 = tpu.concatenate %86, %119, %152, %185, %218, %251, %284, %317 in 0 : vector<8x32xf32>, vector<8x32xf32>, vector<8x32xf32>, vector<8x32xf32>, vector<8x32xf32>, vector<8x32xf32>, vector<8x32xf32>, vector<8x32xf32> -> vector<64x32xf32>
    %319 = tpu.iota {dimensions = array<i32: 0>} : vector<64x64xi32>
    %320 = tpu.iota {dimensions = array<i32: 1>} : vector<64x64xi32>
    %c7_i32 = arith.constant 7 : i32
    %321 = vector.broadcast %c7_i32 : i32 to vector<64x64xi32>
    %322 = arith.andi %319, %321 : vector<64x64xi32>
    %c7_i32_112 = arith.constant 7 : i32
    %323 = vector.broadcast %c7_i32_112 : i32 to vector<64x64xi32>
    %324 = arith.andi %320, %323 : vector<64x64xi32>
    %325 = arith.cmpi eq, %322, %324 : vector<64x64xi32>
    %cst_113 = arith.constant 0.000000e+00 : f32
    %326 = vector.broadcast %cst_113 : f32 to vector<64x32xf32>
    %c0_i32_114 = arith.constant 0 : i32
    %c0_i32_115 = arith.constant 0 : i32
    %c0_i32_116 = arith.constant 0 : i32
    %327 = tpu.memref_slice %arg3[%c0_i32_114, %c0_i32_115, %c0_i32_116] : memref<1x32x416xf32, #tpu.memory_space<vmem>> -> memref<1x32x416xf32, #tpu.memory_space<vmem>>
    %328 = tpu.memref_squeeze %327 : memref<1x32x416xf32, #tpu.memory_space<vmem>> -> memref<32x416xf32, #tpu.memory_space<vmem>>
    %c0_117 = arith.constant 0 : index
    %c256 = arith.constant 256 : index
    %329 = vector.load %328[%c0_117, %c256] : memref<32x416xf32, #tpu.memory_space<vmem>>, vector<32x16xf32>
    %cst_118 = arith.constant dense<0.000000e+00> : vector<64x16xf32>
    %330 = tpu.matmul %318, %329, %cst_118 {dimension_numbers = #tpu.dot_dimension_numbers<[1], [0], [0], [1], [0, 0, 1, 1], [], []>} : vector<64x32xf32>, vector<32x16xf32>, vector<64x16xf32> -> vector<64x16xf32>
    %c0_i32_119 = arith.constant 0 : i32
    %c0_i32_120 = arith.constant 0 : i32
    %c0_i32_121 = arith.constant 0 : i32
    %331 = tpu.memref_slice %arg4[%c0_i32_119, %c0_i32_120, %c0_i32_121] : memref<1x1x2464xf32, #tpu.memory_space<vmem>> -> memref<1x1x2464xf32, #tpu.memory_space<vmem>>
    %332 = tpu.memref_squeeze %331 : memref<1x1x2464xf32, #tpu.memory_space<vmem>> -> memref<1x2464xf32, #tpu.memory_space<vmem>>
    %c0_122 = arith.constant 0 : index
    %c2176 = arith.constant 2176 : index
    %333 = vector.load %332[%c0_122, %c2176] : memref<1x2464xf32, #tpu.memory_space<vmem>>, vector<1x16xf32>
    %334 = vector.broadcast %333 : vector<1x16xf32> to vector<64x16xf32>
    %335 = arith.addf %330, %334 : vector<64x16xf32>
    %c0_i32_123 = arith.constant 0 : i32
    %c0_i32_124 = arith.constant 0 : i32
    %c0_i32_125 = arith.constant 0 : i32
    %336 = tpu.memref_slice %arg3[%c0_i32_123, %c0_i32_124, %c0_i32_125] : memref<1x32x416xf32, #tpu.memory_space<vmem>> -> memref<1x32x416xf32, #tpu.memory_space<vmem>>
    %337 = tpu.memref_squeeze %336 : memref<1x32x416xf32, #tpu.memory_space<vmem>> -> memref<32x416xf32, #tpu.memory_space<vmem>>
    %c0_126 = arith.constant 0 : index
    %c288 = arith.constant 288 : index
    %338 = vector.load %337[%c0_126, %c288] : memref<32x416xf32, #tpu.memory_space<vmem>>, vector<32x16xf32>
    %cst_127 = arith.constant dense<0.000000e+00> : vector<64x16xf32>
    %339 = tpu.matmul %318, %338, %cst_127 {dimension_numbers = #tpu.dot_dimension_numbers<[1], [0], [0], [1], [0, 0, 1, 1], [], []>} : vector<64x32xf32>, vector<32x16xf32>, vector<64x16xf32> -> vector<64x16xf32>
    %c0_i32_128 = arith.constant 0 : i32
    %c0_i32_129 = arith.constant 0 : i32
    %c0_i32_130 = arith.constant 0 : i32
    %340 = tpu.memref_slice %arg4[%c0_i32_128, %c0_i32_129, %c0_i32_130] : memref<1x1x2464xf32, #tpu.memory_space<vmem>> -> memref<1x1x2464xf32, #tpu.memory_space<vmem>>
    %341 = tpu.memref_squeeze %340 : memref<1x1x2464xf32, #tpu.memory_space<vmem>> -> memref<1x2464xf32, #tpu.memory_space<vmem>>
    %c0_131 = arith.constant 0 : index
    %c2208 = arith.constant 2208 : index
    %342 = vector.load %341[%c0_131, %c2208] : memref<1x2464xf32, #tpu.memory_space<vmem>>, vector<1x16xf32>
    %343 = vector.broadcast %342 : vector<1x16xf32> to vector<64x16xf32>
    %344 = arith.addf %339, %343 : vector<64x16xf32>
    %c0_i32_132 = arith.constant 0 : i32
    %c0_i32_133 = arith.constant 0 : i32
    %c0_i32_134 = arith.constant 0 : i32
    %345 = tpu.memref_slice %arg3[%c0_i32_132, %c0_i32_133, %c0_i32_134] : memref<1x32x416xf32, #tpu.memory_space<vmem>> -> memref<1x32x416xf32, #tpu.memory_space<vmem>>
    %346 = tpu.memref_squeeze %345 : memref<1x32x416xf32, #tpu.memory_space<vmem>> -> memref<32x416xf32, #tpu.memory_space<vmem>>
    %c0_135 = arith.constant 0 : index
    %c320 = arith.constant 320 : index
    %347 = vector.load %346[%c0_135, %c320] : memref<32x416xf32, #tpu.memory_space<vmem>>, vector<32x16xf32>
    %cst_136 = arith.constant dense<0.000000e+00> : vector<64x16xf32>
    %348 = tpu.matmul %318, %347, %cst_136 {dimension_numbers = #tpu.dot_dimension_numbers<[1], [0], [0], [1], [0, 0, 1, 1], [], []>} : vector<64x32xf32>, vector<32x16xf32>, vector<64x16xf32> -> vector<64x16xf32>
    %c0_i32_137 = arith.constant 0 : i32
    %c0_i32_138 = arith.constant 0 : i32
    %c0_i32_139 = arith.constant 0 : i32
    %349 = tpu.memref_slice %arg4[%c0_i32_137, %c0_i32_138, %c0_i32_139] : memref<1x1x2464xf32, #tpu.memory_space<vmem>> -> memref<1x1x2464xf32, #tpu.memory_space<vmem>>
    %350 = tpu.memref_squeeze %349 : memref<1x1x2464xf32, #tpu.memory_space<vmem>> -> memref<1x2464xf32, #tpu.memory_space<vmem>>
    %c0_140 = arith.constant 0 : index
    %c2240 = arith.constant 2240 : index
    %351 = vector.load %350[%c0_140, %c2240] : memref<1x2464xf32, #tpu.memory_space<vmem>>, vector<1x16xf32>
    %352 = vector.broadcast %351 : vector<1x16xf32> to vector<64x16xf32>
    %353 = arith.addf %348, %352 : vector<64x16xf32>
    %cst_141 = arith.constant dense<0.000000e+00> : vector<64x64xf32>
    %354 = tpu.matmul %335, %344, %cst_141 {dimension_numbers = #tpu.dot_dimension_numbers<[1], [1], [0], [0], [0, 0, 1, 0], [], []>} : vector<64x16xf32>, vector<64x16xf32>, vector<64x64xf32> -> vector<64x64xf32>
    %cst_142 = arith.constant 2.500000e-01 : f32
    %355 = vector.broadcast %cst_142 : f32 to vector<64x64xf32>
    %356 = arith.mulf %354, %355 : vector<64x64xf32>
    %cst_143 = arith.constant -1.000000e+30 : f32
    %357 = vector.broadcast %cst_143 : f32 to vector<64x64xf32>
    %358 = arith.select %325, %356, %357 : vector<64x64xi1>, vector<64x64xf32>
    %cst_144 = arith.constant dense<0xFF800000> : vector<64xf32>
    %359 = vector.multi_reduction <maximumf>, %358, %cst_144 [1] : vector<64x64xf32> to vector<64xf32>
    %360 = vector.shape_cast %359 : vector<64xf32> to vector<64x1xf32>
    %361 = vector.broadcast %360 : vector<64x1xf32> to vector<64x64xf32>
    %362 = arith.subf %358, %361 : vector<64x64xf32>
    %363 = math.exp %362 : vector<64x64xf32>
    %cst_145 = arith.constant dense<0.000000e+00> : vector<64xf32>
    %364 = vector.multi_reduction <add>, %363, %cst_145 [1] : vector<64x64xf32> to vector<64xf32>
    %365 = vector.shape_cast %364 : vector<64xf32> to vector<64x1xf32>
    %366 = tpu.reciprocal %365 {approx = true} : vector<64x1xf32> -> vector<64x1xf32>
    %367 = vector.broadcast %366 : vector<64x1xf32> to vector<64x64xf32>
    %368 = arith.mulf %363, %367 : vector<64x64xf32>
    %cst_146 = arith.constant dense<0.000000e+00> : vector<64x16xf32>
    %369 = tpu.matmul %368, %353, %cst_146 {dimension_numbers = #tpu.dot_dimension_numbers<[1], [0], [0], [1], [0, 0, 1, 1], [], []>} : vector<64x64xf32>, vector<64x16xf32>, vector<64x16xf32> -> vector<64x16xf32>
    %c0_i32_147 = arith.constant 0 : i32
    %c0_i32_148 = arith.constant 0 : i32
    %c0_i32_149 = arith.constant 0 : i32
    %370 = tpu.memref_slice %arg3[%c0_i32_147, %c0_i32_148, %c0_i32_149] : memref<1x32x416xf32, #tpu.memory_space<vmem>> -> memref<1x32x416xf32, #tpu.memory_space<vmem>>
    %371 = tpu.memref_squeeze %370 : memref<1x32x416xf32, #tpu.memory_space<vmem>> -> memref<32x416xf32, #tpu.memory_space<vmem>>
    %c0_150 = arith.constant 0 : index
    %c384 = arith.constant 384 : index
    %372 = vector.load %371[%c0_150, %c384] : memref<32x416xf32, #tpu.memory_space<vmem>>, vector<16x32xf32>
    %cst_151 = arith.constant dense<0.000000e+00> : vector<64x32xf32>
    %373 = tpu.matmul %369, %372, %cst_151 {dimension_numbers = #tpu.dot_dimension_numbers<[1], [0], [0], [1], [0, 0, 1, 1], [], []>} : vector<64x16xf32>, vector<16x32xf32>, vector<64x32xf32> -> vector<64x32xf32>
    %374 = arith.addf %326, %373 : vector<64x32xf32>
    %c0_i32_152 = arith.constant 0 : i32
    %c0_i32_153 = arith.constant 0 : i32
    %c0_i32_154 = arith.constant 0 : i32
    %375 = tpu.memref_slice %arg3[%c0_i32_152, %c0_i32_153, %c0_i32_154] : memref<1x32x416xf32, #tpu.memory_space<vmem>> -> memref<1x32x416xf32, #tpu.memory_space<vmem>>
    %376 = tpu.memref_squeeze %375 : memref<1x32x416xf32, #tpu.memory_space<vmem>> -> memref<32x416xf32, #tpu.memory_space<vmem>>
    %c0_155 = arith.constant 0 : index
    %c272 = arith.constant 272 : index
    %377 = vector.load %376[%c0_155, %c272] : memref<32x416xf32, #tpu.memory_space<vmem>>, vector<32x16xf32>
    %cst_156 = arith.constant dense<0.000000e+00> : vector<64x16xf32>
    %378 = tpu.matmul %318, %377, %cst_156 {dimension_numbers = #tpu.dot_dimension_numbers<[1], [0], [0], [1], [0, 0, 1, 1], [], []>} : vector<64x32xf32>, vector<32x16xf32>, vector<64x16xf32> -> vector<64x16xf32>
    %c0_i32_157 = arith.constant 0 : i32
    %c0_i32_158 = arith.constant 0 : i32
    %c0_i32_159 = arith.constant 0 : i32
    %379 = tpu.memref_slice %arg4[%c0_i32_157, %c0_i32_158, %c0_i32_159] : memref<1x1x2464xf32, #tpu.memory_space<vmem>> -> memref<1x1x2464xf32, #tpu.memory_space<vmem>>
    %380 = tpu.memref_squeeze %379 : memref<1x1x2464xf32, #tpu.memory_space<vmem>> -> memref<1x2464xf32, #tpu.memory_space<vmem>>
    %c0_160 = arith.constant 0 : index
    %c2192 = arith.constant 2192 : index
    %381 = vector.load %380[%c0_160, %c2192] : memref<1x2464xf32, #tpu.memory_space<vmem>>, vector<1x16xf32>
    %382 = vector.broadcast %381 : vector<1x16xf32> to vector<64x16xf32>
    %383 = arith.addf %378, %382 : vector<64x16xf32>
    %c0_i32_161 = arith.constant 0 : i32
    %c0_i32_162 = arith.constant 0 : i32
    %c0_i32_163 = arith.constant 0 : i32
    %384 = tpu.memref_slice %arg3[%c0_i32_161, %c0_i32_162, %c0_i32_163] : memref<1x32x416xf32, #tpu.memory_space<vmem>> -> memref<1x32x416xf32, #tpu.memory_space<vmem>>
    %385 = tpu.memref_squeeze %384 : memref<1x32x416xf32, #tpu.memory_space<vmem>> -> memref<32x416xf32, #tpu.memory_space<vmem>>
    %c0_164 = arith.constant 0 : index
    %c304 = arith.constant 304 : index
    %386 = vector.load %385[%c0_164, %c304] : memref<32x416xf32, #tpu.memory_space<vmem>>, vector<32x16xf32>
    %cst_165 = arith.constant dense<0.000000e+00> : vector<64x16xf32>
    %387 = tpu.matmul %318, %386, %cst_165 {dimension_numbers = #tpu.dot_dimension_numbers<[1], [0], [0], [1], [0, 0, 1, 1], [], []>} : vector<64x32xf32>, vector<32x16xf32>, vector<64x16xf32> -> vector<64x16xf32>
    %c0_i32_166 = arith.constant 0 : i32
    %c0_i32_167 = arith.constant 0 : i32
    %c0_i32_168 = arith.constant 0 : i32
    %388 = tpu.memref_slice %arg4[%c0_i32_166, %c0_i32_167, %c0_i32_168] : memref<1x1x2464xf32, #tpu.memory_space<vmem>> -> memref<1x1x2464xf32, #tpu.memory_space<vmem>>
    %389 = tpu.memref_squeeze %388 : memref<1x1x2464xf32, #tpu.memory_space<vmem>> -> memref<1x2464xf32, #tpu.memory_space<vmem>>
    %c0_169 = arith.constant 0 : index
    %c2224 = arith.constant 2224 : index
    %390 = vector.load %389[%c0_169, %c2224] : memref<1x2464xf32, #tpu.memory_space<vmem>>, vector<1x16xf32>
    %391 = vector.broadcast %390 : vector<1x16xf32> to vector<64x16xf32>
    %392 = arith.addf %387, %391 : vector<64x16xf32>
    %c0_i32_170 = arith.constant 0 : i32
    %c0_i32_171 = arith.constant 0 : i32
    %c0_i32_172 = arith.constant 0 : i32
    %393 = tpu.memref_slice %arg3[%c0_i32_170, %c0_i32_171, %c0_i32_172] : memref<1x32x416xf32, #tpu.memory_space<vmem>> -> memref<1x32x416xf32, #tpu.memory_space<vmem>>
    %394 = tpu.memref_squeeze %393 : memref<1x32x416xf32, #tpu.memory_space<vmem>> -> memref<32x416xf32, #tpu.memory_space<vmem>>
    %c0_173 = arith.constant 0 : index
    %c336 = arith.constant 336 : index
    %395 = vector.load %394[%c0_173, %c336] : memref<32x416xf32, #tpu.memory_space<vmem>>, vector<32x16xf32>
    %cst_174 = arith.constant dense<0.000000e+00> : vector<64x16xf32>
    %396 = tpu.matmul %318, %395, %cst_174 {dimension_numbers = #tpu.dot_dimension_numbers<[1], [0], [0], [1], [0, 0, 1, 1], [], []>} : vector<64x32xf32>, vector<32x16xf32>, vector<64x16xf32> -> vector<64x16xf32>
    %c0_i32_175 = arith.constant 0 : i32
    %c0_i32_176 = arith.constant 0 : i32
    %c0_i32_177 = arith.constant 0 : i32
    %397 = tpu.memref_slice %arg4[%c0_i32_175, %c0_i32_176, %c0_i32_177] : memref<1x1x2464xf32, #tpu.memory_space<vmem>> -> memref<1x1x2464xf32, #tpu.memory_space<vmem>>
    %398 = tpu.memref_squeeze %397 : memref<1x1x2464xf32, #tpu.memory_space<vmem>> -> memref<1x2464xf32, #tpu.memory_space<vmem>>
    %c0_178 = arith.constant 0 : index
    %c2256 = arith.constant 2256 : index
    %399 = vector.load %398[%c0_178, %c2256] : memref<1x2464xf32, #tpu.memory_space<vmem>>, vector<1x16xf32>
    %400 = vector.broadcast %399 : vector<1x16xf32> to vector<64x16xf32>
    %401 = arith.addf %396, %400 : vector<64x16xf32>
    %cst_179 = arith.constant dense<0.000000e+00> : vector<64x64xf32>
    %402 = tpu.matmul %383, %392, %cst_179 {dimension_numbers = #tpu.dot_dimension_numbers<[1], [1], [0], [0], [0, 0, 1, 0], [], []>} : vector<64x16xf32>, vector<64x16xf32>, vector<64x64xf32> -> vector<64x64xf32>
    %cst_180 = arith.constant 2.500000e-01 : f32
    %403 = vector.broadcast %cst_180 : f32 to vector<64x64xf32>
    %404 = arith.mulf %402, %403 : vector<64x64xf32>
    %cst_181 = arith.constant -1.000000e+30 : f32
    %405 = vector.broadcast %cst_181 : f32 to vector<64x64xf32>
    %406 = arith.select %325, %404, %405 : vector<64x64xi1>, vector<64x64xf32>
    %cst_182 = arith.constant dense<0xFF800000> : vector<64xf32>
    %407 = vector.multi_reduction <maximumf>, %406, %cst_182 [1] : vector<64x64xf32> to vector<64xf32>
    %408 = vector.shape_cast %407 : vector<64xf32> to vector<64x1xf32>
    %409 = vector.broadcast %408 : vector<64x1xf32> to vector<64x64xf32>
    %410 = arith.subf %406, %409 : vector<64x64xf32>
    %411 = math.exp %410 : vector<64x64xf32>
    %cst_183 = arith.constant dense<0.000000e+00> : vector<64xf32>
    %412 = vector.multi_reduction <add>, %411, %cst_183 [1] : vector<64x64xf32> to vector<64xf32>
    %413 = vector.shape_cast %412 : vector<64xf32> to vector<64x1xf32>
    %414 = tpu.reciprocal %413 {approx = true} : vector<64x1xf32> -> vector<64x1xf32>
    %415 = vector.broadcast %414 : vector<64x1xf32> to vector<64x64xf32>
    %416 = arith.mulf %411, %415 : vector<64x64xf32>
    %cst_184 = arith.constant dense<0.000000e+00> : vector<64x16xf32>
    %417 = tpu.matmul %416, %401, %cst_184 {dimension_numbers = #tpu.dot_dimension_numbers<[1], [0], [0], [1], [0, 0, 1, 1], [], []>} : vector<64x64xf32>, vector<64x16xf32>, vector<64x16xf32> -> vector<64x16xf32>
    %c0_i32_185 = arith.constant 0 : i32
    %c0_i32_186 = arith.constant 0 : i32
    %c0_i32_187 = arith.constant 0 : i32
    %418 = tpu.memref_slice %arg3[%c0_i32_185, %c0_i32_186, %c0_i32_187] : memref<1x32x416xf32, #tpu.memory_space<vmem>> -> memref<1x32x416xf32, #tpu.memory_space<vmem>>
    %419 = tpu.memref_squeeze %418 : memref<1x32x416xf32, #tpu.memory_space<vmem>> -> memref<32x416xf32, #tpu.memory_space<vmem>>
    %c16 = arith.constant 16 : index
    %c384_188 = arith.constant 384 : index
    %420 = vector.load %419[%c16, %c384_188] : memref<32x416xf32, #tpu.memory_space<vmem>>, vector<16x32xf32>
    %cst_189 = arith.constant dense<0.000000e+00> : vector<64x32xf32>
    %421 = tpu.matmul %417, %420, %cst_189 {dimension_numbers = #tpu.dot_dimension_numbers<[1], [0], [0], [1], [0, 0, 1, 1], [], []>} : vector<64x16xf32>, vector<16x32xf32>, vector<64x32xf32> -> vector<64x32xf32>
    %422 = arith.addf %374, %421 : vector<64x32xf32>
    %c0_i32_190 = arith.constant 0 : i32
    %c0_i32_191 = arith.constant 0 : i32
    %c0_i32_192 = arith.constant 0 : i32
    %423 = tpu.memref_slice %arg4[%c0_i32_190, %c0_i32_191, %c0_i32_192] : memref<1x1x2464xf32, #tpu.memory_space<vmem>> -> memref<1x1x2464xf32, #tpu.memory_space<vmem>>
    %424 = tpu.memref_squeeze %423 : memref<1x1x2464xf32, #tpu.memory_space<vmem>> -> memref<1x2464xf32, #tpu.memory_space<vmem>>
    %c0_193 = arith.constant 0 : index
    %c2272 = arith.constant 2272 : index
    %425 = vector.load %424[%c0_193, %c2272] : memref<1x2464xf32, #tpu.memory_space<vmem>>, vector<1x32xf32>
    %426 = vector.broadcast %425 : vector<1x32xf32> to vector<64x32xf32>
    %427 = arith.addf %422, %426 : vector<64x32xf32>
    %428 = arith.addf %318, %427 : vector<64x32xf32>
    %c0_i32_194 = arith.constant 0 : i32
    %c0_i32_195 = arith.constant 0 : i32
    %c0_i32_196 = arith.constant 0 : i32
    %429 = tpu.memref_slice %arg4[%c0_i32_194, %c0_i32_195, %c0_i32_196] : memref<1x1x2464xf32, #tpu.memory_space<vmem>> -> memref<1x1x2464xf32, #tpu.memory_space<vmem>>
    %430 = tpu.memref_squeeze %429 : memref<1x1x2464xf32, #tpu.memory_space<vmem>> -> memref<1x2464xf32, #tpu.memory_space<vmem>>
    %c0_197 = arith.constant 0 : index
    %c2336 = arith.constant 2336 : index
    %431 = vector.load %430[%c0_197, %c2336] : memref<1x2464xf32, #tpu.memory_space<vmem>>, vector<1x32xf32>
    %c0_i32_198 = arith.constant 0 : i32
    %c0_i32_199 = arith.constant 0 : i32
    %c0_i32_200 = arith.constant 0 : i32
    %432 = tpu.memref_slice %arg4[%c0_i32_198, %c0_i32_199, %c0_i32_200] : memref<1x1x2464xf32, #tpu.memory_space<vmem>> -> memref<1x1x2464xf32, #tpu.memory_space<vmem>>
    %433 = tpu.memref_squeeze %432 : memref<1x1x2464xf32, #tpu.memory_space<vmem>> -> memref<1x2464xf32, #tpu.memory_space<vmem>>
    %c0_201 = arith.constant 0 : index
    %c2368 = arith.constant 2368 : index
    %434 = vector.load %433[%c0_201, %c2368] : memref<1x2464xf32, #tpu.memory_space<vmem>>, vector<1x32xf32>
    %cst_202 = arith.constant dense<0.000000e+00> : vector<64xf32>
    %435 = vector.multi_reduction <add>, %428, %cst_202 [1] : vector<64x32xf32> to vector<64xf32>
    %436 = vector.shape_cast %435 : vector<64xf32> to vector<64x1xf32>
    %cst_203 = arith.constant 3.200000e+01 : f32
    %437 = vector.broadcast %cst_203 : f32 to vector<64x1xf32>
    %438 = arith.divf %436, %437 : vector<64x1xf32>
    %439 = vector.broadcast %438 : vector<64x1xf32> to vector<64x32xf32>
    %440 = arith.subf %428, %439 : vector<64x32xf32>
    %441 = arith.mulf %440, %440 : vector<64x32xf32>
    %cst_204 = arith.constant dense<0.000000e+00> : vector<64xf32>
    %442 = vector.multi_reduction <add>, %441, %cst_204 [1] : vector<64x32xf32> to vector<64xf32>
    %443 = vector.shape_cast %442 : vector<64xf32> to vector<64x1xf32>
    %cst_205 = arith.constant 3.200000e+01 : f32
    %444 = vector.broadcast %cst_205 : f32 to vector<64x1xf32>
    %445 = arith.divf %443, %444 : vector<64x1xf32>
    %446 = vector.broadcast %438 : vector<64x1xf32> to vector<64x32xf32>
    %447 = arith.subf %428, %446 : vector<64x32xf32>
    %cst_206 = arith.constant 9.99999974E-6 : f32
    %448 = vector.broadcast %cst_206 : f32 to vector<64x1xf32>
    %449 = arith.addf %445, %448 : vector<64x1xf32>
    %450 = math.rsqrt %449 : vector<64x1xf32>
    %451 = vector.broadcast %450 : vector<64x1xf32> to vector<64x32xf32>
    %452 = arith.mulf %447, %451 : vector<64x32xf32>
    %453 = vector.broadcast %431 : vector<1x32xf32> to vector<64x32xf32>
    %454 = arith.mulf %452, %453 : vector<64x32xf32>
    %455 = vector.broadcast %434 : vector<1x32xf32> to vector<64x32xf32>
    %456 = arith.addf %454, %455 : vector<64x32xf32>
    %457 = arith.truncf %456 : vector<64x32xf32> to vector<64x32xbf16>
    %cst_207 = arith.constant 0.000000e+00 : f32
    %458 = vector.broadcast %cst_207 : f32 to vector<64x32xf32>
    %c0_i32_208 = arith.constant 0 : i32
    %c0_i32_209 = arith.constant 0 : i32
    %c0_i32_210 = arith.constant 0 : i32
    %c0_i32_211 = arith.constant 0 : i32
    %459 = tpu.memref_slice %arg5[%c0_i32_208, %c0_i32_209, %c0_i32_210, %c0_i32_211] : memref<1x2x32x2048xbf16, #tpu.memory_space<vmem>> -> memref<1x1x32x2048xbf16, #tpu.memory_space<vmem>>
    %460 = tpu.memref_squeeze %459 : memref<1x1x32x2048xbf16, #tpu.memory_space<vmem>> -> memref<32x2048xbf16, #tpu.memory_space<vmem>>
    %c0_212 = arith.constant 0 : index
    %c0_213 = arith.constant 0 : index
    %461 = vector.load %460[%c0_212, %c0_213] : memref<32x2048xbf16, #tpu.memory_space<vmem>>, vector<32x256xbf16>
    %cst_214 = arith.constant dense<0.000000e+00> : vector<64x256xf32>
    %462 = tpu.matmul %457, %461, %cst_214 {dimension_numbers = #tpu.dot_dimension_numbers<[1], [0], [0], [1], [0, 0, 1, 1], [], []>} : vector<64x32xbf16>, vector<32x256xbf16>, vector<64x256xf32> -> vector<64x256xf32>
    %c0_i32_215 = arith.constant 0 : i32
    %c0_i32_216 = arith.constant 0 : i32
    %c0_i32_217 = arith.constant 0 : i32
    %463 = tpu.memref_slice %arg4[%c0_i32_215, %c0_i32_216, %c0_i32_217] : memref<1x1x2464xf32, #tpu.memory_space<vmem>> -> memref<1x1x2464xf32, #tpu.memory_space<vmem>>
    %464 = tpu.memref_squeeze %463 : memref<1x1x2464xf32, #tpu.memory_space<vmem>> -> memref<1x2464xf32, #tpu.memory_space<vmem>>
    %c0_218 = arith.constant 0 : index
    %c0_219 = arith.constant 0 : index
    %465 = vector.load %464[%c0_218, %c0_219] : memref<1x2464xf32, #tpu.memory_space<vmem>>, vector<1x256xf32>
    %466 = vector.broadcast %465 : vector<1x256xf32> to vector<64x256xf32>
    %467 = arith.addf %462, %466 : vector<64x256xf32>
    %cst_220 = arith.constant 0.000000e+00 : f32
    %468 = vector.broadcast %cst_220 : f32 to vector<64x256xf32>
    %469 = arith.maximumf %467, %468 : vector<64x256xf32>
    %470 = arith.truncf %469 : vector<64x256xf32> to vector<64x256xbf16>
    %c0_i32_221 = arith.constant 0 : i32
    %c1_i32 = arith.constant 1 : i32
    %c0_i32_222 = arith.constant 0 : i32
    %c0_i32_223 = arith.constant 0 : i32
    %471 = tpu.memref_slice %arg5[%c0_i32_221, %c1_i32, %c0_i32_222, %c0_i32_223] : memref<1x2x32x2048xbf16, #tpu.memory_space<vmem>> -> memref<1x1x32x2048xbf16, #tpu.memory_space<vmem>>
    %472 = tpu.memref_squeeze %471 : memref<1x1x32x2048xbf16, #tpu.memory_space<vmem>> -> memref<32x2048xbf16, #tpu.memory_space<vmem>>
    %c0_224 = arith.constant 0 : index
    %c0_225 = arith.constant 0 : index
    %473 = vector.load %472[%c0_224, %c0_225] : memref<32x2048xbf16, #tpu.memory_space<vmem>>, vector<32x256xbf16>
    %cst_226 = arith.constant dense<0.000000e+00> : vector<64x32xf32>
    %474 = tpu.matmul %470, %473, %cst_226 {dimension_numbers = #tpu.dot_dimension_numbers<[1], [1], [0], [0], [0, 0, 1, 0], [], []>} : vector<64x256xbf16>, vector<32x256xbf16>, vector<64x32xf32> -> vector<64x32xf32>
    %475 = arith.addf %458, %474 : vector<64x32xf32>
    %c0_i32_227 = arith.constant 0 : i32
    %c0_i32_228 = arith.constant 0 : i32
    %c0_i32_229 = arith.constant 0 : i32
    %c0_i32_230 = arith.constant 0 : i32
    %476 = tpu.memref_slice %arg5[%c0_i32_227, %c0_i32_228, %c0_i32_229, %c0_i32_230] : memref<1x2x32x2048xbf16, #tpu.memory_space<vmem>> -> memref<1x1x32x2048xbf16, #tpu.memory_space<vmem>>
    %477 = tpu.memref_squeeze %476 : memref<1x1x32x2048xbf16, #tpu.memory_space<vmem>> -> memref<32x2048xbf16, #tpu.memory_space<vmem>>
    %c0_231 = arith.constant 0 : index
    %c256_232 = arith.constant 256 : index
    %478 = vector.load %477[%c0_231, %c256_232] : memref<32x2048xbf16, #tpu.memory_space<vmem>>, vector<32x256xbf16>
    %cst_233 = arith.constant dense<0.000000e+00> : vector<64x256xf32>
    %479 = tpu.matmul %457, %478, %cst_233 {dimension_numbers = #tpu.dot_dimension_numbers<[1], [0], [0], [1], [0, 0, 1, 1], [], []>} : vector<64x32xbf16>, vector<32x256xbf16>, vector<64x256xf32> -> vector<64x256xf32>
    %c0_i32_234 = arith.constant 0 : i32
    %c0_i32_235 = arith.constant 0 : i32
    %c0_i32_236 = arith.constant 0 : i32
    %480 = tpu.memref_slice %arg4[%c0_i32_234, %c0_i32_235, %c0_i32_236] : memref<1x1x2464xf32, #tpu.memory_space<vmem>> -> memref<1x1x2464xf32, #tpu.memory_space<vmem>>
    %481 = tpu.memref_squeeze %480 : memref<1x1x2464xf32, #tpu.memory_space<vmem>> -> memref<1x2464xf32, #tpu.memory_space<vmem>>
    %c0_237 = arith.constant 0 : index
    %c256_238 = arith.constant 256 : index
    %482 = vector.load %481[%c0_237, %c256_238] : memref<1x2464xf32, #tpu.memory_space<vmem>>, vector<1x256xf32>
    %483 = vector.broadcast %482 : vector<1x256xf32> to vector<64x256xf32>
    %484 = arith.addf %479, %483 : vector<64x256xf32>
    %cst_239 = arith.constant 0.000000e+00 : f32
    %485 = vector.broadcast %cst_239 : f32 to vector<64x256xf32>
    %486 = arith.maximumf %484, %485 : vector<64x256xf32>
    %487 = arith.truncf %486 : vector<64x256xf32> to vector<64x256xbf16>
    %c0_i32_240 = arith.constant 0 : i32
    %c1_i32_241 = arith.constant 1 : i32
    %c0_i32_242 = arith.constant 0 : i32
    %c0_i32_243 = arith.constant 0 : i32
    %488 = tpu.memref_slice %arg5[%c0_i32_240, %c1_i32_241, %c0_i32_242, %c0_i32_243] : memref<1x2x32x2048xbf16, #tpu.memory_space<vmem>> -> memref<1x1x32x2048xbf16, #tpu.memory_space<vmem>>
    %489 = tpu.memref_squeeze %488 : memref<1x1x32x2048xbf16, #tpu.memory_space<vmem>> -> memref<32x2048xbf16, #tpu.memory_space<vmem>>
    %c0_244 = arith.constant 0 : index
    %c256_245 = arith.constant 256 : index
    %490 = vector.load %489[%c0_244, %c256_245] : memref<32x2048xbf16, #tpu.memory_space<vmem>>, vector<32x256xbf16>
    %cst_246 = arith.constant dense<0.000000e+00> : vector<64x32xf32>
    %491 = tpu.matmul %487, %490, %cst_246 {dimension_numbers = #tpu.dot_dimension_numbers<[1], [1], [0], [0], [0, 0, 1, 0], [], []>} : vector<64x256xbf16>, vector<32x256xbf16>, vector<64x32xf32> -> vector<64x32xf32>
    %492 = arith.addf %475, %491 : vector<64x32xf32>
    %c0_i32_247 = arith.constant 0 : i32
    %c0_i32_248 = arith.constant 0 : i32
    %c0_i32_249 = arith.constant 0 : i32
    %c0_i32_250 = arith.constant 0 : i32
    %493 = tpu.memref_slice %arg5[%c0_i32_247, %c0_i32_248, %c0_i32_249, %c0_i32_250] : memref<1x2x32x2048xbf16, #tpu.memory_space<vmem>> -> memref<1x1x32x2048xbf16, #tpu.memory_space<vmem>>
    %494 = tpu.memref_squeeze %493 : memref<1x1x32x2048xbf16, #tpu.memory_space<vmem>> -> memref<32x2048xbf16, #tpu.memory_space<vmem>>
    %c0_251 = arith.constant 0 : index
    %c512 = arith.constant 512 : index
    %495 = vector.load %494[%c0_251, %c512] : memref<32x2048xbf16, #tpu.memory_space<vmem>>, vector<32x256xbf16>
    %cst_252 = arith.constant dense<0.000000e+00> : vector<64x256xf32>
    %496 = tpu.matmul %457, %495, %cst_252 {dimension_numbers = #tpu.dot_dimension_numbers<[1], [0], [0], [1], [0, 0, 1, 1], [], []>} : vector<64x32xbf16>, vector<32x256xbf16>, vector<64x256xf32> -> vector<64x256xf32>
    %c0_i32_253 = arith.constant 0 : i32
    %c0_i32_254 = arith.constant 0 : i32
    %c0_i32_255 = arith.constant 0 : i32
    %497 = tpu.memref_slice %arg4[%c0_i32_253, %c0_i32_254, %c0_i32_255] : memref<1x1x2464xf32, #tpu.memory_space<vmem>> -> memref<1x1x2464xf32, #tpu.memory_space<vmem>>
    %498 = tpu.memref_squeeze %497 : memref<1x1x2464xf32, #tpu.memory_space<vmem>> -> memref<1x2464xf32, #tpu.memory_space<vmem>>
    %c0_256 = arith.constant 0 : index
    %c512_257 = arith.constant 512 : index
    %499 = vector.load %498[%c0_256, %c512_257] : memref<1x2464xf32, #tpu.memory_space<vmem>>, vector<1x256xf32>
    %500 = vector.broadcast %499 : vector<1x256xf32> to vector<64x256xf32>
    %501 = arith.addf %496, %500 : vector<64x256xf32>
    %cst_258 = arith.constant 0.000000e+00 : f32
    %502 = vector.broadcast %cst_258 : f32 to vector<64x256xf32>
    %503 = arith.maximumf %501, %502 : vector<64x256xf32>
    %504 = arith.truncf %503 : vector<64x256xf32> to vector<64x256xbf16>
    %c0_i32_259 = arith.constant 0 : i32
    %c1_i32_260 = arith.constant 1 : i32
    %c0_i32_261 = arith.constant 0 : i32
    %c0_i32_262 = arith.constant 0 : i32
    %505 = tpu.memref_slice %arg5[%c0_i32_259, %c1_i32_260, %c0_i32_261, %c0_i32_262] : memref<1x2x32x2048xbf16, #tpu.memory_space<vmem>> -> memref<1x1x32x2048xbf16, #tpu.memory_space<vmem>>
    %506 = tpu.memref_squeeze %505 : memref<1x1x32x2048xbf16, #tpu.memory_space<vmem>> -> memref<32x2048xbf16, #tpu.memory_space<vmem>>
    %c0_263 = arith.constant 0 : index
    %c512_264 = arith.constant 512 : index
    %507 = vector.load %506[%c0_263, %c512_264] : memref<32x2048xbf16, #tpu.memory_space<vmem>>, vector<32x256xbf16>
    %cst_265 = arith.constant dense<0.000000e+00> : vector<64x32xf32>
    %508 = tpu.matmul %504, %507, %cst_265 {dimension_numbers = #tpu.dot_dimension_numbers<[1], [1], [0], [0], [0, 0, 1, 0], [], []>} : vector<64x256xbf16>, vector<32x256xbf16>, vector<64x32xf32> -> vector<64x32xf32>
    %509 = arith.addf %492, %508 : vector<64x32xf32>
    %c0_i32_266 = arith.constant 0 : i32
    %c0_i32_267 = arith.constant 0 : i32
    %c0_i32_268 = arith.constant 0 : i32
    %c0_i32_269 = arith.constant 0 : i32
    %510 = tpu.memref_slice %arg5[%c0_i32_266, %c0_i32_267, %c0_i32_268, %c0_i32_269] : memref<1x2x32x2048xbf16, #tpu.memory_space<vmem>> -> memref<1x1x32x2048xbf16, #tpu.memory_space<vmem>>
    %511 = tpu.memref_squeeze %510 : memref<1x1x32x2048xbf16, #tpu.memory_space<vmem>> -> memref<32x2048xbf16, #tpu.memory_space<vmem>>
    %c0_270 = arith.constant 0 : index
    %c768 = arith.constant 768 : index
    %512 = vector.load %511[%c0_270, %c768] : memref<32x2048xbf16, #tpu.memory_space<vmem>>, vector<32x256xbf16>
    %cst_271 = arith.constant dense<0.000000e+00> : vector<64x256xf32>
    %513 = tpu.matmul %457, %512, %cst_271 {dimension_numbers = #tpu.dot_dimension_numbers<[1], [0], [0], [1], [0, 0, 1, 1], [], []>} : vector<64x32xbf16>, vector<32x256xbf16>, vector<64x256xf32> -> vector<64x256xf32>
    %c0_i32_272 = arith.constant 0 : i32
    %c0_i32_273 = arith.constant 0 : i32
    %c0_i32_274 = arith.constant 0 : i32
    %514 = tpu.memref_slice %arg4[%c0_i32_272, %c0_i32_273, %c0_i32_274] : memref<1x1x2464xf32, #tpu.memory_space<vmem>> -> memref<1x1x2464xf32, #tpu.memory_space<vmem>>
    %515 = tpu.memref_squeeze %514 : memref<1x1x2464xf32, #tpu.memory_space<vmem>> -> memref<1x2464xf32, #tpu.memory_space<vmem>>
    %c0_275 = arith.constant 0 : index
    %c768_276 = arith.constant 768 : index
    %516 = vector.load %515[%c0_275, %c768_276] : memref<1x2464xf32, #tpu.memory_space<vmem>>, vector<1x256xf32>
    %517 = vector.broadcast %516 : vector<1x256xf32> to vector<64x256xf32>
    %518 = arith.addf %513, %517 : vector<64x256xf32>
    %cst_277 = arith.constant 0.000000e+00 : f32
    %519 = vector.broadcast %cst_277 : f32 to vector<64x256xf32>
    %520 = arith.maximumf %518, %519 : vector<64x256xf32>
    %521 = arith.truncf %520 : vector<64x256xf32> to vector<64x256xbf16>
    %c0_i32_278 = arith.constant 0 : i32
    %c1_i32_279 = arith.constant 1 : i32
    %c0_i32_280 = arith.constant 0 : i32
    %c0_i32_281 = arith.constant 0 : i32
    %522 = tpu.memref_slice %arg5[%c0_i32_278, %c1_i32_279, %c0_i32_280, %c0_i32_281] : memref<1x2x32x2048xbf16, #tpu.memory_space<vmem>> -> memref<1x1x32x2048xbf16, #tpu.memory_space<vmem>>
    %523 = tpu.memref_squeeze %522 : memref<1x1x32x2048xbf16, #tpu.memory_space<vmem>> -> memref<32x2048xbf16, #tpu.memory_space<vmem>>
    %c0_282 = arith.constant 0 : index
    %c768_283 = arith.constant 768 : index
    %524 = vector.load %523[%c0_282, %c768_283] : memref<32x2048xbf16, #tpu.memory_space<vmem>>, vector<32x256xbf16>
    %cst_284 = arith.constant dense<0.000000e+00> : vector<64x32xf32>
    %525 = tpu.matmul %521, %524, %cst_284 {dimension_numbers = #tpu.dot_dimension_numbers<[1], [1], [0], [0], [0, 0, 1, 0], [], []>} : vector<64x256xbf16>, vector<32x256xbf16>, vector<64x32xf32> -> vector<64x32xf32>
    %526 = arith.addf %509, %525 : vector<64x32xf32>
    %c0_i32_285 = arith.constant 0 : i32
    %c0_i32_286 = arith.constant 0 : i32
    %c0_i32_287 = arith.constant 0 : i32
    %c0_i32_288 = arith.constant 0 : i32
    %527 = tpu.memref_slice %arg5[%c0_i32_285, %c0_i32_286, %c0_i32_287, %c0_i32_288] : memref<1x2x32x2048xbf16, #tpu.memory_space<vmem>> -> memref<1x1x32x2048xbf16, #tpu.memory_space<vmem>>
    %528 = tpu.memref_squeeze %527 : memref<1x1x32x2048xbf16, #tpu.memory_space<vmem>> -> memref<32x2048xbf16, #tpu.memory_space<vmem>>
    %c0_289 = arith.constant 0 : index
    %c1024 = arith.constant 1024 : index
    %529 = vector.load %528[%c0_289, %c1024] : memref<32x2048xbf16, #tpu.memory_space<vmem>>, vector<32x256xbf16>
    %cst_290 = arith.constant dense<0.000000e+00> : vector<64x256xf32>
    %530 = tpu.matmul %457, %529, %cst_290 {dimension_numbers = #tpu.dot_dimension_numbers<[1], [0], [0], [1], [0, 0, 1, 1], [], []>} : vector<64x32xbf16>, vector<32x256xbf16>, vector<64x256xf32> -> vector<64x256xf32>
    %c0_i32_291 = arith.constant 0 : i32
    %c0_i32_292 = arith.constant 0 : i32
    %c0_i32_293 = arith.constant 0 : i32
    %531 = tpu.memref_slice %arg4[%c0_i32_291, %c0_i32_292, %c0_i32_293] : memref<1x1x2464xf32, #tpu.memory_space<vmem>> -> memref<1x1x2464xf32, #tpu.memory_space<vmem>>
    %532 = tpu.memref_squeeze %531 : memref<1x1x2464xf32, #tpu.memory_space<vmem>> -> memref<1x2464xf32, #tpu.memory_space<vmem>>
    %c0_294 = arith.constant 0 : index
    %c1024_295 = arith.constant 1024 : index
    %533 = vector.load %532[%c0_294, %c1024_295] : memref<1x2464xf32, #tpu.memory_space<vmem>>, vector<1x256xf32>
    %534 = vector.broadcast %533 : vector<1x256xf32> to vector<64x256xf32>
    %535 = arith.addf %530, %534 : vector<64x256xf32>
    %cst_296 = arith.constant 0.000000e+00 : f32
    %536 = vector.broadcast %cst_296 : f32 to vector<64x256xf32>
    %537 = arith.maximumf %535, %536 : vector<64x256xf32>
    %538 = arith.truncf %537 : vector<64x256xf32> to vector<64x256xbf16>
    %c0_i32_297 = arith.constant 0 : i32
    %c1_i32_298 = arith.constant 1 : i32
    %c0_i32_299 = arith.constant 0 : i32
    %c0_i32_300 = arith.constant 0 : i32
    %539 = tpu.memref_slice %arg5[%c0_i32_297, %c1_i32_298, %c0_i32_299, %c0_i32_300] : memref<1x2x32x2048xbf16, #tpu.memory_space<vmem>> -> memref<1x1x32x2048xbf16, #tpu.memory_space<vmem>>
    %540 = tpu.memref_squeeze %539 : memref<1x1x32x2048xbf16, #tpu.memory_space<vmem>> -> memref<32x2048xbf16, #tpu.memory_space<vmem>>
    %c0_301 = arith.constant 0 : index
    %c1024_302 = arith.constant 1024 : index
    %541 = vector.load %540[%c0_301, %c1024_302] : memref<32x2048xbf16, #tpu.memory_space<vmem>>, vector<32x256xbf16>
    %cst_303 = arith.constant dense<0.000000e+00> : vector<64x32xf32>
    %542 = tpu.matmul %538, %541, %cst_303 {dimension_numbers = #tpu.dot_dimension_numbers<[1], [1], [0], [0], [0, 0, 1, 0], [], []>} : vector<64x256xbf16>, vector<32x256xbf16>, vector<64x32xf32> -> vector<64x32xf32>
    %543 = arith.addf %526, %542 : vector<64x32xf32>
    %c0_i32_304 = arith.constant 0 : i32
    %c0_i32_305 = arith.constant 0 : i32
    %c0_i32_306 = arith.constant 0 : i32
    %c0_i32_307 = arith.constant 0 : i32
    %544 = tpu.memref_slice %arg5[%c0_i32_304, %c0_i32_305, %c0_i32_306, %c0_i32_307] : memref<1x2x32x2048xbf16, #tpu.memory_space<vmem>> -> memref<1x1x32x2048xbf16, #tpu.memory_space<vmem>>
    %545 = tpu.memref_squeeze %544 : memref<1x1x32x2048xbf16, #tpu.memory_space<vmem>> -> memref<32x2048xbf16, #tpu.memory_space<vmem>>
    %c0_308 = arith.constant 0 : index
    %c1280 = arith.constant 1280 : index
    %546 = vector.load %545[%c0_308, %c1280] : memref<32x2048xbf16, #tpu.memory_space<vmem>>, vector<32x256xbf16>
    %cst_309 = arith.constant dense<0.000000e+00> : vector<64x256xf32>
    %547 = tpu.matmul %457, %546, %cst_309 {dimension_numbers = #tpu.dot_dimension_numbers<[1], [0], [0], [1], [0, 0, 1, 1], [], []>} : vector<64x32xbf16>, vector<32x256xbf16>, vector<64x256xf32> -> vector<64x256xf32>
    %c0_i32_310 = arith.constant 0 : i32
    %c0_i32_311 = arith.constant 0 : i32
    %c0_i32_312 = arith.constant 0 : i32
    %548 = tpu.memref_slice %arg4[%c0_i32_310, %c0_i32_311, %c0_i32_312] : memref<1x1x2464xf32, #tpu.memory_space<vmem>> -> memref<1x1x2464xf32, #tpu.memory_space<vmem>>
    %549 = tpu.memref_squeeze %548 : memref<1x1x2464xf32, #tpu.memory_space<vmem>> -> memref<1x2464xf32, #tpu.memory_space<vmem>>
    %c0_313 = arith.constant 0 : index
    %c1280_314 = arith.constant 1280 : index
    %550 = vector.load %549[%c0_313, %c1280_314] : memref<1x2464xf32, #tpu.memory_space<vmem>>, vector<1x256xf32>
    %551 = vector.broadcast %550 : vector<1x256xf32> to vector<64x256xf32>
    %552 = arith.addf %547, %551 : vector<64x256xf32>
    %cst_315 = arith.constant 0.000000e+00 : f32
    %553 = vector.broadcast %cst_315 : f32 to vector<64x256xf32>
    %554 = arith.maximumf %552, %553 : vector<64x256xf32>
    %555 = arith.truncf %554 : vector<64x256xf32> to vector<64x256xbf16>
    %c0_i32_316 = arith.constant 0 : i32
    %c1_i32_317 = arith.constant 1 : i32
    %c0_i32_318 = arith.constant 0 : i32
    %c0_i32_319 = arith.constant 0 : i32
    %556 = tpu.memref_slice %arg5[%c0_i32_316, %c1_i32_317, %c0_i32_318, %c0_i32_319] : memref<1x2x32x2048xbf16, #tpu.memory_space<vmem>> -> memref<1x1x32x2048xbf16, #tpu.memory_space<vmem>>
    %557 = tpu.memref_squeeze %556 : memref<1x1x32x2048xbf16, #tpu.memory_space<vmem>> -> memref<32x2048xbf16, #tpu.memory_space<vmem>>
    %c0_320 = arith.constant 0 : index
    %c1280_321 = arith.constant 1280 : index
    %558 = vector.load %557[%c0_320, %c1280_321] : memref<32x2048xbf16, #tpu.memory_space<vmem>>, vector<32x256xbf16>
    %cst_322 = arith.constant dense<0.000000e+00> : vector<64x32xf32>
    %559 = tpu.matmul %555, %558, %cst_322 {dimension_numbers = #tpu.dot_dimension_numbers<[1], [1], [0], [0], [0, 0, 1, 0], [], []>} : vector<64x256xbf16>, vector<32x256xbf16>, vector<64x32xf32> -> vector<64x32xf32>
    %560 = arith.addf %543, %559 : vector<64x32xf32>
    %c0_i32_323 = arith.constant 0 : i32
    %c0_i32_324 = arith.constant 0 : i32
    %c0_i32_325 = arith.constant 0 : i32
    %c0_i32_326 = arith.constant 0 : i32
    %561 = tpu.memref_slice %arg5[%c0_i32_323, %c0_i32_324, %c0_i32_325, %c0_i32_326] : memref<1x2x32x2048xbf16, #tpu.memory_space<vmem>> -> memref<1x1x32x2048xbf16, #tpu.memory_space<vmem>>
    %562 = tpu.memref_squeeze %561 : memref<1x1x32x2048xbf16, #tpu.memory_space<vmem>> -> memref<32x2048xbf16, #tpu.memory_space<vmem>>
    %c0_327 = arith.constant 0 : index
    %c1536 = arith.constant 1536 : index
    %563 = vector.load %562[%c0_327, %c1536] : memref<32x2048xbf16, #tpu.memory_space<vmem>>, vector<32x256xbf16>
    %cst_328 = arith.constant dense<0.000000e+00> : vector<64x256xf32>
    %564 = tpu.matmul %457, %563, %cst_328 {dimension_numbers = #tpu.dot_dimension_numbers<[1], [0], [0], [1], [0, 0, 1, 1], [], []>} : vector<64x32xbf16>, vector<32x256xbf16>, vector<64x256xf32> -> vector<64x256xf32>
    %c0_i32_329 = arith.constant 0 : i32
    %c0_i32_330 = arith.constant 0 : i32
    %c0_i32_331 = arith.constant 0 : i32
    %565 = tpu.memref_slice %arg4[%c0_i32_329, %c0_i32_330, %c0_i32_331] : memref<1x1x2464xf32, #tpu.memory_space<vmem>> -> memref<1x1x2464xf32, #tpu.memory_space<vmem>>
    %566 = tpu.memref_squeeze %565 : memref<1x1x2464xf32, #tpu.memory_space<vmem>> -> memref<1x2464xf32, #tpu.memory_space<vmem>>
    %c0_332 = arith.constant 0 : index
    %c1536_333 = arith.constant 1536 : index
    %567 = vector.load %566[%c0_332, %c1536_333] : memref<1x2464xf32, #tpu.memory_space<vmem>>, vector<1x256xf32>
    %568 = vector.broadcast %567 : vector<1x256xf32> to vector<64x256xf32>
    %569 = arith.addf %564, %568 : vector<64x256xf32>
    %cst_334 = arith.constant 0.000000e+00 : f32
    %570 = vector.broadcast %cst_334 : f32 to vector<64x256xf32>
    %571 = arith.maximumf %569, %570 : vector<64x256xf32>
    %572 = arith.truncf %571 : vector<64x256xf32> to vector<64x256xbf16>
    %c0_i32_335 = arith.constant 0 : i32
    %c1_i32_336 = arith.constant 1 : i32
    %c0_i32_337 = arith.constant 0 : i32
    %c0_i32_338 = arith.constant 0 : i32
    %573 = tpu.memref_slice %arg5[%c0_i32_335, %c1_i32_336, %c0_i32_337, %c0_i32_338] : memref<1x2x32x2048xbf16, #tpu.memory_space<vmem>> -> memref<1x1x32x2048xbf16, #tpu.memory_space<vmem>>
    %574 = tpu.memref_squeeze %573 : memref<1x1x32x2048xbf16, #tpu.memory_space<vmem>> -> memref<32x2048xbf16, #tpu.memory_space<vmem>>
    %c0_339 = arith.constant 0 : index
    %c1536_340 = arith.constant 1536 : index
    %575 = vector.load %574[%c0_339, %c1536_340] : memref<32x2048xbf16, #tpu.memory_space<vmem>>, vector<32x256xbf16>
    %cst_341 = arith.constant dense<0.000000e+00> : vector<64x32xf32>
    %576 = tpu.matmul %572, %575, %cst_341 {dimension_numbers = #tpu.dot_dimension_numbers<[1], [1], [0], [0], [0, 0, 1, 0], [], []>} : vector<64x256xbf16>, vector<32x256xbf16>, vector<64x32xf32> -> vector<64x32xf32>
    %577 = arith.addf %560, %576 : vector<64x32xf32>
    %c0_i32_342 = arith.constant 0 : i32
    %c0_i32_343 = arith.constant 0 : i32
    %c0_i32_344 = arith.constant 0 : i32
    %c0_i32_345 = arith.constant 0 : i32
    %578 = tpu.memref_slice %arg5[%c0_i32_342, %c0_i32_343, %c0_i32_344, %c0_i32_345] : memref<1x2x32x2048xbf16, #tpu.memory_space<vmem>> -> memref<1x1x32x2048xbf16, #tpu.memory_space<vmem>>
    %579 = tpu.memref_squeeze %578 : memref<1x1x32x2048xbf16, #tpu.memory_space<vmem>> -> memref<32x2048xbf16, #tpu.memory_space<vmem>>
    %c0_346 = arith.constant 0 : index
    %c1792 = arith.constant 1792 : index
    %580 = vector.load %579[%c0_346, %c1792] : memref<32x2048xbf16, #tpu.memory_space<vmem>>, vector<32x256xbf16>
    %cst_347 = arith.constant dense<0.000000e+00> : vector<64x256xf32>
    %581 = tpu.matmul %457, %580, %cst_347 {dimension_numbers = #tpu.dot_dimension_numbers<[1], [0], [0], [1], [0, 0, 1, 1], [], []>} : vector<64x32xbf16>, vector<32x256xbf16>, vector<64x256xf32> -> vector<64x256xf32>
    %c0_i32_348 = arith.constant 0 : i32
    %c0_i32_349 = arith.constant 0 : i32
    %c0_i32_350 = arith.constant 0 : i32
    %582 = tpu.memref_slice %arg4[%c0_i32_348, %c0_i32_349, %c0_i32_350] : memref<1x1x2464xf32, #tpu.memory_space<vmem>> -> memref<1x1x2464xf32, #tpu.memory_space<vmem>>
    %583 = tpu.memref_squeeze %582 : memref<1x1x2464xf32, #tpu.memory_space<vmem>> -> memref<1x2464xf32, #tpu.memory_space<vmem>>
    %c0_351 = arith.constant 0 : index
    %c1792_352 = arith.constant 1792 : index
    %584 = vector.load %583[%c0_351, %c1792_352] : memref<1x2464xf32, #tpu.memory_space<vmem>>, vector<1x256xf32>
    %585 = vector.broadcast %584 : vector<1x256xf32> to vector<64x256xf32>
    %586 = arith.addf %581, %585 : vector<64x256xf32>
    %cst_353 = arith.constant 0.000000e+00 : f32
    %587 = vector.broadcast %cst_353 : f32 to vector<64x256xf32>
    %588 = arith.maximumf %586, %587 : vector<64x256xf32>
    %589 = arith.truncf %588 : vector<64x256xf32> to vector<64x256xbf16>
    %c0_i32_354 = arith.constant 0 : i32
    %c1_i32_355 = arith.constant 1 : i32
    %c0_i32_356 = arith.constant 0 : i32
    %c0_i32_357 = arith.constant 0 : i32
    %590 = tpu.memref_slice %arg5[%c0_i32_354, %c1_i32_355, %c0_i32_356, %c0_i32_357] : memref<1x2x32x2048xbf16, #tpu.memory_space<vmem>> -> memref<1x1x32x2048xbf16, #tpu.memory_space<vmem>>
    %591 = tpu.memref_squeeze %590 : memref<1x1x32x2048xbf16, #tpu.memory_space<vmem>> -> memref<32x2048xbf16, #tpu.memory_space<vmem>>
    %c0_358 = arith.constant 0 : index
    %c1792_359 = arith.constant 1792 : index
    %592 = vector.load %591[%c0_358, %c1792_359] : memref<32x2048xbf16, #tpu.memory_space<vmem>>, vector<32x256xbf16>
    %cst_360 = arith.constant dense<0.000000e+00> : vector<64x32xf32>
    %593 = tpu.matmul %589, %592, %cst_360 {dimension_numbers = #tpu.dot_dimension_numbers<[1], [1], [0], [0], [0, 0, 1, 0], [], []>} : vector<64x256xbf16>, vector<32x256xbf16>, vector<64x32xf32> -> vector<64x32xf32>
    %594 = arith.addf %577, %593 : vector<64x32xf32>
    %595 = arith.addf %456, %594 : vector<64x32xf32>
    %c0_i32_361 = arith.constant 0 : i32
    %c0_i32_362 = arith.constant 0 : i32
    %c0_i32_363 = arith.constant 0 : i32
    %596 = tpu.memref_slice %arg4[%c0_i32_361, %c0_i32_362, %c0_i32_363] : memref<1x1x2464xf32, #tpu.memory_space<vmem>> -> memref<1x1x2464xf32, #tpu.memory_space<vmem>>
    %597 = tpu.memref_squeeze %596 : memref<1x1x2464xf32, #tpu.memory_space<vmem>> -> memref<1x2464xf32, #tpu.memory_space<vmem>>
    %c0_364 = arith.constant 0 : index
    %c2304 = arith.constant 2304 : index
    %598 = vector.load %597[%c0_364, %c2304] : memref<1x2464xf32, #tpu.memory_space<vmem>>, vector<1x32xf32>
    %599 = vector.broadcast %598 : vector<1x32xf32> to vector<64x32xf32>
    %600 = arith.addf %595, %599 : vector<64x32xf32>
    %c0_i32_365 = arith.constant 0 : i32
    %c0_i32_366 = arith.constant 0 : i32
    %c0_i32_367 = arith.constant 0 : i32
    %601 = tpu.memref_slice %arg4[%c0_i32_365, %c0_i32_366, %c0_i32_367] : memref<1x1x2464xf32, #tpu.memory_space<vmem>> -> memref<1x1x2464xf32, #tpu.memory_space<vmem>>
    %602 = tpu.memref_squeeze %601 : memref<1x1x2464xf32, #tpu.memory_space<vmem>> -> memref<1x2464xf32, #tpu.memory_space<vmem>>
    %c0_368 = arith.constant 0 : index
    %c2400 = arith.constant 2400 : index
    %603 = vector.load %602[%c0_368, %c2400] : memref<1x2464xf32, #tpu.memory_space<vmem>>, vector<1x32xf32>
    %c0_i32_369 = arith.constant 0 : i32
    %c0_i32_370 = arith.constant 0 : i32
    %c0_i32_371 = arith.constant 0 : i32
    %604 = tpu.memref_slice %arg4[%c0_i32_369, %c0_i32_370, %c0_i32_371] : memref<1x1x2464xf32, #tpu.memory_space<vmem>> -> memref<1x1x2464xf32, #tpu.memory_space<vmem>>
    %605 = tpu.memref_squeeze %604 : memref<1x1x2464xf32, #tpu.memory_space<vmem>> -> memref<1x2464xf32, #tpu.memory_space<vmem>>
    %c0_372 = arith.constant 0 : index
    %c2432 = arith.constant 2432 : index
    %606 = vector.load %605[%c0_372, %c2432] : memref<1x2464xf32, #tpu.memory_space<vmem>>, vector<1x32xf32>
    %cst_373 = arith.constant dense<0.000000e+00> : vector<64xf32>
    %607 = vector.multi_reduction <add>, %600, %cst_373 [1] : vector<64x32xf32> to vector<64xf32>
    %608 = vector.shape_cast %607 : vector<64xf32> to vector<64x1xf32>
    %cst_374 = arith.constant 3.200000e+01 : f32
    %609 = vector.broadcast %cst_374 : f32 to vector<64x1xf32>
    %610 = arith.divf %608, %609 : vector<64x1xf32>
    %611 = vector.broadcast %610 : vector<64x1xf32> to vector<64x32xf32>
    %612 = arith.subf %600, %611 : vector<64x32xf32>
    %613 = arith.mulf %612, %612 : vector<64x32xf32>
    %cst_375 = arith.constant dense<0.000000e+00> : vector<64xf32>
    %614 = vector.multi_reduction <add>, %613, %cst_375 [1] : vector<64x32xf32> to vector<64xf32>
    %615 = vector.shape_cast %614 : vector<64xf32> to vector<64x1xf32>
    %cst_376 = arith.constant 3.200000e+01 : f32
    %616 = vector.broadcast %cst_376 : f32 to vector<64x1xf32>
    %617 = arith.divf %615, %616 : vector<64x1xf32>
    %618 = vector.broadcast %610 : vector<64x1xf32> to vector<64x32xf32>
    %619 = arith.subf %600, %618 : vector<64x32xf32>
    %cst_377 = arith.constant 9.99999974E-6 : f32
    %620 = vector.broadcast %cst_377 : f32 to vector<64x1xf32>
    %621 = arith.addf %617, %620 : vector<64x1xf32>
    %622 = math.rsqrt %621 : vector<64x1xf32>
    %623 = vector.broadcast %622 : vector<64x1xf32> to vector<64x32xf32>
    %624 = arith.mulf %619, %623 : vector<64x32xf32>
    %625 = vector.broadcast %603 : vector<1x32xf32> to vector<64x32xf32>
    %626 = arith.mulf %624, %625 : vector<64x32xf32>
    %627 = vector.broadcast %606 : vector<1x32xf32> to vector<64x32xf32>
    %628 = arith.addf %626, %627 : vector<64x32xf32>
    %c0_378 = arith.constant 0 : index
    %c0_379 = arith.constant 0 : index
    %629 = vector.load %arg9[%c0_378, %c0_379] : memref<64x32xf32, #tpu.memory_space<vmem>>, vector<64x32xf32>
    tpu.vector_store %arg9[%c0_378, %c0_379], %628 {strides = array<i32>} : memref<64x32xf32, #tpu.memory_space<vmem>>, vector<64x32xf32>,
    %c2_i32 = arith.constant 2 : i32
    %630 = arith.cmpi eq, %arg0, %c2_i32 : i32
    %631 = arith.extui %630 : i1 to i32
    %c0_i32_380 = arith.constant 0 : i32
    %632 = arith.cmpi ne, %631, %c0_i32_380 : i32
    scf.if %632 {
      %633 = tpu.iota {dimensions = array<i32: 0>} : vector<8x64xi32>
      %634 = tpu.iota {dimensions = array<i32: 1>} : vector<8x64xi32>
      %c8_i32 = arith.constant 8 : i32
      %635 = vector.broadcast %c8_i32 : i32 to vector<8x64xi32>
      %636 = arith.muli %633, %635 : vector<8x64xi32>
      %c3_i32 = arith.constant 3 : i32
      %637 = vector.broadcast %c3_i32 : i32 to vector<8x64xi32>
      %638 = arith.addi %636, %637 : vector<8x64xi32>
      %639 = arith.cmpi eq, %634, %638 : vector<8x64xi32>
      %cst_381 = arith.constant 1.000000e+00 : f32
      %cst_382 = arith.constant 0.000000e+00 : f32
      %640 = vector.broadcast %cst_381 : f32 to vector<8x64xf32>
      %641 = vector.broadcast %cst_382 : f32 to vector<8x64xf32>
      %642 = arith.select %639, %640, %641 : vector<8x64xi1>, vector<8x64xf32>
      %cst_383 = arith.constant dense<0.000000e+00> : vector<8x32xf32>
      %643 = tpu.matmul %642, %628, %cst_383 {dimension_numbers = #tpu.dot_dimension_numbers<[1], [0], [0], [1], [0, 0, 1, 1], [], []>} : vector<8x64xf32>, vector<64x32xf32>, vector<8x32xf32> -> vector<8x32xf32>
      %cst_384 = arith.constant 1.000000e+00 : f32
      %644 = vector.broadcast %cst_384 : f32 to vector<8x1xf32>
      %c0_385 = arith.constant 0 : index
      %c0_386 = arith.constant 0 : index
      %645 = vector.load %arg2[%c0_385, %c0_386] : memref<8x4xf32, #tpu.memory_space<vmem>>, vector<8x4xf32>
      %646 = tpu.concatenate %643, %645, %644 in 1 : vector<8x32xf32>, vector<8x4xf32>, vector<8x1xf32> -> vector<8x37xf32>
      %c0_387 = arith.constant 0 : index
      %c0_388 = arith.constant 0 : index
      %647 = vector.load %arg6[%c0_387, %c0_388] : memref<37x192xf32, #tpu.memory_space<vmem>>, vector<37x192xf32>
      %cst_389 = arith.constant dense<0.000000e+00> : vector<8x192xf32>
      %648 = tpu.matmul %646, %647, %cst_389 {dimension_numbers = #tpu.dot_dimension_numbers<[1], [0], [0], [1], [0, 0, 1, 1], [], []>} : vector<8x37xf32>, vector<37x192xf32>, vector<8x192xf32> -> vector<8x192xf32>
      %cst_390 = arith.constant 0.000000e+00 : f32
      %649 = vector.broadcast %cst_390 : f32 to vector<8x192xf32>
      %650 = arith.cmpf oge, %648, %649 : vector<8x192xf32>
      %cst_391 = arith.constant 0.00999999977 : f32
      %651 = vector.broadcast %cst_391 : f32 to vector<8x192xf32>
      %652 = arith.mulf %651, %648 : vector<8x192xf32>
      %653 = arith.select %650, %648, %652 : vector<8x192xi1>, vector<8x192xf32>
      %c0_392 = arith.constant 0 : index
      %c0_393 = arith.constant 0 : index
      %654 = vector.load %arg7[%c0_392, %c0_393] : memref<251x56xf32, #tpu.memory_space<vmem>>, vector<193x56xf32>
      %c193 = arith.constant 193 : index
      %c0_394 = arith.constant 0 : index
      %655 = vector.load %arg7[%c193, %c0_394] : memref<251x56xf32, #tpu.memory_space<vmem>>, vector<41x17xf32>
      %c234 = arith.constant 234 : index
      %c0_395 = arith.constant 0 : index
      %656 = vector.load %arg7[%c234, %c0_395] : memref<251x56xf32, #tpu.memory_space<vmem>>, vector<17x4xf32>
      %657 = tpu.concatenate %653, %644 in 1 : vector<8x192xf32>, vector<8x1xf32> -> vector<8x193xf32>
      %cst_396 = arith.constant dense<0.000000e+00> : vector<8x56xf32>
      %658 = tpu.matmul %657, %654, %cst_396 {dimension_numbers = #tpu.dot_dimension_numbers<[1], [0], [0], [1], [0, 0, 1, 1], [], []>} : vector<8x193xf32>, vector<193x56xf32>, vector<8x56xf32> -> vector<8x56xf32>
      %659 = vector.extract_strided_slice %658 {offsets = [0, 0], sizes = [8, 40], strides = [1, 1]} : vector<8x56xf32> to vector<8x40xf32>
      %cst_397 = arith.constant 0.000000e+00 : f32
      %660 = vector.broadcast %cst_397 : f32 to vector<8x40xf32>
      %661 = arith.cmpf oge, %659, %660 : vector<8x40xf32>
      %cst_398 = arith.constant 0.00999999977 : f32
      %662 = vector.broadcast %cst_398 : f32 to vector<8x40xf32>
      %663 = arith.mulf %662, %659 : vector<8x40xf32>
      %664 = arith.select %661, %659, %663 : vector<8x40xi1>, vector<8x40xf32>
      %665 = tpu.concatenate %664, %644 in 1 : vector<8x40xf32>, vector<8x1xf32> -> vector<8x41xf32>
      %cst_399 = arith.constant dense<0.000000e+00> : vector<8x17xf32>
      %666 = tpu.matmul %665, %655, %cst_399 {dimension_numbers = #tpu.dot_dimension_numbers<[1], [0], [0], [1], [0, 0, 1, 1], [], []>} : vector<8x41xf32>, vector<41x17xf32>, vector<8x17xf32> -> vector<8x17xf32>
      %667 = vector.extract_strided_slice %666 {offsets = [0, 0], sizes = [8, 16], strides = [1, 1]} : vector<8x17xf32> to vector<8x16xf32>
      %cst_400 = arith.constant 0.000000e+00 : f32
      %668 = vector.broadcast %cst_400 : f32 to vector<8x16xf32>
      %669 = arith.cmpf oge, %667, %668 : vector<8x16xf32>
      %cst_401 = arith.constant 0.00999999977 : f32
      %670 = vector.broadcast %cst_401 : f32 to vector<8x16xf32>
      %671 = arith.mulf %670, %667 : vector<8x16xf32>
      %672 = arith.select %669, %667, %671 : vector<8x16xi1>, vector<8x16xf32>
      %673 = tpu.concatenate %672, %644 in 1 : vector<8x16xf32>, vector<8x1xf32> -> vector<8x17xf32>
      %cst_402 = arith.constant dense<0.000000e+00> : vector<8x4xf32>
      %674 = tpu.matmul %673, %656, %cst_402 {dimension_numbers = #tpu.dot_dimension_numbers<[1], [0], [0], [1], [0, 0, 1, 1], [], []>} : vector<8x17xf32>, vector<17x4xf32>, vector<8x4xf32> -> vector<8x4xf32>
      %cst_403 = arith.constant dense<0xFF800000> : vector<8xf32>
      %675 = vector.multi_reduction <maximumf>, %674, %cst_403 [1] : vector<8x4xf32> to vector<8xf32>
      %676 = vector.shape_cast %675 : vector<8xf32> to vector<8x1xf32>
      %677 = vector.broadcast %676 : vector<8x1xf32> to vector<8x4xf32>
      %678 = arith.subf %674, %677 : vector<8x4xf32>
      %679 = math.exp %678 : vector<8x4xf32>
      %cst_404 = arith.constant dense<0.000000e+00> : vector<8xf32>
      %680 = vector.multi_reduction <add>, %679, %cst_404 [1] : vector<8x4xf32> to vector<8xf32>
      %681 = vector.shape_cast %680 : vector<8xf32> to vector<8x1xf32>
      %682 = vector.broadcast %681 : vector<8x1xf32> to vector<8x4xf32>
      %683 = arith.divf %679, %682 : vector<8x4xf32>
      %684 = vector.extract_strided_slice %658 {offsets = [0, 40], sizes = [8, 16], strides = [1, 1]} : vector<8x56xf32> to vector<8x16xf32>
      %685 = vector.extract_strided_slice %666 {offsets = [0, 16], sizes = [8, 1], strides = [1, 1]} : vector<8x17xf32> to vector<8x1xf32>
      %cst_405 = arith.constant 0.000000e+00 : f32
      %686 = vector.broadcast %cst_405 : f32 to vector<8x107xf32>
      %687 = tpu.concatenate %683, %684, %685, %686 in 1 : vector<8x4xf32>, vector<8x16xf32>, vector<8x1xf32>, vector<8x107xf32> -> vector<8x128xf32>
      %c0_406 = arith.constant 0 : index
      %c0_407 = arith.constant 0 : index
      %688 = vector.load %arg8[%c0_406, %c0_407] : memref<8x128xf32, #tpu.memory_space<vmem>>, vector<8x128xf32>
      tpu.vector_store %arg8[%c0_406, %c0_407], %687 {strides = array<i32>} : memref<8x128xf32, #tpu.memory_space<vmem>>, vector<8x128xf32>,
    } else {
    }
    return
  }
  func.func @transform_0(%arg0: i32) -> (i32, i32) {
    %c0_i32 = arith.constant 0 : i32
    %c0_i32_0 = arith.constant 0 : i32
    %c0_i32_1 = arith.constant 0 : i32
    return %c0_i32, %c0_i32_0 : i32, i32
  }
  func.func @transform_1(%arg0: i32) -> (i32, i32) {
    %c0_i32 = arith.constant 0 : i32
    %c0_i32_0 = arith.constant 0 : i32
    %c0_i32_1 = arith.constant 0 : i32
    return %c0_i32, %c0_i32_0 : i32, i32
  }
  func.func @transform_2(%arg0: i32) -> (i32, i32, i32) {
    %c0_i32 = arith.constant 0 : i32
    %c0_i32_0 = arith.constant 0 : i32
    %c0_i32_1 = arith.constant 0 : i32
    return %arg0, %c0_i32, %c0_i32_0 : i32, i32, i32
  }
  func.func @transform_3(%arg0: i32) -> (i32, i32, i32) {
    %c0_i32 = arith.constant 0 : i32
    %c0_i32_0 = arith.constant 0 : i32
    %c0_i32_1 = arith.constant 0 : i32
    return %arg0, %c0_i32, %c0_i32_0 : i32, i32, i32
  }
  func.func @transform_4(%arg0: i32) -> (i32, i32, i32, i32) {
    %c0_i32 = arith.constant 0 : i32
    %c0_i32_0 = arith.constant 0 : i32
    %c0_i32_1 = arith.constant 0 : i32
    %c0_i32_2 = arith.constant 0 : i32
    return %arg0, %c0_i32, %c0_i32_0, %c0_i32_1 : i32, i32, i32, i32
  }
  func.func @transform_5(%arg0: i32) -> (i32, i32) {
    %c0_i32 = arith.constant 0 : i32
    %c0_i32_0 = arith.constant 0 : i32
    %c0_i32_1 = arith.constant 0 : i32
    return %c0_i32, %c0_i32_0 : i32, i32
  }
  func.func @transform_6(%arg0: i32) -> (i32, i32) {
    %c0_i32 = arith.constant 0 : i32
    %c0_i32_0 = arith.constant 0 : i32
    %c0_i32_1 = arith.constant 0 : i32
    return %c0_i32, %c0_i32_0 : i32, i32
  }
  func.func @transform_7(%arg0: i32) -> (i32, i32) {
    %c0_i32 = arith.constant 0 : i32
    %c0_i32_0 = arith.constant 0 : i32
    %c0_i32_1 = arith.constant 0 : i32
    return %c0_i32, %c0_i32_0 : i32, i32
  }
}

</mosaic_0001>

<llo_original>
// kernel: attn_qlearning_forward.1
$region0: #{attn_qlearning_forward.1}
  #allocation0 [shape = 'u32[]', space=smem, size = 0x4, offset = 0x4, fixed_abs, tag = 'smem constant byte address 0x4 - core index']
  #allocation1 [shape = 'u32[72,128]{1,0:T(1,128)}', space=vmem, size = 0x9000, scoped, tag = 'internal scratch']
  #allocation2 [shape = 'f32[64,32]{1,0:T(8,128)}', space=vmem, size = 0x8000, scoped, tag = 'scratch operand']
  %s0 = inlined_call_operand.vmem [shape: f32[64,32], index: 0, kind: input, shape index: {}]
  %s1 = inlined_call_operand.vmem [shape: f32[8,4], index: 1, kind: input, shape index: {}]
  %s2 = inlined_call_operand.vmem [shape: f32[3,32,416], index: 2, kind: input, shape index: {}]
  %s3 = inlined_call_operand.hbm [shape: f32[3,1,2464], index: 3, kind: input, shape index: {}]
  %s4 = inlined_call_operand.hbm [shape: bf16[3,2,32,2048], index: 4, kind: input, shape index: {}]
  %s5 = inlined_call_operand.vmem [shape: f32[37,192], index: 5, kind: input, shape index: {}]
  %s6 = inlined_call_operand.vmem [shape: f32[251,56], index: 6, kind: input, shape index: {}]
  %s7 = inlined_call_operand.vmem [shape: f32[8,128], index: 7, kind: output, shape index: {}]
  %s8 = sld [smem:[#allocation0]]
  $region77: #{attn_qlearning_forward.1} parent=0
    _
  %s10 = ssub.s32 1, %s8
  %s11 = scalar_select 0, %s10, %s8
  $region1: #{attn_qlearning_forward.1} parent=0
    #allocation3 [shape = 'u8[20480]{0}', space=vmem, size = 0x5000, scoped, tag = 'input window, operand 3']
    #allocation4 [shape = 's32[2]{0}', space=sflag, size = 0x8, scoped, tag = 'scoped memory for attn_qlearning_forward.1']
    #allocation5 [shape = 'u8[524288]{0}', space=vmem, size = 0x80000, scoped, tag = 'input window, operand 4']
    #allocation6 [shape = 's32[2]{0}', space=sflag, size = 0x8, scoped, tag = 'scoped memory for attn_qlearning_forward.1']
    %12 = vsyncpa [#allocation4], 0
    %s13 = scalar_lea.sflag [#allocation4], 1
    %14 = vsyncpa %s13, 0
    %15 = vsyncpa [#allocation6], 0
    %s16 = scalar_lea.sflag [#allocation6], 1
    %17 = vsyncpa %s16, 0
    loop: start=0, step=1, limit=5
    $region2: #{attn_qlearning_forward.1} parent=1 // loop_pre_header
      _
    $region3: #{attn_qlearning_forward.1} parent=1 // loop_header
      %s19 = sphi 0, %s23
      %p20 = scmp.ge.s32.totalorder %s19, 5
      %s27 = sphi 0, %s27
      %s29 = sphi 0, %s27
      %s30 = sphi 0, %s29
      %s44 = sphi 0, %s30
      %s48 = sphi 0, %s48
      %s50 = sphi 0, %s48
      %s51 = sphi 0, %s50
      %s65 = sphi 0, %s51
      %s71 = sphi 0, %s73
      %s74 = sphi 0, %s71
      %s75 = sphi 0, %s74
      %s91 = sphi 0, %s75
      %s97 = sphi 0, %s99
      %s100 = sphi 0, %s97
      %s101 = sphi 0, %s100
      %s117 = sphi 0, %s101
      %s123 = sphi 0, %s125
      %s126 = sphi 0, %s123
      %s127 = sphi 0, %s126
      %s143 = sphi 0, %s127
      %s147 = sphi 0, %s147
      %s149 = sphi 0, %s147
      %s150 = sphi 0, %s149
      %s164 = sphi 0, %s150
      %s168 = sphi 0, %s168
      %s170 = sphi 0, %s168
      %s171 = sphi 0, %s170
      %s185 = sphi 0, %s171
      %s189 = sphi 0, %s189
      %s191 = sphi 0, %s189
      %s192 = sphi 0, %s191
      %s206 = sphi 0, %s192
    $region4: #{attn_qlearning_forward.1} parent=1 // loop_header_branch
      %22 = sbr.rel (%p20) target = $region8
    $region5: #{attn_qlearning_forward.1} parent=1 // loop_body
      %s24 = ssub.s32 %s19, 1
      %s25 = ssub.s32 %s19, 2
      %s26 = sadd.s32 %s19, 1
      %s28 = sadd.s32 %s27, 1
      %p31 = scmp.eq.s32.totalorder %s19, 2
      %p32 = scmp.ne.s32.totalorder %s27, %s29
      %p33 = scmp.eq.s32.totalorder %s19, 0
      %p34 = por %p32, %p33
      %p35 = scmp.ne.s32.totalorder %s27, %s29
      %p36 = scmp.eq.s32.totalorder %s24, 2
      %p37 = por %p35, %p36
      %p38 = scmp.ne.s32.totalorder %s29, %s30
      %p39 = scmp.eq.s32.totalorder %s24, 0
      %p40 = por %p38, %p39
      %p41 = scmp.ne.s32.totalorder %s29, %s30
      %p42 = scmp.eq.s32.totalorder %s25, 2
      %p43 = por %p41, %p42
      %p45 = scmp.ne.s32.totalorder %s30, %s44
      %p46 = scmp.eq.s32.totalorder %s25, 0
      %p47 = por %p45, %p46
      %s49 = sadd.s32 %s48, 1
      %p52 = scmp.eq.s32.totalorder %s19, 2
      %p53 = scmp.ne.s32.totalorder %s48, %s50
      %p54 = scmp.eq.s32.totalorder %s19, 0
      %p55 = por %p53, %p54
      %p56 = scmp.ne.s32.totalorder %s48, %s50
      %p57 = scmp.eq.s32.totalorder %s24, 2
      %p58 = por %p56, %p57
      %p59 = scmp.ne.s32.totalorder %s50, %s51
      %p60 = scmp.eq.s32.totalorder %s24, 0
      %p61 = por %p59, %p60
      %p62 = scmp.ne.s32.totalorder %s50, %s51
      %p63 = scmp.eq.s32.totalorder %s25, 2
      %p64 = por %p62, %p63
      %p66 = scmp.ne.s32.totalorder %s51, %s65
      %p67 = scmp.eq.s32.totalorder %s25, 0
      %p68 = por %p66, %p67
      %s69 = ssub.s32 %s19, %s26
      %p70 = scmp.eq.s32.totalorder %s69, 0
      %s72 = sadd.s32 %s71, 1
      %s73 = scalar_select %p70, %s71, %s72
      %p76 = pneg %p70
      %p77 = scmp.eq.s32.totalorder %s19, 2
      %p78 = por %p76, %p77
      %p79 = scmp.ne.s32.totalorder %s71, %s74
      %p80 = scmp.eq.s32.totalorder %s19, 0
      %p81 = por %p79, %p80
      %p82 = scmp.ne.s32.totalorder %s71, %s74
      %p83 = scmp.eq.s32.totalorder %s24, 2
      %p84 = por %p82, %p83
      %p85 = scmp.ne.s32.totalorder %s74, %s75
      %p86 = scmp.eq.s32.totalorder %s24, 0
      %p87 = por %p85, %p86
      %p88 = scmp.ne.s32.totalorder %s74, %s75
      %p89 = scmp.eq.s32.totalorder %s25, 2
      %p90 = por %p88, %p89
      %p92 = scmp.ne.s32.totalorder %s75, %s91
      %p93 = scmp.eq.s32.totalorder %s25, 0
      %p94 = por %p92, %p93
      %s95 = ssub.s32 %s19, %s26
      %p96 = scmp.eq.s32.totalorder %s95, 0
      %s98 = sadd.s32 %s97, 1
      %s99 = scalar_select %p96, %s97, %s98
      %p102 = pneg %p96
      %p103 = scmp.eq.s32.totalorder %s19, 2
      %p104 = por %p102, %p103
      %p105 = scmp.ne.s32.totalorder %s97, %s100
      %p106 = scmp.eq.s32.totalorder %s19, 0
      %p107 = por %p105, %p106
      %p108 = scmp.ne.s32.totalorder %s97, %s100
      %p109 = scmp.eq.s32.totalorder %s24, 2
      %p110 = por %p108, %p109
      %p111 = scmp.ne.s32.totalorder %s100, %s101
      %p112 = scmp.eq.s32.totalorder %s24, 0
      %p113 = por %p111, %p112
      %p114 = scmp.ne.s32.totalorder %s100, %s101
      %p115 = scmp.eq.s32.totalorder %s25, 2
      %p116 = por %p114, %p115
      %p118 = scmp.ne.s32.totalorder %s101, %s117
      %p119 = scmp.eq.s32.totalorder %s25, 0
      %p120 = por %p118, %p119
      %s121 = ssub.s32 %s19, %s26
      %p122 = scmp.eq.s32.totalorder %s121, 0
      %s124 = sadd.s32 %s123, 1
      %s125 = scalar_select %p122, %s123, %s124
      %p128 = pneg %p122
      %p129 = scmp.eq.s32.totalorder %s19, 2
      %p130 = por %p128, %p129
      %p131 = scmp.ne.s32.totalorder %s123, %s126
      %p132 = scmp.eq.s32.totalorder %s19, 0
      %p133 = por %p131, %p132
      %p134 = scmp.ne.s32.totalorder %s123, %s126
      %p135 = scmp.eq.s32.totalorder %s24, 2
      %p136 = por %p134, %p135
      %p137 = scmp.ne.s32.totalorder %s126, %s127
      %p138 = scmp.eq.s32.totalorder %s24, 0
      %p139 = por %p137, %p138
      %p140 = scmp.ne.s32.totalorder %s126, %s127
      %p141 = scmp.eq.s32.totalorder %s25, 2
      %p142 = por %p140, %p141
      %p144 = scmp.ne.s32.totalorder %s127, %s143
      %p145 = scmp.eq.s32.totalorder %s25, 0
      %p146 = por %p144, %p145
      %s148 = sadd.s32 %s147, 1
      %p151 = scmp.eq.s32.totalorder %s19, 2
      %p152 = scmp.ne.s32.totalorder %s147, %s149
      %p153 = scmp.eq.s32.totalorder %s19, 0
      %p154 = por %p152, %p153
      %p155 = scmp.ne.s32.totalorder %s147, %s149
      %p156 = scmp.eq.s32.totalorder %s24, 2
      %p157 = por %p155, %p156
      %p158 = scmp.ne.s32.totalorder %s149, %s150
      %p159 = scmp.eq.s32.totalorder %s24, 0
      %p160 = por %p158, %p159
      %p161 = scmp.ne.s32.totalorder %s149, %s150
      %p162 = scmp.eq.s32.totalorder %s25, 2
      %p163 = por %p161, %p162
      %p165 = scmp.ne.s32.totalorder %s150, %s164
      %p166 = scmp.eq.s32.totalorder %s25, 0
      %p167 = por %p165, %p166
      %s169 = sadd.s32 %s168, 1
      %p172 = scmp.eq.s32.totalorder %s19, 2
      %p173 = scmp.ne.s32.totalorder %s168, %s170
      %p174 = scmp.eq.s32.totalorder %s19, 0
      %p175 = por %p173, %p174
      %p176 = scmp.ne.s32.totalorder %s168, %s170
      %p177 = scmp.eq.s32.totalorder %s24, 2
      %p178 = por %p176, %p177
      %p179 = scmp.ne.s32.totalorder %s170, %s171
      %p180 = scmp.eq.s32.totalorder %s24, 0
      %p181 = por %p179, %p180
      %p182 = scmp.ne.s32.totalorder %s170, %s171
      %p183 = scmp.eq.s32.totalorder %s25, 2
      %p184 = por %p182, %p183
      %p186 = scmp.ne.s32.totalorder %s171, %s185
      %p187 = scmp.eq.s32.totalorder %s25, 0
      %p188 = por %p186, %p187
      %s190 = sadd.s32 %s189, 1
      %p193 = scmp.eq.s32.totalorder %s19, 2
      %p194 = scmp.ne.s32.totalorder %s189, %s191
      %p195 = scmp.eq.s32.totalorder %s19, 0
      %p196 = por %p194, %p195
      %p197 = scmp.ne.s32.totalorder %s189, %s191
      %p198 = scmp.eq.s32.totalorder %s24, 2
      %p199 = por %p197, %p198
      %p200 = scmp.ne.s32.totalorder %s191, %s192
      %p201 = scmp.eq.s32.totalorder %s24, 0
      %p202 = por %p200, %p201
      %p203 = scmp.ne.s32.totalorder %s191, %s192
      %p204 = scmp.eq.s32.totalorder %s25, 2
      %p205 = por %p203, %p204
      %p207 = scmp.ne.s32.totalorder %s192, %s206
      %p208 = scmp.eq.s32.totalorder %s25, 0
      %p209 = por %p207, %p208
      %p210 = scmp.le.s32.totalorder 1, %s19
      %p211 = scmp.lt.s32.totalorder %s19, 4
      %p212 = pnand %p210, %p211
      %p213 = pneg %p212
      // Predicated region
      $region9: #{attn_qlearning_forward.1} parent=5 // pred_check
        _
      $region10: #{attn_qlearning_forward.1} parent=5 // pred_check_branch
        %215 = sbr.rel (%p212) target = $region12
      $region11: #{attn_qlearning_forward.1} parent=5 // pred_region
        %s216 = ssub.s32 %s19, 1
        // Predicated region
        $region13: #{attn_qlearning_forward.1} parent=11 // pred_check
          %p217 = pneg %p40
        $region14: #{attn_qlearning_forward.1} parent=11 // pred_check_branch
          %219 = sbr.rel (%p217) target = $region16
        $region15: #{attn_qlearning_forward.1} parent=11 // pred_region
          _
        $region16: #{attn_qlearning_forward.1} parent=11 // pred_fallthru
          _
        // Predicated region
        $region17: #{attn_qlearning_forward.1} parent=11 // pred_check
          %p220 = pneg %p61
        $region18: #{attn_qlearning_forward.1} parent=11 // pred_check_branch
          %222 = sbr.rel (%p220) target = $region20
        $region19: #{attn_qlearning_forward.1} parent=11 // pred_region
          _
        $region20: #{attn_qlearning_forward.1} parent=11 // pred_fallthru
          _
        // Predicated region
        $region21: #{attn_qlearning_forward.1} parent=11 // pred_check
          %p223 = pneg %p160
        $region22: #{attn_qlearning_forward.1} parent=11 // pred_check_branch
          %225 = sbr.rel (%p223) target = $region24
        $region23: #{attn_qlearning_forward.1} parent=11 // pred_region
          _
        $region24: #{attn_qlearning_forward.1} parent=11 // pred_fallthru
          _
        // Predicated region
        $region25: #{attn_qlearning_forward.1} parent=11 // pred_check
          %p226 = pneg %p181
        $region26: #{attn_qlearning_forward.1} parent=11 // pred_check_branch
          %228 = sbr.rel (%p226) target = $region28
        $region27: #{attn_qlearning_forward.1} parent=11 // pred_region
          _
        $region28: #{attn_qlearning_forward.1} parent=11 // pred_fallthru
          _
      $region12: #{attn_qlearning_forward.1} parent=5 // pred_fallthru
        _
      %p229 = scmp.lt.s32.totalorder %s19, 3
      // Predicated region
      $region29: #{attn_qlearning_forward.1} parent=5 // pred_check
        %p230 = pneg %p229
      $region30: #{attn_qlearning_forward.1} parent=5 // pred_check_branch
        %232 = sbr.rel (%p230) target = $region32
      $region31: #{attn_qlearning_forward.1} parent=5 // pred_region
        // Predicated region
        $region33: #{attn_qlearning_forward.1} parent=31 // pred_check
          %p233 = pneg %p81
        $region34: #{attn_qlearning_forward.1} parent=31 // pred_check_branch
          %235 = sbr.rel (%p233) target = $region36
        $region35: #{attn_qlearning_forward.1} parent=31 // pred_region
          %p236 = scmp.lt.s32.totalorder %s19, 2
          %s237 = scalar_select %p236, %s19, 2
          %s238 = smul.addr %s237, 16
          %s239 = smul.addr %s238, 8
          %s240 = scalar_lea.vmem %s2, %s239
        $region36: #{attn_qlearning_forward.1} parent=31 // pred_fallthru
          _
        // Predicated region
        $region37: #{attn_qlearning_forward.1} parent=31 // pred_check
          %p241 = pneg %p107
        $region38: #{attn_qlearning_forward.1} parent=31 // pred_check_branch
          %243 = sbr.rel (%p241) target = $region40
        $region39: #{attn_qlearning_forward.1} parent=31 // pred_region
          %s244 = sand.u32 %s97, 1
          %s245 = scalar_lea.sflag [#allocation4], %s244
          %s246 = sand.u32 %s97, 1
          %s247 = smul.addr %s246, 20
          %s248 = scalar_lea.vmem [#allocation3], %s247
          %250 = vsyncadd %s245, 0
          %s251 = smul.addr %s19, 20
          %s252 = scalar_lea.hbm %s3, %s251
          %s254 = sshll.u32 %s252, 4
          %s255 = int_to_ptr.hbm [resolvable:$true] %s254
          %s256 = sshll.u32 %s248, 4
          %s257 = int_to_ptr.vmem [resolvable:$true] %s256
          %259 = dma.hbm_to_vmem [thread:$0]  %s255, 320, %s257, %s245
        $region40: #{attn_qlearning_forward.1} parent=31 // pred_fallthru
          _
        // Predicated region
        $region41: #{attn_qlearning_forward.1} parent=31 // pred_check
          %p260 = pneg %p133
        $region42: #{attn_qlearning_forward.1} parent=31 // pred_check_branch
          %262 = sbr.rel (%p260) target = $region44
        $region43: #{attn_qlearning_forward.1} parent=31 // pred_region
          %s263 = sand.u32 %s123, 1
          %s264 = scalar_lea.sflag [#allocation6], %s263
          %s265 = sand.u32 %s123, 1
          %s266 = smul.addr %s265, 512
          %s267 = scalar_lea.vmem [#allocation5], %s266
          %269 = vsyncadd %s264, 0
          %s270 = smul.addr %s19, 128
          %s271 = smul.addr %s270, 4
          %s272 = scalar_lea.hbm %s4, %s271
          %s273 = sshll.u32 %s272, 4
          %s274 = int_to_ptr.hbm [resolvable:$true] %s273
          %s275 = sshll.u32 %s267, 4
          %s276 = int_to_ptr.vmem [resolvable:$true] %s275
          %281 = dma.hbm_to_vmem [thread:$0]  %s274, 8192, %s276, %s264, 1024, 1024, 64
        $region44: #{attn_qlearning_forward.1} parent=31 // pred_fallthru
          _
      $region32: #{attn_qlearning_forward.1} parent=5 // pred_fallthru
        _
      %p282 = scmp.le.s32.totalorder 1, %s19
      %p283 = scmp.lt.s32.totalorder %s19, 4
      %p284 = pnand %p282, %p283
      %p285 = pneg %p284
      // Predicated region
      $region45: #{attn_qlearning_forward.1} parent=5 // pred_check
        _
      $region46: #{attn_qlearning_forward.1} parent=5 // pred_check_branch
        %287 = sbr.rel (%p284) target = $region48
      $region47: #{attn_qlearning_forward.1} parent=5 // pred_region
        %s288 = ssub.s32 %s19, 1
        %s289 = sand.u32 %s100, 1
        %s290 = scalar_lea.sflag [#allocation4], %s289
        %s291 = sand.u32 %s100, 1
        %s292 = smul.addr %s291, 20
        %s293 = scalar_lea.vmem [#allocation3], %s292
        // Predicated region
        $region49: #{attn_qlearning_forward.1} parent=47 // pred_check
          %p294 = pneg %p113
        $region50: #{attn_qlearning_forward.1} parent=47 // pred_check_branch
          %296 = sbr.rel (%p294) target = $region52
        $region51: #{attn_qlearning_forward.1} parent=47 // pred_region
          %298 = dma.done %s290, 320
        $region52: #{attn_qlearning_forward.1} parent=47 // pred_fallthru
          _
        %s299 = sand.u32 %s126, 1
        %s300 = scalar_lea.sflag [#allocation6], %s299
        %s301 = sand.u32 %s126, 1
        %s302 = smul.addr %s301, 512
        %s303 = scalar_lea.vmem [#allocation5], %s302
        // Predicated region
        $region53: #{attn_qlearning_forward.1} parent=47 // pred_check
          %p304 = pneg %p139
        $region54: #{attn_qlearning_forward.1} parent=47 // pred_check_branch
          %306 = sbr.rel (%p304) target = $region56
        $region55: #{attn_qlearning_forward.1} parent=47 // pred_region
          %308 = dma.done %s300, 8192
        $region56: #{attn_qlearning_forward.1} parent=47 // pred_fallthru
          _
        %p309 = pneg %p40
        %p310 = pneg %p37
        %p311 = pneg %p61
        %p312 = pneg %p58
        %p313 = scmp.lt.s32.totalorder %s24, 2
        %s314 = scalar_select %p313, %s24, 2
        %s315 = smul.addr %s314, 16
        %s316 = smul.addr %s315, 8
        %s317 = scalar_lea.vmem %s2, %s316
        %p318 = pneg %p87
        %p319 = pneg %p84
        %s320 = sand.u32 %s100, 1
        %s321 = scalar_lea.sflag [#allocation4], %s320
        %s322 = sand.u32 %s100, 1
        %s323 = smul.addr %s322, 20
        %s324 = scalar_lea.vmem [#allocation3], %s323
        %p325 = pneg %p113
        %p326 = pneg %p110
        %s327 = sand.u32 %s126, 1
        %s328 = scalar_lea.sflag [#allocation6], %s327
        %s329 = sand.u32 %s126, 1
        %s330 = smul.addr %s329, 512
        %s331 = scalar_lea.vmem [#allocation5], %s330
        %p332 = pneg %p139
        %p333 = pneg %p136
        %p334 = pneg %p160
        %p335 = pneg %p157
        %p336 = pneg %p181
        %p337 = pneg %p178
        %p338 = pneg %p202
        %p339 = pneg %p199
        %p340 = scmp.lt.s32.totalorder %s24, 2
        %s341 = scalar_select %p340, %s24, 2
        %s342 = smul.addr %s341, 16
        %s343 = smul.addr %s342, 8
        %s344 = scalar_lea.vmem %s2, %s343
        %p346 = scmp.eq.s32.totalorder %s24, 0
        // Predicated region
        $region57: #{attn_qlearning_forward.1} parent=47 // pred_check
          %p347 = pneg %p346
        $region58: #{attn_qlearning_forward.1} parent=47 // pred_check_branch
          %349 = sbr.rel (%p347) target = $region60
        $region59: #{attn_qlearning_forward.1} parent=47 // pred_region
          %v350 = vld [vmem:[%s0] sm:$0xff]
          %v351 = vld [vmem:[%s0 + $0x8] sm:$0xff]
          %v352 = vld [vmem:[%s0 + $0x10] sm:$0xff]
          %v353 = vld [vmem:[%s0 + $0x18] sm:$0xff]
          %v354 = vld [vmem:[%s0 + $0x20] sm:$0xff]
          %v355 = vld [vmem:[%s0 + $0x28] sm:$0xff]
          %v356 = vld [vmem:[%s0 + $0x30] sm:$0xff]
          %v357 = vld [vmem:[%s0 + $0x38] sm:$0xff]
          %vm358 = vcmask 261120
          %359 = vst.msk [vmem:[#allocation2] sm:$0xff] %vm358, %v350
          %360 = vst.msk [vmem:[#allocation2 + $0x8] sm:$0xff] %vm358, %v351
          %361 = vst.msk [vmem:[#allocation2 + $0x10] sm:$0xff] %vm358, %v352
          %362 = vst.msk [vmem:[#allocation2 + $0x18] sm:$0xff] %vm358, %v353
          %363 = vst.msk [vmem:[#allocation2 + $0x20] sm:$0xff] %vm358, %v354
          %364 = vst.msk [vmem:[#allocation2 + $0x28] sm:$0xff] %vm358, %v355
          %365 = vst.msk [vmem:[#allocation2 + $0x30] sm:$0xff] %vm358, %v356
          %366 = vst.msk [vmem:[#allocation2 + $0x38] sm:$0xff] %vm358, %v357
        $region60: #{attn_qlearning_forward.1} parent=47 // pred_fallthru
          _
        %v367 = vld [vmem:[#allocation2] sm:$0xff]
        %v368 = vld [vmem:[#allocation2 + $0x8] sm:$0xff]
        %v369 = vld [vmem:[#allocation2 + $0x10] sm:$0xff]
        %v370 = vld [vmem:[#allocation2 + $0x18] sm:$0xff]
        %v371 = vld [vmem:[#allocation2 + $0x20] sm:$0xff]
        %v372 = vld [vmem:[#allocation2 + $0x28] sm:$0xff]
        %v373 = vld [vmem:[#allocation2 + $0x30] sm:$0xff]
        %v374 = vld [vmem:[#allocation2 + $0x38] sm:$0xff]
        %v375 = vld [vmem:[%s344] sm:$0xff]
        %v376 = vld [vmem:[%s344 + $0x20] sm:$0xff]
        %v377 = vld [vmem:[%s344 + $0x40] sm:$0xff]
        %v378 = vld [vmem:[%s344 + $0x60] sm:$0xff]
        %v379 = vld [vmem:[%s293 + $0x10] sm:$0x1]
        %v381 = vperm.slane %v379, 0
        %vm383 = vcmask 261120
        %v385 = vsel %vm383, %v367, 0
        %v388 = vsel %vm383, %v368, 0
        %v391 = vsel %vm383, %v369, 0
        %v394 = vsel %vm383, %v370, 0
        %v397 = vsel %vm383, %v371, 0
        %v400 = vsel %vm383, %v372, 0
        %v403 = vsel %vm383, %v373, 0
        %v406 = vsel %vm383, %v374, 0
        %408 = vmatpush.msra.mxu0 0.0
        %409 = vmatpush.msra.mxu0 0.0
        %410 = vmatpush.msra.mxu0 0.0
        %411 = vmatpush.msra.mxu0 0.0
        %412 = vmatpush.msra.mxu0 0.0
        %413 = vmatpush.msra.mxu0 0.0
        %414 = vmatpush.msra.mxu0 0.0
        %415 = vmatpush.msra.mxu0 0.0
        %416 = vmatpush.msra.mxu0 0.0
        %417 = vmatpush.msra.mxu0 0.0
        %418 = vmatpush.msra.mxu0 0.0
        %419 = vmatpush.msra.mxu0 0.0
        %420 = vmatpush.msra.mxu0 %v378
        %421 = vmatpush.msra.mxu0 %v377
        %422 = vmatpush.msra.mxu0 %v376
        %423 = vmatpush.msra.mxu0 %v375
        %424 = vmatmul.f32.gmra.mxu0 %v385
        %v425 = vpop.f32.mrf.mxu0
        %v426 = vadd.f32 %v381, %v425
        %427 = vmatmul.f32.gmra.mxu0 %v388
        %v428 = vpop.f32.mrf.mxu0
        %v429 = vadd.f32 %v381, %v428
        %430 = vmatmul.f32.gmra.mxu0 %v391
        %v431 = vpop.f32.mrf.mxu0
        %v432 = vadd.f32 %v381, %v431
        %433 = vmatmul.f32.gmra.mxu0 %v394
        %v434 = vpop.f32.mrf.mxu0
        %v435 = vadd.f32 %v381, %v434
        %436 = vmatmul.f32.gmra.mxu0 %v397
        %v437 = vpop.f32.mrf.mxu0
        %v438 = vadd.f32 %v381, %v437
        %439 = vmatmul.f32.gmra.mxu0 %v400
        %v440 = vpop.f32.mrf.mxu0
        %v441 = vadd.f32 %v381, %v440
        %442 = vmatmul.f32.gmra.mxu0 %v403
        %v443 = vpop.f32.mrf.mxu0
        %v444 = vadd.f32 %v381, %v443
        %445 = vmatmul.f32.gmra.mxu0 %v406
        %v446 = vpop.f32.mrf.mxu0
        %v447 = vadd.f32 %v381, %v446
        %448 = vdwg.mxu0
        %v449 = vld [vmem:[%s344 + $0x8] sm:$0xff]
        %v450 = vld [vmem:[%s344 + $0x28] sm:$0xff]
        %v451 = vld [vmem:[%s344 + $0x48] sm:$0xff]
        %v452 = vld [vmem:[%s344 + $0x68] sm:$0xff]
        %457 = vrot.lane.b32.xlu0 %v375, 96
        %v458 = vpop.permute.xlu0 %457
        %459 = vrot.lane.b32.xlu0 %v376, 96
        %v460 = vpop.permute.xlu0 %459
        %461 = vrot.lane.b32.xlu0 %v377, 96
        %v462 = vpop.permute.xlu0 %461
        %463 = vrot.lane.b32.xlu0 %v378, 96
        %v464 = vpop.permute.xlu0 %463
        %469 = vrot.lane.b32.xlu0 %v381, 96
        %v470 = vpop.permute.xlu0 %469
        %472 = vmatpush.msra.mxu0 0.0
        %473 = vmatpush.msra.mxu0 0.0
        %474 = vmatpush.msra.mxu0 0.0
        %475 = vmatpush.msra.mxu0 0.0
        %476 = vmatpush.msra.mxu0 0.0
        %477 = vmatpush.msra.mxu0 0.0
        %478 = vmatpush.msra.mxu0 0.0
        %479 = vmatpush.msra.mxu0 0.0
        %480 = vmatpush.msra.mxu0 0.0
        %481 = vmatpush.msra.mxu0 0.0
        %482 = vmatpush.msra.mxu0 0.0
        %483 = vmatpush.msra.mxu0 0.0
        %484 = vmatpush.msra.mxu0 %v464
        %485 = vmatpush.msra.mxu0 %v462
        %486 = vmatpush.msra.mxu0 %v460
        %487 = vmatpush.msra.mxu0 %v458
        %488 = vmatmul.f32.gmra.mxu0 %v385
        %v489 = vpop.f32.mrf.mxu0
        %v490 = vadd.f32 %v470, %v489
        %491 = vmatmul.f32.gmra.mxu0 %v388
        %v492 = vpop.f32.mrf.mxu0
        %v493 = vadd.f32 %v470, %v492
        %494 = vmatmul.f32.gmra.mxu0 %v391
        %v495 = vpop.f32.mrf.mxu0
        %v496 = vadd.f32 %v470, %v495
        %497 = vmatmul.f32.gmra.mxu0 %v394
        %v498 = vpop.f32.mrf.mxu0
        %v499 = vadd.f32 %v470, %v498
        %500 = vmatmul.f32.gmra.mxu0 %v397
        %v501 = vpop.f32.mrf.mxu0
        %v502 = vadd.f32 %v470, %v501
        %503 = vmatmul.f32.gmra.mxu0 %v400
        %v504 = vpop.f32.mrf.mxu0
        %v505 = vadd.f32 %v470, %v504
        %506 = vmatmul.f32.gmra.mxu0 %v403
        %v507 = vpop.f32.mrf.mxu0
        %v508 = vadd.f32 %v470, %v507
        %509 = vmatmul.f32.gmra.mxu0 %v406
        %v510 = vpop.f32.mrf.mxu0
        %v511 = vadd.f32 %v470, %v510
        %512 = vdwg.mxu0
        %513 = vrot.lane.b32.xlu0 %v375, 64
        %v514 = vpop.permute.xlu0 %513
        %515 = vrot.lane.b32.xlu0 %v376, 64
        %v516 = vpop.permute.xlu0 %515
        %517 = vrot.lane.b32.xlu0 %v377, 64
        %v518 = vpop.permute.xlu0 %517
        %519 = vrot.lane.b32.xlu0 %v378, 64
        %v520 = vpop.permute.xlu0 %519
        %525 = vrot.lane.b32.xlu0 %v381, 64
        %v526 = vpop.permute.xlu0 %525
        %528 = vmatpush.msra.mxu0 0.0
        %529 = vmatpush.msra.mxu0 0.0
        %530 = vmatpush.msra.mxu0 0.0
        %531 = vmatpush.msra.mxu0 0.0
        %532 = vmatpush.msra.mxu0 0.0
        %533 = vmatpush.msra.mxu0 0.0
        %534 = vmatpush.msra.mxu0 0.0
        %535 = vmatpush.msra.mxu0 0.0
        %536 = vmatpush.msra.mxu0 0.0
        %537 = vmatpush.msra.mxu0 0.0
        %538 = vmatpush.msra.mxu0 0.0
        %539 = vmatpush.msra.mxu0 0.0
        %540 = vmatpush.msra.mxu0 %v520
        %541 = vmatpush.msra.mxu0 %v518
        %542 = vmatpush.msra.mxu0 %v516
        %543 = vmatpush.msra.mxu0 %v514
        %544 = vmatmul.f32.gmra.mxu0 %v385
        %v545 = vpop.f32.mrf.mxu0
        %v546 = vadd.f32 %v526, %v545
        %547 = vmatmul.f32.gmra.mxu0 %v388
        %v548 = vpop.f32.mrf.mxu0
        %v549 = vadd.f32 %v526, %v548
        %550 = vmatmul.f32.gmra.mxu0 %v391
        %v551 = vpop.f32.mrf.mxu0
        %v552 = vadd.f32 %v526, %v551
        %553 = vmatmul.f32.gmra.mxu0 %v394
        %v554 = vpop.f32.mrf.mxu0
        %v555 = vadd.f32 %v526, %v554
        %556 = vmatmul.f32.gmra.mxu0 %v397
        %v557 = vpop.f32.mrf.mxu0
        %v558 = vadd.f32 %v526, %v557
        %559 = vmatmul.f32.gmra.mxu0 %v400
        %v560 = vpop.f32.mrf.mxu0
        %v561 = vadd.f32 %v526, %v560
        %562 = vmatmul.f32.gmra.mxu0 %v403
        %v563 = vpop.f32.mrf.mxu0
        %v564 = vadd.f32 %v526, %v563
        %565 = vmatmul.f32.gmra.mxu0 %v406
        %v566 = vpop.f32.mrf.mxu0
        %v567 = vadd.f32 %v526, %v566
        %568 = vdwg.mxu0
        %569 = vrot.lane.b32.xlu0 %v375, 32
        %v570 = vpop.permute.xlu0 %569
        %571 = vrot.lane.b32.xlu0 %v376, 32
        %v572 = vpop.permute.xlu0 %571
        %573 = vrot.lane.b32.xlu0 %v377, 32
        %v574 = vpop.permute.xlu0 %573
        %575 = vrot.lane.b32.xlu0 %v378, 32
        %v576 = vpop.permute.xlu0 %575
        %581 = vrot.lane.b32.xlu0 %v381, 32
        %v582 = vpop.permute.xlu0 %581
        %584 = vmatpush.msra.mxu0 0.0
        %585 = vmatpush.msra.mxu0 0.0
        %586 = vmatpush.msra.mxu0 0.0
        %587 = vmatpush.msra.mxu0 0.0
        %588 = vmatpush.msra.mxu0 0.0
        %589 = vmatpush.msra.mxu0 0.0
        %590 = vmatpush.msra.mxu0 0.0
        %591 = vmatpush.msra.mxu0 0.0
        %592 = vmatpush.msra.mxu0 0.0
        %593 = vmatpush.msra.mxu0 0.0
        %594 = vmatpush.msra.mxu0 0.0
        %595 = vmatpush.msra.mxu0 0.0
        %596 = vmatpush.msra.mxu0 %v576
        %597 = vmatpush.msra.mxu0 %v574
        %598 = vmatpush.msra.mxu0 %v572
        %599 = vmatpush.msra.mxu0 %v570
        %600 = vmatmul.f32.gmra.mxu0 %v385
        %v601 = vpop.f32.mrf.mxu0
        %v602 = vadd.f32 %v582, %v601
        %603 = vmatmul.f32.gmra.mxu0 %v388
        %v604 = vpop.f32.mrf.mxu0
        %v605 = vadd.f32 %v582, %v604
        %606 = vmatmul.f32.gmra.mxu0 %v391
        %v607 = vpop.f32.mrf.mxu0
        %v608 = vadd.f32 %v582, %v607
        %609 = vmatmul.f32.gmra.mxu0 %v394
        %v610 = vpop.f32.mrf.mxu0
        %v611 = vadd.f32 %v582, %v610
        %612 = vmatmul.f32.gmra.mxu0 %v397
        %v613 = vpop.f32.mrf.mxu0
        %v614 = vadd.f32 %v582, %v613
        %615 = vmatmul.f32.gmra.mxu0 %v400
        %v616 = vpop.f32.mrf.mxu0
        %v617 = vadd.f32 %v582, %v616
        %618 = vmatmul.f32.gmra.mxu0 %v403
        %v619 = vpop.f32.mrf.mxu0
        %v620 = vadd.f32 %v582, %v619
        %621 = vmatmul.f32.gmra.mxu0 %v406
        %v622 = vpop.f32.mrf.mxu0
        %v623 = vadd.f32 %v582, %v622
        %624 = vdwg.mxu0
        %v626 = vsel %vm383, 0.0, 0
        %628 = vmatpush.msra.mxu0 0.0
        %629 = vmatpush.msra.mxu0 0.0
        %630 = vmatpush.msra.mxu0 0.0
        %631 = vmatpush.msra.mxu0 0.0
        %632 = vmatpush.msra.mxu0 0.0
        %633 = vmatpush.msra.mxu0 0.0
        %634 = vmatpush.msra.mxu0 0.0
        %635 = vmatpush.msra.mxu0 0.0
        %636 = vmatpush.msra.mxu0 0.0
        %637 = vmatpush.msra.mxu0 0.0
        %638 = vmatpush.msra.mxu0 0.0
        %639 = vmatpush.msra.mxu0 0.0
        %640 = vmatpush.msra.mxu0 %v452
        %641 = vmatpush.msra.mxu0 %v451
        %642 = vmatpush.msra.mxu0 %v450
        %643 = vmatpush.msra.mxu0 %v449
        %644 = vmatmul.f32.gmra.mxu0 %v626
        %v645 = vpop.f32.mrf.mxu0
        %v646 = vadd.f32 0.0, %v645
        %647 = vdwg.mxu0
        %v648 = vadd.f32 %v426, %v646
        %653 = vrot.lane.b32.xlu0 %v449, 96
        %v654 = vpop.permute.xlu0 %653
        %655 = vrot.lane.b32.xlu0 %v450, 96
        %v656 = vpop.permute.xlu0 %655
        %657 = vrot.lane.b32.xlu0 %v451, 96
        %v658 = vpop.permute.xlu0 %657
        %659 = vrot.lane.b32.xlu0 %v452, 96
        %v660 = vpop.permute.xlu0 %659
        %665 = vmatpush.msra.mxu0 0.0
        %666 = vmatpush.msra.mxu0 0.0
        %667 = vmatpush.msra.mxu0 0.0
        %668 = vmatpush.msra.mxu0 0.0
        %669 = vmatpush.msra.mxu0 0.0
        %670 = vmatpush.msra.mxu0 0.0
        %671 = vmatpush.msra.mxu0 0.0
        %672 = vmatpush.msra.mxu0 0.0
        %673 = vmatpush.msra.mxu0 0.0
        %674 = vmatpush.msra.mxu0 0.0
        %675 = vmatpush.msra.mxu0 0.0
        %676 = vmatpush.msra.mxu0 0.0
        %677 = vmatpush.msra.mxu0 %v660
        %678 = vmatpush.msra.mxu0 %v658
        %679 = vmatpush.msra.mxu0 %v656
        %680 = vmatpush.msra.mxu0 %v654
        %681 = vmatmul.f32.gmra.mxu0 %v626
        %v682 = vpop.f32.mrf.mxu0
        %v683 = vadd.f32 0.0, %v682
        %684 = vdwg.mxu0
        %v685 = vadd.f32 %v490, %v683
        %686 = vrot.lane.b32.xlu0 %v449, 64
        %v687 = vpop.permute.xlu0 %686
        %688 = vrot.lane.b32.xlu0 %v450, 64
        %v689 = vpop.permute.xlu0 %688
        %690 = vrot.lane.b32.xlu0 %v451, 64
        %v691 = vpop.permute.xlu0 %690
        %692 = vrot.lane.b32.xlu0 %v452, 64
        %v693 = vpop.permute.xlu0 %692
        %698 = vmatpush.msra.mxu0 0.0
        %699 = vmatpush.msra.mxu0 0.0
        %700 = vmatpush.msra.mxu0 0.0
        %701 = vmatpush.msra.mxu0 0.0
        %702 = vmatpush.msra.mxu0 0.0
        %703 = vmatpush.msra.mxu0 0.0
        %704 = vmatpush.msra.mxu0 0.0
        %705 = vmatpush.msra.mxu0 0.0
        %706 = vmatpush.msra.mxu0 0.0
        %707 = vmatpush.msra.mxu0 0.0
        %708 = vmatpush.msra.mxu0 0.0
        %709 = vmatpush.msra.mxu0 0.0
        %710 = vmatpush.msra.mxu0 %v693
        %711 = vmatpush.msra.mxu0 %v691
        %712 = vmatpush.msra.mxu0 %v689
        %713 = vmatpush.msra.mxu0 %v687
        %714 = vmatmul.f32.gmra.mxu0 %v626
        %v715 = vpop.f32.mrf.mxu0
        %v716 = vadd.f32 0.0, %v715
        %717 = vdwg.mxu0
        %v718 = vadd.f32 %v546, %v716
        %719 = vrot.lane.b32.xlu0 %v449, 32
        %v720 = vpop.permute.xlu0 %719
        %721 = vrot.lane.b32.xlu0 %v450, 32
        %v722 = vpop.permute.xlu0 %721
        %723 = vrot.lane.b32.xlu0 %v451, 32
        %v724 = vpop.permute.xlu0 %723
        %725 = vrot.lane.b32.xlu0 %v452, 32
        %v726 = vpop.permute.xlu0 %725
        %731 = vmatpush.msra.mxu0 0.0
        %732 = vmatpush.msra.mxu0 0.0
        %733 = vmatpush.msra.mxu0 0.0
        %734 = vmatpush.msra.mxu0 0.0
        %735 = vmatpush.msra.mxu0 0.0
        %736 = vmatpush.msra.mxu0 0.0
        %737 = vmatpush.msra.mxu0 0.0
        %738 = vmatpush.msra.mxu0 0.0
        %739 = vmatpush.msra.mxu0 0.0
        %740 = vmatpush.msra.mxu0 0.0
        %741 = vmatpush.msra.mxu0 0.0
        %742 = vmatpush.msra.mxu0 0.0
        %743 = vmatpush.msra.mxu0 %v726
        %744 = vmatpush.msra.mxu0 %v724
        %745 = vmatpush.msra.mxu0 %v722
        %746 = vmatpush.msra.mxu0 %v720
        %747 = vmatmul.f32.gmra.mxu0 %v626
        %v748 = vpop.f32.mrf.mxu0
        %v749 = vadd.f32 0.0, %v748
        %750 = vdwg.mxu0
        %v751 = vadd.f32 %v602, %v749
        %v752 = vxor.u32 %v685, 2147483648
        %v753 = vmul.f32 %v752, 1.442695
        %v754 = vpow.pop %v753
        %v755 = vadd.f32 %v754, 1.0
        %v756 = vrcp.pop %v755
        %v757 = vmul.f32 %v755, %v756
        %v758 = vsub.f32 1.0, %v757
        %v759 = vmul.f32 %v756, %v758
        %v760 = vadd.f32 %v756, %v759
        %vm761 = vweird.f32 %v755
        %vm762 = vweird.f32 %v756
        %vm763 = vmor %vm761, %vm762
        %v764 = vsel %vm763, %v756, %v760
        %v765 = vand.u32 2147483647, %v755
        %vm766 = vcmp.eq.f32.partialorder %v765, 8.507059e+37
        %v767 = vand.u32 %v755, 2147483648
        %v768 = vor.u32 1.1754944e-38, %v767
        %v769 = vsel %vm766, %v768, %v764
        %v770 = vmul.f32 1.0, %v769
        %v771 = vmul.f32 %v770, 0.0
        %v772 = vxor.u32 %v648, 2147483648
        %v773 = vmul.f32 %v772, 1.442695
        %v774 = vpow.pop %v773
        %v775 = vadd.f32 %v774, 1.0
        %v776 = vrcp.pop %v775
        %v777 = vmul.f32 %v775, %v776
        %v778 = vsub.f32 1.0, %v777
        %v779 = vmul.f32 %v776, %v778
        %v780 = vadd.f32 %v776, %v779
        %vm781 = vweird.f32 %v775
        %vm782 = vweird.f32 %v776
        %vm783 = vmor %vm781, %vm782
        %v784 = vsel %vm783, %v776, %v780
        %v785 = vand.u32 2147483647, %v775
        %vm786 = vcmp.eq.f32.partialorder %v785, 8.507059e+37
        %v787 = vand.u32 %v775, 2147483648
        %v788 = vor.u32 1.1754944e-38, %v787
        %v789 = vsel %vm786, %v788, %v784
        %v790 = vmul.f32 1.0, %v789
        %v791 = vtanh.pop %v718
        %v792 = vmul.f32 %v790, %v791
        %v793 = vadd.f32 %v771, %v792
        %v794 = vxor.u32 %v751, 2147483648
        %v795 = vmul.f32 %v794, 1.442695
        %v796 = vpow.pop %v795
        %v797 = vadd.f32 %v796, 1.0
        %v798 = vrcp.pop %v797
        %v799 = vmul.f32 %v797, %v798
        %v800 = vsub.f32 1.0, %v799
        %v801 = vmul.f32 %v798, %v800
        %v802 = vadd.f32 %v798, %v801
        %vm803 = vweird.f32 %v797
        %vm804 = vweird.f32 %v798
        %vm805 = vmor %vm803, %vm804
        %v806 = vsel %vm805, %v798, %v802
        %v807 = vand.u32 2147483647, %v797
        %vm808 = vcmp.eq.f32.partialorder %v807, 8.507059e+37
        %v809 = vand.u32 %v797, 2147483648
        %v810 = vor.u32 1.1754944e-38, %v809
        %v811 = vsel %vm808, %v810, %v806
        %v812 = vmul.f32 1.0, %v811
        %v813 = vtanh.pop %v793
        %v814 = vmul.f32 %v812, %v813
        %v816 = vsel %vm383, %v814, 0
        %818 = vmatpush.msra.mxu0 0.0
        %819 = vmatpush.msra.mxu0 0.0
        %820 = vmatpush.msra.mxu0 0.0
        %821 = vmatpush.msra.mxu0 0.0
        %822 = vmatpush.msra.mxu0 0.0
        %823 = vmatpush.msra.mxu0 0.0
        %824 = vmatpush.msra.mxu0 0.0
        %825 = vmatpush.msra.mxu0 0.0
        %826 = vmatpush.msra.mxu0 0.0
        %827 = vmatpush.msra.mxu0 0.0
        %828 = vmatpush.msra.mxu0 0.0
        %829 = vmatpush.msra.mxu0 0.0
        %830 = vmatpush.msra.mxu0 %v452
        %831 = vmatpush.msra.mxu0 %v451
        %832 = vmatpush.msra.mxu0 %v450
        %833 = vmatpush.msra.mxu0 %v449
        %834 = vmatmul.f32.gmra.mxu0 %v816
        %v835 = vpop.f32.mrf.mxu0
        %v836 = vadd.f32 0.0, %v835
        %837 = vdwg.mxu0
        %v838 = vadd.f32 %v429, %v836
        %839 = vmatpush.msra.mxu0 0.0
        %840 = vmatpush.msra.mxu0 0.0
        %841 = vmatpush.msra.mxu0 0.0
        %842 = vmatpush.msra.mxu0 0.0
        %843 = vmatpush.msra.mxu0 0.0
        %844 = vmatpush.msra.mxu0 0.0
        %845 = vmatpush.msra.mxu0 0.0
        %846 = vmatpush.msra.mxu0 0.0
        %847 = vmatpush.msra.mxu0 0.0
        %848 = vmatpush.msra.mxu0 0.0
        %849 = vmatpush.msra.mxu0 0.0
        %850 = vmatpush.msra.mxu0 0.0
        %851 = vmatpush.msra.mxu0 %v660
        %852 = vmatpush.msra.mxu0 %v658
        %853 = vmatpush.msra.mxu0 %v656
        %854 = vmatpush.msra.mxu0 %v654
        %855 = vmatmul.f32.gmra.mxu0 %v816
        %v856 = vpop.f32.mrf.mxu0
        %v857 = vadd.f32 0.0, %v856
        %858 = vdwg.mxu0
        %v859 = vadd.f32 %v493, %v857
        %860 = vmatpush.msra.mxu0 0.0
        %861 = vmatpush.msra.mxu0 0.0
        %862 = vmatpush.msra.mxu0 0.0
        %863 = vmatpush.msra.mxu0 0.0
        %864 = vmatpush.msra.mxu0 0.0
        %865 = vmatpush.msra.mxu0 0.0
        %866 = vmatpush.msra.mxu0 0.0
        %867 = vmatpush.msra.mxu0 0.0
        %868 = vmatpush.msra.mxu0 0.0
        %869 = vmatpush.msra.mxu0 0.0
        %870 = vmatpush.msra.mxu0 0.0
        %871 = vmatpush.msra.mxu0 0.0
        %872 = vmatpush.msra.mxu0 %v693
        %873 = vmatpush.msra.mxu0 %v691
        %874 = vmatpush.msra.mxu0 %v689
        %875 = vmatpush.msra.mxu0 %v687
        %876 = vmatmul.f32.gmra.mxu0 %v816
        %v877 = vpop.f32.mrf.mxu0
        %v878 = vadd.f32 0.0, %v877
        %879 = vdwg.mxu0
        %v880 = vadd.f32 %v549, %v878
        %881 = vmatpush.msra.mxu0 0.0
        %882 = vmatpush.msra.mxu0 0.0
        %883 = vmatpush.msra.mxu0 0.0
        %884 = vmatpush.msra.mxu0 0.0
        %885 = vmatpush.msra.mxu0 0.0
        %886 = vmatpush.msra.mxu0 0.0
        %887 = vmatpush.msra.mxu0 0.0
        %888 = vmatpush.msra.mxu0 0.0
        %889 = vmatpush.msra.mxu0 0.0
        %890 = vmatpush.msra.mxu0 0.0
        %891 = vmatpush.msra.mxu0 0.0
        %892 = vmatpush.msra.mxu0 0.0
        %893 = vmatpush.msra.mxu0 %v726
        %894 = vmatpush.msra.mxu0 %v724
        %895 = vmatpush.msra.mxu0 %v722
        %896 = vmatpush.msra.mxu0 %v720
        %897 = vmatmul.f32.gmra.mxu0 %v816
        %v898 = vpop.f32.mrf.mxu0
        %v899 = vadd.f32 0.0, %v898
        %900 = vdwg.mxu0
        %v901 = vadd.f32 %v605, %v899
        %v902 = vxor.u32 %v859, 2147483648
        %v903 = vmul.f32 %v902, 1.442695
        %v904 = vpow.pop %v903
        %v905 = vadd.f32 %v904, 1.0
        %v906 = vrcp.pop %v905
        %v907 = vmul.f32 %v905, %v906
        %v908 = vsub.f32 1.0, %v907
        %v909 = vmul.f32 %v906, %v908
        %v910 = vadd.f32 %v906, %v909
        %vm911 = vweird.f32 %v905
        %vm912 = vweird.f32 %v906
        %vm913 = vmor %vm911, %vm912
        %v914 = vsel %vm913, %v906, %v910
        %v915 = vand.u32 2147483647, %v905
        %vm916 = vcmp.eq.f32.partialorder %v915, 8.507059e+37
        %v917 = vand.u32 %v905, 2147483648
        %v918 = vor.u32 1.1754944e-38, %v917
        %v919 = vsel %vm916, %v918, %v914
        %v920 = vmul.f32 1.0, %v919
        %v921 = vmul.f32 %v920, %v793
        %v922 = vxor.u32 %v838, 2147483648
        %v923 = vmul.f32 %v922, 1.442695
        %v924 = vpow.pop %v923
        %v925 = vadd.f32 %v924, 1.0
        %v926 = vrcp.pop %v925
        %v927 = vmul.f32 %v925, %v926
        %v928 = vsub.f32 1.0, %v927
        %v929 = vmul.f32 %v926, %v928
        %v930 = vadd.f32 %v926, %v929
        %vm931 = vweird.f32 %v925
        %vm932 = vweird.f32 %v926
        %vm933 = vmor %vm931, %vm932
        %v934 = vsel %vm933, %v926, %v930
        %v935 = vand.u32 2147483647, %v925
        %vm936 = vcmp.eq.f32.partialorder %v935, 8.507059e+37
        %v937 = vand.u32 %v925, 2147483648
        %v938 = vor.u32 1.1754944e-38, %v937
        %v939 = vsel %vm936, %v938, %v934
        %v940 = vmul.f32 1.0, %v939
        %v941 = vtanh.pop %v880
        %v942 = vmul.f32 %v940, %v941
        %v943 = vadd.f32 %v921, %v942
        %v944 = vxor.u32 %v901, 2147483648
        %v945 = vmul.f32 %v944, 1.442695
        %v946 = vpow.pop %v945
        %v947 = vadd.f32 %v946, 1.0
        %v948 = vrcp.pop %v947
        %v949 = vmul.f32 %v947, %v948
        %v950 = vsub.f32 1.0, %v949
        %v951 = vmul.f32 %v948, %v950
        %v952 = vadd.f32 %v948, %v951
        %vm953 = vweird.f32 %v947
        %vm954 = vweird.f32 %v948
        %vm955 = vmor %vm953, %vm954
        %v956 = vsel %vm955, %v948, %v952
        %v957 = vand.u32 2147483647, %v947
        %vm958 = vcmp.eq.f32.partialorder %v957, 8.507059e+37
        %v959 = vand.u32 %v947, 2147483648
        %v960 = vor.u32 1.1754944e-38, %v959
        %v961 = vsel %vm958, %v960, %v956
        %v962 = vmul.f32 1.0, %v961
        %v963 = vtanh.pop %v943
        %v964 = vmul.f32 %v962, %v963
        %v966 = vsel %vm383, %v964, 0
        %968 = vmatpush.msra.mxu0 0.0
        %969 = vmatpush.msra.mxu0 0.0
        %970 = vmatpush.msra.mxu0 0.0
        %971 = vmatpush.msra.mxu0 0.0
        %972 = vmatpush.msra.mxu0 0.0
        %973 = vmatpush.msra.mxu0 0.0
        %974 = vmatpush.msra.mxu0 0.0
        %975 = vmatpush.msra.mxu0 0.0
        %976 = vmatpush.msra.mxu0 0.0
        %977 = vmatpush.msra.mxu0 0.0
        %978 = vmatpush.msra.mxu0 0.0
        %979 = vmatpush.msra.mxu0 0.0
        %980 = vmatpush.msra.mxu0 %v452
        %981 = vmatpush.msra.mxu0 %v451
        %982 = vmatpush.msra.mxu0 %v450
        %983 = vmatpush.msra.mxu0 %v449
        %984 = vmatmul.f32.gmra.mxu0 %v966
        %v985 = vpop.f32.mrf.mxu0
        %v986 = vadd.f32 0.0, %v985
        %987 = vdwg.mxu0
        %v988 = vadd.f32 %v432, %v986
        %989 = vmatpush.msra.mxu0 0.0
        %990 = vmatpush.msra.mxu0 0.0
        %991 = vmatpush.msra.mxu0 0.0
        %992 = vmatpush.msra.mxu0 0.0
        %993 = vmatpush.msra.mxu0 0.0
        %994 = vmatpush.msra.mxu0 0.0
        %995 = vmatpush.msra.mxu0 0.0
        %996 = vmatpush.msra.mxu0 0.0
        %997 = vmatpush.msra.mxu0 0.0
        %998 = vmatpush.msra.mxu0 0.0
        %999 = vmatpush.msra.mxu0 0.0
        %1000 = vmatpush.msra.mxu0 0.0
        %1001 = vmatpush.msra.mxu0 %v660
        %1002 = vmatpush.msra.mxu0 %v658
        %1003 = vmatpush.msra.mxu0 %v656
        %1004 = vmatpush.msra.mxu0 %v654
        %1005 = vmatmul.f32.gmra.mxu0 %v966
        %v1006 = vpop.f32.mrf.mxu0
        %v1007 = vadd.f32 0.0, %v1006
        %1008 = vdwg.mxu0
        %v1009 = vadd.f32 %v496, %v1007
        %1010 = vmatpush.msra.mxu0 0.0
        %1011 = vmatpush.msra.mxu0 0.0
        %1012 = vmatpush.msra.mxu0 0.0
        %1013 = vmatpush.msra.mxu0 0.0
        %1014 = vmatpush.msra.mxu0 0.0
        %1015 = vmatpush.msra.mxu0 0.0
        %1016 = vmatpush.msra.mxu0 0.0
        %1017 = vmatpush.msra.mxu0 0.0
        %1018 = vmatpush.msra.mxu0 0.0
        %1019 = vmatpush.msra.mxu0 0.0
        %1020 = vmatpush.msra.mxu0 0.0
        %1021 = vmatpush.msra.mxu0 0.0
        %1022 = vmatpush.msra.mxu0 %v693
        %1023 = vmatpush.msra.mxu0 %v691
        %1024 = vmatpush.msra.mxu0 %v689
        %1025 = vmatpush.msra.mxu0 %v687
        %1026 = vmatmul.f32.gmra.mxu0 %v966
        %v1027 = vpop.f32.mrf.mxu0
        %v1028 = vadd.f32 0.0, %v1027
        %1029 = vdwg.mxu0
        %v1030 = vadd.f32 %v552, %v1028
        %1031 = vmatpush.msra.mxu0 0.0
        %1032 = vmatpush.msra.mxu0 0.0
        %1033 = vmatpush.msra.mxu0 0.0
        %1034 = vmatpush.msra.mxu0 0.0
        %1035 = vmatpush.msra.mxu0 0.0
        %1036 = vmatpush.msra.mxu0 0.0
        %1037 = vmatpush.msra.mxu0 0.0
        %1038 = vmatpush.msra.mxu0 0.0
        %1039 = vmatpush.msra.mxu0 0.0
        %1040 = vmatpush.msra.mxu0 0.0
        %1041 = vmatpush.msra.mxu0 0.0
        %1042 = vmatpush.msra.mxu0 0.0
        %1043 = vmatpush.msra.mxu0 %v726
        %1044 = vmatpush.msra.mxu0 %v724
        %1045 = vmatpush.msra.mxu0 %v722
        %1046 = vmatpush.msra.mxu0 %v720
        %1047 = vmatmul.f32.gmra.mxu0 %v966
        %v1048 = vpop.f32.mrf.mxu0
        %v1049 = vadd.f32 0.0, %v1048
        %1050 = vdwg.mxu0
        %v1051 = vadd.f32 %v608, %v1049
        %v1052 = vxor.u32 %v1009, 2147483648
        %v1053 = vmul.f32 %v1052, 1.442695
        %v1054 = vpow.pop %v1053
        %v1055 = vadd.f32 %v1054, 1.0
        %v1056 = vrcp.pop %v1055
        %v1057 = vmul.f32 %v1055, %v1056
        %v1058 = vsub.f32 1.0, %v1057
        %v1059 = vmul.f32 %v1056, %v1058
        %v1060 = vadd.f32 %v1056, %v1059
        %vm1061 = vweird.f32 %v1055
        %vm1062 = vweird.f32 %v1056
        %vm1063 = vmor %vm1061, %vm1062
        %v1064 = vsel %vm1063, %v1056, %v1060
        %v1065 = vand.u32 2147483647, %v1055
        %vm1066 = vcmp.eq.f32.partialorder %v1065, 8.507059e+37
        %v1067 = vand.u32 %v1055, 2147483648
        %v1068 = vor.u32 1.1754944e-38, %v1067
        %v1069 = vsel %vm1066, %v1068, %v1064
        %v1070 = vmul.f32 1.0, %v1069
        %v1071 = vmul.f32 %v1070, %v943
        %v1072 = vxor.u32 %v988, 2147483648
        %v1073 = vmul.f32 %v1072, 1.442695
        %v1074 = vpow.pop %v1073
        %v1075 = vadd.f32 %v1074, 1.0
        %v1076 = vrcp.pop %v1075
        %v1077 = vmul.f32 %v1075, %v1076
        %v1078 = vsub.f32 1.0, %v1077
        %v1079 = vmul.f32 %v1076, %v1078
        %v1080 = vadd.f32 %v1076, %v1079
        %vm1081 = vweird.f32 %v1075
        %vm1082 = vweird.f32 %v1076
        %vm1083 = vmor %vm1081, %vm1082
        %v1084 = vsel %vm1083, %v1076, %v1080
        %v1085 = vand.u32 2147483647, %v1075
        %vm1086 = vcmp.eq.f32.partialorder %v1085, 8.507059e+37
        %v1087 = vand.u32 %v1075, 2147483648
        %v1088 = vor.u32 1.1754944e-38, %v1087
        %v1089 = vsel %vm1086, %v1088, %v1084
        %v1090 = vmul.f32 1.0, %v1089
        %v1091 = vtanh.pop %v1030
        %v1092 = vmul.f32 %v1090, %v1091
        %v1093 = vadd.f32 %v1071, %v1092
        %v1094 = vxor.u32 %v1051, 2147483648
        %v1095 = vmul.f32 %v1094, 1.442695
        %v1096 = vpow.pop %v1095
        %v1097 = vadd.f32 %v1096, 1.0
        %v1098 = vrcp.pop %v1097
        %v1099 = vmul.f32 %v1097, %v1098
        %v1100 = vsub.f32 1.0, %v1099
        %v1101 = vmul.f32 %v1098, %v1100
        %v1102 = vadd.f32 %v1098, %v1101
        %vm1103 = vweird.f32 %v1097
        %vm1104 = vweird.f32 %v1098
        %vm1105 = vmor %vm1103, %vm1104
        %v1106 = vsel %vm1105, %v1098, %v1102
        %v1107 = vand.u32 2147483647, %v1097
        %vm1108 = vcmp.eq.f32.partialorder %v1107, 8.507059e+37
        %v1109 = vand.u32 %v1097, 2147483648
        %v1110 = vor.u32 1.1754944e-38, %v1109
        %v1111 = vsel %vm1108, %v1110, %v1106
        %v1112 = vmul.f32 1.0, %v1111
        %v1113 = vtanh.pop %v1093
        %v1114 = vmul.f32 %v1112, %v1113
        %v1116 = vsel %vm383, %v1114, 0
        %1118 = vmatpush.msra.mxu0 0.0
        %1119 = vmatpush.msra.mxu0 0.0
        %1120 = vmatpush.msra.mxu0 0.0
        %1121 = vmatpush.msra.mxu0 0.0
        %1122 = vmatpush.msra.mxu0 0.0
        %1123 = vmatpush.msra.mxu0 0.0
        %1124 = vmatpush.msra.mxu0 0.0
        %1125 = vmatpush.msra.mxu0 0.0
        %1126 = vmatpush.msra.mxu0 0.0
        %1127 = vmatpush.msra.mxu0 0.0
        %1128 = vmatpush.msra.mxu0 0.0
        %1129 = vmatpush.msra.mxu0 0.0
        %1130 = vmatpush.msra.mxu0 %v452
        %1131 = vmatpush.msra.mxu0 %v451
        %1132 = vmatpush.msra.mxu0 %v450
        %1133 = vmatpush.msra.mxu0 %v449
        %1134 = vmatmul.f32.gmra.mxu0 %v1116
        %v1135 = vpop.f32.mrf.mxu0
        %v1136 = vadd.f32 0.0, %v1135
        %1137 = vdwg.mxu0
        %v1138 = vadd.f32 %v435, %v1136
        %1139 = vmatpush.msra.mxu0 0.0
        %1140 = vmatpush.msra.mxu0 0.0
        %1141 = vmatpush.msra.mxu0 0.0
        %1142 = vmatpush.msra.mxu0 0.0
        %1143 = vmatpush.msra.mxu0 0.0
        %1144 = vmatpush.msra.mxu0 0.0
        %1145 = vmatpush.msra.mxu0 0.0
        %1146 = vmatpush.msra.mxu0 0.0
        %1147 = vmatpush.msra.mxu0 0.0
        %1148 = vmatpush.msra.mxu0 0.0
        %1149 = vmatpush.msra.mxu0 0.0
        %1150 = vmatpush.msra.mxu0 0.0
        %1151 = vmatpush.msra.mxu0 %v660
        %1152 = vmatpush.msra.mxu0 %v658
        %1153 = vmatpush.msra.mxu0 %v656
        %1154 = vmatpush.msra.mxu0 %v654
        %1155 = vmatmul.f32.gmra.mxu0 %v1116
        %v1156 = vpop.f32.mrf.mxu0
        %v1157 = vadd.f32 0.0, %v1156
        %1158 = vdwg.mxu0
        %v1159 = vadd.f32 %v499, %v1157
        %1160 = vmatpush.msra.mxu0 0.0
        %1161 = vmatpush.msra.mxu0 0.0
        %1162 = vmatpush.msra.mxu0 0.0
        %1163 = vmatpush.msra.mxu0 0.0
        %1164 = vmatpush.msra.mxu0 0.0
        %1165 = vmatpush.msra.mxu0 0.0
        %1166 = vmatpush.msra.mxu0 0.0
        %1167 = vmatpush.msra.mxu0 0.0
        %1168 = vmatpush.msra.mxu0 0.0
        %1169 = vmatpush.msra.mxu0 0.0
        %1170 = vmatpush.msra.mxu0 0.0
        %1171 = vmatpush.msra.mxu0 0.0
        %1172 = vmatpush.msra.mxu0 %v693
        %1173 = vmatpush.msra.mxu0 %v691
        %1174 = vmatpush.msra.mxu0 %v689
        %1175 = vmatpush.msra.mxu0 %v687
        %1176 = vmatmul.f32.gmra.mxu0 %v1116
        %v1177 = vpop.f32.mrf.mxu0
        %v1178 = vadd.f32 0.0, %v1177
        %1179 = vdwg.mxu0
        %v1180 = vadd.f32 %v555, %v1178
        %1181 = vmatpush.msra.mxu0 0.0
        %1182 = vmatpush.msra.mxu0 0.0
        %1183 = vmatpush.msra.mxu0 0.0
        %1184 = vmatpush.msra.mxu0 0.0
        %1185 = vmatpush.msra.mxu0 0.0
        %1186 = vmatpush.msra.mxu0 0.0
        %1187 = vmatpush.msra.mxu0 0.0
        %1188 = vmatpush.msra.mxu0 0.0
        %1189 = vmatpush.msra.mxu0 0.0
        %1190 = vmatpush.msra.mxu0 0.0
        %1191 = vmatpush.msra.mxu0 0.0
        %1192 = vmatpush.msra.mxu0 0.0
        %1193 = vmatpush.msra.mxu0 %v726
        %1194 = vmatpush.msra.mxu0 %v724
        %1195 = vmatpush.msra.mxu0 %v722
        %1196 = vmatpush.msra.mxu0 %v720
        %1197 = vmatmul.f32.gmra.mxu0 %v1116
        %v1198 = vpop.f32.mrf.mxu0
        %v1199 = vadd.f32 0.0, %v1198
        %1200 = vdwg.mxu0
        %v1201 = vadd.f32 %v611, %v1199
        %v1202 = vxor.u32 %v1159, 2147483648
        %v1203 = vmul.f32 %v1202, 1.442695
        %v1204 = vpow.pop %v1203
        %v1205 = vadd.f32 %v1204, 1.0
        %v1206 = vrcp.pop %v1205
        %v1207 = vmul.f32 %v1205, %v1206
        %v1208 = vsub.f32 1.0, %v1207
        %v1209 = vmul.f32 %v1206, %v1208
        %v1210 = vadd.f32 %v1206, %v1209
        %vm1211 = vweird.f32 %v1205
        %vm1212 = vweird.f32 %v1206
        %vm1213 = vmor %vm1211, %vm1212
        %v1214 = vsel %vm1213, %v1206, %v1210
        %v1215 = vand.u32 2147483647, %v1205
        %vm1216 = vcmp.eq.f32.partialorder %v1215, 8.507059e+37
        %v1217 = vand.u32 %v1205, 2147483648
        %v1218 = vor.u32 1.1754944e-38, %v1217
        %v1219 = vsel %vm1216, %v1218, %v1214
        %v1220 = vmul.f32 1.0, %v1219
        %v1221 = vmul.f32 %v1220, %v1093
        %v1222 = vxor.u32 %v1138, 2147483648
        %v1223 = vmul.f32 %v1222, 1.442695
        %v1224 = vpow.pop %v1223
        %v1225 = vadd.f32 %v1224, 1.0
        %v1226 = vrcp.pop %v1225
        %v1227 = vmul.f32 %v1225, %v1226
        %v1228 = vsub.f32 1.0, %v1227
        %v1229 = vmul.f32 %v1226, %v1228
        %v1230 = vadd.f32 %v1226, %v1229
        %vm1231 = vweird.f32 %v1225
        %vm1232 = vweird.f32 %v1226
        %vm1233 = vmor %vm1231, %vm1232
        %v1234 = vsel %vm1233, %v1226, %v1230
        %v1235 = vand.u32 2147483647, %v1225
        %vm1236 = vcmp.eq.f32.partialorder %v1235, 8.507059e+37
        %v1237 = vand.u32 %v1225, 2147483648
        %v1238 = vor.u32 1.1754944e-38, %v1237
        %v1239 = vsel %vm1236, %v1238, %v1234
        %v1240 = vmul.f32 1.0, %v1239
        %v1241 = vtanh.pop %v1180
        %v1242 = vmul.f32 %v1240, %v1241
        %v1243 = vadd.f32 %v1221, %v1242
        %v1244 = vxor.u32 %v1201, 2147483648
        %v1245 = vmul.f32 %v1244, 1.442695
        %v1246 = vpow.pop %v1245
        %v1247 = vadd.f32 %v1246, 1.0
        %v1248 = vrcp.pop %v1247
        %v1249 = vmul.f32 %v1247, %v1248
        %v1250 = vsub.f32 1.0, %v1249
        %v1251 = vmul.f32 %v1248, %v1250
        %v1252 = vadd.f32 %v1248, %v1251
        %vm1253 = vweird.f32 %v1247
        %vm1254 = vweird.f32 %v1248
        %vm1255 = vmor %vm1253, %vm1254
        %v1256 = vsel %vm1255, %v1248, %v1252
        %v1257 = vand.u32 2147483647, %v1247
        %vm1258 = vcmp.eq.f32.partialorder %v1257, 8.507059e+37
        %v1259 = vand.u32 %v1247, 2147483648
        %v1260 = vor.u32 1.1754944e-38, %v1259
        %v1261 = vsel %vm1258, %v1260, %v1256
        %v1262 = vmul.f32 1.0, %v1261
        %v1263 = vtanh.pop %v1243
        %v1264 = vmul.f32 %v1262, %v1263
        %v1266 = vsel %vm383, %v1264, 0
        %1268 = vmatpush.msra.mxu0 0.0
        %1269 = vmatpush.msra.mxu0 0.0
        %1270 = vmatpush.msra.mxu0 0.0
        %1271 = vmatpush.msra.mxu0 0.0
        %1272 = vmatpush.msra.mxu0 0.0
        %1273 = vmatpush.msra.mxu0 0.0
        %1274 = vmatpush.msra.mxu0 0.0
        %1275 = vmatpush.msra.mxu0 0.0
        %1276 = vmatpush.msra.mxu0 0.0
        %1277 = vmatpush.msra.mxu0 0.0
        %1278 = vmatpush.msra.mxu0 0.0
        %1279 = vmatpush.msra.mxu0 0.0
        %1280 = vmatpush.msra.mxu0 %v452
        %1281 = vmatpush.msra.mxu0 %v451
        %1282 = vmatpush.msra.mxu0 %v450
        %1283 = vmatpush.msra.mxu0 %v449
        %1284 = vmatmul.f32.gmra.mxu0 %v1266
        %v1285 = vpop.f32.mrf.mxu0
        %v1286 = vadd.f32 0.0, %v1285
        %1287 = vdwg.mxu0
        %v1288 = vadd.f32 %v438, %v1286
        %1289 = vmatpush.msra.mxu0 0.0
        %1290 = vmatpush.msra.mxu0 0.0
        %1291 = vmatpush.msra.mxu0 0.0
        %1292 = vmatpush.msra.mxu0 0.0
        %1293 = vmatpush.msra.mxu0 0.0
        %1294 = vmatpush.msra.mxu0 0.0
        %1295 = vmatpush.msra.mxu0 0.0
        %1296 = vmatpush.msra.mxu0 0.0
        %1297 = vmatpush.msra.mxu0 0.0
        %1298 = vmatpush.msra.mxu0 0.0
        %1299 = vmatpush.msra.mxu0 0.0
        %1300 = vmatpush.msra.mxu0 0.0
        %1301 = vmatpush.msra.mxu0 %v660
        %1302 = vmatpush.msra.mxu0 %v658
        %1303 = vmatpush.msra.mxu0 %v656
        %1304 = vmatpush.msra.mxu0 %v654
        %1305 = vmatmul.f32.gmra.mxu0 %v1266
        %v1306 = vpop.f32.mrf.mxu0
        %v1307 = vadd.f32 0.0, %v1306
        %1308 = vdwg.mxu0
        %v1309 = vadd.f32 %v502, %v1307
        %1310 = vmatpush.msra.mxu0 0.0
        %1311 = vmatpush.msra.mxu0 0.0
        %1312 = vmatpush.msra.mxu0 0.0
        %1313 = vmatpush.msra.mxu0 0.0
        %1314 = vmatpush.msra.mxu0 0.0
        %1315 = vmatpush.msra.mxu0 0.0
        %1316 = vmatpush.msra.mxu0 0.0
        %1317 = vmatpush.msra.mxu0 0.0
        %1318 = vmatpush.msra.mxu0 0.0
        %1319 = vmatpush.msra.mxu0 0.0
        %1320 = vmatpush.msra.mxu0 0.0
        %1321 = vmatpush.msra.mxu0 0.0
        %1322 = vmatpush.msra.mxu0 %v693
        %1323 = vmatpush.msra.mxu0 %v691
        %1324 = vmatpush.msra.mxu0 %v689
        %1325 = vmatpush.msra.mxu0 %v687
        %1326 = vmatmul.f32.gmra.mxu0 %v1266
        %v1327 = vpop.f32.mrf.mxu0
        %v1328 = vadd.f32 0.0, %v1327
        %1329 = vdwg.mxu0
        %v1330 = vadd.f32 %v558, %v1328
        %1331 = vmatpush.msra.mxu0 0.0
        %1332 = vmatpush.msra.mxu0 0.0
        %1333 = vmatpush.msra.mxu0 0.0
        %1334 = vmatpush.msra.mxu0 0.0
        %1335 = vmatpush.msra.mxu0 0.0
        %1336 = vmatpush.msra.mxu0 0.0
        %1337 = vmatpush.msra.mxu0 0.0
        %1338 = vmatpush.msra.mxu0 0.0
        %1339 = vmatpush.msra.mxu0 0.0
        %1340 = vmatpush.msra.mxu0 0.0
        %1341 = vmatpush.msra.mxu0 0.0
        %1342 = vmatpush.msra.mxu0 0.0
        %1343 = vmatpush.msra.mxu0 %v726
        %1344 = vmatpush.msra.mxu0 %v724
        %1345 = vmatpush.msra.mxu0 %v722
        %1346 = vmatpush.msra.mxu0 %v720
        %1347 = vmatmul.f32.gmra.mxu0 %v1266
        %v1348 = vpop.f32.mrf.mxu0
        %v1349 = vadd.f32 0.0, %v1348
        %1350 = vdwg.mxu0
        %v1351 = vadd.f32 %v614, %v1349
        %v1352 = vxor.u32 %v1309, 2147483648
        %v1353 = vmul.f32 %v1352, 1.442695
        %v1354 = vpow.pop %v1353
        %v1355 = vadd.f32 %v1354, 1.0
        %v1356 = vrcp.pop %v1355
        %v1357 = vmul.f32 %v1355, %v1356
        %v1358 = vsub.f32 1.0, %v1357
        %v1359 = vmul.f32 %v1356, %v1358
        %v1360 = vadd.f32 %v1356, %v1359
        %vm1361 = vweird.f32 %v1355
        %vm1362 = vweird.f32 %v1356
        %vm1363 = vmor %vm1361, %vm1362
        %v1364 = vsel %vm1363, %v1356, %v1360
        %v1365 = vand.u32 2147483647, %v1355
        %vm1366 = vcmp.eq.f32.partialorder %v1365, 8.507059e+37
        %v1367 = vand.u32 %v1355, 2147483648
        %v1368 = vor.u32 1.1754944e-38, %v1367
        %v1369 = vsel %vm1366, %v1368, %v1364
        %v1370 = vmul.f32 1.0, %v1369
        %v1371 = vmul.f32 %v1370, %v1243
        %v1372 = vxor.u32 %v1288, 2147483648
        %v1373 = vmul.f32 %v1372, 1.442695
        %v1374 = vpow.pop %v1373
        %v1375 = vadd.f32 %v1374, 1.0
        %v1376 = vrcp.pop %v1375
        %v1377 = vmul.f32 %v1375, %v1376
        %v1378 = vsub.f32 1.0, %v1377
        %v1379 = vmul.f32 %v1376, %v1378
        %v1380 = vadd.f32 %v1376, %v1379
        %vm1381 = vweird.f32 %v1375
        %vm1382 = vweird.f32 %v1376
        %vm1383 = vmor %vm1381, %vm1382
        %v1384 = vsel %vm1383, %v1376, %v1380
        %v1385 = vand.u32 2147483647, %v1375
        %vm1386 = vcmp.eq.f32.partialorder %v1385, 8.507059e+37
        %v1387 = vand.u32 %v1375, 2147483648
        %v1388 = vor.u32 1.1754944e-38, %v1387
        %v1389 = vsel %vm1386, %v1388, %v1384
        %v1390 = vmul.f32 1.0, %v1389
        %v1391 = vtanh.pop %v1330
        %v1392 = vmul.f32 %v1390, %v1391
        %v1393 = vadd.f32 %v1371, %v1392
        %v1394 = vxor.u32 %v1351, 2147483648
        %v1395 = vmul.f32 %v1394, 1.442695
        %v1396 = vpow.pop %v1395
        %v1397 = vadd.f32 %v1396, 1.0
        %v1398 = vrcp.pop %v1397
        %v1399 = vmul.f32 %v1397, %v1398
        %v1400 = vsub.f32 1.0, %v1399
        %v1401 = vmul.f32 %v1398, %v1400
        %v1402 = vadd.f32 %v1398, %v1401
        %vm1403 = vweird.f32 %v1397
        %vm1404 = vweird.f32 %v1398
        %vm1405 = vmor %vm1403, %vm1404
        %v1406 = vsel %vm1405, %v1398, %v1402
        %v1407 = vand.u32 2147483647, %v1397
        %vm1408 = vcmp.eq.f32.partialorder %v1407, 8.507059e+37
        %v1409 = vand.u32 %v1397, 2147483648
        %v1410 = vor.u32 1.1754944e-38, %v1409
        %v1411 = vsel %vm1408, %v1410, %v1406
        %v1412 = vmul.f32 1.0, %v1411
        %v1413 = vtanh.pop %v1393
        %v1414 = vmul.f32 %v1412, %v1413
        %v1416 = vsel %vm383, %v1414, 0
        %1418 = vmatpush.msra.mxu0 0.0
        %1419 = vmatpush.msra.mxu0 0.0
        %1420 = vmatpush.msra.mxu0 0.0
        %1421 = vmatpush.msra.mxu0 0.0
        %1422 = vmatpush.msra.mxu0 0.0
        %1423 = vmatpush.msra.mxu0 0.0
        %1424 = vmatpush.msra.mxu0 0.0
        %1425 = vmatpush.msra.mxu0 0.0
        %1426 = vmatpush.msra.mxu0 0.0
        %1427 = vmatpush.msra.mxu0 0.0
        %1428 = vmatpush.msra.mxu0 0.0
        %1429 = vmatpush.msra.mxu0 0.0
        %1430 = vmatpush.msra.mxu0 %v452
        %1431 = vmatpush.msra.mxu0 %v451
        %1432 = vmatpush.msra.mxu0 %v450
        %1433 = vmatpush.msra.mxu0 %v449
        %1434 = vmatmul.f32.gmra.mxu0 %v1416
        %v1435 = vpop.f32.mrf.mxu0
        %v1436 = vadd.f32 0.0, %v1435
        %1437 = vdwg.mxu0
        %v1438 = vadd.f32 %v441, %v1436
        %1439 = vmatpush.msra.mxu0 0.0
        %1440 = vmatpush.msra.mxu0 0.0
        %1441 = vmatpush.msra.mxu0 0.0
        %1442 = vmatpush.msra.mxu0 0.0
        %1443 = vmatpush.msra.mxu0 0.0
        %1444 = vmatpush.msra.mxu0 0.0
        %1445 = vmatpush.msra.mxu0 0.0
        %1446 = vmatpush.msra.mxu0 0.0
        %1447 = vmatpush.msra.mxu0 0.0
        %1448 = vmatpush.msra.mxu0 0.0
        %1449 = vmatpush.msra.mxu0 0.0
        %1450 = vmatpush.msra.mxu0 0.0
        %1451 = vmatpush.msra.mxu0 %v660
        %1452 = vmatpush.msra.mxu0 %v658
        %1453 = vmatpush.msra.mxu0 %v656
        %1454 = vmatpush.msra.mxu0 %v654
        %1455 = vmatmul.f32.gmra.mxu0 %v1416
        %v1456 = vpop.f32.mrf.mxu0
        %v1457 = vadd.f32 0.0, %v1456
        %1458 = vdwg.mxu0
        %v1459 = vadd.f32 %v505, %v1457
        %1460 = vmatpush.msra.mxu0 0.0
        %1461 = vmatpush.msra.mxu0 0.0
        %1462 = vmatpush.msra.mxu0 0.0
        %1463 = vmatpush.msra.mxu0 0.0
        %1464 = vmatpush.msra.mxu0 0.0
        %1465 = vmatpush.msra.mxu0 0.0
        %1466 = vmatpush.msra.mxu0 0.0
        %1467 = vmatpush.msra.mxu0 0.0
        %1468 = vmatpush.msra.mxu0 0.0
        %1469 = vmatpush.msra.mxu0 0.0
        %1470 = vmatpush.msra.mxu0 0.0
        %1471 = vmatpush.msra.mxu0 0.0
        %1472 = vmatpush.msra.mxu0 %v693
        %1473 = vmatpush.msra.mxu0 %v691
        %1474 = vmatpush.msra.mxu0 %v689
        %1475 = vmatpush.msra.mxu0 %v687
        %1476 = vmatmul.f32.gmra.mxu0 %v1416
        %v1477 = vpop.f32.mrf.mxu0
        %v1478 = vadd.f32 0.0, %v1477
        %1479 = vdwg.mxu0
        %v1480 = vadd.f32 %v561, %v1478
        %1481 = vmatpush.msra.mxu0 0.0
        %1482 = vmatpush.msra.mxu0 0.0
        %1483 = vmatpush.msra.mxu0 0.0
        %1484 = vmatpush.msra.mxu0 0.0
        %1485 = vmatpush.msra.mxu0 0.0
        %1486 = vmatpush.msra.mxu0 0.0
        %1487 = vmatpush.msra.mxu0 0.0
        %1488 = vmatpush.msra.mxu0 0.0
        %1489 = vmatpush.msra.mxu0 0.0
        %1490 = vmatpush.msra.mxu0 0.0
        %1491 = vmatpush.msra.mxu0 0.0
        %1492 = vmatpush.msra.mxu0 0.0
        %1493 = vmatpush.msra.mxu0 %v726
        %1494 = vmatpush.msra.mxu0 %v724
        %1495 = vmatpush.msra.mxu0 %v722
        %1496 = vmatpush.msra.mxu0 %v720
        %1497 = vmatmul.f32.gmra.mxu0 %v1416
        %v1498 = vpop.f32.mrf.mxu0
        %v1499 = vadd.f32 0.0, %v1498
        %1500 = vdwg.mxu0
        %v1501 = vadd.f32 %v617, %v1499
        %v1502 = vxor.u32 %v1459, 2147483648
        %v1503 = vmul.f32 %v1502, 1.442695
        %v1504 = vpow.pop %v1503
        %v1505 = vadd.f32 %v1504, 1.0
        %v1506 = vrcp.pop %v1505
        %v1507 = vmul.f32 %v1505, %v1506
        %v1508 = vsub.f32 1.0, %v1507
        %v1509 = vmul.f32 %v1506, %v1508
        %v1510 = vadd.f32 %v1506, %v1509
        %vm1511 = vweird.f32 %v1505
        %vm1512 = vweird.f32 %v1506
        %vm1513 = vmor %vm1511, %vm1512
        %v1514 = vsel %vm1513, %v1506, %v1510
        %v1515 = vand.u32 2147483647, %v1505
        %vm1516 = vcmp.eq.f32.partialorder %v1515, 8.507059e+37
        %v1517 = vand.u32 %v1505, 2147483648
        %v1518 = vor.u32 1.1754944e-38, %v1517
        %v1519 = vsel %vm1516, %v1518, %v1514
        %v1520 = vmul.f32 1.0, %v1519
        %v1521 = vmul.f32 %v1520, %v1393
        %v1522 = vxor.u32 %v1438, 2147483648
        %v1523 = vmul.f32 %v1522, 1.442695
        %v1524 = vpow.pop %v1523
        %v1525 = vadd.f32 %v1524, 1.0
        %v1526 = vrcp.pop %v1525
        %v1527 = vmul.f32 %v1525, %v1526
        %v1528 = vsub.f32 1.0, %v1527
        %v1529 = vmul.f32 %v1526, %v1528
        %v1530 = vadd.f32 %v1526, %v1529
        %vm1531 = vweird.f32 %v1525
        %vm1532 = vweird.f32 %v1526
        %vm1533 = vmor %vm1531, %vm1532
        %v1534 = vsel %vm1533, %v1526, %v1530
        %v1535 = vand.u32 2147483647, %v1525
        %vm1536 = vcmp.eq.f32.partialorder %v1535, 8.507059e+37
        %v1537 = vand.u32 %v1525, 2147483648
        %v1538 = vor.u32 1.1754944e-38, %v1537
        %v1539 = vsel %vm1536, %v1538, %v1534
        %v1540 = vmul.f32 1.0, %v1539
        %v1541 = vtanh.pop %v1480
        %v1542 = vmul.f32 %v1540, %v1541
        %v1543 = vadd.f32 %v1521, %v1542
        %v1544 = vxor.u32 %v1501, 2147483648
        %v1545 = vmul.f32 %v1544, 1.442695
        %v1546 = vpow.pop %v1545
        %v1547 = vadd.f32 %v1546, 1.0
        %v1548 = vrcp.pop %v1547
        %v1549 = vmul.f32 %v1547, %v1548
        %v1550 = vsub.f32 1.0, %v1549
        %v1551 = vmul.f32 %v1548, %v1550
        %v1552 = vadd.f32 %v1548, %v1551
        %vm1553 = vweird.f32 %v1547
        %vm1554 = vweird.f32 %v1548
        %vm1555 = vmor %vm1553, %vm1554
        %v1556 = vsel %vm1555, %v1548, %v1552
        %v1557 = vand.u32 2147483647, %v1547
        %vm1558 = vcmp.eq.f32.partialorder %v1557, 8.507059e+37
        %v1559 = vand.u32 %v1547, 2147483648
        %v1560 = vor.u32 1.1754944e-38, %v1559
        %v1561 = vsel %vm1558, %v1560, %v1556
        %v1562 = vmul.f32 1.0, %v1561
        %v1563 = vtanh.pop %v1543
        %v1564 = vmul.f32 %v1562, %v1563
        %v1566 = vsel %vm383, %v1564, 0
        %1568 = vmatpush.msra.mxu0 0.0
        %1569 = vmatpush.msra.mxu0 0.0
        %1570 = vmatpush.msra.mxu0 0.0
        %1571 = vmatpush.msra.mxu0 0.0
        %1572 = vmatpush.msra.mxu0 0.0
        %1573 = vmatpush.msra.mxu0 0.0
        %1574 = vmatpush.msra.mxu0 0.0
        %1575 = vmatpush.msra.mxu0 0.0
        %1576 = vmatpush.msra.mxu0 0.0
        %1577 = vmatpush.msra.mxu0 0.0
        %1578 = vmatpush.msra.mxu0 0.0
        %1579 = vmatpush.msra.mxu0 0.0
        %1580 = vmatpush.msra.mxu0 %v452
        %1581 = vmatpush.msra.mxu0 %v451
        %1582 = vmatpush.msra.mxu0 %v450
        %1583 = vmatpush.msra.mxu0 %v449
        %1584 = vmatmul.f32.gmra.mxu0 %v1566
        %v1585 = vpop.f32.mrf.mxu0
        %v1586 = vadd.f32 0.0, %v1585
        %1587 = vdwg.mxu0
        %v1588 = vadd.f32 %v444, %v1586
        %1589 = vmatpush.msra.mxu0 0.0
        %1590 = vmatpush.msra.mxu0 0.0
        %1591 = vmatpush.msra.mxu0 0.0
        %1592 = vmatpush.msra.mxu0 0.0
        %1593 = vmatpush.msra.mxu0 0.0
        %1594 = vmatpush.msra.mxu0 0.0
        %1595 = vmatpush.msra.mxu0 0.0
        %1596 = vmatpush.msra.mxu0 0.0
        %1597 = vmatpush.msra.mxu0 0.0
        %1598 = vmatpush.msra.mxu0 0.0
        %1599 = vmatpush.msra.mxu0 0.0
        %1600 = vmatpush.msra.mxu0 0.0
        %1601 = vmatpush.msra.mxu0 %v660
        %1602 = vmatpush.msra.mxu0 %v658
        %1603 = vmatpush.msra.mxu0 %v656
        %1604 = vmatpush.msra.mxu0 %v654
        %1605 = vmatmul.f32.gmra.mxu0 %v1566
        %v1606 = vpop.f32.mrf.mxu0
        %v1607 = vadd.f32 0.0, %v1606
        %1608 = vdwg.mxu0
        %v1609 = vadd.f32 %v508, %v1607
        %1610 = vmatpush.msra.mxu0 0.0
        %1611 = vmatpush.msra.mxu0 0.0
        %1612 = vmatpush.msra.mxu0 0.0
        %1613 = vmatpush.msra.mxu0 0.0
        %1614 = vmatpush.msra.mxu0 0.0
        %1615 = vmatpush.msra.mxu0 0.0
        %1616 = vmatpush.msra.mxu0 0.0
        %1617 = vmatpush.msra.mxu0 0.0
        %1618 = vmatpush.msra.mxu0 0.0
        %1619 = vmatpush.msra.mxu0 0.0
        %1620 = vmatpush.msra.mxu0 0.0
        %1621 = vmatpush.msra.mxu0 0.0
        %1622 = vmatpush.msra.mxu0 %v693
        %1623 = vmatpush.msra.mxu0 %v691
        %1624 = vmatpush.msra.mxu0 %v689
        %1625 = vmatpush.msra.mxu0 %v687
        %1626 = vmatmul.f32.gmra.mxu0 %v1566
        %v1627 = vpop.f32.mrf.mxu0
        %v1628 = vadd.f32 0.0, %v1627
        %1629 = vdwg.mxu0
        %v1630 = vadd.f32 %v564, %v1628
        %1631 = vmatpush.msra.mxu0 0.0
        %1632 = vmatpush.msra.mxu0 0.0
        %1633 = vmatpush.msra.mxu0 0.0
        %1634 = vmatpush.msra.mxu0 0.0
        %1635 = vmatpush.msra.mxu0 0.0
        %1636 = vmatpush.msra.mxu0 0.0
        %1637 = vmatpush.msra.mxu0 0.0
        %1638 = vmatpush.msra.mxu0 0.0
        %1639 = vmatpush.msra.mxu0 0.0
        %1640 = vmatpush.msra.mxu0 0.0
        %1641 = vmatpush.msra.mxu0 0.0
        %1642 = vmatpush.msra.mxu0 0.0
        %1643 = vmatpush.msra.mxu0 %v726
        %1644 = vmatpush.msra.mxu0 %v724
        %1645 = vmatpush.msra.mxu0 %v722
        %1646 = vmatpush.msra.mxu0 %v720
        %1647 = vmatmul.f32.gmra.mxu0 %v1566
        %v1648 = vpop.f32.mrf.mxu0
        %v1649 = vadd.f32 0.0, %v1648
        %1650 = vdwg.mxu0
        %v1651 = vadd.f32 %v620, %v1649
        %v1652 = vxor.u32 %v1609, 2147483648
        %v1653 = vmul.f32 %v1652, 1.442695
        %v1654 = vpow.pop %v1653
        %v1655 = vadd.f32 %v1654, 1.0
        %v1656 = vrcp.pop %v1655
        %v1657 = vmul.f32 %v1655, %v1656
        %v1658 = vsub.f32 1.0, %v1657
        %v1659 = vmul.f32 %v1656, %v1658
        %v1660 = vadd.f32 %v1656, %v1659
        %vm1661 = vweird.f32 %v1655
        %vm1662 = vweird.f32 %v1656
        %vm1663 = vmor %vm1661, %vm1662
        %v1664 = vsel %vm1663, %v1656, %v1660
        %v1665 = vand.u32 2147483647, %v1655
        %vm1666 = vcmp.eq.f32.partialorder %v1665, 8.507059e+37
        %v1667 = vand.u32 %v1655, 2147483648
        %v1668 = vor.u32 1.1754944e-38, %v1667
        %v1669 = vsel %vm1666, %v1668, %v1664
        %v1670 = vmul.f32 1.0, %v1669
        %v1671 = vmul.f32 %v1670, %v1543
        %v1672 = vxor.u32 %v1588, 2147483648
        %v1673 = vmul.f32 %v1672, 1.442695
        %v1674 = vpow.pop %v1673
        %v1675 = vadd.f32 %v1674, 1.0
        %v1676 = vrcp.pop %v1675
        %v1677 = vmul.f32 %v1675, %v1676
        %v1678 = vsub.f32 1.0, %v1677
        %v1679 = vmul.f32 %v1676, %v1678
        %v1680 = vadd.f32 %v1676, %v1679
        %vm1681 = vweird.f32 %v1675
        %vm1682 = vweird.f32 %v1676
        %vm1683 = vmor %vm1681, %vm1682
        %v1684 = vsel %vm1683, %v1676, %v1680
        %v1685 = vand.u32 2147483647, %v1675
        %vm1686 = vcmp.eq.f32.partialorder %v1685, 8.507059e+37
        %v1687 = vand.u32 %v1675, 2147483648
        %v1688 = vor.u32 1.1754944e-38, %v1687
        %v1689 = vsel %vm1686, %v1688, %v1684
        %v1690 = vmul.f32 1.0, %v1689
        %v1691 = vtanh.pop %v1630
        %v1692 = vmul.f32 %v1690, %v1691
        %v1693 = vadd.f32 %v1671, %v1692
        %v1694 = vxor.u32 %v1651, 2147483648
        %v1695 = vmul.f32 %v1694, 1.442695
        %v1696 = vpow.pop %v1695
        %v1697 = vadd.f32 %v1696, 1.0
        %v1698 = vrcp.pop %v1697
        %v1699 = vmul.f32 %v1697, %v1698
        %v1700 = vsub.f32 1.0, %v1699
        %v1701 = vmul.f32 %v1698, %v1700
        %v1702 = vadd.f32 %v1698, %v1701
        %vm1703 = vweird.f32 %v1697
        %vm1704 = vweird.f32 %v1698
        %vm1705 = vmor %vm1703, %vm1704
        %v1706 = vsel %vm1705, %v1698, %v1702
        %v1707 = vand.u32 2147483647, %v1697
        %vm1708 = vcmp.eq.f32.partialorder %v1707, 8.507059e+37
        %v1709 = vand.u32 %v1697, 2147483648
        %v1710 = vor.u32 1.1754944e-38, %v1709
        %v1711 = vsel %vm1708, %v1710, %v1706
        %v1712 = vmul.f32 1.0, %v1711
        %v1713 = vtanh.pop %v1693
        %v1714 = vmul.f32 %v1712, %v1713
        %v1716 = vsel %vm383, %v1714, 0
        %1718 = vmatpush.msra.mxu0 0.0
        %1719 = vmatpush.msra.mxu0 0.0
        %1720 = vmatpush.msra.mxu0 0.0
        %1721 = vmatpush.msra.mxu0 0.0
        %1722 = vmatpush.msra.mxu0 0.0
        %1723 = vmatpush.msra.mxu0 0.0
        %1724 = vmatpush.msra.mxu0 0.0
        %1725 = vmatpush.msra.mxu0 0.0
        %1726 = vmatpush.msra.mxu0 0.0
        %1727 = vmatpush.msra.mxu0 0.0
        %1728 = vmatpush.msra.mxu0 0.0
        %1729 = vmatpush.msra.mxu0 0.0
        %1730 = vmatpush.msra.mxu0 %v452
        %1731 = vmatpush.msra.mxu0 %v451
        %1732 = vmatpush.msra.mxu0 %v450
        %1733 = vmatpush.msra.mxu0 %v449
        %1734 = vmatmul.f32.gmra.mxu0 %v1716
        %v1735 = vpop.f32.mrf.mxu0
        %v1736 = vadd.f32 0.0, %v1735
        %1737 = vdwg.mxu0
        %v1738 = vadd.f32 %v447, %v1736
        %1739 = vmatpush.msra.mxu0 0.0
        %1740 = vmatpush.msra.mxu0 0.0
        %1741 = vmatpush.msra.mxu0 0.0
        %1742 = vmatpush.msra.mxu0 0.0
        %1743 = vmatpush.msra.mxu0 0.0
        %1744 = vmatpush.msra.mxu0 0.0
        %1745 = vmatpush.msra.mxu0 0.0
        %1746 = vmatpush.msra.mxu0 0.0
        %1747 = vmatpush.msra.mxu0 0.0
        %1748 = vmatpush.msra.mxu0 0.0
        %1749 = vmatpush.msra.mxu0 0.0
        %1750 = vmatpush.msra.mxu0 0.0
        %1751 = vmatpush.msra.mxu0 %v660
        %1752 = vmatpush.msra.mxu0 %v658
        %1753 = vmatpush.msra.mxu0 %v656
        %1754 = vmatpush.msra.mxu0 %v654
        %1755 = vmatmul.f32.gmra.mxu0 %v1716
        %v1756 = vpop.f32.mrf.mxu0
        %v1757 = vadd.f32 0.0, %v1756
        %1758 = vdwg.mxu0
        %v1759 = vadd.f32 %v511, %v1757
        %1760 = vmatpush.msra.mxu0 0.0
        %1761 = vmatpush.msra.mxu0 0.0
        %1762 = vmatpush.msra.mxu0 0.0
        %1763 = vmatpush.msra.mxu0 0.0
        %1764 = vmatpush.msra.mxu0 0.0
        %1765 = vmatpush.msra.mxu0 0.0
        %1766 = vmatpush.msra.mxu0 0.0
        %1767 = vmatpush.msra.mxu0 0.0
        %1768 = vmatpush.msra.mxu0 0.0
        %1769 = vmatpush.msra.mxu0 0.0
        %1770 = vmatpush.msra.mxu0 0.0
        %1771 = vmatpush.msra.mxu0 0.0
        %1772 = vmatpush.msra.mxu0 %v693
        %1773 = vmatpush.msra.mxu0 %v691
        %1774 = vmatpush.msra.mxu0 %v689
        %1775 = vmatpush.msra.mxu0 %v687
        %1776 = vmatmul.f32.gmra.mxu0 %v1716
        %v1777 = vpop.f32.mrf.mxu0
        %v1778 = vadd.f32 0.0, %v1777
        %1779 = vdwg.mxu0
        %v1780 = vadd.f32 %v567, %v1778
        %1781 = vmatpush.msra.mxu0 0.0
        %1782 = vmatpush.msra.mxu0 0.0
        %1783 = vmatpush.msra.mxu0 0.0
        %1784 = vmatpush.msra.mxu0 0.0
        %1785 = vmatpush.msra.mxu0 0.0
        %1786 = vmatpush.msra.mxu0 0.0
        %1787 = vmatpush.msra.mxu0 0.0
        %1788 = vmatpush.msra.mxu0 0.0
        %1789 = vmatpush.msra.mxu0 0.0
        %1790 = vmatpush.msra.mxu0 0.0
        %1791 = vmatpush.msra.mxu0 0.0
        %1792 = vmatpush.msra.mxu0 0.0
        %1793 = vmatpush.msra.mxu0 %v726
        %1794 = vmatpush.msra.mxu0 %v724
        %1795 = vmatpush.msra.mxu0 %v722
        %1796 = vmatpush.msra.mxu0 %v720
        %1797 = vmatmul.f32.gmra.mxu0 %v1716
        %v1798 = vpop.f32.mrf.mxu0
        %v1799 = vadd.f32 0.0, %v1798
        %1800 = vdwg.mxu0
        %v1801 = vadd.f32 %v623, %v1799
        %v1802 = vxor.u32 %v1759, 2147483648
        %v1803 = vmul.f32 %v1802, 1.442695
        %v1804 = vpow.pop %v1803
        %v1805 = vadd.f32 %v1804, 1.0
        %v1806 = vrcp.pop %v1805
        %v1807 = vmul.f32 %v1805, %v1806
        %v1808 = vsub.f32 1.0, %v1807
        %v1809 = vmul.f32 %v1806, %v1808
        %v1810 = vadd.f32 %v1806, %v1809
        %vm1811 = vweird.f32 %v1805
        %vm1812 = vweird.f32 %v1806
        %vm1813 = vmor %vm1811, %vm1812
        %v1814 = vsel %vm1813, %v1806, %v1810
        %v1815 = vand.u32 2147483647, %v1805
        %vm1816 = vcmp.eq.f32.partialorder %v1815, 8.507059e+37
        %v1817 = vand.u32 %v1805, 2147483648
        %v1818 = vor.u32 1.1754944e-38, %v1817
        %v1819 = vsel %vm1816, %v1818, %v1814
        %v1820 = vmul.f32 1.0, %v1819
        %v1821 = vmul.f32 %v1820, %v1693
        %v1822 = vxor.u32 %v1738, 2147483648
        %v1823 = vmul.f32 %v1822, 1.442695
        %v1824 = vpow.pop %v1823
        %v1825 = vadd.f32 %v1824, 1.0
        %v1826 = vrcp.pop %v1825
        %v1827 = vmul.f32 %v1825, %v1826
        %v1828 = vsub.f32 1.0, %v1827
        %v1829 = vmul.f32 %v1826, %v1828
        %v1830 = vadd.f32 %v1826, %v1829
        %vm1831 = vweird.f32 %v1825
        %vm1832 = vweird.f32 %v1826
        %vm1833 = vmor %vm1831, %vm1832
        %v1834 = vsel %vm1833, %v1826, %v1830
        %v1835 = vand.u32 2147483647, %v1825
        %vm1836 = vcmp.eq.f32.partialorder %v1835, 8.507059e+37
        %v1837 = vand.u32 %v1825, 2147483648
        %v1838 = vor.u32 1.1754944e-38, %v1837
        %v1839 = vsel %vm1836, %v1838, %v1834
        %v1840 = vmul.f32 1.0, %v1839
        %v1841 = vtanh.pop %v1780
        %v1842 = vmul.f32 %v1840, %v1841
        %v1843 = vadd.f32 %v1821, %v1842
        %v1844 = vxor.u32 %v1801, 2147483648
        %v1845 = vmul.f32 %v1844, 1.442695
        %v1846 = vpow.pop %v1845
        %v1847 = vadd.f32 %v1846, 1.0
        %v1848 = vrcp.pop %v1847
        %v1849 = vmul.f32 %v1847, %v1848
        %v1850 = vsub.f32 1.0, %v1849
        %v1851 = vmul.f32 %v1848, %v1850
        %v1852 = vadd.f32 %v1848, %v1851
        %vm1853 = vweird.f32 %v1847
        %vm1854 = vweird.f32 %v1848
        %vm1855 = vmor %vm1853, %vm1854
        %v1856 = vsel %vm1855, %v1848, %v1852
        %v1857 = vand.u32 2147483647, %v1847
        %vm1858 = vcmp.eq.f32.partialorder %v1857, 8.507059e+37
        %v1859 = vand.u32 %v1847, 2147483648
        %v1860 = vor.u32 1.1754944e-38, %v1859
        %v1861 = vsel %vm1858, %v1860, %v1856
        %v1862 = vmul.f32 1.0, %v1861
        %v1863 = vtanh.pop %v1843
        %v1864 = vmul.f32 %v1862, %v1863
        %v1865 = vlaneseq
        %v1866 = vshrl.u32 %v1865, 7
        %v1867 = vadd.s32 %v1866, 8
        %v1868 = vadd.s32 %v1866, 16
        %v1869 = vadd.s32 %v1866, 24
        %v1870 = vadd.s32 %v1866, 32
        %v1871 = vadd.s32 %v1866, 40
        %v1872 = vadd.s32 %v1866, 48
        %v1873 = vadd.s32 %v1866, 56
        %v1874 = vlaneseq
        %v1875 = vand.u32 %v1874, 127
        %v1876 = vand.u32 %v1866, 7
        %v1877 = vand.u32 %v1867, 7
        %v1878 = vand.u32 %v1868, 7
        %v1879 = vand.u32 %v1869, 7
        %v1880 = vand.u32 %v1870, 7
        %v1881 = vand.u32 %v1871, 7
        %v1882 = vand.u32 %v1872, 7
        %v1883 = vand.u32 %v1873, 7
        %v1884 = vand.u32 %v1875, 7
        %vm1885 = vcmp.eq.s32.totalorder %v1876, %v1884
        %vm1886 = vcmp.eq.s32.totalorder %v1877, %v1884
        %vm1887 = vcmp.eq.s32.totalorder %v1878, %v1884
        %vm1888 = vcmp.eq.s32.totalorder %v1879, %v1884
        %vm1889 = vcmp.eq.s32.totalorder %v1880, %v1884
        %vm1890 = vcmp.eq.s32.totalorder %v1881, %v1884
        %vm1891 = vcmp.eq.s32.totalorder %v1882, %v1884
        %vm1892 = vcmp.eq.s32.totalorder %v1883, %v1884
        %v1893 = vld [vmem:[%s344 + $0x10] sm:$0xff]
        %v1894 = vld [vmem:[%s344 + $0x30] sm:$0xff]
        %v1895 = vld [vmem:[%s344 + $0x50] sm:$0xff]
        %v1896 = vld [vmem:[%s344 + $0x70] sm:$0xff]
        %v1897 = vld [vmem:[%s293 + $0x11] sm:$0x1]
        %v1899 = vperm.slane %v1897, 0
        %v1902 = vsel %vm383, %v1864, 0
        %1904 = vmatpush.msra.mxu0 0.0
        %1905 = vmatpush.msra.mxu0 0.0
        %1906 = vmatpush.msra.mxu0 0.0
        %1907 = vmatpush.msra.mxu0 0.0
        %1908 = vmatpush.msra.mxu0 0.0
        %1909 = vmatpush.msra.mxu0 0.0
        %1910 = vmatpush.msra.mxu0 0.0
        %1911 = vmatpush.msra.mxu0 0.0
        %1912 = vmatpush.msra.mxu0 0.0
        %1913 = vmatpush.msra.mxu0 0.0
        %1914 = vmatpush.msra.mxu0 0.0
        %1915 = vmatpush.msra.mxu0 0.0
        %1916 = vmatpush.msra.mxu0 %v1896
        %1917 = vmatpush.msra.mxu0 %v1895
        %1918 = vmatpush.msra.mxu0 %v1894
        %1919 = vmatpush.msra.mxu0 %v1893
        %1920 = vmatmul.f32.gmra.mxu0 %v816
        %v1921 = vpop.f32.mrf.mxu0
        %v1922 = vadd.f32 %v1899, %v1921
        %1923 = vmatmul.f32.gmra.mxu0 %v966
        %v1924 = vpop.f32.mrf.mxu0
        %v1925 = vadd.f32 %v1899, %v1924
        %1926 = vmatmul.f32.gmra.mxu0 %v1116
        %v1927 = vpop.f32.mrf.mxu0
        %v1928 = vadd.f32 %v1899, %v1927
        %1929 = vmatmul.f32.gmra.mxu0 %v1266
        %v1930 = vpop.f32.mrf.mxu0
        %v1931 = vadd.f32 %v1899, %v1930
        %1932 = vmatmul.f32.gmra.mxu0 %v1416
        %v1933 = vpop.f32.mrf.mxu0
        %v1934 = vadd.f32 %v1899, %v1933
        %1935 = vmatmul.f32.gmra.mxu0 %v1566
        %v1936 = vpop.f32.mrf.mxu0
        %v1937 = vadd.f32 %v1899, %v1936
        %1938 = vmatmul.f32.gmra.mxu0 %v1716
        %v1939 = vpop.f32.mrf.mxu0
        %v1940 = vadd.f32 %v1899, %v1939
        %1941 = vmatmul.f32.gmra.mxu0 %v1902
        %v1942 = vpop.f32.mrf.mxu0
        %v1943 = vadd.f32 %v1899, %v1942
        %1944 = vdwg.mxu0
        %1949 = vrot.lane.b32.xlu0 %v1893, 96
        %v1950 = vpop.permute.xlu0 %1949
        %1951 = vrot.lane.b32.xlu0 %v1894, 96
        %v1952 = vpop.permute.xlu0 %1951
        %1953 = vrot.lane.b32.xlu0 %v1895, 96
        %v1954 = vpop.permute.xlu0 %1953
        %1955 = vrot.lane.b32.xlu0 %v1896, 96
        %v1956 = vpop.permute.xlu0 %1955
        %1961 = vrot.lane.b32.xlu0 %v1899, 96
        %v1962 = vpop.permute.xlu0 %1961
        %1964 = vmatpush.msra.mxu0 0.0
        %1965 = vmatpush.msra.mxu0 0.0
        %1966 = vmatpush.msra.mxu0 0.0
        %1967 = vmatpush.msra.mxu0 0.0
        %1968 = vmatpush.msra.mxu0 0.0
        %1969 = vmatpush.msra.mxu0 0.0
        %1970 = vmatpush.msra.mxu0 0.0
        %1971 = vmatpush.msra.mxu0 0.0
        %1972 = vmatpush.msra.mxu0 0.0
        %1973 = vmatpush.msra.mxu0 0.0
        %1974 = vmatpush.msra.mxu0 0.0
        %1975 = vmatpush.msra.mxu0 0.0
        %1976 = vmatpush.msra.mxu0 %v1956
        %1977 = vmatpush.msra.mxu0 %v1954
        %1978 = vmatpush.msra.mxu0 %v1952
        %1979 = vmatpush.msra.mxu0 %v1950
        %1980 = vmatmul.f32.gmra.mxu0 %v816
        %v1981 = vpop.f32.mrf.mxu0
        %v1982 = vadd.f32 %v1962, %v1981
        %1983 = vmatmul.f32.gmra.mxu0 %v966
        %v1984 = vpop.f32.mrf.mxu0
        %v1985 = vadd.f32 %v1962, %v1984
        %1986 = vmatmul.f32.gmra.mxu0 %v1116
        %v1987 = vpop.f32.mrf.mxu0
        %v1988 = vadd.f32 %v1962, %v1987
        %1989 = vmatmul.f32.gmra.mxu0 %v1266
        %v1990 = vpop.f32.mrf.mxu0
        %v1991 = vadd.f32 %v1962, %v1990
        %1992 = vmatmul.f32.gmra.mxu0 %v1416
        %v1993 = vpop.f32.mrf.mxu0
        %v1994 = vadd.f32 %v1962, %v1993
        %1995 = vmatmul.f32.gmra.mxu0 %v1566
        %v1996 = vpop.f32.mrf.mxu0
        %v1997 = vadd.f32 %v1962, %v1996
        %1998 = vmatmul.f32.gmra.mxu0 %v1716
        %v1999 = vpop.f32.mrf.mxu0
        %v2000 = vadd.f32 %v1962, %v1999
        %2001 = vmatmul.f32.gmra.mxu0 %v1902
        %v2002 = vpop.f32.mrf.mxu0
        %v2003 = vadd.f32 %v1962, %v2002
        %2004 = vdwg.mxu0
        %2005 = vrot.lane.b32.xlu0 %v1893, 64
        %v2006 = vpop.permute.xlu0 %2005
        %2007 = vrot.lane.b32.xlu0 %v1894, 64
        %v2008 = vpop.permute.xlu0 %2007
        %2009 = vrot.lane.b32.xlu0 %v1895, 64
        %v2010 = vpop.permute.xlu0 %2009
        %2011 = vrot.lane.b32.xlu0 %v1896, 64
        %v2012 = vpop.permute.xlu0 %2011
        %2017 = vrot.lane.b32.xlu0 %v1899, 64
        %v2018 = vpop.permute.xlu0 %2017
        %2020 = vmatpush.msra.mxu0 0.0
        %2021 = vmatpush.msra.mxu0 0.0
        %2022 = vmatpush.msra.mxu0 0.0
        %2023 = vmatpush.msra.mxu0 0.0
        %2024 = vmatpush.msra.mxu0 0.0
        %2025 = vmatpush.msra.mxu0 0.0
        %2026 = vmatpush.msra.mxu0 0.0
        %2027 = vmatpush.msra.mxu0 0.0
        %2028 = vmatpush.msra.mxu0 0.0
        %2029 = vmatpush.msra.mxu0 0.0
        %2030 = vmatpush.msra.mxu0 0.0
        %2031 = vmatpush.msra.mxu0 0.0
        %2032 = vmatpush.msra.mxu0 %v2012
        %2033 = vmatpush.msra.mxu0 %v2010
        %2034 = vmatpush.msra.mxu0 %v2008
        %2035 = vmatpush.msra.mxu0 %v2006
        %2036 = vmatmul.f32.gmra.mxu0 %v816
        %v2037 = vpop.f32.mrf.mxu0
        %v2038 = vadd.f32 %v2018, %v2037
        %2039 = vmatmul.f32.gmra.mxu0 %v966
        %v2040 = vpop.f32.mrf.mxu0
        %v2041 = vadd.f32 %v2018, %v2040
        %2042 = vmatmul.f32.gmra.mxu0 %v1116
        %v2043 = vpop.f32.mrf.mxu0
        %v2044 = vadd.f32 %v2018, %v2043
        %2045 = vmatmul.f32.gmra.mxu0 %v1266
        %v2046 = vpop.f32.mrf.mxu0
        %v2047 = vadd.f32 %v2018, %v2046
        %2048 = vmatmul.f32.gmra.mxu0 %v1416
        %v2049 = vpop.f32.mrf.mxu0
        %v2050 = vadd.f32 %v2018, %v2049
        %2051 = vmatmul.f32.gmra.mxu0 %v1566
        %v2052 = vpop.f32.mrf.mxu0
        %v2053 = vadd.f32 %v2018, %v2052
        %2054 = vmatmul.f32.gmra.mxu0 %v1716
        %v2055 = vpop.f32.mrf.mxu0
        %v2056 = vadd.f32 %v2018, %v2055
        %2057 = vmatmul.f32.gmra.mxu0 %v1902
        %v2058 = vpop.f32.mrf.mxu0
        %v2059 = vadd.f32 %v2018, %v2058
        %2060 = vdwg.mxu0
        %vm2061 = vcmask 130048
        %v2063 = vsel %vm2061, %v1922, 0
        %v2066 = vsel %vm2061, %v1925, 0
        %v2069 = vsel %vm2061, %v1928, 0
        %v2072 = vsel %vm2061, %v1931, 0
        %v2075 = vsel %vm2061, %v1934, 0
        %v2078 = vsel %vm2061, %v1937, 0
        %v2081 = vsel %vm2061, %v1940, 0
        %v2084 = vsel %vm2061, %v1943, 0
        %v2087 = vsel %vm2061, %v1982, 0
        %v2090 = vsel %vm2061, %v1985, 0
        %v2093 = vsel %vm2061, %v1988, 0
        %v2096 = vsel %vm2061, %v1991, 0
        %v2099 = vsel %vm2061, %v1994, 0
        %v2102 = vsel %vm2061, %v1997, 0
        %v2105 = vsel %vm2061, %v2000, 0
        %v2108 = vsel %vm2061, %v2003, 0
        %2110 = vmatpush.xpose.msra.mxu0 0.0
        %2111 = vmatpush.xpose.msra.mxu0 0.0
        %2112 = vmatpush.xpose.msra.mxu0 0.0
        %2113 = vmatpush.xpose.msra.mxu0 0.0
        %2114 = vmatpush.xpose.msra.mxu0 0.0
        %2115 = vmatpush.xpose.msra.mxu0 0.0
        %2116 = vmatpush.xpose.msra.mxu0 0.0
        %2117 = vmatpush.xpose.msra.mxu0 0.0
        %2118 = vmatpush.xpose.msra.mxu0 %v2108
        %2119 = vmatpush.xpose.msra.mxu0 %v2105
        %2120 = vmatpush.xpose.msra.mxu0 %v2102
        %2121 = vmatpush.xpose.msra.mxu0 %v2099
        %2122 = vmatpush.xpose.msra.mxu0 %v2096
        %2123 = vmatpush.xpose.msra.mxu0 %v2093
        %2124 = vmatpush.xpose.msra.mxu0 %v2090
        %2125 = vmatpush.xpose.msra.mxu0 %v2087
        %2126 = vmatmul.f32.gmra.mxu0 %v2063
        %v2127 = vpop.f32.mrf.mxu0
        %v2128 = vadd.f32 0.0, %v2127
        %2129 = vmatmul.f32.gmra.mxu0 %v2066
        %v2130 = vpop.f32.mrf.mxu0
        %v2131 = vadd.f32 0.0, %v2130
        %2132 = vmatmul.f32.gmra.mxu0 %v2069
        %v2133 = vpop.f32.mrf.mxu0
        %v2134 = vadd.f32 0.0, %v2133
        %2135 = vmatmul.f32.gmra.mxu0 %v2072
        %v2136 = vpop.f32.mrf.mxu0
        %v2137 = vadd.f32 0.0, %v2136
        %2138 = vmatmul.f32.gmra.mxu0 %v2075
        %v2139 = vpop.f32.mrf.mxu0
        %v2140 = vadd.f32 0.0, %v2139
        %2141 = vmatmul.f32.gmra.mxu0 %v2078
        %v2142 = vpop.f32.mrf.mxu0
        %v2143 = vadd.f32 0.0, %v2142
        %2144 = vmatmul.f32.gmra.mxu0 %v2081
        %v2145 = vpop.f32.mrf.mxu0
        %v2146 = vadd.f32 0.0, %v2145
        %2147 = vmatmul.f32.gmra.mxu0 %v2084
        %v2148 = vpop.f32.mrf.mxu0
        %v2149 = vadd.f32 0.0, %v2148
        %2150 = vdwg.mxu0
        %v2151 = vmul.f32 %v2128, 0.25
        %v2152 = vmul.f32 %v2131, 0.25
        %v2153 = vmul.f32 %v2134, 0.25
        %v2154 = vmul.f32 %v2137, 0.25
        %v2155 = vmul.f32 %v2140, 0.25
        %v2156 = vmul.f32 %v2143, 0.25
        %v2157 = vmul.f32 %v2146, 0.25
        %v2158 = vmul.f32 %v2149, 0.25
        %v2159 = vsel %vm1885, %v2151, -1e+30
        %v2160 = vsel %vm1886, %v2152, -1e+30
        %v2161 = vsel %vm1887, %v2153, -1e+30
        %v2162 = vsel %vm1888, %v2154, -1e+30
        %v2163 = vsel %vm1889, %v2155, -1e+30
        %v2164 = vsel %vm1890, %v2156, -1e+30
        %v2165 = vsel %vm1891, %v2157, -1e+30
        %v2166 = vsel %vm1892, %v2158, -1e+30
        %vm2167 = vcmask 523264
        %v2168 = vsel %vm2167, %v2159, -inf
        %2169 = vmax.xlane.f32.xlu0 %v2168
        %v2170 = vpop.xlane.xlu0 %2169
        %v2171 = vsel %vm2167, %v2160, -inf
        %2172 = vmax.xlane.f32.xlu0 %v2171
        %v2173 = vpop.xlane.xlu0 %2172
        %v2174 = vsel %vm2167, %v2161, -inf
        %2175 = vmax.xlane.f32.xlu0 %v2174
        %v2176 = vpop.xlane.xlu0 %2175
        %v2177 = vsel %vm2167, %v2162, -inf
        %2178 = vmax.xlane.f32.xlu0 %v2177
        %v2179 = vpop.xlane.xlu0 %2178
        %v2180 = vsel %vm2167, %v2163, -inf
        %2181 = vmax.xlane.f32.xlu0 %v2180
        %v2182 = vpop.xlane.xlu0 %2181
        %v2183 = vsel %vm2167, %v2164, -inf
        %2184 = vmax.xlane.f32.xlu0 %v2183
        %v2185 = vpop.xlane.xlu0 %2184
        %v2186 = vsel %vm2167, %v2165, -inf
        %2187 = vmax.xlane.f32.xlu0 %v2186
        %v2188 = vpop.xlane.xlu0 %2187
        %v2189 = vsel %vm2167, %v2166, -inf
        %2190 = vmax.xlane.f32.xlu0 %v2189
        %v2191 = vpop.xlane.xlu0 %2190
        %v2192 = vsub.f32 %v2159, %v2170
        %v2193 = vsub.f32 %v2160, %v2173
        %v2194 = vsub.f32 %v2161, %v2176
        %v2195 = vsub.f32 %v2162, %v2179
        %v2196 = vsub.f32 %v2163, %v2182
        %v2197 = vsub.f32 %v2164, %v2185
        %v2198 = vsub.f32 %v2165, %v2188
        %v2199 = vsub.f32 %v2166, %v2191
        %v2200 = vmul.f32 %v2192, 1.442695
        %v2201 = vpow.pop %v2200
        %v2202 = vmul.f32 %v2193, 1.442695
        %v2203 = vpow.pop %v2202
        %v2204 = vmul.f32 %v2194, 1.442695
        %v2205 = vpow.pop %v2204
        %v2206 = vmul.f32 %v2195, 1.442695
        %v2207 = vpow.pop %v2206
        %v2208 = vmul.f32 %v2196, 1.442695
        %v2209 = vpow.pop %v2208
        %v2210 = vmul.f32 %v2197, 1.442695
        %v2211 = vpow.pop %v2210
        %v2212 = vmul.f32 %v2198, 1.442695
        %v2213 = vpow.pop %v2212
        %v2214 = vmul.f32 %v2199, 1.442695
        %v2215 = vpow.pop %v2214
        %v2216 = vsel %vm2167, %v2201, 0.0
        %2217 = vadd.xlane.f32.xlu0 %v2216
        %v2218 = vpop.xlane.xlu0 %2217
        %v2219 = vsel %vm2167, %v2203, 0.0
        %2220 = vadd.xlane.f32.xlu0 %v2219
        %v2221 = vpop.xlane.xlu0 %2220
        %v2222 = vsel %vm2167, %v2205, 0.0
        %2223 = vadd.xlane.f32.xlu0 %v2222
        %v2224 = vpop.xlane.xlu0 %2223
        %v2225 = vsel %vm2167, %v2207, 0.0
        %2226 = vadd.xlane.f32.xlu0 %v2225
        %v2227 = vpop.xlane.xlu0 %2226
        %v2228 = vsel %vm2167, %v2209, 0.0
        %2229 = vadd.xlane.f32.xlu0 %v2228
        %v2230 = vpop.xlane.xlu0 %2229
        %v2231 = vsel %vm2167, %v2211, 0.0
        %2232 = vadd.xlane.f32.xlu0 %v2231
        %v2233 = vpop.xlane.xlu0 %2232
        %v2234 = vsel %vm2167, %v2213, 0.0
        %2235 = vadd.xlane.f32.xlu0 %v2234
        %v2236 = vpop.xlane.xlu0 %2235
        %v2237 = vsel %vm2167, %v2215, 0.0
        %2238 = vadd.xlane.f32.xlu0 %v2237
        %v2239 = vpop.xlane.xlu0 %2238
        %v2240 = vrcp.pop %v2218
        %v2241 = vrcp.pop %v2221
        %v2242 = vrcp.pop %v2224
        %v2243 = vrcp.pop %v2227
        %v2244 = vrcp.pop %v2230
        %v2245 = vrcp.pop %v2233
        %v2246 = vrcp.pop %v2236
        %v2247 = vrcp.pop %v2239
        %v2248 = vmul.f32 %v2201, %v2240
        %v2249 = vmul.f32 %v2203, %v2241
        %v2250 = vmul.f32 %v2205, %v2242
        %v2251 = vmul.f32 %v2207, %v2243
        %v2252 = vmul.f32 %v2209, %v2244
        %v2253 = vmul.f32 %v2211, %v2245
        %v2254 = vmul.f32 %v2213, %v2246
        %v2255 = vmul.f32 %v2215, %v2247
        %v2257 = vsel %vm2167, %v2248, 0
        %v2260 = vsel %vm2167, %v2249, 0
        %v2263 = vsel %vm2167, %v2250, 0
        %v2266 = vsel %vm2167, %v2251, 0
        %v2269 = vsel %vm2167, %v2252, 0
        %v2272 = vsel %vm2167, %v2253, 0
        %v2275 = vsel %vm2167, %v2254, 0
        %v2278 = vsel %vm2167, %v2255, 0
        %2280 = vmatpush.msra.mxu0 0.0
        %2281 = vmatpush.msra.mxu0 0.0
        %2282 = vmatpush.msra.mxu0 0.0
        %2283 = vmatpush.msra.mxu0 0.0
        %2284 = vmatpush.msra.mxu0 0.0
        %2285 = vmatpush.msra.mxu0 0.0
        %2286 = vmatpush.msra.mxu0 0.0
        %2287 = vmatpush.msra.mxu0 0.0
        %2288 = vmatpush.msra.mxu0 %v2059
        %2289 = vmatpush.msra.mxu0 %v2056
        %2290 = vmatpush.msra.mxu0 %v2053
        %2291 = vmatpush.msra.mxu0 %v2050
        %2292 = vmatpush.msra.mxu0 %v2047
        %2293 = vmatpush.msra.mxu0 %v2044
        %2294 = vmatpush.msra.mxu0 %v2041
        %2295 = vmatpush.msra.mxu0 %v2038
        %2296 = vmatmul.f32.gmra.mxu0 %v2257
        %v2297 = vpop.f32.mrf.mxu0
        %v2298 = vadd.f32 0.0, %v2297
        %2299 = vmatmul.f32.gmra.mxu0 %v2260
        %v2300 = vpop.f32.mrf.mxu0
        %v2301 = vadd.f32 0.0, %v2300
        %2302 = vmatmul.f32.gmra.mxu0 %v2263
        %v2303 = vpop.f32.mrf.mxu0
        %v2304 = vadd.f32 0.0, %v2303
        %2305 = vmatmul.f32.gmra.mxu0 %v2266
        %v2306 = vpop.f32.mrf.mxu0
        %v2307 = vadd.f32 0.0, %v2306
        %2308 = vmatmul.f32.gmra.mxu0 %v2269
        %v2309 = vpop.f32.mrf.mxu0
        %v2310 = vadd.f32 0.0, %v2309
        %2311 = vmatmul.f32.gmra.mxu0 %v2272
        %v2312 = vpop.f32.mrf.mxu0
        %v2313 = vadd.f32 0.0, %v2312
        %2314 = vmatmul.f32.gmra.mxu0 %v2275
        %v2315 = vpop.f32.mrf.mxu0
        %v2316 = vadd.f32 0.0, %v2315
        %2317 = vmatmul.f32.gmra.mxu0 %v2278
        %v2318 = vpop.f32.mrf.mxu0
        %v2319 = vadd.f32 0.0, %v2318
        %2320 = vdwg.mxu0
        %v2321 = vld [vmem:[%s344 + $0x18] sm:$0xff]
        %v2322 = vld [vmem:[%s344 + $0x38] sm:$0xff]
        %2323 = vrot.lane.b32.xlu0 %v1893, 112
        %v2324 = vpop.permute.xlu0 %2323
        %2325 = vrot.lane.b32.xlu0 %v1894, 112
        %v2326 = vpop.permute.xlu0 %2325
        %2327 = vrot.lane.b32.xlu0 %v1895, 112
        %v2328 = vpop.permute.xlu0 %2327
        %2329 = vrot.lane.b32.xlu0 %v1896, 112
        %v2330 = vpop.permute.xlu0 %2329
        %2335 = vrot.lane.b32.xlu0 %v1899, 112
        %v2336 = vpop.permute.xlu0 %2335
        %2338 = vmatpush.msra.mxu0 0.0
        %2339 = vmatpush.msra.mxu0 0.0
        %2340 = vmatpush.msra.mxu0 0.0
        %2341 = vmatpush.msra.mxu0 0.0
        %2342 = vmatpush.msra.mxu0 0.0
        %2343 = vmatpush.msra.mxu0 0.0
        %2344 = vmatpush.msra.mxu0 0.0
        %2345 = vmatpush.msra.mxu0 0.0
        %2346 = vmatpush.msra.mxu0 0.0
        %2347 = vmatpush.msra.mxu0 0.0
        %2348 = vmatpush.msra.mxu0 0.0
        %2349 = vmatpush.msra.mxu0 0.0
        %2350 = vmatpush.msra.mxu0 %v2330
        %2351 = vmatpush.msra.mxu0 %v2328
        %2352 = vmatpush.msra.mxu0 %v2326
        %2353 = vmatpush.msra.mxu0 %v2324
        %2354 = vmatmul.f32.gmra.mxu0 %v816
        %v2355 = vpop.f32.mrf.mxu0
        %v2356 = vadd.f32 %v2336, %v2355
        %2357 = vmatmul.f32.gmra.mxu0 %v966
        %v2358 = vpop.f32.mrf.mxu0
        %v2359 = vadd.f32 %v2336, %v2358
        %2360 = vmatmul.f32.gmra.mxu0 %v1116
        %v2361 = vpop.f32.mrf.mxu0
        %v2362 = vadd.f32 %v2336, %v2361
        %2363 = vmatmul.f32.gmra.mxu0 %v1266
        %v2364 = vpop.f32.mrf.mxu0
        %v2365 = vadd.f32 %v2336, %v2364
        %2366 = vmatmul.f32.gmra.mxu0 %v1416
        %v2367 = vpop.f32.mrf.mxu0
        %v2368 = vadd.f32 %v2336, %v2367
        %2369 = vmatmul.f32.gmra.mxu0 %v1566
        %v2370 = vpop.f32.mrf.mxu0
        %v2371 = vadd.f32 %v2336, %v2370
        %2372 = vmatmul.f32.gmra.mxu0 %v1716
        %v2373 = vpop.f32.mrf.mxu0
        %v2374 = vadd.f32 %v2336, %v2373
        %2375 = vmatmul.f32.gmra.mxu0 %v1902
        %v2376 = vpop.f32.mrf.mxu0
        %v2377 = vadd.f32 %v2336, %v2376
        %2378 = vdwg.mxu0
        %2379 = vrot.lane.b32.xlu0 %v1893, 80
        %v2380 = vpop.permute.xlu0 %2379
        %2381 = vrot.lane.b32.xlu0 %v1894, 80
        %v2382 = vpop.permute.xlu0 %2381
        %2383 = vrot.lane.b32.xlu0 %v1895, 80
        %v2384 = vpop.permute.xlu0 %2383
        %2385 = vrot.lane.b32.xlu0 %v1896, 80
        %v2386 = vpop.permute.xlu0 %2385
        %2391 = vrot.lane.b32.xlu0 %v1899, 80
        %v2392 = vpop.permute.xlu0 %2391
        %2394 = vmatpush.msra.mxu0 0.0
        %2395 = vmatpush.msra.mxu0 0.0
        %2396 = vmatpush.msra.mxu0 0.0
        %2397 = vmatpush.msra.mxu0 0.0
        %2398 = vmatpush.msra.mxu0 0.0
        %2399 = vmatpush.msra.mxu0 0.0
        %2400 = vmatpush.msra.mxu0 0.0
        %2401 = vmatpush.msra.mxu0 0.0
        %2402 = vmatpush.msra.mxu0 0.0
        %2403 = vmatpush.msra.mxu0 0.0
        %2404 = vmatpush.msra.mxu0 0.0
        %2405 = vmatpush.msra.mxu0 0.0
        %2406 = vmatpush.msra.mxu0 %v2386
        %2407 = vmatpush.msra.mxu0 %v2384
        %2408 = vmatpush.msra.mxu0 %v2382
        %2409 = vmatpush.msra.mxu0 %v2380
        %2410 = vmatmul.f32.gmra.mxu0 %v816
        %v2411 = vpop.f32.mrf.mxu0
        %v2412 = vadd.f32 %v2392, %v2411
        %2413 = vmatmul.f32.gmra.mxu0 %v966
        %v2414 = vpop.f32.mrf.mxu0
        %v2415 = vadd.f32 %v2392, %v2414
        %2416 = vmatmul.f32.gmra.mxu0 %v1116
        %v2417 = vpop.f32.mrf.mxu0
        %v2418 = vadd.f32 %v2392, %v2417
        %2419 = vmatmul.f32.gmra.mxu0 %v1266
        %v2420 = vpop.f32.mrf.mxu0
        %v2421 = vadd.f32 %v2392, %v2420
        %2422 = vmatmul.f32.gmra.mxu0 %v1416
        %v2423 = vpop.f32.mrf.mxu0
        %v2424 = vadd.f32 %v2392, %v2423
        %2425 = vmatmul.f32.gmra.mxu0 %v1566
        %v2426 = vpop.f32.mrf.mxu0
        %v2427 = vadd.f32 %v2392, %v2426
        %2428 = vmatmul.f32.gmra.mxu0 %v1716
        %v2429 = vpop.f32.mrf.mxu0
        %v2430 = vadd.f32 %v2392, %v2429
        %2431 = vmatmul.f32.gmra.mxu0 %v1902
        %v2432 = vpop.f32.mrf.mxu0
        %v2433 = vadd.f32 %v2392, %v2432
        %2434 = vdwg.mxu0
        %2435 = vrot.lane.b32.xlu0 %v1893, 48
        %v2436 = vpop.permute.xlu0 %2435
        %2437 = vrot.lane.b32.xlu0 %v1894, 48
        %v2438 = vpop.permute.xlu0 %2437
        %2439 = vrot.lane.b32.xlu0 %v1895, 48
        %v2440 = vpop.permute.xlu0 %2439
        %2441 = vrot.lane.b32.xlu0 %v1896, 48
        %v2442 = vpop.permute.xlu0 %2441
        %2447 = vrot.lane.b32.xlu0 %v1899, 48
        %v2448 = vpop.permute.xlu0 %2447
        %2450 = vmatpush.msra.mxu0 0.0
        %2451 = vmatpush.msra.mxu0 0.0
        %2452 = vmatpush.msra.mxu0 0.0
        %2453 = vmatpush.msra.mxu0 0.0
        %2454 = vmatpush.msra.mxu0 0.0
        %2455 = vmatpush.msra.mxu0 0.0
        %2456 = vmatpush.msra.mxu0 0.0
        %2457 = vmatpush.msra.mxu0 0.0
        %2458 = vmatpush.msra.mxu0 0.0
        %2459 = vmatpush.msra.mxu0 0.0
        %2460 = vmatpush.msra.mxu0 0.0
        %2461 = vmatpush.msra.mxu0 0.0
        %2462 = vmatpush.msra.mxu0 %v2442
        %2463 = vmatpush.msra.mxu0 %v2440
        %2464 = vmatpush.msra.mxu0 %v2438
        %2465 = vmatpush.msra.mxu0 %v2436
        %2466 = vmatmul.f32.gmra.mxu0 %v816
        %v2467 = vpop.f32.mrf.mxu0
        %v2468 = vadd.f32 %v2448, %v2467
        %2469 = vmatmul.f32.gmra.mxu0 %v966
        %v2470 = vpop.f32.mrf.mxu0
        %v2471 = vadd.f32 %v2448, %v2470
        %2472 = vmatmul.f32.gmra.mxu0 %v1116
        %v2473 = vpop.f32.mrf.mxu0
        %v2474 = vadd.f32 %v2448, %v2473
        %2475 = vmatmul.f32.gmra.mxu0 %v1266
        %v2476 = vpop.f32.mrf.mxu0
        %v2477 = vadd.f32 %v2448, %v2476
        %2478 = vmatmul.f32.gmra.mxu0 %v1416
        %v2479 = vpop.f32.mrf.mxu0
        %v2480 = vadd.f32 %v2448, %v2479
        %2481 = vmatmul.f32.gmra.mxu0 %v1566
        %v2482 = vpop.f32.mrf.mxu0
        %v2483 = vadd.f32 %v2448, %v2482
        %2484 = vmatmul.f32.gmra.mxu0 %v1716
        %v2485 = vpop.f32.mrf.mxu0
        %v2486 = vadd.f32 %v2448, %v2485
        %2487 = vmatmul.f32.gmra.mxu0 %v1902
        %v2488 = vpop.f32.mrf.mxu0
        %v2489 = vadd.f32 %v2448, %v2488
        %2490 = vdwg.mxu0
        %v2492 = vsel %vm2061, %v2356, 0
        %v2495 = vsel %vm2061, %v2359, 0
        %v2498 = vsel %vm2061, %v2362, 0
        %v2501 = vsel %vm2061, %v2365, 0
        %v2504 = vsel %vm2061, %v2368, 0
        %v2507 = vsel %vm2061, %v2371, 0
        %v2510 = vsel %vm2061, %v2374, 0
        %v2513 = vsel %vm2061, %v2377, 0
        %v2516 = vsel %vm2061, %v2412, 0
        %v2519 = vsel %vm2061, %v2415, 0
        %v2522 = vsel %vm2061, %v2418, 0
        %v2525 = vsel %vm2061, %v2421, 0
        %v2528 = vsel %vm2061, %v2424, 0
        %v2531 = vsel %vm2061, %v2427, 0
        %v2534 = vsel %vm2061, %v2430, 0
        %v2537 = vsel %vm2061, %v2433, 0
        %2539 = vmatpush.xpose.msra.mxu0 0.0
        %2540 = vmatpush.xpose.msra.mxu0 0.0
        %2541 = vmatpush.xpose.msra.mxu0 0.0
        %2542 = vmatpush.xpose.msra.mxu0 0.0
        %2543 = vmatpush.xpose.msra.mxu0 0.0
        %2544 = vmatpush.xpose.msra.mxu0 0.0
        %2545 = vmatpush.xpose.msra.mxu0 0.0
        %2546 = vmatpush.xpose.msra.mxu0 0.0
        %2547 = vmatpush.xpose.msra.mxu0 %v2537
        %2548 = vmatpush.xpose.msra.mxu0 %v2534
        %2549 = vmatpush.xpose.msra.mxu0 %v2531
        %2550 = vmatpush.xpose.msra.mxu0 %v2528
        %2551 = vmatpush.xpose.msra.mxu0 %v2525
        %2552 = vmatpush.xpose.msra.mxu0 %v2522
        %2553 = vmatpush.xpose.msra.mxu0 %v2519
        %2554 = vmatpush.xpose.msra.mxu0 %v2516
        %2555 = vmatmul.f32.gmra.mxu0 %v2492
        %v2556 = vpop.f32.mrf.mxu0
        %v2557 = vadd.f32 0.0, %v2556
        %2558 = vmatmul.f32.gmra.mxu0 %v2495
        %v2559 = vpop.f32.mrf.mxu0
        %v2560 = vadd.f32 0.0, %v2559
        %2561 = vmatmul.f32.gmra.mxu0 %v2498
        %v2562 = vpop.f32.mrf.mxu0
        %v2563 = vadd.f32 0.0, %v2562
        %2564 = vmatmul.f32.gmra.mxu0 %v2501
        %v2565 = vpop.f32.mrf.mxu0
        %v2566 = vadd.f32 0.0, %v2565
        %2567 = vmatmul.f32.gmra.mxu0 %v2504
        %v2568 = vpop.f32.mrf.mxu0
        %v2569 = vadd.f32 0.0, %v2568
        %2570 = vmatmul.f32.gmra.mxu0 %v2507
        %v2571 = vpop.f32.mrf.mxu0
        %v2572 = vadd.f32 0.0, %v2571
        %2573 = vmatmul.f32.gmra.mxu0 %v2510
        %v2574 = vpop.f32.mrf.mxu0
        %v2575 = vadd.f32 0.0, %v2574
        %2576 = vmatmul.f32.gmra.mxu0 %v2513
        %v2577 = vpop.f32.mrf.mxu0
        %v2578 = vadd.f32 0.0, %v2577
        %2579 = vdwg.mxu0
        %v2580 = vmul.f32 %v2557, 0.25
        %v2581 = vmul.f32 %v2560, 0.25
        %v2582 = vmul.f32 %v2563, 0.25
        %v2583 = vmul.f32 %v2566, 0.25
        %v2584 = vmul.f32 %v2569, 0.25
        %v2585 = vmul.f32 %v2572, 0.25
        %v2586 = vmul.f32 %v2575, 0.25
        %v2587 = vmul.f32 %v2578, 0.25
        %v2588 = vsel %vm1885, %v2580, -1e+30
        %v2589 = vsel %vm1886, %v2581, -1e+30
        %v2590 = vsel %vm1887, %v2582, -1e+30
        %v2591 = vsel %vm1888, %v2583, -1e+30
        %v2592 = vsel %vm1889, %v2584, -1e+30
        %v2593 = vsel %vm1890, %v2585, -1e+30
        %v2594 = vsel %vm1891, %v2586, -1e+30
        %v2595 = vsel %vm1892, %v2587, -1e+30
        %v2596 = vsel %vm2167, %v2588, -inf
        %2597 = vmax.xlane.f32.xlu0 %v2596
        %v2598 = vpop.xlane.xlu0 %2597
        %v2599 = vsel %vm2167, %v2589, -inf
        %2600 = vmax.xlane.f32.xlu0 %v2599
        %v2601 = vpop.xlane.xlu0 %2600
        %v2602 = vsel %vm2167, %v2590, -inf
        %2603 = vmax.xlane.f32.xlu0 %v2602
        %v2604 = vpop.xlane.xlu0 %2603
        %v2605 = vsel %vm2167, %v2591, -inf
        %2606 = vmax.xlane.f32.xlu0 %v2605
        %v2607 = vpop.xlane.xlu0 %2606
        %v2608 = vsel %vm2167, %v2592, -inf
        %2609 = vmax.xlane.f32.xlu0 %v2608
        %v2610 = vpop.xlane.xlu0 %2609
        %v2611 = vsel %vm2167, %v2593, -inf
        %2612 = vmax.xlane.f32.xlu0 %v2611
        %v2613 = vpop.xlane.xlu0 %2612
        %v2614 = vsel %vm2167, %v2594, -inf
        %2615 = vmax.xlane.f32.xlu0 %v2614
        %v2616 = vpop.xlane.xlu0 %2615
        %v2617 = vsel %vm2167, %v2595, -inf
        %2618 = vmax.xlane.f32.xlu0 %v2617
        %v2619 = vpop.xlane.xlu0 %2618
        %v2620 = vsub.f32 %v2588, %v2598
        %v2621 = vsub.f32 %v2589, %v2601
        %v2622 = vsub.f32 %v2590, %v2604
        %v2623 = vsub.f32 %v2591, %v2607
        %v2624 = vsub.f32 %v2592, %v2610
        %v2625 = vsub.f32 %v2593, %v2613
        %v2626 = vsub.f32 %v2594, %v2616
        %v2627 = vsub.f32 %v2595, %v2619
        %v2628 = vmul.f32 %v2620, 1.442695
        %v2629 = vpow.pop %v2628
        %v2630 = vmul.f32 %v2621, 1.442695
        %v2631 = vpow.pop %v2630
        %v2632 = vmul.f32 %v2622, 1.442695
        %v2633 = vpow.pop %v2632
        %v2634 = vmul.f32 %v2623, 1.442695
        %v2635 = vpow.pop %v2634
        %v2636 = vmul.f32 %v2624, 1.442695
        %v2637 = vpow.pop %v2636
        %v2638 = vmul.f32 %v2625, 1.442695
        %v2639 = vpow.pop %v2638
        %v2640 = vmul.f32 %v2626, 1.442695
        %v2641 = vpow.pop %v2640
        %v2642 = vmul.f32 %v2627, 1.442695
        %v2643 = vpow.pop %v2642
        %v2644 = vsel %vm2167, %v2629, 0.0
        %2645 = vadd.xlane.f32.xlu0 %v2644
        %v2646 = vpop.xlane.xlu0 %2645
        %v2647 = vsel %vm2167, %v2631, 0.0
        %2648 = vadd.xlane.f32.xlu0 %v2647
        %v2649 = vpop.xlane.xlu0 %2648
        %v2650 = vsel %vm2167, %v2633, 0.0
        %2651 = vadd.xlane.f32.xlu0 %v2650
        %v2652 = vpop.xlane.xlu0 %2651
        %v2653 = vsel %vm2167, %v2635, 0.0
        %2654 = vadd.xlane.f32.xlu0 %v2653
        %v2655 = vpop.xlane.xlu0 %2654
        %v2656 = vsel %vm2167, %v2637, 0.0
        %2657 = vadd.xlane.f32.xlu0 %v2656
        %v2658 = vpop.xlane.xlu0 %2657
        %v2659 = vsel %vm2167, %v2639, 0.0
        %2660 = vadd.xlane.f32.xlu0 %v2659
        %v2661 = vpop.xlane.xlu0 %2660
        %v2662 = vsel %vm2167, %v2641, 0.0
        %2663 = vadd.xlane.f32.xlu0 %v2662
        %v2664 = vpop.xlane.xlu0 %2663
        %v2665 = vsel %vm2167, %v2643, 0.0
        %2666 = vadd.xlane.f32.xlu0 %v2665
        %v2667 = vpop.xlane.xlu0 %2666
        %v2668 = vrcp.pop %v2646
        %v2669 = vrcp.pop %v2649
        %v2670 = vrcp.pop %v2652
        %v2671 = vrcp.pop %v2655
        %v2672 = vrcp.pop %v2658
        %v2673 = vrcp.pop %v2661
        %v2674 = vrcp.pop %v2664
        %v2675 = vrcp.pop %v2667
        %v2676 = vmul.f32 %v2629, %v2668
        %v2677 = vmul.f32 %v2631, %v2669
        %v2678 = vmul.f32 %v2633, %v2670
        %v2679 = vmul.f32 %v2635, %v2671
        %v2680 = vmul.f32 %v2637, %v2672
        %v2681 = vmul.f32 %v2639, %v2673
        %v2682 = vmul.f32 %v2641, %v2674
        %v2683 = vmul.f32 %v2643, %v2675
        %v2685 = vsel %vm2167, %v2676, 0
        %v2688 = vsel %vm2167, %v2677, 0
        %v2691 = vsel %vm2167, %v2678, 0
        %v2694 = vsel %vm2167, %v2679, 0
        %v2697 = vsel %vm2167, %v2680, 0
        %v2700 = vsel %vm2167, %v2681, 0
        %v2703 = vsel %vm2167, %v2682, 0
        %v2706 = vsel %vm2167, %v2683, 0
        %2708 = vmatpush.msra.mxu0 0.0
        %2709 = vmatpush.msra.mxu0 0.0
        %2710 = vmatpush.msra.mxu0 0.0
        %2711 = vmatpush.msra.mxu0 0.0
        %2712 = vmatpush.msra.mxu0 0.0
        %2713 = vmatpush.msra.mxu0 0.0
        %2714 = vmatpush.msra.mxu0 0.0
        %2715 = vmatpush.msra.mxu0 0.0
        %2716 = vmatpush.msra.mxu0 %v2489
        %2717 = vmatpush.msra.mxu0 %v2486
        %2718 = vmatpush.msra.mxu0 %v2483
        %2719 = vmatpush.msra.mxu0 %v2480
        %2720 = vmatpush.msra.mxu0 %v2477
        %2721 = vmatpush.msra.mxu0 %v2474
        %2722 = vmatpush.msra.mxu0 %v2471
        %2723 = vmatpush.msra.mxu0 %v2468
        %2724 = vmatmul.f32.gmra.mxu0 %v2685
        %v2725 = vpop.f32.mrf.mxu0
        %v2726 = vadd.f32 0.0, %v2725
        %2727 = vmatmul.f32.gmra.mxu0 %v2688
        %v2728 = vpop.f32.mrf.mxu0
        %v2729 = vadd.f32 0.0, %v2728
        %2730 = vmatmul.f32.gmra.mxu0 %v2691
        %v2731 = vpop.f32.mrf.mxu0
        %v2732 = vadd.f32 0.0, %v2731
        %2733 = vmatmul.f32.gmra.mxu0 %v2694
        %v2734 = vpop.f32.mrf.mxu0
        %v2735 = vadd.f32 0.0, %v2734
        %2736 = vmatmul.f32.gmra.mxu0 %v2697
        %v2737 = vpop.f32.mrf.mxu0
        %v2738 = vadd.f32 0.0, %v2737
        %2739 = vmatmul.f32.gmra.mxu0 %v2700
        %v2740 = vpop.f32.mrf.mxu0
        %v2741 = vadd.f32 0.0, %v2740
        %2742 = vmatmul.f32.gmra.mxu0 %v2703
        %v2743 = vpop.f32.mrf.mxu0
        %v2744 = vadd.f32 0.0, %v2743
        %2745 = vmatmul.f32.gmra.mxu0 %v2706
        %v2746 = vpop.f32.mrf.mxu0
        %v2747 = vadd.f32 0.0, %v2746
        %2748 = vdwg.mxu0
        %v2749 = vld [vmem:[%s344 + $0x58] sm:$0xff]
        %v2750 = vld [vmem:[%s344 + $0x78] sm:$0xff]
        %v2752 = vsel %vm2061, %v2726, 0
        %v2755 = vsel %vm2061, %v2729, 0
        %v2758 = vsel %vm2061, %v2732, 0
        %v2761 = vsel %vm2061, %v2735, 0
        %v2764 = vsel %vm2061, %v2738, 0
        %v2767 = vsel %vm2061, %v2741, 0
        %v2770 = vsel %vm2061, %v2744, 0
        %v2773 = vsel %vm2061, %v2747, 0
        %2775 = vmatpush.msra.mxu0 0.0
        %2776 = vmatpush.msra.mxu0 0.0
        %2777 = vmatpush.msra.mxu0 0.0
        %2778 = vmatpush.msra.mxu0 0.0
        %2779 = vmatpush.msra.mxu0 0.0
        %2780 = vmatpush.msra.mxu0 0.0
        %2781 = vmatpush.msra.mxu0 0.0
        %2782 = vmatpush.msra.mxu0 0.0
        %2783 = vmatpush.msra.mxu0 0.0
        %2784 = vmatpush.msra.mxu0 0.0
        %2785 = vmatpush.msra.mxu0 0.0
        %2786 = vmatpush.msra.mxu0 0.0
        %2787 = vmatpush.msra.mxu0 0.0
        %2788 = vmatpush.msra.mxu0 0.0
        %2789 = vmatpush.msra.mxu0 %v2750
        %2790 = vmatpush.msra.mxu0 %v2749
        %2791 = vmatmul.f32.gmra.mxu0 %v2752
        %v2792 = vpop.f32.mrf.mxu0
        %v2793 = vadd.f32 0.0, %v2792
        %2794 = vmatmul.f32.gmra.mxu0 %v2755
        %v2795 = vpop.f32.mrf.mxu0
        %v2796 = vadd.f32 0.0, %v2795
        %2797 = vmatmul.f32.gmra.mxu0 %v2758
        %v2798 = vpop.f32.mrf.mxu0
        %v2799 = vadd.f32 0.0, %v2798
        %2800 = vmatmul.f32.gmra.mxu0 %v2761
        %v2801 = vpop.f32.mrf.mxu0
        %v2802 = vadd.f32 0.0, %v2801
        %2803 = vmatmul.f32.gmra.mxu0 %v2764
        %v2804 = vpop.f32.mrf.mxu0
        %v2805 = vadd.f32 0.0, %v2804
        %2806 = vmatmul.f32.gmra.mxu0 %v2767
        %v2807 = vpop.f32.mrf.mxu0
        %v2808 = vadd.f32 0.0, %v2807
        %2809 = vmatmul.f32.gmra.mxu0 %v2770
        %v2810 = vpop.f32.mrf.mxu0
        %v2811 = vadd.f32 0.0, %v2810
        %2812 = vmatmul.f32.gmra.mxu0 %v2773
        %v2813 = vpop.f32.mrf.mxu0
        %v2814 = vadd.f32 0.0, %v2813
        %2815 = vdwg.mxu0
        %v2817 = vsel %vm2061, %v2298, 0
        %v2820 = vsel %vm2061, %v2301, 0
        %v2823 = vsel %vm2061, %v2304, 0
        %v2826 = vsel %vm2061, %v2307, 0
        %v2829 = vsel %vm2061, %v2310, 0
        %v2832 = vsel %vm2061, %v2313, 0
        %v2835 = vsel %vm2061, %v2316, 0
        %v2838 = vsel %vm2061, %v2319, 0
        %2840 = vmatpush.msra.mxu0 0.0
        %2841 = vmatpush.msra.mxu0 0.0
        %2842 = vmatpush.msra.mxu0 0.0
        %2843 = vmatpush.msra.mxu0 0.0
        %2844 = vmatpush.msra.mxu0 0.0
        %2845 = vmatpush.msra.mxu0 0.0
        %2846 = vmatpush.msra.mxu0 0.0
        %2847 = vmatpush.msra.mxu0 0.0
        %2848 = vmatpush.msra.mxu0 0.0
        %2849 = vmatpush.msra.mxu0 0.0
        %2850 = vmatpush.msra.mxu0 0.0
        %2851 = vmatpush.msra.mxu0 0.0
        %2852 = vmatpush.msra.mxu0 0.0
        %2853 = vmatpush.msra.mxu0 0.0
        %2854 = vmatpush.msra.mxu0 %v2322
        %2855 = vmatpush.msra.mxu0 %v2321
        %2856 = vmatmul.f32.gmra.mxu0 %v2817
        %v2857 = vpop.f32.mrf.mxu0
        %v2858 = vadd.f32 %v2793, %v2857
        %2859 = vmatmul.f32.gmra.mxu0 %v2820
        %v2860 = vpop.f32.mrf.mxu0
        %v2861 = vadd.f32 %v2796, %v2860
        %2862 = vmatmul.f32.gmra.mxu0 %v2823
        %v2863 = vpop.f32.mrf.mxu0
        %v2864 = vadd.f32 %v2799, %v2863
        %2865 = vmatmul.f32.gmra.mxu0 %v2826
        %v2866 = vpop.f32.mrf.mxu0
        %v2867 = vadd.f32 %v2802, %v2866
        %2868 = vmatmul.f32.gmra.mxu0 %v2829
        %v2869 = vpop.f32.mrf.mxu0
        %v2870 = vadd.f32 %v2805, %v2869
        %2871 = vmatmul.f32.gmra.mxu0 %v2832
        %v2872 = vpop.f32.mrf.mxu0
        %v2873 = vadd.f32 %v2808, %v2872
        %2874 = vmatmul.f32.gmra.mxu0 %v2835
        %v2875 = vpop.f32.mrf.mxu0
        %v2876 = vadd.f32 %v2811, %v2875
        %2877 = vmatmul.f32.gmra.mxu0 %v2838
        %v2878 = vpop.f32.mrf.mxu0
        %v2879 = vadd.f32 %v2814, %v2878
        %2880 = vdwg.mxu0
        %2881 = vrot.lane.b32.xlu0 %v1899, 32
        %v2882 = vpop.permute.xlu0 %2881
        %v2884 = vadd.f32 %v2858, %v2882
        %v2885 = vadd.f32 %v2861, %v2882
        %v2886 = vadd.f32 %v2864, %v2882
        %v2887 = vadd.f32 %v2867, %v2882
        %v2888 = vadd.f32 %v2870, %v2882
        %v2889 = vadd.f32 %v2873, %v2882
        %v2890 = vadd.f32 %v2876, %v2882
        %v2891 = vadd.f32 %v2879, %v2882
        %v2892 = vadd.f32 %v814, %v2884
        %v2893 = vadd.f32 %v964, %v2885
        %v2894 = vadd.f32 %v1114, %v2886
        %v2895 = vadd.f32 %v1264, %v2887
        %v2896 = vadd.f32 %v1414, %v2888
        %v2897 = vadd.f32 %v1564, %v2889
        %v2898 = vadd.f32 %v1714, %v2890
        %v2899 = vadd.f32 %v1864, %v2891
        %v2900 = vld [vmem:[%s293 + $0x12] sm:$0x1]
        %v2901 = vsel %vm383, %v2892, 0.0
        %2902 = vadd.xlane.f32.xlu0 %v2901
        %v2903 = vpop.xlane.xlu0 %2902
        %v2904 = vsel %vm383, %v2893, 0.0
        %2905 = vadd.xlane.f32.xlu0 %v2904
        %v2906 = vpop.xlane.xlu0 %2905
        %v2907 = vsel %vm383, %v2894, 0.0
        %2908 = vadd.xlane.f32.xlu0 %v2907
        %v2909 = vpop.xlane.xlu0 %2908
        %v2910 = vsel %vm383, %v2895, 0.0
        %2911 = vadd.xlane.f32.xlu0 %v2910
        %v2912 = vpop.xlane.xlu0 %2911
        %v2913 = vsel %vm383, %v2896, 0.0
        %2914 = vadd.xlane.f32.xlu0 %v2913
        %v2915 = vpop.xlane.xlu0 %2914
        %v2916 = vsel %vm383, %v2897, 0.0
        %2917 = vadd.xlane.f32.xlu0 %v2916
        %v2918 = vpop.xlane.xlu0 %2917
        %v2919 = vsel %vm383, %v2898, 0.0
        %2920 = vadd.xlane.f32.xlu0 %v2919
        %v2921 = vpop.xlane.xlu0 %2920
        %v2922 = vsel %vm383, %v2899, 0.0
        %2923 = vadd.xlane.f32.xlu0 %v2922
        %v2924 = vpop.xlane.xlu0 %2923
        %v2925 = vrcp.pop 32.0
        %v2926 = vmul.f32 32.0, %v2925
        %v2927 = vsub.f32 1.0, %v2926
        %v2928 = vmul.f32 %v2925, %v2927
        %v2929 = vadd.f32 %v2925, %v2928
        %vm2930 = vweird.f32 %v2925
        %v2931 = vsel %vm2930, %v2925, %v2929
        %v2932 = vmul.f32 %v2903, %v2931
        %v2933 = vmul.f32 %v2906, %v2931
        %v2934 = vmul.f32 %v2909, %v2931
        %v2935 = vmul.f32 %v2912, %v2931
        %v2936 = vmul.f32 %v2915, %v2931
        %v2937 = vmul.f32 %v2918, %v2931
        %v2938 = vmul.f32 %v2921, %v2931
        %v2939 = vmul.f32 %v2924, %v2931
        %v2940 = vsub.f32 %v2892, %v2932
        %v2941 = vsub.f32 %v2893, %v2933
        %v2942 = vsub.f32 %v2894, %v2934
        %v2943 = vsub.f32 %v2895, %v2935
        %v2944 = vsub.f32 %v2896, %v2936
        %v2945 = vsub.f32 %v2897, %v2937
        %v2946 = vsub.f32 %v2898, %v2938
        %v2947 = vsub.f32 %v2899, %v2939
        %v2948 = vmul.f32 %v2940, %v2940
        %v2949 = vmul.f32 %v2941, %v2941
        %v2950 = vmul.f32 %v2942, %v2942
        %v2951 = vmul.f32 %v2943, %v2943
        %v2952 = vmul.f32 %v2944, %v2944
        %v2953 = vmul.f32 %v2945, %v2945
        %v2954 = vmul.f32 %v2946, %v2946
        %v2955 = vmul.f32 %v2947, %v2947
        %v2956 = vsel %vm383, %v2948, 0.0
        %2957 = vadd.xlane.f32.xlu0 %v2956
        %v2958 = vpop.xlane.xlu0 %2957
        %v2959 = vsel %vm383, %v2949, 0.0
        %2960 = vadd.xlane.f32.xlu0 %v2959
        %v2961 = vpop.xlane.xlu0 %2960
        %v2962 = vsel %vm383, %v2950, 0.0
        %2963 = vadd.xlane.f32.xlu0 %v2962
        %v2964 = vpop.xlane.xlu0 %2963
        %v2965 = vsel %vm383, %v2951, 0.0
        %2966 = vadd.xlane.f32.xlu0 %v2965
        %v2967 = vpop.xlane.xlu0 %2966
        %v2968 = vsel %vm383, %v2952, 0.0
        %2969 = vadd.xlane.f32.xlu0 %v2968
        %v2970 = vpop.xlane.xlu0 %2969
        %v2971 = vsel %vm383, %v2953, 0.0
        %2972 = vadd.xlane.f32.xlu0 %v2971
        %v2973 = vpop.xlane.xlu0 %2972
        %v2974 = vsel %vm383, %v2954, 0.0
        %2975 = vadd.xlane.f32.xlu0 %v2974
        %v2976 = vpop.xlane.xlu0 %2975
        %v2977 = vsel %vm383, %v2955, 0.0
        %2978 = vadd.xlane.f32.xlu0 %v2977
        %v2979 = vpop.xlane.xlu0 %2978
        %v2980 = vmul.f32 %v2958, %v2931
        %v2981 = vmul.f32 %v2961, %v2931
        %v2982 = vmul.f32 %v2964, %v2931
        %v2983 = vmul.f32 %v2967, %v2931
        %v2984 = vmul.f32 %v2970, %v2931
        %v2985 = vmul.f32 %v2973, %v2931
        %v2986 = vmul.f32 %v2976, %v2931
        %v2987 = vmul.f32 %v2979, %v2931
        %v2988 = vadd.f32 %v2980, 1e-05
        %v2989 = vadd.f32 %v2981, 1e-05
        %v2990 = vadd.f32 %v2982, 1e-05
        %v2991 = vadd.f32 %v2983, 1e-05
        %v2992 = vadd.f32 %v2984, 1e-05
        %v2993 = vadd.f32 %v2985, 1e-05
        %v2994 = vadd.f32 %v2986, 1e-05
        %v2995 = vadd.f32 %v2987, 1e-05
        %v2996 = vrsqrt.pop %v2988
        %v2997 = vmul.f32 %v2996, %v2988
        %v2998 = vmul.f32 %v2997, %v2996
        %v2999 = vmul.f32 0.5, %v2998
        %v3000 = vsub.f32 1.5, %v2999
        %v3001 = vmul.f32 %v2996, %v3000
        %vm3002 = vweird.f32 %v2988
        %vm3003 = vweird.f32 %v2996
        %vm3004 = vmor %vm3002, %vm3003
        %v3005 = vsel %vm3004, %v2996, %v3001
        %v3006 = vrsqrt.pop %v2989
        %v3007 = vmul.f32 %v3006, %v2989
        %v3008 = vmul.f32 %v3007, %v3006
        %v3009 = vmul.f32 0.5, %v3008
        %v3010 = vsub.f32 1.5, %v3009
        %v3011 = vmul.f32 %v3006, %v3010
        %vm3012 = vweird.f32 %v2989
        %vm3013 = vweird.f32 %v3006
        %vm3014 = vmor %vm3012, %vm3013
        %v3015 = vsel %vm3014, %v3006, %v3011
        %v3016 = vrsqrt.pop %v2990
        %v3017 = vmul.f32 %v3016, %v2990
        %v3018 = vmul.f32 %v3017, %v3016
        %v3019 = vmul.f32 0.5, %v3018
        %v3020 = vsub.f32 1.5, %v3019
        %v3021 = vmul.f32 %v3016, %v3020
        %vm3022 = vweird.f32 %v2990
        %vm3023 = vweird.f32 %v3016
        %vm3024 = vmor %vm3022, %vm3023
        %v3025 = vsel %vm3024, %v3016, %v3021
        %v3026 = vrsqrt.pop %v2991
        %v3027 = vmul.f32 %v3026, %v2991
        %v3028 = vmul.f32 %v3027, %v3026
        %v3029 = vmul.f32 0.5, %v3028
        %v3030 = vsub.f32 1.5, %v3029
        %v3031 = vmul.f32 %v3026, %v3030
        %vm3032 = vweird.f32 %v2991
        %vm3033 = vweird.f32 %v3026
        %vm3034 = vmor %vm3032, %vm3033
        %v3035 = vsel %vm3034, %v3026, %v3031
        %v3036 = vrsqrt.pop %v2992
        %v3037 = vmul.f32 %v3036, %v2992
        %v3038 = vmul.f32 %v3037, %v3036
        %v3039 = vmul.f32 0.5, %v3038
        %v3040 = vsub.f32 1.5, %v3039
        %v3041 = vmul.f32 %v3036, %v3040
        %vm3042 = vweird.f32 %v2992
        %vm3043 = vweird.f32 %v3036
        %vm3044 = vmor %vm3042, %vm3043
        %v3045 = vsel %vm3044, %v3036, %v3041
        %v3046 = vrsqrt.pop %v2993
        %v3047 = vmul.f32 %v3046, %v2993
        %v3048 = vmul.f32 %v3047, %v3046
        %v3049 = vmul.f32 0.5, %v3048
        %v3050 = vsub.f32 1.5, %v3049
        %v3051 = vmul.f32 %v3046, %v3050
        %vm3052 = vweird.f32 %v2993
        %vm3053 = vweird.f32 %v3046
        %vm3054 = vmor %vm3052, %vm3053
        %v3055 = vsel %vm3054, %v3046, %v3051
        %v3056 = vrsqrt.pop %v2994
        %v3057 = vmul.f32 %v3056, %v2994
        %v3058 = vmul.f32 %v3057, %v3056
        %v3059 = vmul.f32 0.5, %v3058
        %v3060 = vsub.f32 1.5, %v3059
        %v3061 = vmul.f32 %v3056, %v3060
        %vm3062 = vweird.f32 %v2994
        %vm3063 = vweird.f32 %v3056
        %vm3064 = vmor %vm3062, %vm3063
        %v3065 = vsel %vm3064, %v3056, %v3061
        %v3066 = vrsqrt.pop %v2995
        %v3067 = vmul.f32 %v3066, %v2995
        %v3068 = vmul.f32 %v3067, %v3066
        %v3069 = vmul.f32 0.5, %v3068
        %v3070 = vsub.f32 1.5, %v3069
        %v3071 = vmul.f32 %v3066, %v3070
        %vm3072 = vweird.f32 %v2995
        %vm3073 = vweird.f32 %v3066
        %vm3074 = vmor %vm3072, %vm3073
        %v3075 = vsel %vm3074, %v3066, %v3071
        %v3076 = vmul.f32 %v2940, %v3005
        %v3077 = vmul.f32 %v2941, %v3015
        %v3078 = vmul.f32 %v2942, %v3025
        %v3079 = vmul.f32 %v2943, %v3035
        %v3080 = vmul.f32 %v2944, %v3045
        %v3081 = vmul.f32 %v2945, %v3055
        %v3082 = vmul.f32 %v2946, %v3065
        %v3083 = vmul.f32 %v2947, %v3075
        %v3085 = vperm.slane %v2900, 0
        %3086 = vrot.lane.b32.xlu0 %v3085, 96
        %v3087 = vpop.permute.xlu0 %3086
        %v3089 = vmul.f32 %v3076, %v3087
        %v3090 = vmul.f32 %v3077, %v3087
        %v3091 = vmul.f32 %v3078, %v3087
        %v3092 = vmul.f32 %v3079, %v3087
        %v3093 = vmul.f32 %v3080, %v3087
        %v3094 = vmul.f32 %v3081, %v3087
        %v3095 = vmul.f32 %v3082, %v3087
        %v3096 = vmul.f32 %v3083, %v3087
        %3097 = vrot.lane.b32.xlu0 %v3085, 64
        %v3098 = vpop.permute.xlu0 %3097
        %v3100 = vadd.f32 %v3089, %v3098
        %v3101 = vadd.f32 %v3090, %v3098
        %v3102 = vadd.f32 %v3091, %v3098
        %v3103 = vadd.f32 %v3092, %v3098
        %v3104 = vadd.f32 %v3093, %v3098
        %v3105 = vadd.f32 %v3094, %v3098
        %v3106 = vadd.f32 %v3095, %v3098
        %v3107 = vadd.f32 %v3096, %v3098
        %v3108 = vpack.c.bf16 %v3101, %v3100
        %v3109 = vpack.c.bf16 %v3103, %v3102
        %v3110 = vpack.c.bf16 %v3105, %v3104
        %v3111 = vpack.c.bf16 %v3107, %v3106
        %v3112 = vld [vmem:[%s303] sm:$0xff]
        %v3113 = vld [vmem:[%s303 + $0x40] sm:$0xff]
        %v3114 = vld [vmem:[%s303 + $0x80] sm:$0xff]
        %v3115 = vld [vmem:[%s303 + $0xc0] sm:$0xff]
        %v3116 = vld [vmem:[%s293] sm:$0x3]
        %v3118 = vperm.slane %v3116, 0
        %v3119 = vperm.slane %v3116, 1
        %v3126 = vunpack.c.l.b16 %v3112
        %v3127 = vunpack.c.h.b16 %v3112
        %v3128 = vunpack.c.l.b16 %v3113
        %v3129 = vunpack.c.h.b16 %v3113
        %v3130 = vunpack.c.l.b16 %v3114
        %v3131 = vunpack.c.h.b16 %v3114
        %v3132 = vunpack.c.l.b16 %v3115
        %v3133 = vunpack.c.h.b16 %v3115
        %v3134 = vpack.c.b16 %v3128, %v3126
        %v3135 = vpack.c.b16 %v3129, %v3127
        %v3136 = vpack.c.b16 %v3132, %v3130
        %v3137 = vpack.c.b16 %v3133, %v3131
        %v3143 = vsel %vm383, %v3108, 0
        %v3146 = vsel %vm383, %v3109, 0
        %v3149 = vsel %vm383, %v3110, 0
        %v3152 = vsel %vm383, %v3111, 0
        %3154 = vmatpush.bf16.msra.mxu0 0
        %3155 = vmatpush.bf16.msra.mxu0 0
        %3156 = vmatpush.bf16.msra.mxu0 0
        %3157 = vmatpush.bf16.msra.mxu0 0
        %3158 = vmatpush.bf16.msra.mxu0 0
        %3159 = vmatpush.bf16.msra.mxu0 0
        %3160 = vmatpush.bf16.msra.mxu0 %v3136
        %3161 = vmatpush.bf16.msra.mxu0 %v3134
        %3162 = vmatmul.bf16.gmra.mxu0 %v3143
        %v3163 = vpop.f32.mrf.mxu0
        %v3164 = vadd.f32 %v3118, %v3163
        %v3165 = vpop.f32.mrf.mxu0
        %v3166 = vadd.f32 %v3118, %v3165
        %3167 = vmatmul.bf16.gmra.mxu0 %v3146
        %v3168 = vpop.f32.mrf.mxu0
        %v3169 = vadd.f32 %v3118, %v3168
        %v3170 = vpop.f32.mrf.mxu0
        %v3171 = vadd.f32 %v3118, %v3170
        %3172 = vmatmul.bf16.gmra.mxu0 %v3149
        %v3173 = vpop.f32.mrf.mxu0
        %v3174 = vadd.f32 %v3118, %v3173
        %v3175 = vpop.f32.mrf.mxu0
        %v3176 = vadd.f32 %v3118, %v3175
        %3177 = vmatmul.bf16.gmra.mxu0 %v3152
        %v3178 = vpop.f32.mrf.mxu0
        %v3179 = vadd.f32 %v3118, %v3178
        %v3180 = vpop.f32.mrf.mxu0
        %v3181 = vadd.f32 %v3118, %v3180
        %3182 = vdwg.mxu0
        %3183 = vmatpush.bf16.msra.mxu0 0
        %3184 = vmatpush.bf16.msra.mxu0 0
        %3185 = vmatpush.bf16.msra.mxu0 0
        %3186 = vmatpush.bf16.msra.mxu0 0
        %3187 = vmatpush.bf16.msra.mxu0 0
        %3188 = vmatpush.bf16.msra.mxu0 0
        %3189 = vmatpush.bf16.msra.mxu0 %v3137
        %3190 = vmatpush.bf16.msra.mxu0 %v3135
        %3191 = vmatmul.bf16.gmra.mxu0 %v3143
        %v3192 = vpop.f32.mrf.mxu0
        %v3193 = vadd.f32 %v3119, %v3192
        %v3194 = vpop.f32.mrf.mxu0
        %v3195 = vadd.f32 %v3119, %v3194
        %3196 = vmatmul.bf16.gmra.mxu0 %v3146
        %v3197 = vpop.f32.mrf.mxu0
        %v3198 = vadd.f32 %v3119, %v3197
        %v3199 = vpop.f32.mrf.mxu0
        %v3200 = vadd.f32 %v3119, %v3199
        %3201 = vmatmul.bf16.gmra.mxu0 %v3149
        %v3202 = vpop.f32.mrf.mxu0
        %v3203 = vadd.f32 %v3119, %v3202
        %v3204 = vpop.f32.mrf.mxu0
        %v3205 = vadd.f32 %v3119, %v3204
        %3206 = vmatmul.bf16.gmra.mxu0 %v3152
        %v3207 = vpop.f32.mrf.mxu0
        %v3208 = vadd.f32 %v3119, %v3207
        %v3209 = vpop.f32.mrf.mxu0
        %v3210 = vadd.f32 %v3119, %v3209
        %3211 = vdwg.mxu0
        %v3212 = vmax.f32 %v3164, 0.0
        %v3213 = vmax.f32 %v3193, 0.0
        %v3214 = vmax.f32 %v3166, 0.0
        %v3215 = vmax.f32 %v3195, 0.0
        %v3216 = vmax.f32 %v3169, 0.0
        %v3217 = vmax.f32 %v3198, 0.0
        %v3218 = vmax.f32 %v3171, 0.0
        %v3219 = vmax.f32 %v3200, 0.0
        %v3220 = vmax.f32 %v3174, 0.0
        %v3221 = vmax.f32 %v3203, 0.0
        %v3222 = vmax.f32 %v3176, 0.0
        %v3223 = vmax.f32 %v3205, 0.0
        %v3224 = vmax.f32 %v3179, 0.0
        %v3225 = vmax.f32 %v3208, 0.0
        %v3226 = vmax.f32 %v3181, 0.0
        %v3227 = vmax.f32 %v3210, 0.0
        %v3228 = vpack.c.bf16 %v3214, %v3212
        %v3229 = vpack.c.bf16 %v3215, %v3213
        %v3230 = vpack.c.bf16 %v3218, %v3216
        %v3231 = vpack.c.bf16 %v3219, %v3217
        %v3232 = vpack.c.bf16 %v3222, %v3220
        %v3233 = vpack.c.bf16 %v3223, %v3221
        %v3234 = vpack.c.bf16 %v3226, %v3224
        %v3235 = vpack.c.bf16 %v3227, %v3225
        %s3236 = scalar_lea.vmem %s303, 256 [#allocation5]
        %v3237 = vld [vmem:[%s3236] sm:$0xff]
        %v3238 = vld [vmem:[%s3236 + $0x40] sm:$0xff]
        %v3239 = vld [vmem:[%s3236 + $0x80] sm:$0xff]
        %v3240 = vld [vmem:[%s3236 + $0xc0] sm:$0xff]
        %v3241 = vld [vmem:[%s303 + $0x8] sm:$0xff]
        %v3242 = vld [vmem:[%s303 + $0x48] sm:$0xff]
        %v3243 = vld [vmem:[%s303 + $0x88] sm:$0xff]
        %v3244 = vld [vmem:[%s303 + $0xc8] sm:$0xff]
        %v3245 = vld [vmem:[%s293 + $0x2] sm:$0x3]
        %v3247 = vperm.slane %v3245, 0
        %v3248 = vperm.slane %v3245, 1
        %v3255 = vunpack.c.l.b16 %v3241
        %v3256 = vunpack.c.h.b16 %v3241
        %v3257 = vunpack.c.l.b16 %v3242
        %v3258 = vunpack.c.h.b16 %v3242
        %v3259 = vunpack.c.l.b16 %v3243
        %v3260 = vunpack.c.h.b16 %v3243
        %v3261 = vunpack.c.l.b16 %v3244
        %v3262 = vunpack.c.h.b16 %v3244
        %v3263 = vpack.c.b16 %v3257, %v3255
        %v3264 = vpack.c.b16 %v3258, %v3256
        %v3265 = vpack.c.b16 %v3261, %v3259
        %v3266 = vpack.c.b16 %v3262, %v3260
        %3271 = vmatpush.bf16.msra.mxu0 0
        %3272 = vmatpush.bf16.msra.mxu0 0
        %3273 = vmatpush.bf16.msra.mxu0 0
        %3274 = vmatpush.bf16.msra.mxu0 0
        %3275 = vmatpush.bf16.msra.mxu0 0
        %3276 = vmatpush.bf16.msra.mxu0 0
        %3277 = vmatpush.bf16.msra.mxu0 %v3265
        %3278 = vmatpush.bf16.msra.mxu0 %v3263
        %3279 = vmatmul.bf16.gmra.mxu0 %v3143
        %v3280 = vpop.f32.mrf.mxu0
        %v3281 = vadd.f32 %v3247, %v3280
        %v3282 = vpop.f32.mrf.mxu0
        %v3283 = vadd.f32 %v3247, %v3282
        %3284 = vmatmul.bf16.gmra.mxu0 %v3146
        %v3285 = vpop.f32.mrf.mxu0
        %v3286 = vadd.f32 %v3247, %v3285
        %v3287 = vpop.f32.mrf.mxu0
        %v3288 = vadd.f32 %v3247, %v3287
        %3289 = vmatmul.bf16.gmra.mxu0 %v3149
        %v3290 = vpop.f32.mrf.mxu0
        %v3291 = vadd.f32 %v3247, %v3290
        %v3292 = vpop.f32.mrf.mxu0
        %v3293 = vadd.f32 %v3247, %v3292
        %3294 = vmatmul.bf16.gmra.mxu0 %v3152
        %v3295 = vpop.f32.mrf.mxu0
        %v3296 = vadd.f32 %v3247, %v3295
        %v3297 = vpop.f32.mrf.mxu0
        %v3298 = vadd.f32 %v3247, %v3297
        %3299 = vdwg.mxu0
        %3300 = vmatpush.bf16.msra.mxu0 0
        %3301 = vmatpush.bf16.msra.mxu0 0
        %3302 = vmatpush.bf16.msra.mxu0 0
        %3303 = vmatpush.bf16.msra.mxu0 0
        %3304 = vmatpush.bf16.msra.mxu0 0
        %3305 = vmatpush.bf16.msra.mxu0 0
        %3306 = vmatpush.bf16.msra.mxu0 %v3266
        %3307 = vmatpush.bf16.msra.mxu0 %v3264
        %3308 = vmatmul.bf16.gmra.mxu0 %v3143
        %v3309 = vpop.f32.mrf.mxu0
        %v3310 = vadd.f32 %v3248, %v3309
        %v3311 = vpop.f32.mrf.mxu0
        %v3312 = vadd.f32 %v3248, %v3311
        %3313 = vmatmul.bf16.gmra.mxu0 %v3146
        %v3314 = vpop.f32.mrf.mxu0
        %v3315 = vadd.f32 %v3248, %v3314
        %v3316 = vpop.f32.mrf.mxu0
        %v3317 = vadd.f32 %v3248, %v3316
        %3318 = vmatmul.bf16.gmra.mxu0 %v3149
        %v3319 = vpop.f32.mrf.mxu0
        %v3320 = vadd.f32 %v3248, %v3319
        %v3321 = vpop.f32.mrf.mxu0
        %v3322 = vadd.f32 %v3248, %v3321
        %3323 = vmatmul.bf16.gmra.mxu0 %v3152
        %v3324 = vpop.f32.mrf.mxu0
        %v3325 = vadd.f32 %v3248, %v3324
        %v3326 = vpop.f32.mrf.mxu0
        %v3327 = vadd.f32 %v3248, %v3326
        %3328 = vdwg.mxu0
        %v3329 = vmax.f32 %v3281, 0.0
        %v3330 = vmax.f32 %v3310, 0.0
        %v3331 = vmax.f32 %v3283, 0.0
        %v3332 = vmax.f32 %v3312, 0.0
        %v3333 = vmax.f32 %v3286, 0.0
        %v3334 = vmax.f32 %v3315, 0.0
        %v3335 = vmax.f32 %v3288, 0.0
        %v3336 = vmax.f32 %v3317, 0.0
        %v3337 = vmax.f32 %v3291, 0.0
        %v3338 = vmax.f32 %v3320, 0.0
        %v3339 = vmax.f32 %v3293, 0.0
        %v3340 = vmax.f32 %v3322, 0.0
        %v3341 = vmax.f32 %v3296, 0.0
        %v3342 = vmax.f32 %v3325, 0.0
        %v3343 = vmax.f32 %v3298, 0.0
        %v3344 = vmax.f32 %v3327, 0.0
        %v3345 = vpack.c.bf16 %v3331, %v3329
        %v3346 = vpack.c.bf16 %v3332, %v3330
        %v3347 = vpack.c.bf16 %v3335, %v3333
        %v3348 = vpack.c.bf16 %v3336, %v3334
        %v3349 = vpack.c.bf16 %v3339, %v3337
        %v3350 = vpack.c.bf16 %v3340, %v3338
        %v3351 = vpack.c.bf16 %v3343, %v3341
        %v3352 = vpack.c.bf16 %v3344, %v3342
        %v3353 = vld [vmem:[%s3236 + $0x8] sm:$0xff]
        %v3354 = vld [vmem:[%s3236 + $0x48] sm:$0xff]
        %v3355 = vld [vmem:[%s3236 + $0x88] sm:$0xff]
        %v3356 = vld [vmem:[%s3236 + $0xc8] sm:$0xff]
        %v3361 = vunpack.c.l.b16 %v3353
        %v3362 = vunpack.c.h.b16 %v3353
        %v3363 = vunpack.c.l.b16 %v3354
        %v3364 = vunpack.c.h.b16 %v3354
        %v3365 = vunpack.c.l.b16 %v3355
        %v3366 = vunpack.c.h.b16 %v3355
        %v3367 = vunpack.c.l.b16 %v3356
        %v3368 = vunpack.c.h.b16 %v3356
        %v3369 = vpack.c.b16 %v3363, %v3361
        %v3370 = vpack.c.b16 %v3364, %v3362
        %v3371 = vpack.c.b16 %v3367, %v3365
        %v3372 = vpack.c.b16 %v3368, %v3366
        %3377 = vmatpush.bf16.xpose.msra.mxu0 0
        %3378 = vmatpush.bf16.xpose.msra.mxu0 0
        %3379 = vmatpush.bf16.xpose.msra.mxu0 0
        %3380 = vmatpush.bf16.xpose.msra.mxu0 0
        %3381 = vmatpush.bf16.xpose.msra.mxu0 0
        %3382 = vmatpush.bf16.xpose.msra.mxu0 0
        %3383 = vmatpush.bf16.xpose.msra.mxu0 %v3371
        %3384 = vmatpush.bf16.xpose.msra.mxu0 %v3369
        %3385 = vmatmul.bf16.gmra.mxu0 %v3345
        %v3386 = vpop.f32.mrf.mxu0
        %v3387 = vadd.f32 0.0, %v3386
        %v3388 = vpop.f32.mrf.mxu0
        %v3389 = vadd.f32 0.0, %v3388
        %3390 = vmatmul.bf16.gmra.mxu0 %v3347
        %v3391 = vpop.f32.mrf.mxu0
        %v3392 = vadd.f32 0.0, %v3391
        %v3393 = vpop.f32.mrf.mxu0
        %v3394 = vadd.f32 0.0, %v3393
        %3395 = vmatmul.bf16.gmra.mxu0 %v3349
        %v3396 = vpop.f32.mrf.mxu0
        %v3397 = vadd.f32 0.0, %v3396
        %v3398 = vpop.f32.mrf.mxu0
        %v3399 = vadd.f32 0.0, %v3398
        %3400 = vmatmul.bf16.gmra.mxu0 %v3351
        %v3401 = vpop.f32.mrf.mxu0
        %v3402 = vadd.f32 0.0, %v3401
        %v3403 = vpop.f32.mrf.mxu0
        %v3404 = vadd.f32 0.0, %v3403
        %3405 = vdwg.mxu0
        %3406 = vmatpush.bf16.xpose.msra.mxu0 0
        %3407 = vmatpush.bf16.xpose.msra.mxu0 0
        %3408 = vmatpush.bf16.xpose.msra.mxu0 0
        %3409 = vmatpush.bf16.xpose.msra.mxu0 0
        %3410 = vmatpush.bf16.xpose.msra.mxu0 0
        %3411 = vmatpush.bf16.xpose.msra.mxu0 0
        %3412 = vmatpush.bf16.xpose.msra.mxu0 %v3372
        %3413 = vmatpush.bf16.xpose.msra.mxu0 %v3370
        %3414 = vmatmul.bf16.gmra.mxu0 %v3346
        %v3415 = vpop.f32.mrf.mxu0
        %v3416 = vadd.f32 %v3387, %v3415
        %v3417 = vpop.f32.mrf.mxu0
        %v3418 = vadd.f32 %v3389, %v3417
        %3419 = vmatmul.bf16.gmra.mxu0 %v3348
        %v3420 = vpop.f32.mrf.mxu0
        %v3421 = vadd.f32 %v3392, %v3420
        %v3422 = vpop.f32.mrf.mxu0
        %v3423 = vadd.f32 %v3394, %v3422
        %3424 = vmatmul.bf16.gmra.mxu0 %v3350
        %v3425 = vpop.f32.mrf.mxu0
        %v3426 = vadd.f32 %v3397, %v3425
        %v3427 = vpop.f32.mrf.mxu0
        %v3428 = vadd.f32 %v3399, %v3427
        %3429 = vmatmul.bf16.gmra.mxu0 %v3352
        %v3430 = vpop.f32.mrf.mxu0
        %v3431 = vadd.f32 %v3402, %v3430
        %v3432 = vpop.f32.mrf.mxu0
        %v3433 = vadd.f32 %v3404, %v3432
        %3434 = vdwg.mxu0
        %v3439 = vunpack.c.l.b16 %v3237
        %v3440 = vunpack.c.h.b16 %v3237
        %v3441 = vunpack.c.l.b16 %v3238
        %v3442 = vunpack.c.h.b16 %v3238
        %v3443 = vunpack.c.l.b16 %v3239
        %v3444 = vunpack.c.h.b16 %v3239
        %v3445 = vunpack.c.l.b16 %v3240
        %v3446 = vunpack.c.h.b16 %v3240
        %v3447 = vpack.c.b16 %v3441, %v3439
        %v3448 = vpack.c.b16 %v3442, %v3440
        %v3449 = vpack.c.b16 %v3445, %v3443
        %v3450 = vpack.c.b16 %v3446, %v3444
        %3455 = vmatpush.bf16.xpose.msra.mxu0 0
        %3456 = vmatpush.bf16.xpose.msra.mxu0 0
        %3457 = vmatpush.bf16.xpose.msra.mxu0 0
        %3458 = vmatpush.bf16.xpose.msra.mxu0 0
        %3459 = vmatpush.bf16.xpose.msra.mxu0 0
        %3460 = vmatpush.bf16.xpose.msra.mxu0 0
        %3461 = vmatpush.bf16.xpose.msra.mxu0 %v3449
        %3462 = vmatpush.bf16.xpose.msra.mxu0 %v3447
        %3463 = vmatmul.bf16.gmra.mxu0 %v3228
        %v3464 = vpop.f32.mrf.mxu0
        %v3465 = vadd.f32 %v3416, %v3464
        %v3466 = vpop.f32.mrf.mxu0
        %v3467 = vadd.f32 %v3418, %v3466
        %3468 = vmatmul.bf16.gmra.mxu0 %v3230
        %v3469 = vpop.f32.mrf.mxu0
        %v3470 = vadd.f32 %v3421, %v3469
        %v3471 = vpop.f32.mrf.mxu0
        %v3472 = vadd.f32 %v3423, %v3471
        %3473 = vmatmul.bf16.gmra.mxu0 %v3232
        %v3474 = vpop.f32.mrf.mxu0
        %v3475 = vadd.f32 %v3426, %v3474
        %v3476 = vpop.f32.mrf.mxu0
        %v3477 = vadd.f32 %v3428, %v3476
        %3478 = vmatmul.bf16.gmra.mxu0 %v3234
        %v3479 = vpop.f32.mrf.mxu0
        %v3480 = vadd.f32 %v3431, %v3479
        %v3481 = vpop.f32.mrf.mxu0
        %v3482 = vadd.f32 %v3433, %v3481
        %3483 = vdwg.mxu0
        %3484 = vmatpush.bf16.xpose.msra.mxu0 0
        %3485 = vmatpush.bf16.xpose.msra.mxu0 0
        %3486 = vmatpush.bf16.xpose.msra.mxu0 0
        %3487 = vmatpush.bf16.xpose.msra.mxu0 0
        %3488 = vmatpush.bf16.xpose.msra.mxu0 0
        %3489 = vmatpush.bf16.xpose.msra.mxu0 0
        %3490 = vmatpush.bf16.xpose.msra.mxu0 %v3450
        %3491 = vmatpush.bf16.xpose.msra.mxu0 %v3448
        %3492 = vmatmul.bf16.gmra.mxu0 %v3229
        %v3493 = vpop.f32.mrf.mxu0
        %v3494 = vadd.f32 %v3465, %v3493
        %v3495 = vpop.f32.mrf.mxu0
        %v3496 = vadd.f32 %v3467, %v3495
        %3497 = vmatmul.bf16.gmra.mxu0 %v3231
        %v3498 = vpop.f32.mrf.mxu0
        %v3499 = vadd.f32 %v3470, %v3498
        %v3500 = vpop.f32.mrf.mxu0
        %v3501 = vadd.f32 %v3472, %v3500
        %3502 = vmatmul.bf16.gmra.mxu0 %v3233
        %v3503 = vpop.f32.mrf.mxu0
        %v3504 = vadd.f32 %v3475, %v3503
        %v3505 = vpop.f32.mrf.mxu0
        %v3506 = vadd.f32 %v3477, %v3505
        %3507 = vmatmul.bf16.gmra.mxu0 %v3235
        %v3508 = vpop.f32.mrf.mxu0
        %v3509 = vadd.f32 %v3480, %v3508
        %v3510 = vpop.f32.mrf.mxu0
        %v3511 = vadd.f32 %v3482, %v3510
        %3512 = vdwg.mxu0
        %v3513 = vld [vmem:[%s303 + $0x10] sm:$0xff]
        %v3514 = vld [vmem:[%s303 + $0x50] sm:$0xff]
        %v3515 = vld [vmem:[%s303 + $0x90] sm:$0xff]
        %v3516 = vld [vmem:[%s303 + $0xd0] sm:$0xff]
        %v3517 = vld [vmem:[%s293 + $0x4] sm:$0x3]
        %v3519 = vperm.slane %v3517, 0
        %v3520 = vperm.slane %v3517, 1
        %v3527 = vunpack.c.l.b16 %v3513
        %v3528 = vunpack.c.h.b16 %v3513
        %v3529 = vunpack.c.l.b16 %v3514
        %v3530 = vunpack.c.h.b16 %v3514
        %v3531 = vunpack.c.l.b16 %v3515
        %v3532 = vunpack.c.h.b16 %v3515
        %v3533 = vunpack.c.l.b16 %v3516
        %v3534 = vunpack.c.h.b16 %v3516
        %v3535 = vpack.c.b16 %v3529, %v3527
        %v3536 = vpack.c.b16 %v3530, %v3528
        %v3537 = vpack.c.b16 %v3533, %v3531
        %v3538 = vpack.c.b16 %v3534, %v3532
        %3543 = vmatpush.bf16.msra.mxu0 0
        %3544 = vmatpush.bf16.msra.mxu0 0
        %3545 = vmatpush.bf16.msra.mxu0 0
        %3546 = vmatpush.bf16.msra.mxu0 0
        %3547 = vmatpush.bf16.msra.mxu0 0
        %3548 = vmatpush.bf16.msra.mxu0 0
        %3549 = vmatpush.bf16.msra.mxu0 %v3537
        %3550 = vmatpush.bf16.msra.mxu0 %v3535
        %3551 = vmatmul.bf16.gmra.mxu0 %v3143
        %v3552 = vpop.f32.mrf.mxu0
        %v3553 = vadd.f32 %v3519, %v3552
        %v3554 = vpop.f32.mrf.mxu0
        %v3555 = vadd.f32 %v3519, %v3554
        %3556 = vmatmul.bf16.gmra.mxu0 %v3146
        %v3557 = vpop.f32.mrf.mxu0
        %v3558 = vadd.f32 %v3519, %v3557
        %v3559 = vpop.f32.mrf.mxu0
        %v3560 = vadd.f32 %v3519, %v3559
        %3561 = vmatmul.bf16.gmra.mxu0 %v3149
        %v3562 = vpop.f32.mrf.mxu0
        %v3563 = vadd.f32 %v3519, %v3562
        %v3564 = vpop.f32.mrf.mxu0
        %v3565 = vadd.f32 %v3519, %v3564
        %3566 = vmatmul.bf16.gmra.mxu0 %v3152
        %v3567 = vpop.f32.mrf.mxu0
        %v3568 = vadd.f32 %v3519, %v3567
        %v3569 = vpop.f32.mrf.mxu0
        %v3570 = vadd.f32 %v3519, %v3569
        %3571 = vdwg.mxu0
        %3572 = vmatpush.bf16.msra.mxu0 0
        %3573 = vmatpush.bf16.msra.mxu0 0
        %3574 = vmatpush.bf16.msra.mxu0 0
        %3575 = vmatpush.bf16.msra.mxu0 0
        %3576 = vmatpush.bf16.msra.mxu0 0
        %3577 = vmatpush.bf16.msra.mxu0 0
        %3578 = vmatpush.bf16.msra.mxu0 %v3538
        %3579 = vmatpush.bf16.msra.mxu0 %v3536
        %3580 = vmatmul.bf16.gmra.mxu0 %v3143
        %v3581 = vpop.f32.mrf.mxu0
        %v3582 = vadd.f32 %v3520, %v3581
        %v3583 = vpop.f32.mrf.mxu0
        %v3584 = vadd.f32 %v3520, %v3583
        %3585 = vmatmul.bf16.gmra.mxu0 %v3146
        %v3586 = vpop.f32.mrf.mxu0
        %v3587 = vadd.f32 %v3520, %v3586
        %v3588 = vpop.f32.mrf.mxu0
        %v3589 = vadd.f32 %v3520, %v3588
        %3590 = vmatmul.bf16.gmra.mxu0 %v3149
        %v3591 = vpop.f32.mrf.mxu0
        %v3592 = vadd.f32 %v3520, %v3591
        %v3593 = vpop.f32.mrf.mxu0
        %v3594 = vadd.f32 %v3520, %v3593
        %3595 = vmatmul.bf16.gmra.mxu0 %v3152
        %v3596 = vpop.f32.mrf.mxu0
        %v3597 = vadd.f32 %v3520, %v3596
        %v3598 = vpop.f32.mrf.mxu0
        %v3599 = vadd.f32 %v3520, %v3598
        %3600 = vdwg.mxu0
        %v3601 = vmax.f32 %v3553, 0.0
        %v3602 = vmax.f32 %v3582, 0.0
        %v3603 = vmax.f32 %v3555, 0.0
        %v3604 = vmax.f32 %v3584, 0.0
        %v3605 = vmax.f32 %v3558, 0.0
        %v3606 = vmax.f32 %v3587, 0.0
        %v3607 = vmax.f32 %v3560, 0.0
        %v3608 = vmax.f32 %v3589, 0.0
        %v3609 = vmax.f32 %v3563, 0.0
        %v3610 = vmax.f32 %v3592, 0.0
        %v3611 = vmax.f32 %v3565, 0.0
        %v3612 = vmax.f32 %v3594, 0.0
        %v3613 = vmax.f32 %v3568, 0.0
        %v3614 = vmax.f32 %v3597, 0.0
        %v3615 = vmax.f32 %v3570, 0.0
        %v3616 = vmax.f32 %v3599, 0.0
        %v3617 = vpack.c.bf16 %v3603, %v3601
        %v3618 = vpack.c.bf16 %v3604, %v3602
        %v3619 = vpack.c.bf16 %v3607, %v3605
        %v3620 = vpack.c.bf16 %v3608, %v3606
        %v3621 = vpack.c.bf16 %v3611, %v3609
        %v3622 = vpack.c.bf16 %v3612, %v3610
        %v3623 = vpack.c.bf16 %v3615, %v3613
        %v3624 = vpack.c.bf16 %v3616, %v3614
        %v3625 = vld [vmem:[%s3236 + $0x10] sm:$0xff]
        %v3626 = vld [vmem:[%s3236 + $0x50] sm:$0xff]
        %v3627 = vld [vmem:[%s3236 + $0x90] sm:$0xff]
        %v3628 = vld [vmem:[%s3236 + $0xd0] sm:$0xff]
        %v3633 = vunpack.c.l.b16 %v3625
        %v3634 = vunpack.c.h.b16 %v3625
        %v3635 = vunpack.c.l.b16 %v3626
        %v3636 = vunpack.c.h.b16 %v3626
        %v3637 = vunpack.c.l.b16 %v3627
        %v3638 = vunpack.c.h.b16 %v3627
        %v3639 = vunpack.c.l.b16 %v3628
        %v3640 = vunpack.c.h.b16 %v3628
        %v3641 = vpack.c.b16 %v3635, %v3633
        %v3642 = vpack.c.b16 %v3636, %v3634
        %v3643 = vpack.c.b16 %v3639, %v3637
        %v3644 = vpack.c.b16 %v3640, %v3638
        %3649 = vmatpush.bf16.xpose.msra.mxu0 0
        %3650 = vmatpush.bf16.xpose.msra.mxu0 0
        %3651 = vmatpush.bf16.xpose.msra.mxu0 0
        %3652 = vmatpush.bf16.xpose.msra.mxu0 0
        %3653 = vmatpush.bf16.xpose.msra.mxu0 0
        %3654 = vmatpush.bf16.xpose.msra.mxu0 0
        %3655 = vmatpush.bf16.xpose.msra.mxu0 %v3643
        %3656 = vmatpush.bf16.xpose.msra.mxu0 %v3641
        %3657 = vmatmul.bf16.gmra.mxu0 %v3617
        %v3658 = vpop.f32.mrf.mxu0
        %v3659 = vadd.f32 0.0, %v3658
        %v3660 = vpop.f32.mrf.mxu0
        %v3661 = vadd.f32 0.0, %v3660
        %3662 = vmatmul.bf16.gmra.mxu0 %v3619
        %v3663 = vpop.f32.mrf.mxu0
        %v3664 = vadd.f32 0.0, %v3663
        %v3665 = vpop.f32.mrf.mxu0
        %v3666 = vadd.f32 0.0, %v3665
        %3667 = vmatmul.bf16.gmra.mxu0 %v3621
        %v3668 = vpop.f32.mrf.mxu0
        %v3669 = vadd.f32 0.0, %v3668
        %v3670 = vpop.f32.mrf.mxu0
        %v3671 = vadd.f32 0.0, %v3670
        %3672 = vmatmul.bf16.gmra.mxu0 %v3623
        %v3673 = vpop.f32.mrf.mxu0
        %v3674 = vadd.f32 0.0, %v3673
        %v3675 = vpop.f32.mrf.mxu0
        %v3676 = vadd.f32 0.0, %v3675
        %3677 = vdwg.mxu0
        %3678 = vmatpush.bf16.xpose.msra.mxu0 0
        %3679 = vmatpush.bf16.xpose.msra.mxu0 0
        %3680 = vmatpush.bf16.xpose.msra.mxu0 0
        %3681 = vmatpush.bf16.xpose.msra.mxu0 0
        %3682 = vmatpush.bf16.xpose.msra.mxu0 0
        %3683 = vmatpush.bf16.xpose.msra.mxu0 0
        %3684 = vmatpush.bf16.xpose.msra.mxu0 %v3644
        %3685 = vmatpush.bf16.xpose.msra.mxu0 %v3642
        %3686 = vmatmul.bf16.gmra.mxu0 %v3618
        %v3687 = vpop.f32.mrf.mxu0
        %v3688 = vadd.f32 %v3659, %v3687
        %v3689 = vpop.f32.mrf.mxu0
        %v3690 = vadd.f32 %v3661, %v3689
        %3691 = vmatmul.bf16.gmra.mxu0 %v3620
        %v3692 = vpop.f32.mrf.mxu0
        %v3693 = vadd.f32 %v3664, %v3692
        %v3694 = vpop.f32.mrf.mxu0
        %v3695 = vadd.f32 %v3666, %v3694
        %3696 = vmatmul.bf16.gmra.mxu0 %v3622
        %v3697 = vpop.f32.mrf.mxu0
        %v3698 = vadd.f32 %v3669, %v3697
        %v3699 = vpop.f32.mrf.mxu0
        %v3700 = vadd.f32 %v3671, %v3699
        %3701 = vmatmul.bf16.gmra.mxu0 %v3624
        %v3702 = vpop.f32.mrf.mxu0
        %v3703 = vadd.f32 %v3674, %v3702
        %v3704 = vpop.f32.mrf.mxu0
        %v3705 = vadd.f32 %v3676, %v3704
        %3706 = vdwg.mxu0
        %v3707 = vadd.f32 %v3494, %v3688
        %v3708 = vadd.f32 %v3496, %v3690
        %v3709 = vadd.f32 %v3499, %v3693
        %v3710 = vadd.f32 %v3501, %v3695
        %v3711 = vadd.f32 %v3504, %v3698
        %v3712 = vadd.f32 %v3506, %v3700
        %v3713 = vadd.f32 %v3509, %v3703
        %v3714 = vadd.f32 %v3511, %v3705
        %v3715 = vld [vmem:[%s303 + $0x18] sm:$0xff]
        %v3716 = vld [vmem:[%s303 + $0x58] sm:$0xff]
        %v3717 = vld [vmem:[%s303 + $0x98] sm:$0xff]
        %v3718 = vld [vmem:[%s303 + $0xd8] sm:$0xff]
        %v3719 = vld [vmem:[%s293 + $0x6] sm:$0x3]
        %v3721 = vperm.slane %v3719, 0
        %v3722 = vperm.slane %v3719, 1
        %v3729 = vunpack.c.l.b16 %v3715
        %v3730 = vunpack.c.h.b16 %v3715
        %v3731 = vunpack.c.l.b16 %v3716
        %v3732 = vunpack.c.h.b16 %v3716
        %v3733 = vunpack.c.l.b16 %v3717
        %v3734 = vunpack.c.h.b16 %v3717
        %v3735 = vunpack.c.l.b16 %v3718
        %v3736 = vunpack.c.h.b16 %v3718
        %v3737 = vpack.c.b16 %v3731, %v3729
        %v3738 = vpack.c.b16 %v3732, %v3730
        %v3739 = vpack.c.b16 %v3735, %v3733
        %v3740 = vpack.c.b16 %v3736, %v3734
        %3745 = vmatpush.bf16.msra.mxu0 0
        %3746 = vmatpush.bf16.msra.mxu0 0
        %3747 = vmatpush.bf16.msra.mxu0 0
        %3748 = vmatpush.bf16.msra.mxu0 0
        %3749 = vmatpush.bf16.msra.mxu0 0
        %3750 = vmatpush.bf16.msra.mxu0 0
        %3751 = vmatpush.bf16.msra.mxu0 %v3739
        %3752 = vmatpush.bf16.msra.mxu0 %v3737
        %3753 = vmatmul.bf16.gmra.mxu0 %v3143
        %v3754 = vpop.f32.mrf.mxu0
        %v3755 = vadd.f32 %v3721, %v3754
        %v3756 = vpop.f32.mrf.mxu0
        %v3757 = vadd.f32 %v3721, %v3756
        %3758 = vmatmul.bf16.gmra.mxu0 %v3146
        %v3759 = vpop.f32.mrf.mxu0
        %v3760 = vadd.f32 %v3721, %v3759
        %v3761 = vpop.f32.mrf.mxu0
        %v3762 = vadd.f32 %v3721, %v3761
        %3763 = vmatmul.bf16.gmra.mxu0 %v3149
        %v3764 = vpop.f32.mrf.mxu0
        %v3765 = vadd.f32 %v3721, %v3764
        %v3766 = vpop.f32.mrf.mxu0
        %v3767 = vadd.f32 %v3721, %v3766
        %3768 = vmatmul.bf16.gmra.mxu0 %v3152
        %v3769 = vpop.f32.mrf.mxu0
        %v3770 = vadd.f32 %v3721, %v3769
        %v3771 = vpop.f32.mrf.mxu0
        %v3772 = vadd.f32 %v3721, %v3771
        %3773 = vdwg.mxu0
        %3774 = vmatpush.bf16.msra.mxu0 0
        %3775 = vmatpush.bf16.msra.mxu0 0
        %3776 = vmatpush.bf16.msra.mxu0 0
        %3777 = vmatpush.bf16.msra.mxu0 0
        %3778 = vmatpush.bf16.msra.mxu0 0
        %3779 = vmatpush.bf16.msra.mxu0 0
        %3780 = vmatpush.bf16.msra.mxu0 %v3740
        %3781 = vmatpush.bf16.msra.mxu0 %v3738
        %3782 = vmatmul.bf16.gmra.mxu0 %v3143
        %v3783 = vpop.f32.mrf.mxu0
        %v3784 = vadd.f32 %v3722, %v3783
        %v3785 = vpop.f32.mrf.mxu0
        %v3786 = vadd.f32 %v3722, %v3785
        %3787 = vmatmul.bf16.gmra.mxu0 %v3146
        %v3788 = vpop.f32.mrf.mxu0
        %v3789 = vadd.f32 %v3722, %v3788
        %v3790 = vpop.f32.mrf.mxu0
        %v3791 = vadd.f32 %v3722, %v3790
        %3792 = vmatmul.bf16.gmra.mxu0 %v3149
        %v3793 = vpop.f32.mrf.mxu0
        %v3794 = vadd.f32 %v3722, %v3793
        %v3795 = vpop.f32.mrf.mxu0
        %v3796 = vadd.f32 %v3722, %v3795
        %3797 = vmatmul.bf16.gmra.mxu0 %v3152
        %v3798 = vpop.f32.mrf.mxu0
        %v3799 = vadd.f32 %v3722, %v3798
        %v3800 = vpop.f32.mrf.mxu0
        %v3801 = vadd.f32 %v3722, %v3800
        %3802 = vdwg.mxu0
        %v3803 = vmax.f32 %v3755, 0.0
        %v3804 = vmax.f32 %v3784, 0.0
        %v3805 = vmax.f32 %v3757, 0.0
        %v3806 = vmax.f32 %v3786, 0.0
        %v3807 = vmax.f32 %v3760, 0.0
        %v3808 = vmax.f32 %v3789, 0.0
        %v3809 = vmax.f32 %v3762, 0.0
        %v3810 = vmax.f32 %v3791, 0.0
        %v3811 = vmax.f32 %v3765, 0.0
        %v3812 = vmax.f32 %v3794, 0.0
        %v3813 = vmax.f32 %v3767, 0.0
        %v3814 = vmax.f32 %v3796, 0.0
        %v3815 = vmax.f32 %v3770, 0.0
        %v3816 = vmax.f32 %v3799, 0.0
        %v3817 = vmax.f32 %v3772, 0.0
        %v3818 = vmax.f32 %v3801, 0.0
        %v3819 = vpack.c.bf16 %v3805, %v3803
        %v3820 = vpack.c.bf16 %v3806, %v3804
        %v3821 = vpack.c.bf16 %v3809, %v3807
        %v3822 = vpack.c.bf16 %v3810, %v3808
        %v3823 = vpack.c.bf16 %v3813, %v3811
        %v3824 = vpack.c.bf16 %v3814, %v3812
        %v3825 = vpack.c.bf16 %v3817, %v3815
        %v3826 = vpack.c.bf16 %v3818, %v3816
        %v3827 = vld [vmem:[%s3236 + $0x18] sm:$0xff]
        %v3828 = vld [vmem:[%s3236 + $0x58] sm:$0xff]
        %v3829 = vld [vmem:[%s3236 + $0x98] sm:$0xff]
        %v3830 = vld [vmem:[%s3236 + $0xd8] sm:$0xff]
        %v3835 = vunpack.c.l.b16 %v3827
        %v3836 = vunpack.c.h.b16 %v3827
        %v3837 = vunpack.c.l.b16 %v3828
        %v3838 = vunpack.c.h.b16 %v3828
        %v3839 = vunpack.c.l.b16 %v3829
        %v3840 = vunpack.c.h.b16 %v3829
        %v3841 = vunpack.c.l.b16 %v3830
        %v3842 = vunpack.c.h.b16 %v3830
        %v3843 = vpack.c.b16 %v3837, %v3835
        %v3844 = vpack.c.b16 %v3838, %v3836
        %v3845 = vpack.c.b16 %v3841, %v3839
        %v3846 = vpack.c.b16 %v3842, %v3840
        %3851 = vmatpush.bf16.xpose.msra.mxu0 0
        %3852 = vmatpush.bf16.xpose.msra.mxu0 0
        %3853 = vmatpush.bf16.xpose.msra.mxu0 0
        %3854 = vmatpush.bf16.xpose.msra.mxu0 0
        %3855 = vmatpush.bf16.xpose.msra.mxu0 0
        %3856 = vmatpush.bf16.xpose.msra.mxu0 0
        %3857 = vmatpush.bf16.xpose.msra.mxu0 %v3845
        %3858 = vmatpush.bf16.xpose.msra.mxu0 %v3843
        %3859 = vmatmul.bf16.gmra.mxu0 %v3819
        %v3860 = vpop.f32.mrf.mxu0
        %v3861 = vadd.f32 0.0, %v3860
        %v3862 = vpop.f32.mrf.mxu0
        %v3863 = vadd.f32 0.0, %v3862
        %3864 = vmatmul.bf16.gmra.mxu0 %v3821
        %v3865 = vpop.f32.mrf.mxu0
        %v3866 = vadd.f32 0.0, %v3865
        %v3867 = vpop.f32.mrf.mxu0
        %v3868 = vadd.f32 0.0, %v3867
        %3869 = vmatmul.bf16.gmra.mxu0 %v3823
        %v3870 = vpop.f32.mrf.mxu0
        %v3871 = vadd.f32 0.0, %v3870
        %v3872 = vpop.f32.mrf.mxu0
        %v3873 = vadd.f32 0.0, %v3872
        %3874 = vmatmul.bf16.gmra.mxu0 %v3825
        %v3875 = vpop.f32.mrf.mxu0
        %v3876 = vadd.f32 0.0, %v3875
        %v3877 = vpop.f32.mrf.mxu0
        %v3878 = vadd.f32 0.0, %v3877
        %3879 = vdwg.mxu0
        %3880 = vmatpush.bf16.xpose.msra.mxu0 0
        %3881 = vmatpush.bf16.xpose.msra.mxu0 0
        %3882 = vmatpush.bf16.xpose.msra.mxu0 0
        %3883 = vmatpush.bf16.xpose.msra.mxu0 0
        %3884 = vmatpush.bf16.xpose.msra.mxu0 0
        %3885 = vmatpush.bf16.xpose.msra.mxu0 0
        %3886 = vmatpush.bf16.xpose.msra.mxu0 %v3846
        %3887 = vmatpush.bf16.xpose.msra.mxu0 %v3844
        %3888 = vmatmul.bf16.gmra.mxu0 %v3820
        %v3889 = vpop.f32.mrf.mxu0
        %v3890 = vadd.f32 %v3861, %v3889
        %v3891 = vpop.f32.mrf.mxu0
        %v3892 = vadd.f32 %v3863, %v3891
        %3893 = vmatmul.bf16.gmra.mxu0 %v3822
        %v3894 = vpop.f32.mrf.mxu0
        %v3895 = vadd.f32 %v3866, %v3894
        %v3896 = vpop.f32.mrf.mxu0
        %v3897 = vadd.f32 %v3868, %v3896
        %3898 = vmatmul.bf16.gmra.mxu0 %v3824
        %v3899 = vpop.f32.mrf.mxu0
        %v3900 = vadd.f32 %v3871, %v3899
        %v3901 = vpop.f32.mrf.mxu0
        %v3902 = vadd.f32 %v3873, %v3901
        %3903 = vmatmul.bf16.gmra.mxu0 %v3826
        %v3904 = vpop.f32.mrf.mxu0
        %v3905 = vadd.f32 %v3876, %v3904
        %v3906 = vpop.f32.mrf.mxu0
        %v3907 = vadd.f32 %v3878, %v3906
        %3908 = vdwg.mxu0
        %v3909 = vadd.f32 %v3707, %v3890
        %v3910 = vadd.f32 %v3708, %v3892
        %v3911 = vadd.f32 %v3709, %v3895
        %v3912 = vadd.f32 %v3710, %v3897
        %v3913 = vadd.f32 %v3711, %v3900
        %v3914 = vadd.f32 %v3712, %v3902
        %v3915 = vadd.f32 %v3713, %v3905
        %v3916 = vadd.f32 %v3714, %v3907
        %v3917 = vld [vmem:[%s303 + $0x20] sm:$0xff]
        %v3918 = vld [vmem:[%s303 + $0x60] sm:$0xff]
        %v3919 = vld [vmem:[%s303 + $0xa0] sm:$0xff]
        %v3920 = vld [vmem:[%s303 + $0xe0] sm:$0xff]
        %v3921 = vld [vmem:[%s293 + $0x8] sm:$0x3]
        %v3923 = vperm.slane %v3921, 0
        %v3924 = vperm.slane %v3921, 1
        %v3931 = vunpack.c.l.b16 %v3917
        %v3932 = vunpack.c.h.b16 %v3917
        %v3933 = vunpack.c.l.b16 %v3918
        %v3934 = vunpack.c.h.b16 %v3918
        %v3935 = vunpack.c.l.b16 %v3919
        %v3936 = vunpack.c.h.b16 %v3919
        %v3937 = vunpack.c.l.b16 %v3920
        %v3938 = vunpack.c.h.b16 %v3920
        %v3939 = vpack.c.b16 %v3933, %v3931
        %v3940 = vpack.c.b16 %v3934, %v3932
        %v3941 = vpack.c.b16 %v3937, %v3935
        %v3942 = vpack.c.b16 %v3938, %v3936
        %3947 = vmatpush.bf16.msra.mxu0 0
        %3948 = vmatpush.bf16.msra.mxu0 0
        %3949 = vmatpush.bf16.msra.mxu0 0
        %3950 = vmatpush.bf16.msra.mxu0 0
        %3951 = vmatpush.bf16.msra.mxu0 0
        %3952 = vmatpush.bf16.msra.mxu0 0
        %3953 = vmatpush.bf16.msra.mxu0 %v3941
        %3954 = vmatpush.bf16.msra.mxu0 %v3939
        %3955 = vmatmul.bf16.gmra.mxu0 %v3143
        %v3956 = vpop.f32.mrf.mxu0
        %v3957 = vadd.f32 %v3923, %v3956
        %v3958 = vpop.f32.mrf.mxu0
        %v3959 = vadd.f32 %v3923, %v3958
        %3960 = vmatmul.bf16.gmra.mxu0 %v3146
        %v3961 = vpop.f32.mrf.mxu0
        %v3962 = vadd.f32 %v3923, %v3961
        %v3963 = vpop.f32.mrf.mxu0
        %v3964 = vadd.f32 %v3923, %v3963
        %3965 = vmatmul.bf16.gmra.mxu0 %v3149
        %v3966 = vpop.f32.mrf.mxu0
        %v3967 = vadd.f32 %v3923, %v3966
        %v3968 = vpop.f32.mrf.mxu0
        %v3969 = vadd.f32 %v3923, %v3968
        %3970 = vmatmul.bf16.gmra.mxu0 %v3152
        %v3971 = vpop.f32.mrf.mxu0
        %v3972 = vadd.f32 %v3923, %v3971
        %v3973 = vpop.f32.mrf.mxu0
        %v3974 = vadd.f32 %v3923, %v3973
        %3975 = vdwg.mxu0
        %3976 = vmatpush.bf16.msra.mxu0 0
        %3977 = vmatpush.bf16.msra.mxu0 0
        %3978 = vmatpush.bf16.msra.mxu0 0
        %3979 = vmatpush.bf16.msra.mxu0 0
        %3980 = vmatpush.bf16.msra.mxu0 0
        %3981 = vmatpush.bf16.msra.mxu0 0
        %3982 = vmatpush.bf16.msra.mxu0 %v3942
        %3983 = vmatpush.bf16.msra.mxu0 %v3940
        %3984 = vmatmul.bf16.gmra.mxu0 %v3143
        %v3985 = vpop.f32.mrf.mxu0
        %v3986 = vadd.f32 %v3924, %v3985
        %v3987 = vpop.f32.mrf.mxu0
        %v3988 = vadd.f32 %v3924, %v3987
        %3989 = vmatmul.bf16.gmra.mxu0 %v3146
        %v3990 = vpop.f32.mrf.mxu0
        %v3991 = vadd.f32 %v3924, %v3990
        %v3992 = vpop.f32.mrf.mxu0
        %v3993 = vadd.f32 %v3924, %v3992
        %3994 = vmatmul.bf16.gmra.mxu0 %v3149
        %v3995 = vpop.f32.mrf.mxu0
        %v3996 = vadd.f32 %v3924, %v3995
        %v3997 = vpop.f32.mrf.mxu0
        %v3998 = vadd.f32 %v3924, %v3997
        %3999 = vmatmul.bf16.gmra.mxu0 %v3152
        %v4000 = vpop.f32.mrf.mxu0
        %v4001 = vadd.f32 %v3924, %v4000
        %v4002 = vpop.f32.mrf.mxu0
        %v4003 = vadd.f32 %v3924, %v4002
        %4004 = vdwg.mxu0
        %v4005 = vmax.f32 %v3957, 0.0
        %v4006 = vmax.f32 %v3986, 0.0
        %v4007 = vmax.f32 %v3959, 0.0
        %v4008 = vmax.f32 %v3988, 0.0
        %v4009 = vmax.f32 %v3962, 0.0
        %v4010 = vmax.f32 %v3991, 0.0
        %v4011 = vmax.f32 %v3964, 0.0
        %v4012 = vmax.f32 %v3993, 0.0
        %v4013 = vmax.f32 %v3967, 0.0
        %v4014 = vmax.f32 %v3996, 0.0
        %v4015 = vmax.f32 %v3969, 0.0
        %v4016 = vmax.f32 %v3998, 0.0
        %v4017 = vmax.f32 %v3972, 0.0
        %v4018 = vmax.f32 %v4001, 0.0
        %v4019 = vmax.f32 %v3974, 0.0
        %v4020 = vmax.f32 %v4003, 0.0
        %v4021 = vpack.c.bf16 %v4007, %v4005
        %v4022 = vpack.c.bf16 %v4008, %v4006
        %v4023 = vpack.c.bf16 %v4011, %v4009
        %v4024 = vpack.c.bf16 %v4012, %v4010
        %v4025 = vpack.c.bf16 %v4015, %v4013
        %v4026 = vpack.c.bf16 %v4016, %v4014
        %v4027 = vpack.c.bf16 %v4019, %v4017
        %v4028 = vpack.c.bf16 %v4020, %v4018
        %v4029 = vld [vmem:[%s3236 + $0x20] sm:$0xff]
        %v4030 = vld [vmem:[%s3236 + $0x60] sm:$0xff]
        %v4031 = vld [vmem:[%s3236 + $0xa0] sm:$0xff]
        %v4032 = vld [vmem:[%s3236 + $0xe0] sm:$0xff]
        %v4037 = vunpack.c.l.b16 %v4029
        %v4038 = vunpack.c.h.b16 %v4029
        %v4039 = vunpack.c.l.b16 %v4030
        %v4040 = vunpack.c.h.b16 %v4030
        %v4041 = vunpack.c.l.b16 %v4031
        %v4042 = vunpack.c.h.b16 %v4031
        %v4043 = vunpack.c.l.b16 %v4032
        %v4044 = vunpack.c.h.b16 %v4032
        %v4045 = vpack.c.b16 %v4039, %v4037
        %v4046 = vpack.c.b16 %v4040, %v4038
        %v4047 = vpack.c.b16 %v4043, %v4041
        %v4048 = vpack.c.b16 %v4044, %v4042
        %4053 = vmatpush.bf16.xpose.msra.mxu0 0
        %4054 = vmatpush.bf16.xpose.msra.mxu0 0
        %4055 = vmatpush.bf16.xpose.msra.mxu0 0
        %4056 = vmatpush.bf16.xpose.msra.mxu0 0
        %4057 = vmatpush.bf16.xpose.msra.mxu0 0
        %4058 = vmatpush.bf16.xpose.msra.mxu0 0
        %4059 = vmatpush.bf16.xpose.msra.mxu0 %v4047
        %4060 = vmatpush.bf16.xpose.msra.mxu0 %v4045
        %4061 = vmatmul.bf16.gmra.mxu0 %v4021
        %v4062 = vpop.f32.mrf.mxu0
        %v4063 = vadd.f32 0.0, %v4062
        %v4064 = vpop.f32.mrf.mxu0
        %v4065 = vadd.f32 0.0, %v4064
        %4066 = vmatmul.bf16.gmra.mxu0 %v4023
        %v4067 = vpop.f32.mrf.mxu0
        %v4068 = vadd.f32 0.0, %v4067
        %v4069 = vpop.f32.mrf.mxu0
        %v4070 = vadd.f32 0.0, %v4069
        %4071 = vmatmul.bf16.gmra.mxu0 %v4025
        %v4072 = vpop.f32.mrf.mxu0
        %v4073 = vadd.f32 0.0, %v4072
        %v4074 = vpop.f32.mrf.mxu0
        %v4075 = vadd.f32 0.0, %v4074
        %4076 = vmatmul.bf16.gmra.mxu0 %v4027
        %v4077 = vpop.f32.mrf.mxu0
        %v4078 = vadd.f32 0.0, %v4077
        %v4079 = vpop.f32.mrf.mxu0
        %v4080 = vadd.f32 0.0, %v4079
        %4081 = vdwg.mxu0
        %4082 = vmatpush.bf16.xpose.msra.mxu0 0
        %4083 = vmatpush.bf16.xpose.msra.mxu0 0
        %4084 = vmatpush.bf16.xpose.msra.mxu0 0
        %4085 = vmatpush.bf16.xpose.msra.mxu0 0
        %4086 = vmatpush.bf16.xpose.msra.mxu0 0
        %4087 = vmatpush.bf16.xpose.msra.mxu0 0
        %4088 = vmatpush.bf16.xpose.msra.mxu0 %v4048
        %4089 = vmatpush.bf16.xpose.msra.mxu0 %v4046
        %4090 = vmatmul.bf16.gmra.mxu0 %v4022
        %v4091 = vpop.f32.mrf.mxu0
        %v4092 = vadd.f32 %v4063, %v4091
        %v4093 = vpop.f32.mrf.mxu0
        %v4094 = vadd.f32 %v4065, %v4093
        %4095 = vmatmul.bf16.gmra.mxu0 %v4024
        %v4096 = vpop.f32.mrf.mxu0
        %v4097 = vadd.f32 %v4068, %v4096
        %v4098 = vpop.f32.mrf.mxu0
        %v4099 = vadd.f32 %v4070, %v4098
        %4100 = vmatmul.bf16.gmra.mxu0 %v4026
        %v4101 = vpop.f32.mrf.mxu0
        %v4102 = vadd.f32 %v4073, %v4101
        %v4103 = vpop.f32.mrf.mxu0
        %v4104 = vadd.f32 %v4075, %v4103
        %4105 = vmatmul.bf16.gmra.mxu0 %v4028
        %v4106 = vpop.f32.mrf.mxu0
        %v4107 = vadd.f32 %v4078, %v4106
        %v4108 = vpop.f32.mrf.mxu0
        %v4109 = vadd.f32 %v4080, %v4108
        %4110 = vdwg.mxu0
        %v4111 = vadd.f32 %v3909, %v4092
        %v4112 = vadd.f32 %v3910, %v4094
        %v4113 = vadd.f32 %v3911, %v4097
        %v4114 = vadd.f32 %v3912, %v4099
        %v4115 = vadd.f32 %v3913, %v4102
        %v4116 = vadd.f32 %v3914, %v4104
        %v4117 = vadd.f32 %v3915, %v4107
        %v4118 = vadd.f32 %v3916, %v4109
        %v4119 = vld [vmem:[%s303 + $0x28] sm:$0xff]
        %v4120 = vld [vmem:[%s303 + $0x68] sm:$0xff]
        %v4121 = vld [vmem:[%s303 + $0xa8] sm:$0xff]
        %v4122 = vld [vmem:[%s303 + $0xe8] sm:$0xff]
        %v4123 = vld [vmem:[%s293 + $0xa] sm:$0x3]
        %v4125 = vperm.slane %v4123, 0
        %v4126 = vperm.slane %v4123, 1
        %v4133 = vunpack.c.l.b16 %v4119
        %v4134 = vunpack.c.h.b16 %v4119
        %v4135 = vunpack.c.l.b16 %v4120
        %v4136 = vunpack.c.h.b16 %v4120
        %v4137 = vunpack.c.l.b16 %v4121
        %v4138 = vunpack.c.h.b16 %v4121
        %v4139 = vunpack.c.l.b16 %v4122
        %v4140 = vunpack.c.h.b16 %v4122
        %v4141 = vpack.c.b16 %v4135, %v4133
        %v4142 = vpack.c.b16 %v4136, %v4134
        %v4143 = vpack.c.b16 %v4139, %v4137
        %v4144 = vpack.c.b16 %v4140, %v4138
        %4149 = vmatpush.bf16.msra.mxu0 0
        %4150 = vmatpush.bf16.msra.mxu0 0
        %4151 = vmatpush.bf16.msra.mxu0 0
        %4152 = vmatpush.bf16.msra.mxu0 0
        %4153 = vmatpush.bf16.msra.mxu0 0
        %4154 = vmatpush.bf16.msra.mxu0 0
        %4155 = vmatpush.bf16.msra.mxu0 %v4143
        %4156 = vmatpush.bf16.msra.mxu0 %v4141
        %4157 = vmatmul.bf16.gmra.mxu0 %v3143
        %v4158 = vpop.f32.mrf.mxu0
        %v4159 = vadd.f32 %v4125, %v4158
        %v4160 = vpop.f32.mrf.mxu0
        %v4161 = vadd.f32 %v4125, %v4160
        %4162 = vmatmul.bf16.gmra.mxu0 %v3146
        %v4163 = vpop.f32.mrf.mxu0
        %v4164 = vadd.f32 %v4125, %v4163
        %v4165 = vpop.f32.mrf.mxu0
        %v4166 = vadd.f32 %v4125, %v4165
        %4167 = vmatmul.bf16.gmra.mxu0 %v3149
        %v4168 = vpop.f32.mrf.mxu0
        %v4169 = vadd.f32 %v4125, %v4168
        %v4170 = vpop.f32.mrf.mxu0
        %v4171 = vadd.f32 %v4125, %v4170
        %4172 = vmatmul.bf16.gmra.mxu0 %v3152
        %v4173 = vpop.f32.mrf.mxu0
        %v4174 = vadd.f32 %v4125, %v4173
        %v4175 = vpop.f32.mrf.mxu0
        %v4176 = vadd.f32 %v4125, %v4175
        %4177 = vdwg.mxu0
        %4178 = vmatpush.bf16.msra.mxu0 0
        %4179 = vmatpush.bf16.msra.mxu0 0
        %4180 = vmatpush.bf16.msra.mxu0 0
        %4181 = vmatpush.bf16.msra.mxu0 0
        %4182 = vmatpush.bf16.msra.mxu0 0
        %4183 = vmatpush.bf16.msra.mxu0 0
        %4184 = vmatpush.bf16.msra.mxu0 %v4144
        %4185 = vmatpush.bf16.msra.mxu0 %v4142
        %4186 = vmatmul.bf16.gmra.mxu0 %v3143
        %v4187 = vpop.f32.mrf.mxu0
        %v4188 = vadd.f32 %v4126, %v4187
        %v4189 = vpop.f32.mrf.mxu0
        %v4190 = vadd.f32 %v4126, %v4189
        %4191 = vmatmul.bf16.gmra.mxu0 %v3146
        %v4192 = vpop.f32.mrf.mxu0
        %v4193 = vadd.f32 %v4126, %v4192
        %v4194 = vpop.f32.mrf.mxu0
        %v4195 = vadd.f32 %v4126, %v4194
        %4196 = vmatmul.bf16.gmra.mxu0 %v3149
        %v4197 = vpop.f32.mrf.mxu0
        %v4198 = vadd.f32 %v4126, %v4197
        %v4199 = vpop.f32.mrf.mxu0
        %v4200 = vadd.f32 %v4126, %v4199
        %4201 = vmatmul.bf16.gmra.mxu0 %v3152
        %v4202 = vpop.f32.mrf.mxu0
        %v4203 = vadd.f32 %v4126, %v4202
        %v4204 = vpop.f32.mrf.mxu0
        %v4205 = vadd.f32 %v4126, %v4204
        %4206 = vdwg.mxu0
        %v4207 = vmax.f32 %v4159, 0.0
        %v4208 = vmax.f32 %v4188, 0.0
        %v4209 = vmax.f32 %v4161, 0.0
        %v4210 = vmax.f32 %v4190, 0.0
        %v4211 = vmax.f32 %v4164, 0.0
        %v4212 = vmax.f32 %v4193, 0.0
        %v4213 = vmax.f32 %v4166, 0.0
        %v4214 = vmax.f32 %v4195, 0.0
        %v4215 = vmax.f32 %v4169, 0.0
        %v4216 = vmax.f32 %v4198, 0.0
        %v4217 = vmax.f32 %v4171, 0.0
        %v4218 = vmax.f32 %v4200, 0.0
        %v4219 = vmax.f32 %v4174, 0.0
        %v4220 = vmax.f32 %v4203, 0.0
        %v4221 = vmax.f32 %v4176, 0.0
        %v4222 = vmax.f32 %v4205, 0.0
        %v4223 = vpack.c.bf16 %v4209, %v4207
        %v4224 = vpack.c.bf16 %v4210, %v4208
        %v4225 = vpack.c.bf16 %v4213, %v4211
        %v4226 = vpack.c.bf16 %v4214, %v4212
        %v4227 = vpack.c.bf16 %v4217, %v4215
        %v4228 = vpack.c.bf16 %v4218, %v4216
        %v4229 = vpack.c.bf16 %v4221, %v4219
        %v4230 = vpack.c.bf16 %v4222, %v4220
        %v4231 = vld [vmem:[%s3236 + $0x28] sm:$0xff]
        %v4232 = vld [vmem:[%s3236 + $0x68] sm:$0xff]
        %v4233 = vld [vmem:[%s3236 + $0xa8] sm:$0xff]
        %v4234 = vld [vmem:[%s3236 + $0xe8] sm:$0xff]
        %v4239 = vunpack.c.l.b16 %v4231
        %v4240 = vunpack.c.h.b16 %v4231
        %v4241 = vunpack.c.l.b16 %v4232
        %v4242 = vunpack.c.h.b16 %v4232
        %v4243 = vunpack.c.l.b16 %v4233
        %v4244 = vunpack.c.h.b16 %v4233
        %v4245 = vunpack.c.l.b16 %v4234
        %v4246 = vunpack.c.h.b16 %v4234
        %v4247 = vpack.c.b16 %v4241, %v4239
        %v4248 = vpack.c.b16 %v4242, %v4240
        %v4249 = vpack.c.b16 %v4245, %v4243
        %v4250 = vpack.c.b16 %v4246, %v4244
        %4255 = vmatpush.bf16.xpose.msra.mxu0 0
        %4256 = vmatpush.bf16.xpose.msra.mxu0 0
        %4257 = vmatpush.bf16.xpose.msra.mxu0 0
        %4258 = vmatpush.bf16.xpose.msra.mxu0 0
        %4259 = vmatpush.bf16.xpose.msra.mxu0 0
        %4260 = vmatpush.bf16.xpose.msra.mxu0 0
        %4261 = vmatpush.bf16.xpose.msra.mxu0 %v4249
        %4262 = vmatpush.bf16.xpose.msra.mxu0 %v4247
        %4263 = vmatmul.bf16.gmra.mxu0 %v4223
        %v4264 = vpop.f32.mrf.mxu0
        %v4265 = vadd.f32 0.0, %v4264
        %v4266 = vpop.f32.mrf.mxu0
        %v4267 = vadd.f32 0.0, %v4266
        %4268 = vmatmul.bf16.gmra.mxu0 %v4225
        %v4269 = vpop.f32.mrf.mxu0
        %v4270 = vadd.f32 0.0, %v4269
        %v4271 = vpop.f32.mrf.mxu0
        %v4272 = vadd.f32 0.0, %v4271
        %4273 = vmatmul.bf16.gmra.mxu0 %v4227
        %v4274 = vpop.f32.mrf.mxu0
        %v4275 = vadd.f32 0.0, %v4274
        %v4276 = vpop.f32.mrf.mxu0
        %v4277 = vadd.f32 0.0, %v4276
        %4278 = vmatmul.bf16.gmra.mxu0 %v4229
        %v4279 = vpop.f32.mrf.mxu0
        %v4280 = vadd.f32 0.0, %v4279
        %v4281 = vpop.f32.mrf.mxu0
        %v4282 = vadd.f32 0.0, %v4281
        %4283 = vdwg.mxu0
        %4284 = vmatpush.bf16.xpose.msra.mxu0 0
        %4285 = vmatpush.bf16.xpose.msra.mxu0 0
        %4286 = vmatpush.bf16.xpose.msra.mxu0 0
        %4287 = vmatpush.bf16.xpose.msra.mxu0 0
        %4288 = vmatpush.bf16.xpose.msra.mxu0 0
        %4289 = vmatpush.bf16.xpose.msra.mxu0 0
        %4290 = vmatpush.bf16.xpose.msra.mxu0 %v4250
        %4291 = vmatpush.bf16.xpose.msra.mxu0 %v4248
        %4292 = vmatmul.bf16.gmra.mxu0 %v4224
        %v4293 = vpop.f32.mrf.mxu0
        %v4294 = vadd.f32 %v4265, %v4293
        %v4295 = vpop.f32.mrf.mxu0
        %v4296 = vadd.f32 %v4267, %v4295
        %4297 = vmatmul.bf16.gmra.mxu0 %v4226
        %v4298 = vpop.f32.mrf.mxu0
        %v4299 = vadd.f32 %v4270, %v4298
        %v4300 = vpop.f32.mrf.mxu0
        %v4301 = vadd.f32 %v4272, %v4300
        %4302 = vmatmul.bf16.gmra.mxu0 %v4228
        %v4303 = vpop.f32.mrf.mxu0
        %v4304 = vadd.f32 %v4275, %v4303
        %v4305 = vpop.f32.mrf.mxu0
        %v4306 = vadd.f32 %v4277, %v4305
        %4307 = vmatmul.bf16.gmra.mxu0 %v4230
        %v4308 = vpop.f32.mrf.mxu0
        %v4309 = vadd.f32 %v4280, %v4308
        %v4310 = vpop.f32.mrf.mxu0
        %v4311 = vadd.f32 %v4282, %v4310
        %4312 = vdwg.mxu0
        %v4313 = vadd.f32 %v4111, %v4294
        %v4314 = vadd.f32 %v4112, %v4296
        %v4315 = vadd.f32 %v4113, %v4299
        %v4316 = vadd.f32 %v4114, %v4301
        %v4317 = vadd.f32 %v4115, %v4304
        %v4318 = vadd.f32 %v4116, %v4306
        %v4319 = vadd.f32 %v4117, %v4309
        %v4320 = vadd.f32 %v4118, %v4311
        %v4321 = vld [vmem:[%s303 + $0x30] sm:$0xff]
        %v4322 = vld [vmem:[%s303 + $0x70] sm:$0xff]
        %v4323 = vld [vmem:[%s303 + $0xb0] sm:$0xff]
        %v4324 = vld [vmem:[%s303 + $0xf0] sm:$0xff]
        %v4325 = vld [vmem:[%s293 + $0xc] sm:$0x3]
        %v4327 = vperm.slane %v4325, 0
        %v4328 = vperm.slane %v4325, 1
        %v4335 = vunpack.c.l.b16 %v4321
        %v4336 = vunpack.c.h.b16 %v4321
        %v4337 = vunpack.c.l.b16 %v4322
        %v4338 = vunpack.c.h.b16 %v4322
        %v4339 = vunpack.c.l.b16 %v4323
        %v4340 = vunpack.c.h.b16 %v4323
        %v4341 = vunpack.c.l.b16 %v4324
        %v4342 = vunpack.c.h.b16 %v4324
        %v4343 = vpack.c.b16 %v4337, %v4335
        %v4344 = vpack.c.b16 %v4338, %v4336
        %v4345 = vpack.c.b16 %v4341, %v4339
        %v4346 = vpack.c.b16 %v4342, %v4340
        %4351 = vmatpush.bf16.msra.mxu0 0
        %4352 = vmatpush.bf16.msra.mxu0 0
        %4353 = vmatpush.bf16.msra.mxu0 0
        %4354 = vmatpush.bf16.msra.mxu0 0
        %4355 = vmatpush.bf16.msra.mxu0 0
        %4356 = vmatpush.bf16.msra.mxu0 0
        %4357 = vmatpush.bf16.msra.mxu0 %v4345
        %4358 = vmatpush.bf16.msra.mxu0 %v4343
        %4359 = vmatmul.bf16.gmra.mxu0 %v3143
        %v4360 = vpop.f32.mrf.mxu0
        %v4361 = vadd.f32 %v4327, %v4360
        %v4362 = vpop.f32.mrf.mxu0
        %v4363 = vadd.f32 %v4327, %v4362
        %4364 = vmatmul.bf16.gmra.mxu0 %v3146
        %v4365 = vpop.f32.mrf.mxu0
        %v4366 = vadd.f32 %v4327, %v4365
        %v4367 = vpop.f32.mrf.mxu0
        %v4368 = vadd.f32 %v4327, %v4367
        %4369 = vmatmul.bf16.gmra.mxu0 %v3149
        %v4370 = vpop.f32.mrf.mxu0
        %v4371 = vadd.f32 %v4327, %v4370
        %v4372 = vpop.f32.mrf.mxu0
        %v4373 = vadd.f32 %v4327, %v4372
        %4374 = vmatmul.bf16.gmra.mxu0 %v3152
        %v4375 = vpop.f32.mrf.mxu0
        %v4376 = vadd.f32 %v4327, %v4375
        %v4377 = vpop.f32.mrf.mxu0
        %v4378 = vadd.f32 %v4327, %v4377
        %4379 = vdwg.mxu0
        %4380 = vmatpush.bf16.msra.mxu0 0
        %4381 = vmatpush.bf16.msra.mxu0 0
        %4382 = vmatpush.bf16.msra.mxu0 0
        %4383 = vmatpush.bf16.msra.mxu0 0
        %4384 = vmatpush.bf16.msra.mxu0 0
        %4385 = vmatpush.bf16.msra.mxu0 0
        %4386 = vmatpush.bf16.msra.mxu0 %v4346
        %4387 = vmatpush.bf16.msra.mxu0 %v4344
        %4388 = vmatmul.bf16.gmra.mxu0 %v3143
        %v4389 = vpop.f32.mrf.mxu0
        %v4390 = vadd.f32 %v4328, %v4389
        %v4391 = vpop.f32.mrf.mxu0
        %v4392 = vadd.f32 %v4328, %v4391
        %4393 = vmatmul.bf16.gmra.mxu0 %v3146
        %v4394 = vpop.f32.mrf.mxu0
        %v4395 = vadd.f32 %v4328, %v4394
        %v4396 = vpop.f32.mrf.mxu0
        %v4397 = vadd.f32 %v4328, %v4396
        %4398 = vmatmul.bf16.gmra.mxu0 %v3149
        %v4399 = vpop.f32.mrf.mxu0
        %v4400 = vadd.f32 %v4328, %v4399
        %v4401 = vpop.f32.mrf.mxu0
        %v4402 = vadd.f32 %v4328, %v4401
        %4403 = vmatmul.bf16.gmra.mxu0 %v3152
        %v4404 = vpop.f32.mrf.mxu0
        %v4405 = vadd.f32 %v4328, %v4404
        %v4406 = vpop.f32.mrf.mxu0
        %v4407 = vadd.f32 %v4328, %v4406
        %4408 = vdwg.mxu0
        %v4409 = vmax.f32 %v4361, 0.0
        %v4410 = vmax.f32 %v4390, 0.0
        %v4411 = vmax.f32 %v4363, 0.0
        %v4412 = vmax.f32 %v4392, 0.0
        %v4413 = vmax.f32 %v4366, 0.0
        %v4414 = vmax.f32 %v4395, 0.0
        %v4415 = vmax.f32 %v4368, 0.0
        %v4416 = vmax.f32 %v4397, 0.0
        %v4417 = vmax.f32 %v4371, 0.0
        %v4418 = vmax.f32 %v4400, 0.0
        %v4419 = vmax.f32 %v4373, 0.0
        %v4420 = vmax.f32 %v4402, 0.0
        %v4421 = vmax.f32 %v4376, 0.0
        %v4422 = vmax.f32 %v4405, 0.0
        %v4423 = vmax.f32 %v4378, 0.0
        %v4424 = vmax.f32 %v4407, 0.0
        %v4425 = vpack.c.bf16 %v4411, %v4409
        %v4426 = vpack.c.bf16 %v4412, %v4410
        %v4427 = vpack.c.bf16 %v4415, %v4413
        %v4428 = vpack.c.bf16 %v4416, %v4414
        %v4429 = vpack.c.bf16 %v4419, %v4417
        %v4430 = vpack.c.bf16 %v4420, %v4418
        %v4431 = vpack.c.bf16 %v4423, %v4421
        %v4432 = vpack.c.bf16 %v4424, %v4422
        %v4433 = vld [vmem:[%s3236 + $0x30] sm:$0xff]
        %v4434 = vld [vmem:[%s3236 + $0x70] sm:$0xff]
        %v4435 = vld [vmem:[%s3236 + $0xb0] sm:$0xff]
        %v4436 = vld [vmem:[%s3236 + $0xf0] sm:$0xff]
        %v4441 = vunpack.c.l.b16 %v4433
        %v4442 = vunpack.c.h.b16 %v4433
        %v4443 = vunpack.c.l.b16 %v4434
        %v4444 = vunpack.c.h.b16 %v4434
        %v4445 = vunpack.c.l.b16 %v4435
        %v4446 = vunpack.c.h.b16 %v4435
        %v4447 = vunpack.c.l.b16 %v4436
        %v4448 = vunpack.c.h.b16 %v4436
        %v4449 = vpack.c.b16 %v4443, %v4441
        %v4450 = vpack.c.b16 %v4444, %v4442
        %v4451 = vpack.c.b16 %v4447, %v4445
        %v4452 = vpack.c.b16 %v4448, %v4446
        %4457 = vmatpush.bf16.xpose.msra.mxu0 0
        %4458 = vmatpush.bf16.xpose.msra.mxu0 0
        %4459 = vmatpush.bf16.xpose.msra.mxu0 0
        %4460 = vmatpush.bf16.xpose.msra.mxu0 0
        %4461 = vmatpush.bf16.xpose.msra.mxu0 0
        %4462 = vmatpush.bf16.xpose.msra.mxu0 0
        %4463 = vmatpush.bf16.xpose.msra.mxu0 %v4451
        %4464 = vmatpush.bf16.xpose.msra.mxu0 %v4449
        %4465 = vmatmul.bf16.gmra.mxu0 %v4425
        %v4466 = vpop.f32.mrf.mxu0
        %v4467 = vadd.f32 0.0, %v4466
        %v4468 = vpop.f32.mrf.mxu0
        %v4469 = vadd.f32 0.0, %v4468
        %4470 = vmatmul.bf16.gmra.mxu0 %v4427
        %v4471 = vpop.f32.mrf.mxu0
        %v4472 = vadd.f32 0.0, %v4471
        %v4473 = vpop.f32.mrf.mxu0
        %v4474 = vadd.f32 0.0, %v4473
        %4475 = vmatmul.bf16.gmra.mxu0 %v4429
        %v4476 = vpop.f32.mrf.mxu0
        %v4477 = vadd.f32 0.0, %v4476
        %v4478 = vpop.f32.mrf.mxu0
        %v4479 = vadd.f32 0.0, %v4478
        %4480 = vmatmul.bf16.gmra.mxu0 %v4431
        %v4481 = vpop.f32.mrf.mxu0
        %v4482 = vadd.f32 0.0, %v4481
        %v4483 = vpop.f32.mrf.mxu0
        %v4484 = vadd.f32 0.0, %v4483
        %4485 = vdwg.mxu0
        %4486 = vmatpush.bf16.xpose.msra.mxu0 0
        %4487 = vmatpush.bf16.xpose.msra.mxu0 0
        %4488 = vmatpush.bf16.xpose.msra.mxu0 0
        %4489 = vmatpush.bf16.xpose.msra.mxu0 0
        %4490 = vmatpush.bf16.xpose.msra.mxu0 0
        %4491 = vmatpush.bf16.xpose.msra.mxu0 0
        %4492 = vmatpush.bf16.xpose.msra.mxu0 %v4452
        %4493 = vmatpush.bf16.xpose.msra.mxu0 %v4450
        %4494 = vmatmul.bf16.gmra.mxu0 %v4426
        %v4495 = vpop.f32.mrf.mxu0
        %v4496 = vadd.f32 %v4467, %v4495
        %v4497 = vpop.f32.mrf.mxu0
        %v4498 = vadd.f32 %v4469, %v4497
        %4499 = vmatmul.bf16.gmra.mxu0 %v4428
        %v4500 = vpop.f32.mrf.mxu0
        %v4501 = vadd.f32 %v4472, %v4500
        %v4502 = vpop.f32.mrf.mxu0
        %v4503 = vadd.f32 %v4474, %v4502
        %4504 = vmatmul.bf16.gmra.mxu0 %v4430
        %v4505 = vpop.f32.mrf.mxu0
        %v4506 = vadd.f32 %v4477, %v4505
        %v4507 = vpop.f32.mrf.mxu0
        %v4508 = vadd.f32 %v4479, %v4507
        %4509 = vmatmul.bf16.gmra.mxu0 %v4432
        %v4510 = vpop.f32.mrf.mxu0
        %v4511 = vadd.f32 %v4482, %v4510
        %v4512 = vpop.f32.mrf.mxu0
        %v4513 = vadd.f32 %v4484, %v4512
        %4514 = vdwg.mxu0
        %v4515 = vadd.f32 %v4313, %v4496
        %v4516 = vadd.f32 %v4314, %v4498
        %v4517 = vadd.f32 %v4315, %v4501
        %v4518 = vadd.f32 %v4316, %v4503
        %v4519 = vadd.f32 %v4317, %v4506
        %v4520 = vadd.f32 %v4318, %v4508
        %v4521 = vadd.f32 %v4319, %v4511
        %v4522 = vadd.f32 %v4320, %v4513
        %v4523 = vld [vmem:[%s303 + $0x38] sm:$0xff]
        %v4524 = vld [vmem:[%s303 + $0x78] sm:$0xff]
        %v4525 = vld [vmem:[%s303 + $0xb8] sm:$0xff]
        %v4526 = vld [vmem:[%s303 + $0xf8] sm:$0xff]
        %v4527 = vld [vmem:[%s293 + $0xe] sm:$0x3]
        %v4529 = vperm.slane %v4527, 0
        %v4530 = vperm.slane %v4527, 1
        %v4537 = vunpack.c.l.b16 %v4523
        %v4538 = vunpack.c.h.b16 %v4523
        %v4539 = vunpack.c.l.b16 %v4524
        %v4540 = vunpack.c.h.b16 %v4524
        %v4541 = vunpack.c.l.b16 %v4525
        %v4542 = vunpack.c.h.b16 %v4525
        %v4543 = vunpack.c.l.b16 %v4526
        %v4544 = vunpack.c.h.b16 %v4526
        %v4545 = vpack.c.b16 %v4539, %v4537
        %v4546 = vpack.c.b16 %v4540, %v4538
        %v4547 = vpack.c.b16 %v4543, %v4541
        %v4548 = vpack.c.b16 %v4544, %v4542
        %4553 = vmatpush.bf16.msra.mxu0 0
        %4554 = vmatpush.bf16.msra.mxu0 0
        %4555 = vmatpush.bf16.msra.mxu0 0
        %4556 = vmatpush.bf16.msra.mxu0 0
        %4557 = vmatpush.bf16.msra.mxu0 0
        %4558 = vmatpush.bf16.msra.mxu0 0
        %4559 = vmatpush.bf16.msra.mxu0 %v4547
        %4560 = vmatpush.bf16.msra.mxu0 %v4545
        %4561 = vmatmul.bf16.gmra.mxu0 %v3143
        %v4562 = vpop.f32.mrf.mxu0
        %v4563 = vadd.f32 %v4529, %v4562
        %v4564 = vpop.f32.mrf.mxu0
        %v4565 = vadd.f32 %v4529, %v4564
        %4566 = vmatmul.bf16.gmra.mxu0 %v3146
        %v4567 = vpop.f32.mrf.mxu0
        %v4568 = vadd.f32 %v4529, %v4567
        %v4569 = vpop.f32.mrf.mxu0
        %v4570 = vadd.f32 %v4529, %v4569
        %4571 = vmatmul.bf16.gmra.mxu0 %v3149
        %v4572 = vpop.f32.mrf.mxu0
        %v4573 = vadd.f32 %v4529, %v4572
        %v4574 = vpop.f32.mrf.mxu0
        %v4575 = vadd.f32 %v4529, %v4574
        %4576 = vmatmul.bf16.gmra.mxu0 %v3152
        %v4577 = vpop.f32.mrf.mxu0
        %v4578 = vadd.f32 %v4529, %v4577
        %v4579 = vpop.f32.mrf.mxu0
        %v4580 = vadd.f32 %v4529, %v4579
        %4581 = vdwg.mxu0
        %4582 = vmatpush.bf16.msra.mxu0 0
        %4583 = vmatpush.bf16.msra.mxu0 0
        %4584 = vmatpush.bf16.msra.mxu0 0
        %4585 = vmatpush.bf16.msra.mxu0 0
        %4586 = vmatpush.bf16.msra.mxu0 0
        %4587 = vmatpush.bf16.msra.mxu0 0
        %4588 = vmatpush.bf16.msra.mxu0 %v4548
        %4589 = vmatpush.bf16.msra.mxu0 %v4546
        %4590 = vmatmul.bf16.gmra.mxu0 %v3143
        %v4591 = vpop.f32.mrf.mxu0
        %v4592 = vadd.f32 %v4530, %v4591
        %v4593 = vpop.f32.mrf.mxu0
        %v4594 = vadd.f32 %v4530, %v4593
        %4595 = vmatmul.bf16.gmra.mxu0 %v3146
        %v4596 = vpop.f32.mrf.mxu0
        %v4597 = vadd.f32 %v4530, %v4596
        %v4598 = vpop.f32.mrf.mxu0
        %v4599 = vadd.f32 %v4530, %v4598
        %4600 = vmatmul.bf16.gmra.mxu0 %v3149
        %v4601 = vpop.f32.mrf.mxu0
        %v4602 = vadd.f32 %v4530, %v4601
        %v4603 = vpop.f32.mrf.mxu0
        %v4604 = vadd.f32 %v4530, %v4603
        %4605 = vmatmul.bf16.gmra.mxu0 %v3152
        %v4606 = vpop.f32.mrf.mxu0
        %v4607 = vadd.f32 %v4530, %v4606
        %v4608 = vpop.f32.mrf.mxu0
        %v4609 = vadd.f32 %v4530, %v4608
        %4610 = vdwg.mxu0
        %v4611 = vmax.f32 %v4563, 0.0
        %v4612 = vmax.f32 %v4592, 0.0
        %v4613 = vmax.f32 %v4565, 0.0
        %v4614 = vmax.f32 %v4594, 0.0
        %v4615 = vmax.f32 %v4568, 0.0
        %v4616 = vmax.f32 %v4597, 0.0
        %v4617 = vmax.f32 %v4570, 0.0
        %v4618 = vmax.f32 %v4599, 0.0
        %v4619 = vmax.f32 %v4573, 0.0
        %v4620 = vmax.f32 %v4602, 0.0
        %v4621 = vmax.f32 %v4575, 0.0
        %v4622 = vmax.f32 %v4604, 0.0
        %v4623 = vmax.f32 %v4578, 0.0
        %v4624 = vmax.f32 %v4607, 0.0
        %v4625 = vmax.f32 %v4580, 0.0
        %v4626 = vmax.f32 %v4609, 0.0
        %v4627 = vpack.c.bf16 %v4613, %v4611
        %v4628 = vpack.c.bf16 %v4614, %v4612
        %v4629 = vpack.c.bf16 %v4617, %v4615
        %v4630 = vpack.c.bf16 %v4618, %v4616
        %v4631 = vpack.c.bf16 %v4621, %v4619
        %v4632 = vpack.c.bf16 %v4622, %v4620
        %v4633 = vpack.c.bf16 %v4625, %v4623
        %v4634 = vpack.c.bf16 %v4626, %v4624
        %v4635 = vld [vmem:[%s3236 + $0x38] sm:$0xff]
        %v4636 = vld [vmem:[%s3236 + $0x78] sm:$0xff]
        %v4637 = vld [vmem:[%s3236 + $0xb8] sm:$0xff]
        %v4638 = vld [vmem:[%s3236 + $0xf8] sm:$0xff]
        %v4643 = vunpack.c.l.b16 %v4635
        %v4644 = vunpack.c.h.b16 %v4635
        %v4645 = vunpack.c.l.b16 %v4636
        %v4646 = vunpack.c.h.b16 %v4636
        %v4647 = vunpack.c.l.b16 %v4637
        %v4648 = vunpack.c.h.b16 %v4637
        %v4649 = vunpack.c.l.b16 %v4638
        %v4650 = vunpack.c.h.b16 %v4638
        %v4651 = vpack.c.b16 %v4645, %v4643
        %v4652 = vpack.c.b16 %v4646, %v4644
        %v4653 = vpack.c.b16 %v4649, %v4647
        %v4654 = vpack.c.b16 %v4650, %v4648
        %4659 = vmatpush.bf16.xpose.msra.mxu0 0
        %4660 = vmatpush.bf16.xpose.msra.mxu0 0
        %4661 = vmatpush.bf16.xpose.msra.mxu0 0
        %4662 = vmatpush.bf16.xpose.msra.mxu0 0
        %4663 = vmatpush.bf16.xpose.msra.mxu0 0
        %4664 = vmatpush.bf16.xpose.msra.mxu0 0
        %4665 = vmatpush.bf16.xpose.msra.mxu0 %v4653
        %4666 = vmatpush.bf16.xpose.msra.mxu0 %v4651
        %4667 = vmatmul.bf16.gmra.mxu0 %v4627
        %v4668 = vpop.f32.mrf.mxu0
        %v4669 = vadd.f32 0.0, %v4668
        %v4670 = vpop.f32.mrf.mxu0
        %v4671 = vadd.f32 0.0, %v4670
        %4672 = vmatmul.bf16.gmra.mxu0 %v4629
        %v4673 = vpop.f32.mrf.mxu0
        %v4674 = vadd.f32 0.0, %v4673
        %v4675 = vpop.f32.mrf.mxu0
        %v4676 = vadd.f32 0.0, %v4675
        %4677 = vmatmul.bf16.gmra.mxu0 %v4631
        %v4678 = vpop.f32.mrf.mxu0
        %v4679 = vadd.f32 0.0, %v4678
        %v4680 = vpop.f32.mrf.mxu0
        %v4681 = vadd.f32 0.0, %v4680
        %4682 = vmatmul.bf16.gmra.mxu0 %v4633
        %v4683 = vpop.f32.mrf.mxu0
        %v4684 = vadd.f32 0.0, %v4683
        %v4685 = vpop.f32.mrf.mxu0
        %v4686 = vadd.f32 0.0, %v4685
        %4687 = vdwg.mxu0
        %4688 = vmatpush.bf16.xpose.msra.mxu0 0
        %4689 = vmatpush.bf16.xpose.msra.mxu0 0
        %4690 = vmatpush.bf16.xpose.msra.mxu0 0
        %4691 = vmatpush.bf16.xpose.msra.mxu0 0
        %4692 = vmatpush.bf16.xpose.msra.mxu0 0
        %4693 = vmatpush.bf16.xpose.msra.mxu0 0
        %4694 = vmatpush.bf16.xpose.msra.mxu0 %v4654
        %4695 = vmatpush.bf16.xpose.msra.mxu0 %v4652
        %4696 = vmatmul.bf16.gmra.mxu0 %v4628
        %v4697 = vpop.f32.mrf.mxu0
        %v4698 = vadd.f32 %v4669, %v4697
        %v4699 = vpop.f32.mrf.mxu0
        %v4700 = vadd.f32 %v4671, %v4699
        %4701 = vmatmul.bf16.gmra.mxu0 %v4630
        %v4702 = vpop.f32.mrf.mxu0
        %v4703 = vadd.f32 %v4674, %v4702
        %v4704 = vpop.f32.mrf.mxu0
        %v4705 = vadd.f32 %v4676, %v4704
        %4706 = vmatmul.bf16.gmra.mxu0 %v4632
        %v4707 = vpop.f32.mrf.mxu0
        %v4708 = vadd.f32 %v4679, %v4707
        %v4709 = vpop.f32.mrf.mxu0
        %v4710 = vadd.f32 %v4681, %v4709
        %4711 = vmatmul.bf16.gmra.mxu0 %v4634
        %v4712 = vpop.f32.mrf.mxu0
        %v4713 = vadd.f32 %v4684, %v4712
        %v4714 = vpop.f32.mrf.mxu0
        %v4715 = vadd.f32 %v4686, %v4714
        %4716 = vdwg.mxu0
        %v4717 = vadd.f32 %v4515, %v4698
        %v4718 = vadd.f32 %v4516, %v4700
        %v4719 = vadd.f32 %v4517, %v4703
        %v4720 = vadd.f32 %v4518, %v4705
        %v4721 = vadd.f32 %v4519, %v4708
        %v4722 = vadd.f32 %v4520, %v4710
        %v4723 = vadd.f32 %v4521, %v4713
        %v4724 = vadd.f32 %v4522, %v4715
        %v4725 = vadd.f32 %v3100, %v4717
        %v4726 = vadd.f32 %v3101, %v4718
        %v4727 = vadd.f32 %v3102, %v4719
        %v4728 = vadd.f32 %v3103, %v4720
        %v4729 = vadd.f32 %v3104, %v4721
        %v4730 = vadd.f32 %v3105, %v4722
        %v4731 = vadd.f32 %v3106, %v4723
        %v4732 = vadd.f32 %v3107, %v4724
        %v4734 = vadd.f32 %v4725, %v3085
        %v4735 = vadd.f32 %v4726, %v3085
        %v4736 = vadd.f32 %v4727, %v3085
        %v4737 = vadd.f32 %v4728, %v3085
        %v4738 = vadd.f32 %v4729, %v3085
        %v4739 = vadd.f32 %v4730, %v3085
        %v4740 = vadd.f32 %v4731, %v3085
        %v4741 = vadd.f32 %v4732, %v3085
        %v4742 = vld [vmem:[%s293 + $0x13] sm:$0x1]
        %v4743 = vsel %vm383, %v4734, 0.0
        %4744 = vadd.xlane.f32.xlu0 %v4743
        %v4745 = vpop.xlane.xlu0 %4744
        %v4746 = vsel %vm383, %v4735, 0.0
        %4747 = vadd.xlane.f32.xlu0 %v4746
        %v4748 = vpop.xlane.xlu0 %4747
        %v4749 = vsel %vm383, %v4736, 0.0
        %4750 = vadd.xlane.f32.xlu0 %v4749
        %v4751 = vpop.xlane.xlu0 %4750
        %v4752 = vsel %vm383, %v4737, 0.0
        %4753 = vadd.xlane.f32.xlu0 %v4752
        %v4754 = vpop.xlane.xlu0 %4753
        %v4755 = vsel %vm383, %v4738, 0.0
        %4756 = vadd.xlane.f32.xlu0 %v4755
        %v4757 = vpop.xlane.xlu0 %4756
        %v4758 = vsel %vm383, %v4739, 0.0
        %4759 = vadd.xlane.f32.xlu0 %v4758
        %v4760 = vpop.xlane.xlu0 %4759
        %v4761 = vsel %vm383, %v4740, 0.0
        %4762 = vadd.xlane.f32.xlu0 %v4761
        %v4763 = vpop.xlane.xlu0 %4762
        %v4764 = vsel %vm383, %v4741, 0.0
        %4765 = vadd.xlane.f32.xlu0 %v4764
        %v4766 = vpop.xlane.xlu0 %4765
        %v4767 = vmul.f32 %v4745, %v2931
        %v4768 = vmul.f32 %v4748, %v2931
        %v4769 = vmul.f32 %v4751, %v2931
        %v4770 = vmul.f32 %v4754, %v2931
        %v4771 = vmul.f32 %v4757, %v2931
        %v4772 = vmul.f32 %v4760, %v2931
        %v4773 = vmul.f32 %v4763, %v2931
        %v4774 = vmul.f32 %v4766, %v2931
        %v4775 = vsub.f32 %v4734, %v4767
        %v4776 = vsub.f32 %v4735, %v4768
        %v4777 = vsub.f32 %v4736, %v4769
        %v4778 = vsub.f32 %v4737, %v4770
        %v4779 = vsub.f32 %v4738, %v4771
        %v4780 = vsub.f32 %v4739, %v4772
        %v4781 = vsub.f32 %v4740, %v4773
        %v4782 = vsub.f32 %v4741, %v4774
        %v4783 = vmul.f32 %v4775, %v4775
        %v4784 = vmul.f32 %v4776, %v4776
        %v4785 = vmul.f32 %v4777, %v4777
        %v4786 = vmul.f32 %v4778, %v4778
        %v4787 = vmul.f32 %v4779, %v4779
        %v4788 = vmul.f32 %v4780, %v4780
        %v4789 = vmul.f32 %v4781, %v4781
        %v4790 = vmul.f32 %v4782, %v4782
        %v4791 = vsel %vm383, %v4783, 0.0
        %4792 = vadd.xlane.f32.xlu0 %v4791
        %v4793 = vpop.xlane.xlu0 %4792
        %v4794 = vsel %vm383, %v4784, 0.0
        %4795 = vadd.xlane.f32.xlu0 %v4794
        %v4796 = vpop.xlane.xlu0 %4795
        %v4797 = vsel %vm383, %v4785, 0.0
        %4798 = vadd.xlane.f32.xlu0 %v4797
        %v4799 = vpop.xlane.xlu0 %4798
        %v4800 = vsel %vm383, %v4786, 0.0
        %4801 = vadd.xlane.f32.xlu0 %v4800
        %v4802 = vpop.xlane.xlu0 %4801
        %v4803 = vsel %vm383, %v4787, 0.0
        %4804 = vadd.xlane.f32.xlu0 %v4803
        %v4805 = vpop.xlane.xlu0 %4804
        %v4806 = vsel %vm383, %v4788, 0.0
        %4807 = vadd.xlane.f32.xlu0 %v4806
        %v4808 = vpop.xlane.xlu0 %4807
        %v4809 = vsel %vm383, %v4789, 0.0
        %4810 = vadd.xlane.f32.xlu0 %v4809
        %v4811 = vpop.xlane.xlu0 %4810
        %v4812 = vsel %vm383, %v4790, 0.0
        %4813 = vadd.xlane.f32.xlu0 %v4812
        %v4814 = vpop.xlane.xlu0 %4813
        %v4815 = vmul.f32 %v4793, %v2931
        %v4816 = vmul.f32 %v4796, %v2931
        %v4817 = vmul.f32 %v4799, %v2931
        %v4818 = vmul.f32 %v4802, %v2931
        %v4819 = vmul.f32 %v4805, %v2931
        %v4820 = vmul.f32 %v4808, %v2931
        %v4821 = vmul.f32 %v4811, %v2931
        %v4822 = vmul.f32 %v4814, %v2931
        %v4823 = vadd.f32 %v4815, 1e-05
        %v4824 = vadd.f32 %v4816, 1e-05
        %v4825 = vadd.f32 %v4817, 1e-05
        %v4826 = vadd.f32 %v4818, 1e-05
        %v4827 = vadd.f32 %v4819, 1e-05
        %v4828 = vadd.f32 %v4820, 1e-05
        %v4829 = vadd.f32 %v4821, 1e-05
        %v4830 = vadd.f32 %v4822, 1e-05
        %v4831 = vrsqrt.pop %v4823
        %v4832 = vmul.f32 %v4831, %v4823
        %v4833 = vmul.f32 %v4832, %v4831
        %v4834 = vmul.f32 0.5, %v4833
        %v4835 = vsub.f32 1.5, %v4834
        %v4836 = vmul.f32 %v4831, %v4835
        %vm4837 = vweird.f32 %v4823
        %vm4838 = vweird.f32 %v4831
        %vm4839 = vmor %vm4837, %vm4838
        %v4840 = vsel %vm4839, %v4831, %v4836
        %v4841 = vrsqrt.pop %v4824
        %v4842 = vmul.f32 %v4841, %v4824
        %v4843 = vmul.f32 %v4842, %v4841
        %v4844 = vmul.f32 0.5, %v4843
        %v4845 = vsub.f32 1.5, %v4844
        %v4846 = vmul.f32 %v4841, %v4845
        %vm4847 = vweird.f32 %v4824
        %vm4848 = vweird.f32 %v4841
        %vm4849 = vmor %vm4847, %vm4848
        %v4850 = vsel %vm4849, %v4841, %v4846
        %v4851 = vrsqrt.pop %v4825
        %v4852 = vmul.f32 %v4851, %v4825
        %v4853 = vmul.f32 %v4852, %v4851
        %v4854 = vmul.f32 0.5, %v4853
        %v4855 = vsub.f32 1.5, %v4854
        %v4856 = vmul.f32 %v4851, %v4855
        %vm4857 = vweird.f32 %v4825
        %vm4858 = vweird.f32 %v4851
        %vm4859 = vmor %vm4857, %vm4858
        %v4860 = vsel %vm4859, %v4851, %v4856
        %v4861 = vrsqrt.pop %v4826
        %v4862 = vmul.f32 %v4861, %v4826
        %v4863 = vmul.f32 %v4862, %v4861
        %v4864 = vmul.f32 0.5, %v4863
        %v4865 = vsub.f32 1.5, %v4864
        %v4866 = vmul.f32 %v4861, %v4865
        %vm4867 = vweird.f32 %v4826
        %vm4868 = vweird.f32 %v4861
        %vm4869 = vmor %vm4867, %vm4868
        %v4870 = vsel %vm4869, %v4861, %v4866
        %v4871 = vrsqrt.pop %v4827
        %v4872 = vmul.f32 %v4871, %v4827
        %v4873 = vmul.f32 %v4872, %v4871
        %v4874 = vmul.f32 0.5, %v4873
        %v4875 = vsub.f32 1.5, %v4874
        %v4876 = vmul.f32 %v4871, %v4875
        %vm4877 = vweird.f32 %v4827
        %vm4878 = vweird.f32 %v4871
        %vm4879 = vmor %vm4877, %vm4878
        %v4880 = vsel %vm4879, %v4871, %v4876
        %v4881 = vrsqrt.pop %v4828
        %v4882 = vmul.f32 %v4881, %v4828
        %v4883 = vmul.f32 %v4882, %v4881
        %v4884 = vmul.f32 0.5, %v4883
        %v4885 = vsub.f32 1.5, %v4884
        %v4886 = vmul.f32 %v4881, %v4885
        %vm4887 = vweird.f32 %v4828
        %vm4888 = vweird.f32 %v4881
        %vm4889 = vmor %vm4887, %vm4888
        %v4890 = vsel %vm4889, %v4881, %v4886
        %v4891 = vrsqrt.pop %v4829
        %v4892 = vmul.f32 %v4891, %v4829
        %v4893 = vmul.f32 %v4892, %v4891
        %v4894 = vmul.f32 0.5, %v4893
        %v4895 = vsub.f32 1.5, %v4894
        %v4896 = vmul.f32 %v4891, %v4895
        %vm4897 = vweird.f32 %v4829
        %vm4898 = vweird.f32 %v4891
        %vm4899 = vmor %vm4897, %vm4898
        %v4900 = vsel %vm4899, %v4891, %v4896
        %v4901 = vrsqrt.pop %v4830
        %v4902 = vmul.f32 %v4901, %v4830
        %v4903 = vmul.f32 %v4902, %v4901
        %v4904 = vmul.f32 0.5, %v4903
        %v4905 = vsub.f32 1.5, %v4904
        %v4906 = vmul.f32 %v4901, %v4905
        %vm4907 = vweird.f32 %v4830
        %vm4908 = vweird.f32 %v4901
        %vm4909 = vmor %vm4907, %vm4908
        %v4910 = vsel %vm4909, %v4901, %v4906
        %v4911 = vmul.f32 %v4775, %v4840
        %v4912 = vmul.f32 %v4776, %v4850
        %v4913 = vmul.f32 %v4777, %v4860
        %v4914 = vmul.f32 %v4778, %v4870
        %v4915 = vmul.f32 %v4779, %v4880
        %v4916 = vmul.f32 %v4780, %v4890
        %v4917 = vmul.f32 %v4781, %v4900
        %v4918 = vmul.f32 %v4782, %v4910
        %4919 = vrot.lane.b32.xlu0 %v3085, 32
        %v4920 = vpop.permute.xlu0 %4919
        %v4922 = vmul.f32 %v4911, %v4920
        %v4923 = vmul.f32 %v4912, %v4920
        %v4924 = vmul.f32 %v4913, %v4920
        %v4925 = vmul.f32 %v4914, %v4920
        %v4926 = vmul.f32 %v4915, %v4920
        %v4927 = vmul.f32 %v4916, %v4920
        %v4928 = vmul.f32 %v4917, %v4920
        %v4929 = vmul.f32 %v4918, %v4920
        %v4931 = vperm.slane %v4742, 0
        %v4933 = vadd.f32 %v4922, %v4931
        %v4934 = vadd.f32 %v4923, %v4931
        %v4935 = vadd.f32 %v4924, %v4931
        %v4936 = vadd.f32 %v4925, %v4931
        %v4937 = vadd.f32 %v4926, %v4931
        %v4938 = vadd.f32 %v4927, %v4931
        %v4939 = vadd.f32 %v4928, %v4931
        %v4940 = vadd.f32 %v4929, %v4931
        %4941 = vst.msk [vmem:[#allocation2] sm:$0xff] %vm383, %v4933
        %4942 = vst.msk [vmem:[#allocation2 + $0x8] sm:$0xff] %vm383, %v4934
        %4943 = vst.msk [vmem:[#allocation2 + $0x10] sm:$0xff] %vm383, %v4935
        %4944 = vst.msk [vmem:[#allocation2 + $0x18] sm:$0xff] %vm383, %v4936
        %4945 = vst.msk [vmem:[#allocation2 + $0x20] sm:$0xff] %vm383, %v4937
        %4946 = vst.msk [vmem:[#allocation2 + $0x28] sm:$0xff] %vm383, %v4938
        %4947 = vst.msk [vmem:[#allocation2 + $0x30] sm:$0xff] %vm383, %v4939
        %4948 = vst.msk [vmem:[#allocation2 + $0x38] sm:$0xff] %vm383, %v4940
        %p4949 = scmp.eq.s32.totalorder %s24, 2
        // Predicated region
        $region61: #{attn_qlearning_forward.1} parent=47 // pred_check
          %p4950 = pneg %p4949
        $region62: #{attn_qlearning_forward.1} parent=47 // pred_check_branch
          %4952 = sbr.rel (%p4950) target = $region64
        $region63: #{attn_qlearning_forward.1} parent=47 // pred_region
          %v4953 = vmul.u32 %v1866, 8
          %v4954 = vadd.s32 %v4953, 3
          %vm4955 = vcmp.eq.s32.totalorder %v1875, %v4954
          %v4956 = vsel %vm4955, 1.0, 0.0
          %v4958 = vsel %vm2167, %v4956, 0
          %4960 = vmatpush.msra.mxu0 0.0
          %4961 = vmatpush.msra.mxu0 0.0
          %4962 = vmatpush.msra.mxu0 0.0
          %4963 = vmatpush.msra.mxu0 0.0
          %4964 = vmatpush.msra.mxu0 0.0
          %4965 = vmatpush.msra.mxu0 0.0
          %4966 = vmatpush.msra.mxu0 0.0
          %4967 = vmatpush.msra.mxu0 0.0
          %4968 = vmatpush.msra.mxu0 %v4940
          %4969 = vmatpush.msra.mxu0 %v4939
          %4970 = vmatpush.msra.mxu0 %v4938
          %4971 = vmatpush.msra.mxu0 %v4937
          %4972 = vmatpush.msra.mxu0 %v4936
          %4973 = vmatpush.msra.mxu0 %v4935
          %4974 = vmatpush.msra.mxu0 %v4934
          %4975 = vmatpush.msra.mxu0 %v4933
          %4976 = vmatmul.f32.gmra.mxu0 %v4958
          %v4977 = vpop.f32.mrf.mxu0
          %v4978 = vadd.f32 0.0, %v4977
          %4979 = vdwg.mxu0
          %v4980 = vld [vmem:[%s1] sm:$0xff]
          %4982 = vrot.lane.b32.xlu0 %v4980, 32
          %v4983 = vpop.permute.xlu0 %4982
          %v4985 = vsel %vm383, %v4978, %v4983
          %vm4986 = vcmask 293888
          %v4987 = vsel %vm4986, %v4985, 1.0
          %v4988 = vld [vmem:[%s5] sm:$0xff]
          %v4989 = vld [vmem:[%s5 + $0x8] sm:$0xff]
          %v4990 = vld [vmem:[%s5 + $0x10] sm:$0xff]
          %v4991 = vld [vmem:[%s5 + $0x18] sm:$0xff]
          %v4992 = vld [vmem:[%s5 + $0x20] sm:$0xff]
          %v4993 = vld [vmem:[%s5 + $0x28] sm:$0xff]
          %v4994 = vld [vmem:[%s5 + $0x30] sm:$0xff]
          %v4995 = vld [vmem:[%s5 + $0x38] sm:$0xff]
          %v4996 = vld [vmem:[%s5 + $0x40] sm:$0x1f]
          %v4997 = vld [vmem:[%s5 + $0x48] sm:$0x1f]
          %vm4998 = vcmask 302080
          %v5000 = vsel %vm4998, %v4987, 0
          %vm5002 = vcmask 1044480
          %v5004 = vsel %vm5002, %v4996, 0
          %v5007 = vsel %vm5002, %v4997, 0
          %5009 = vmatpush.msra.mxu0 0.0
          %5010 = vmatpush.msra.mxu0 0.0
          %5011 = vmatpush.msra.mxu0 0.0
          %5012 = vmatpush.msra.mxu0 0.0
          %5013 = vmatpush.msra.mxu0 0.0
          %5014 = vmatpush.msra.mxu0 0.0
          %5015 = vmatpush.msra.mxu0 0.0
          %5016 = vmatpush.msra.mxu0 0.0
          %5017 = vmatpush.msra.mxu0 0.0
          %5018 = vmatpush.msra.mxu0 0.0
          %5019 = vmatpush.msra.mxu0 0.0
          %5020 = vmatpush.msra.mxu0 %v5004
          %5021 = vmatpush.msra.mxu0 %v4994
          %5022 = vmatpush.msra.mxu0 %v4992
          %5023 = vmatpush.msra.mxu0 %v4990
          %5024 = vmatpush.msra.mxu0 %v4988
          %5025 = vmatmul.f32.gmra.mxu0 %v5000
          %v5026 = vpop.f32.mrf.mxu0
          %v5027 = vadd.f32 0.0, %v5026
          %5028 = vdwg.mxu0
          %5029 = vmatpush.msra.mxu0 0.0
          %5030 = vmatpush.msra.mxu0 0.0
          %5031 = vmatpush.msra.mxu0 0.0
          %5032 = vmatpush.msra.mxu0 0.0
          %5033 = vmatpush.msra.mxu0 0.0
          %5034 = vmatpush.msra.mxu0 0.0
          %5035 = vmatpush.msra.mxu0 0.0
          %5036 = vmatpush.msra.mxu0 0.0
          %5037 = vmatpush.msra.mxu0 0.0
          %5038 = vmatpush.msra.mxu0 0.0
          %5039 = vmatpush.msra.mxu0 0.0
          %5040 = vmatpush.msra.mxu0 %v5007
          %5041 = vmatpush.msra.mxu0 %v4995
          %5042 = vmatpush.msra.mxu0 %v4993
          %5043 = vmatpush.msra.mxu0 %v4991
          %5044 = vmatpush.msra.mxu0 %v4989
          %5045 = vmatmul.f32.gmra.mxu0 %v5000
          %v5046 = vpop.f32.mrf.mxu0
          %v5047 = vadd.f32 0.0, %v5046
          %5048 = vdwg.mxu0
          %vm5049 = vcmp.ge.f32.partialorder %v5027, 0.0
          %vm5050 = vcmp.ge.f32.partialorder %v5047, 0.0
          %v5051 = vmul.f32 %v5027, 0.01
          %v5052 = vmul.f32 %v5047, 0.01
          %v5053 = vsel %vm5049, %v5027, %v5051
          %v5054 = vsel %vm5050, %v5047, %v5052
          %v5055 = vld [vmem:[%s6] sm:$0xff]
          %v5056 = vld [vmem:[%s6 + $0x8] sm:$0xff]
          %v5057 = vld [vmem:[%s6 + $0x10] sm:$0xff]
          %v5058 = vld [vmem:[%s6 + $0x18] sm:$0xff]
          %v5059 = vld [vmem:[%s6 + $0x20] sm:$0xff]
          %v5060 = vld [vmem:[%s6 + $0x28] sm:$0xff]
          %v5061 = vld [vmem:[%s6 + $0x30] sm:$0xff]
          %v5062 = vld [vmem:[%s6 + $0x38] sm:$0xff]
          %v5063 = vld [vmem:[%s6 + $0x40] sm:$0xff]
          %v5064 = vld [vmem:[%s6 + $0x48] sm:$0xff]
          %v5065 = vld [vmem:[%s6 + $0x50] sm:$0xff]
          %v5066 = vld [vmem:[%s6 + $0x58] sm:$0xff]
          %v5067 = vld [vmem:[%s6 + $0x60] sm:$0xff]
          %v5068 = vld [vmem:[%s6 + $0x68] sm:$0xff]
          %v5069 = vld [vmem:[%s6 + $0x70] sm:$0xff]
          %v5070 = vld [vmem:[%s6 + $0x78] sm:$0xff]
          %v5071 = vld [vmem:[%s6 + $0x80] sm:$0xff]
          %v5072 = vld [vmem:[%s6 + $0x88] sm:$0xff]
          %v5073 = vld [vmem:[%s6 + $0x90] sm:$0xff]
          %v5074 = vld [vmem:[%s6 + $0x98] sm:$0xff]
          %v5075 = vld [vmem:[%s6 + $0xa0] sm:$0xff]
          %v5076 = vld [vmem:[%s6 + $0xa8] sm:$0xff]
          %v5077 = vld [vmem:[%s6 + $0xb0] sm:$0xff]
          %v5078 = vld [vmem:[%s6 + $0xb8] sm:$0xff]
          %v5079 = vld [vmem:[%s6 + $0xc0] sm:$0x1]
          %v5080 = vld [vmem:[%s6 + $0xc1] sm:$0xff]
          %v5081 = vld [vmem:[%s6 + $0xc9] sm:$0xff]
          %v5082 = vld [vmem:[%s6 + $0xd1] sm:$0xff]
          %v5083 = vld [vmem:[%s6 + $0xd9] sm:$0xff]
          %v5084 = vld [vmem:[%s6 + $0xe1] sm:$0xff]
          %v5085 = vld [vmem:[%s6 + $0xe9] sm:$0x1]
          %v5086 = vld [vmem:[%s6 + $0xea] sm:$0xff]
          %v5087 = vld [vmem:[%s6 + $0xf2] sm:$0xff]
          %v5088 = vld [vmem:[%s6 + $0xfa] sm:$0x1]
          %v5089 = vsel %vm2167, %v5054, 1.0
          %vm5090 = vcmask 531456
          %v5092 = vsel %vm5090, %v5089, 0
          %vm5094 = vcmask 1040384
          %v5096 = vsel %vm5094, %v5079, 0
          %5098 = vmatpush.msra.mxu0 %v5070
          %5099 = vmatpush.msra.mxu0 %v5069
          %5100 = vmatpush.msra.mxu0 %v5068
          %5101 = vmatpush.msra.mxu0 %v5067
          %5102 = vmatpush.msra.mxu0 %v5066
          %5103 = vmatpush.msra.mxu0 %v5065
          %5104 = vmatpush.msra.mxu0 %v5064
          %5105 = vmatpush.msra.mxu0 %v5063
          %5106 = vmatpush.msra.mxu0 %v5062
          %5107 = vmatpush.msra.mxu0 %v5061
          %5108 = vmatpush.msra.mxu0 %v5060
          %5109 = vmatpush.msra.mxu0 %v5059
          %5110 = vmatpush.msra.mxu0 %v5058
          %5111 = vmatpush.msra.mxu0 %v5057
          %5112 = vmatpush.msra.mxu0 %v5056
          %5113 = vmatpush.msra.mxu0 %v5055
          %5114 = vmatmul.f32.gmra.mxu0 %v5053
          %v5115 = vpop.f32.mrf.mxu0
          %v5116 = vadd.f32 0.0, %v5115
          %5117 = vdwg.mxu0
          %5118 = vmatpush.msra.mxu0 0.0
          %5119 = vmatpush.msra.mxu0 0.0
          %5120 = vmatpush.msra.mxu0 0.0
          %5121 = vmatpush.msra.mxu0 0.0
          %5122 = vmatpush.msra.mxu0 0.0
          %5123 = vmatpush.msra.mxu0 0.0
          %5124 = vmatpush.msra.mxu0 0.0
          %5125 = vmatpush.msra.mxu0 %v5096
          %5126 = vmatpush.msra.mxu0 %v5078
          %5127 = vmatpush.msra.mxu0 %v5077
          %5128 = vmatpush.msra.mxu0 %v5076
          %5129 = vmatpush.msra.mxu0 %v5075
          %5130 = vmatpush.msra.mxu0 %v5074
          %5131 = vmatpush.msra.mxu0 %v5073
          %5132 = vmatpush.msra.mxu0 %v5072
          %5133 = vmatpush.msra.mxu0 %v5071
          %5134 = vmatmul.f32.gmra.mxu0 %v5092
          %v5135 = vpop.f32.mrf.mxu0
          %v5136 = vadd.f32 %v5116, %v5135
          %5137 = vdwg.mxu0
          %vm5138 = vcmp.ge.f32.partialorder %v5136, 0.0
          %v5139 = vmul.f32 %v5136, 0.01
          %v5140 = vsel %vm5138, %v5136, %v5139
          %vm5141 = vcmask 326656
          %v5142 = vsel %vm5141, %v5140, 1.0
          %vm5143 = vcmask 334848
          %v5145 = vsel %vm5143, %v5142, 0
          %v5148 = vsel %vm5094, %v5085, 0
          %5150 = vmatpush.msra.mxu0 0.0
          %5151 = vmatpush.msra.mxu0 0.0
          %5152 = vmatpush.msra.mxu0 0.0
          %5153 = vmatpush.msra.mxu0 0.0
          %5154 = vmatpush.msra.mxu0 0.0
          %5155 = vmatpush.msra.mxu0 0.0
          %5156 = vmatpush.msra.mxu0 0.0
          %5157 = vmatpush.msra.mxu0 0.0
          %5158 = vmatpush.msra.mxu0 0.0
          %5159 = vmatpush.msra.mxu0 0.0
          %5160 = vmatpush.msra.mxu0 %v5148
          %5161 = vmatpush.msra.mxu0 %v5084
          %5162 = vmatpush.msra.mxu0 %v5083
          %5163 = vmatpush.msra.mxu0 %v5082
          %5164 = vmatpush.msra.mxu0 %v5081
          %5165 = vmatpush.msra.mxu0 %v5080
          %5166 = vmatmul.f32.gmra.mxu0 %v5145
          %v5167 = vpop.f32.mrf.mxu0
          %v5168 = vadd.f32 0.0, %v5167
          %5169 = vdwg.mxu0
          %vm5170 = vcmp.ge.f32.partialorder %v5168, 0.0
          %v5171 = vmul.f32 %v5168, 0.01
          %v5172 = vsel %vm5170, %v5168, %v5171
          %v5173 = vsel %vm2061, %v5172, 1.0
          %vm5174 = vcmask 138240
          %v5176 = vsel %vm5174, %v5173, 0
          %v5179 = vsel %vm5094, %v5088, 0
          %5181 = vmatpush.msra.mxu0 0.0
          %5182 = vmatpush.msra.mxu0 0.0
          %5183 = vmatpush.msra.mxu0 0.0
          %5184 = vmatpush.msra.mxu0 0.0
          %5185 = vmatpush.msra.mxu0 0.0
          %5186 = vmatpush.msra.mxu0 0.0
          %5187 = vmatpush.msra.mxu0 0.0
          %5188 = vmatpush.msra.mxu0 0.0
          %5189 = vmatpush.msra.mxu0 0.0
          %5190 = vmatpush.msra.mxu0 0.0
          %5191 = vmatpush.msra.mxu0 0.0
          %5192 = vmatpush.msra.mxu0 0.0
          %5193 = vmatpush.msra.mxu0 0.0
          %5194 = vmatpush.msra.mxu0 %v5179
          %5195 = vmatpush.msra.mxu0 %v5087
          %5196 = vmatpush.msra.mxu0 %v5086
          %5197 = vmatmul.f32.gmra.mxu0 %v5176
          %v5198 = vpop.f32.mrf.mxu0
          %v5199 = vadd.f32 0.0, %v5198
          %5200 = vdwg.mxu0
          %vm5201 = vcmask 31744
          %v5202 = vsel %vm5201, %v5199, -inf
          %5203 = vmax.xlane.f32.xlu0 %v5202
          %v5204 = vpop.xlane.xlu0 %5203
          %v5205 = vsub.f32 %v5199, %v5204
          %v5206 = vmul.f32 %v5205, 1.442695
          %v5207 = vpow.pop %v5206
          %v5208 = vsel %vm5201, %v5207, 0.0
          %5209 = vadd.xlane.f32.xlu0 %v5208
          %v5210 = vpop.xlane.xlu0 %5209
          %v5211 = vrcp.pop %v5210
          %v5212 = vmul.f32 %v5210, %v5211
          %v5213 = vsub.f32 1.0, %v5212
          %v5214 = vmul.f32 %v5211, %v5213
          %v5215 = vadd.f32 %v5211, %v5214
          %vm5216 = vweird.f32 %v5210
          %vm5217 = vweird.f32 %v5211
          %vm5218 = vmor %vm5216, %vm5217
          %v5219 = vsel %vm5218, %v5211, %v5215
          %v5220 = vand.u32 2147483647, %v5210
          %vm5221 = vcmp.eq.f32.partialorder %v5220, 8.507059e+37
          %v5222 = vand.u32 %v5210, 2147483648
          %v5223 = vor.u32 1.1754944e-38, %v5222
          %v5224 = vsel %vm5221, %v5223, %v5219
          %v5225 = vmul.f32 %v5207, %v5224
          %5227 = vrot.lane.b32.xlu0 %v5136, 92
          %v5228 = vpop.permute.xlu0 %5227
          %5231 = vrot.lane.b32.xlu0 %v5168, 4
          %v5232 = vpop.permute.xlu0 %5231
          %v5234 = vsel %vm5201, %v5225, %v5228
          %vm5235 = vcmask 162816
          %v5236 = vsel %vm5235, %v5234, %v5232
          %vm5237 = vcmask 171008
          %v5238 = vsel %vm5237, %v5236, 0.0
          %5239 = vst [vmem:[%s7] sm:$0xff] %v5238
        $region64: #{attn_qlearning_forward.1} parent=47 // pred_fallthru
          _
        // Predicated region
        $region65: #{attn_qlearning_forward.1} parent=47 // pred_check
          %p5240 = pneg %p199
        $region66: #{attn_qlearning_forward.1} parent=47 // pred_check_branch
          %5242 = sbr.rel (%p5240) target = $region68
        $region67: #{attn_qlearning_forward.1} parent=47 // pred_region
          _
        $region68: #{attn_qlearning_forward.1} parent=47 // pred_fallthru
          _
        // Predicated region
        $region69: #{attn_qlearning_forward.1} parent=47 // pred_check
          %p5243 = pneg %p199
        $region70: #{attn_qlearning_forward.1} parent=47 // pred_check_branch
          %5245 = sbr.rel (%p5243) target = $region72
        $region71: #{attn_qlearning_forward.1} parent=47 // pred_region
          _
        $region72: #{attn_qlearning_forward.1} parent=47 // pred_fallthru
          _
      $region48: #{attn_qlearning_forward.1} parent=5 // pred_fallthru
        _
      %p5246 = scmp.le.s32.totalorder 2, %s19
      // Predicated region
      $region73: #{attn_qlearning_forward.1} parent=5 // pred_check
        %p5247 = pneg %p5246
      $region74: #{attn_qlearning_forward.1} parent=5 // pred_check_branch
        %5249 = sbr.rel (%p5247) target = $region76
      $region75: #{attn_qlearning_forward.1} parent=5 // pred_region
        %s5250 = ssub.s32 %s19, 2
      $region76: #{attn_qlearning_forward.1} parent=5 // pred_fallthru
        _
    $region6: #{attn_qlearning_forward.1} parent=1 // loop_footer
      %s23 = sadd.s32 1, %s19
    $region7: #{attn_qlearning_forward.1} parent=1 // loop_footer_branch
      %18 = sbr.rel target = $region3
    $region8: #{attn_qlearning_forward.1} parent=1 // loop_exit
      _
    %5251 = vsyncpa [#allocation4], 1
    %s5252 = scalar_lea.sflag [#allocation4], 1
    %5253 = vsyncpa %s5252, 1
    %5254 = vsyncpa [#allocation6], 1
    %s5255 = scalar_lea.sflag [#allocation6], 1
    %5256 = vsyncpa %s5255, 1

</llo_original>
